<compile_context>
chip_gen: v7x
topology: tpu7x:2x2x1
jax: 0.10.0
libtpu: 0.0.40
codegen_flags: <defaults>
</compile_context>

<pallas_src>
import jax
import jax.numpy as jnp
from jax.experimental import pallas as pl
from jax.experimental.pallas import tpu as pltpu

BN_EPS = 1e-5


# ----------------------------------------------------------------------------
# Fused MFAB2D kernel (runs once per batch element; grid=(B,))
# ----------------------------------------------------------------------------
def _mfab_kernel(xp_ref, skp_ref, pup_ref, qpd_ref,
                 w0_ref, ab0_ref, w1_ref, ab1_ref,
                 wh1_ref, bh1_ref, wh2_ref, bh2_ref,
                 wl1_ref, bl1_ref, wl2_ref, bl2_ref,
                 wcx_ref, wcs_ref, abc1_ref,
                 w2c_ref, abc2_ref,
                 o_ref):
    f32 = jnp.float32
    _, h2p, w2p, cs = skp_ref.shape          # padded skip block (1, H2+2, W2+2, Cs)
    h2, w2 = h2p - 2, w2p - 2
    co = abc2_ref.shape[1]

    def conv3x3(xpad, wflat):
        """im2col 3x3 conv: pad-1 input (Hp,Wp,C) x flat weight (9C, Co)."""
        hh = xpad.shape[0] - 2
        ww = xpad.shape[1] - 2
        cols = jnp.concatenate(
            [xpad[kh:kh + hh, kw:kw + ww, :]
             for kh in range(3) for kw in range(3)], axis=-1)   # (hh, ww, 9C)
        cols = cols.reshape(hh * ww, cols.shape[-1])
        return jnp.dot(cols.astype(wflat.dtype), wflat,
                       preferred_element_type=f32)              # (hh*ww, Co) f32

    def bn_relu(v, ab):                                          # ab: (2, C) = [scale; shift]
        return jnp.maximum(v * ab[0:1, :] + ab[1:2, :], 0.0)

    # ---- hl_conv: Conv3x3+BN+ReLU, Conv1x1+BN+ReLU (low-res grid) ----------
    y = bn_relu(conv3x3(xp_ref[0], w0_ref[...]), ab0_ref[...])   # (H1*W1, Cin)
    w1v = w1_ref[...]
    y = bn_relu(jnp.dot(y.astype(w1v.dtype), w1v,
                        preferred_element_type=f32), ab1_ref[...])  # (H1*W1, Cs)

    # ---- SE attentions (GAP of x2-upsampled y == GAP of y) -----------------
    pool_hl = jnp.mean(y, axis=0, keepdims=True)                 # (1, Cs)
    skp = skp_ref[0]                                             # (H2+2, W2+2, Cs)
    skin = skp[1:1 + h2, 1:1 + w2, :].reshape(h2 * w2, cs)
    pool_ll = jnp.mean(skin, axis=0, keepdims=True)              # (1, Cs)

    se_h = jnp.maximum(jnp.dot(pool_hl, wh1_ref[...],
                               preferred_element_type=f32) + bh1_ref[...], 0.0)
    att_hl = jax.nn.sigmoid(jnp.dot(se_h, wh2_ref[...],
                                    preferred_element_type=f32) + bh2_ref[...])
    se_l = jnp.maximum(jnp.dot(pool_ll, wl1_ref[...],
                               preferred_element_type=f32) + bl1_ref[...], 0.0)
    att_ll = jax.nn.sigmoid(jnp.dot(se_l, wl2_ref[...],
                                    preferred_element_type=f32) + bl2_ref[...])
    att = att_hl + att_ll                                        # (1, Cs)

    # ---- x2 nearest upsample + zero pad (selection matmul), then * att -----
    x_up_pad = jnp.dot(pup_ref[...], y, preferred_element_type=f32)   # ((H2+2)*(W2+2), Cs)
    x_att_pad = (x_up_pad * att).reshape(h2p, w2p, cs)

    # ---- conv1 on cat([x*att, skip]) == conv(x*att,Wx) + conv(skip,Ws) -----
    z = conv3x3(x_att_pad, wcx_ref[...]) + conv3x3(skp, wcs_ref[...])  # (H2*W2, Co)
    z = bn_relu(z, abc1_ref[...])

    # ---- conv2 (zero-pad via selection matmul, stay in VMEM) ---------------
    z_pad = jnp.dot(qpd_ref[...], z,
                    preferred_element_type=f32).reshape(h2p, w2p, co)
    z = bn_relu(conv3x3(z_pad, w2c_ref[...]), abc2_ref[...])     # (H2*W2, Co)

    o_ref[0] = z.astype(o_ref.dtype)


# ----------------------------------------------------------------------------
# Constant 0/1 selection matrices (built once, tiny)
# ----------------------------------------------------------------------------
def _selection_matrices(h1, w1, h2, w2):
    hp, wp = h2 + 2, w2 + 2
    idx = jnp.arange(hp * wp)
    r, c = idx // wp, idx % wp
    valid = ((r >= 1) & (r <= h2) & (c >= 1) & (c <= w2)).astype(jnp.float32)
    up_src = (jnp.clip((r - 1) // 2, 0, h1 - 1) * w1
              + jnp.clip((c - 1) // 2, 0, w1 - 1))
    pd_src = jnp.clip(r - 1, 0, h2 - 1) * w2 + jnp.clip(c - 1, 0, w2 - 1)
    p_up = jax.nn.one_hot(up_src, h1 * w1, dtype=jnp.float32) * valid[:, None]
    q_pad = jax.nn.one_hot(pd_src, h2 * w2, dtype=jnp.float32) * valid[:, None]
    return p_up, q_pad


# ----------------------------------------------------------------------------
# Parameter construction (deterministic, PyTorch-default BN stats)
# ----------------------------------------------------------------------------
def make_conv_bn(key, kh, kw, cin, cout):
    w = jax.random.normal(key, (kh, kw, cin, cout), jnp.float32) * 0.1
    gamma = jnp.ones((cout,), jnp.float32)
    beta = jnp.zeros((cout,), jnp.float32)
    run_mean = jnp.zeros((cout,), jnp.float32)
    run_var = jnp.ones((cout,), jnp.float32)
    scale = gamma / jnp.sqrt(run_var + BN_EPS)
    shift = beta - run_mean * scale
    return w, scale, shift


def make_se(key, c, cmid):
    k1, k2, k3, k4 = jax.random.split(key, 4)
    w1 = jax.random.normal(k1, (c, cmid), jnp.float32) * 0.1
    b1 = jax.random.normal(k2, (cmid,), jnp.float32) * 0.1
    w2 = jax.random.normal(k3, (cmid, c), jnp.float32) * 0.1
    b2 = jax.random.normal(k4, (c,), jnp.float32) * 0.1
    return w1, b1, w2, b2


def init_mfab2d_params(key, in_channels, skip_channels, out_channels, reduction=16):
    keys = jax.random.split(key, 6)
    cmid = skip_channels // reduction
    return {
        "hl0": make_conv_bn(keys[0], 3, 3, in_channels, in_channels),
        "hl1": make_conv_bn(keys[1], 1, 1, in_channels, skip_channels),
        "se_hl": make_se(keys[2], skip_channels, cmid),
        "se_ll": make_se(keys[3], skip_channels, cmid),
        "conv1": make_conv_bn(keys[4], 3, 3, 2 * skip_channels, out_channels),
        "conv2": make_conv_bn(keys[5], 3, 3, out_channels, out_channels),
    }


# ----------------------------------------------------------------------------
# Full MFAB2D forward (NCHW in / NCHW out, matching the PyTorch module)
# ----------------------------------------------------------------------------
@jax.jit
def mfab2d_forward(params, x_nchw, skip_nchw):
    x = jnp.transpose(x_nchw, (0, 2, 3, 1)).astype(jnp.float32)      # NCHW->NHWC
    skip = jnp.transpose(skip_nchw, (0, 2, 3, 1)).astype(jnp.float32)
    B, H1, W1, CIN = x.shape
    _, H2, W2, CS = skip.shape

    w0, sc0, sh0 = params["hl0"]
    w1, sc1, sh1 = params["hl1"]
    wh1, bh1, wh2, bh2 = params["se_hl"]
    wl1, bl1, wl2, bl2 = params["se_ll"]
    wc1, scc1, shc1 = params["conv1"]
    wc2, scc2, shc2 = params["conv2"]
    CO = wc2.shape[-1]
    CM = wh1.shape[-1]

    # zero-pad the two HBM-resident activations in the wrapper (cheap, once)
    xp = jnp.pad(x, ((0, 0), (1, 1), (1, 1), (0, 0)))                # (B, H1+2, W1+2, Cin)
    skp = jnp.pad(skip, ((0, 0), (1, 1), (1, 1), (0, 0)))            # (B, H2+2, W2+2, Cs)

    P, Q = _selection_matrices(H1, W1, H2, W2)                       # upsample+pad / pad

    bf16 = jnp.bfloat16
    w0f = w0.reshape(9 * CIN, CIN).astype(bf16)                      # im2col weights
    w1f = w1.reshape(CIN, CS).astype(bf16)
    wcx = wc1[:, :, :CS, :].reshape(9 * CS, CO).astype(bf16)         # conv1: x-branch
    wcs = wc1[:, :, CS:, :].reshape(9 * CS, CO).astype(bf16)         # conv1: skip-branch
    w2f = wc2.reshape(9 * CO, CO).astype(bf16)
    ab0 = jnp.stack([sc0, sh0])
    ab1 = jnp.stack([sc1, sh1])
    abc1 = jnp.stack([scc1, shc1])
    abc2 = jnp.stack([scc2, shc2])
    bh1r, bh2r = bh1.reshape(1, CM), bh2.reshape(1, CS)
    bl1r, bl2r = bl1.reshape(1, CM), bl2.reshape(1, CS)

    def full2d(a):
        return pl.BlockSpec(a.shape, lambda b: (0, 0))

    out = pl.pallas_call(
        _mfab_kernel,
        out_shape=jax.ShapeDtypeStruct((B, H2 * W2, CO), jnp.float32),
        grid=(B,),
        in_specs=[
            pl.BlockSpec((1, H1 + 2, W1 + 2, CIN), lambda b: (b, 0, 0, 0)),
            pl.BlockSpec((1, H2 + 2, W2 + 2, CS), lambda b: (b, 0, 0, 0)),
            full2d(P), full2d(Q),
            full2d(w0f), full2d(ab0), full2d(w1f), full2d(ab1),
            full2d(wh1), full2d(bh1r), full2d(wh2), full2d(bh2r),
            full2d(wl1), full2d(bl1r), full2d(wl2), full2d(bl2r),
            full2d(wcx), full2d(wcs), full2d(abc1),
            full2d(w2f), full2d(abc2),
        ],
        out_specs=pl.BlockSpec((1, H2 * W2, CO), lambda b: (b, 0, 0)),
        compiler_params=pltpu.CompilerParams(dimension_semantics=("parallel",)),
    )(xp, skp, P, Q, w0f, ab0, w1f, ab1,
      wh1, bh1r, wh2, bh2r,
      wl1, bl1r, wl2, bl2r,
      wcx, wcs, abc1, w2f, abc2)

    out = out.reshape(B, H2, W2, CO)
    return jnp.transpose(out, (0, 3, 1, 2))                          # NHWC -> NCHW


if __name__ == "__main__":
    # Small deterministic example: B=2, in_channels=16, skip_channels=32,
    # out_channels=16, reduction=16 (squeeze width = 2).
    # x spatial 8x8 -> x2 nearest upsample to 16x16 to match skip's 16x16.
    B, Cin, Cskip, Cout = 2, 16, 32, 16
    key = jax.random.PRNGKey(0)
    kx, kskip, kparams = jax.random.split(key, 3)

    x_nchw = jax.random.normal(kx, (B, Cin, 8, 8), jnp.float32)
    skip_nchw = jax.random.normal(kskip, (B, Cskip, 16, 16), jnp.float32)
    params = init_mfab2d_params(kparams, Cin, Cskip, Cout, reduction=16)

    out = mfab2d_forward(params, x_nchw, skip_nchw)
    out = jax.block_until_ready(out)
    assert out.shape == (B, Cout, 16, 16), out.shape
    assert bool(jnp.all(jnp.isfinite(out)))
    print("KERNEL_OK")
</pallas_src>

<mosaic_0001>
module attributes {stable_mosaic.version = 11 : i64} {
  func.func @_mfab_kernel(%arg0: i32, %arg1: memref<1x10x10x16xf32, #tpu.memory_space<vmem>>, %arg2: memref<1x18x18x32xf32, #tpu.memory_space<vmem>>, %arg3: memref<324x64xf32, #tpu.memory_space<vmem>>, %arg4: memref<324x256xf32, #tpu.memory_space<vmem>>, %arg5: memref<144x16xbf16, #tpu.memory_space<vmem>>, %arg6: memref<2x16xf32, #tpu.memory_space<vmem>>, %arg7: memref<16x32xbf16, #tpu.memory_space<vmem>>, %arg8: memref<2x32xf32, #tpu.memory_space<vmem>>, %arg9: memref<32x2xf32, #tpu.memory_space<vmem>>, %arg10: memref<1x2xf32, #tpu.memory_space<vmem>>, %arg11: memref<2x32xf32, #tpu.memory_space<vmem>>, %arg12: memref<1x32xf32, #tpu.memory_space<vmem>>, %arg13: memref<32x2xf32, #tpu.memory_space<vmem>>, %arg14: memref<1x2xf32, #tpu.memory_space<vmem>>, %arg15: memref<2x32xf32, #tpu.memory_space<vmem>>, %arg16: memref<1x32xf32, #tpu.memory_space<vmem>>, %arg17: memref<288x16xbf16, #tpu.memory_space<vmem>>, %arg18: memref<288x16xbf16, #tpu.memory_space<vmem>>, %arg19: memref<2x16xf32, #tpu.memory_space<vmem>>, %arg20: memref<144x16xbf16, #tpu.memory_space<vmem>>, %arg21: memref<2x16xf32, #tpu.memory_space<vmem>>, %arg22: memref<1x256x16xf32, #tpu.memory_space<vmem>>) attributes {dimension_semantics = [#tpu.dimension_semantics<parallel>], iteration_bounds = array<i64: 2>, scalar_prefetch = 0 : i64, scratch_operands = 0 : i64, tpu.core_type = #tpu.core_type<tc>, window_params = [{transform_indices = @transform_0, window_bounds = array<i64: 1, 10, 10, 16>}, {transform_indices = @transform_1, window_bounds = array<i64: 1, 18, 18, 32>}, {pipeline_mode = #tpu.pipeline_mode<synchronous>, transform_indices = @transform_2, window_bounds = array<i64: 324, 64>}, {pipeline_mode = #tpu.pipeline_mode<synchronous>, transform_indices = @transform_3, window_bounds = array<i64: 324, 256>}, {pipeline_mode = #tpu.pipeline_mode<synchronous>, transform_indices = @transform_4, window_bounds = array<i64: 144, 16>}, {pipeline_mode = #tpu.pipeline_mode<synchronous>, transform_indices = @transform_5, window_bounds = array<i64: 2, 16>}, {pipeline_mode = #tpu.pipeline_mode<synchronous>, transform_indices = @transform_6, window_bounds = array<i64: 16, 32>}, {pipeline_mode = #tpu.pipeline_mode<synchronous>, transform_indices = @transform_7, window_bounds = array<i64: 2, 32>}, {pipeline_mode = #tpu.pipeline_mode<synchronous>, transform_indices = @transform_8, window_bounds = array<i64: 32, 2>}, {pipeline_mode = #tpu.pipeline_mode<synchronous>, transform_indices = @transform_9, window_bounds = array<i64: 1, 2>}, {pipeline_mode = #tpu.pipeline_mode<synchronous>, transform_indices = @transform_10, window_bounds = array<i64: 2, 32>}, {pipeline_mode = #tpu.pipeline_mode<synchronous>, transform_indices = @transform_11, window_bounds = array<i64: 1, 32>}, {pipeline_mode = #tpu.pipeline_mode<synchronous>, transform_indices = @transform_12, window_bounds = array<i64: 32, 2>}, {pipeline_mode = #tpu.pipeline_mode<synchronous>, transform_indices = @transform_13, window_bounds = array<i64: 1, 2>}, {pipeline_mode = #tpu.pipeline_mode<synchronous>, transform_indices = @transform_14, window_bounds = array<i64: 2, 32>}, {pipeline_mode = #tpu.pipeline_mode<synchronous>, transform_indices = @transform_15, window_bounds = array<i64: 1, 32>}, {pipeline_mode = #tpu.pipeline_mode<synchronous>, transform_indices = @transform_16, window_bounds = array<i64: 288, 16>}, {pipeline_mode = #tpu.pipeline_mode<synchronous>, transform_indices = @transform_17, window_bounds = array<i64: 288, 16>}, {pipeline_mode = #tpu.pipeline_mode<synchronous>, transform_indices = @transform_18, window_bounds = array<i64: 2, 16>}, {pipeline_mode = #tpu.pipeline_mode<synchronous>, transform_indices = @transform_19, window_bounds = array<i64: 144, 16>}, {pipeline_mode = #tpu.pipeline_mode<synchronous>, transform_indices = @transform_20, window_bounds = array<i64: 2, 16>}, {transform_indices = @transform_21, window_bounds = array<i64: 1, 256, 16>}]} {
    %c0 = arith.constant 0 : index
    %c0_0 = arith.constant 0 : index
    %c0_1 = arith.constant 0 : index
    %c0_2 = arith.constant 0 : index
    %0 = vector.load %arg1[%c0, %c0_0, %c0_1, %c0_2] : memref<1x10x10x16xf32, #tpu.memory_space<vmem>>, vector<1x10x10x16xf32>
    %1 = vector.shape_cast %0 : vector<1x10x10x16xf32> to vector<10x10x16xf32>
    %c0_3 = arith.constant 0 : index
    %c0_4 = arith.constant 0 : index
    %2 = vector.load %arg5[%c0_3, %c0_4] : memref<144x16xbf16, #tpu.memory_space<vmem>>, vector<144x16xbf16>
    %3 = vector.extract_strided_slice %1 {offsets = [0, 0, 0], sizes = [8, 8, 16], strides = [1, 1, 1]} : vector<10x10x16xf32> to vector<8x8x16xf32>
    %4 = vector.extract_strided_slice %1 {offsets = [0, 1, 0], sizes = [8, 8, 16], strides = [1, 1, 1]} : vector<10x10x16xf32> to vector<8x8x16xf32>
    %5 = vector.extract_strided_slice %1 {offsets = [0, 2, 0], sizes = [8, 8, 16], strides = [1, 1, 1]} : vector<10x10x16xf32> to vector<8x8x16xf32>
    %6 = vector.extract_strided_slice %1 {offsets = [1, 0, 0], sizes = [8, 8, 16], strides = [1, 1, 1]} : vector<10x10x16xf32> to vector<8x8x16xf32>
    %7 = vector.extract_strided_slice %1 {offsets = [1, 1, 0], sizes = [8, 8, 16], strides = [1, 1, 1]} : vector<10x10x16xf32> to vector<8x8x16xf32>
    %8 = vector.extract_strided_slice %1 {offsets = [1, 2, 0], sizes = [8, 8, 16], strides = [1, 1, 1]} : vector<10x10x16xf32> to vector<8x8x16xf32>
    %9 = vector.extract_strided_slice %1 {offsets = [2, 0, 0], sizes = [8, 8, 16], strides = [1, 1, 1]} : vector<10x10x16xf32> to vector<8x8x16xf32>
    %10 = vector.extract_strided_slice %1 {offsets = [2, 1, 0], sizes = [8, 8, 16], strides = [1, 1, 1]} : vector<10x10x16xf32> to vector<8x8x16xf32>
    %11 = vector.extract_strided_slice %1 {offsets = [2, 2, 0], sizes = [8, 8, 16], strides = [1, 1, 1]} : vector<10x10x16xf32> to vector<8x8x16xf32>
    %12 = tpu.concatenate %3, %4, %5, %6, %7, %8, %9, %10, %11 in 2 : vector<8x8x16xf32>, vector<8x8x16xf32>, vector<8x8x16xf32>, vector<8x8x16xf32>, vector<8x8x16xf32>, vector<8x8x16xf32>, vector<8x8x16xf32>, vector<8x8x16xf32>, vector<8x8x16xf32> -> vector<8x8x144xf32>
    %13 = vector.shape_cast %12 : vector<8x8x144xf32> to vector<64x144xf32>
    %14 = arith.truncf %13 : vector<64x144xf32> to vector<64x144xbf16>
    %cst = arith.constant dense<0.000000e+00> : vector<64x16xf32>
    %15 = tpu.matmul %14, %2, %cst {dimension_numbers = #tpu.dot_dimension_numbers<[1], [0], [0], [1], [0, 0, 1, 1], [], []>} : vector<64x144xbf16>, vector<144x16xbf16>, vector<64x16xf32> -> vector<64x16xf32>
    %c0_5 = arith.constant 0 : index
    %c0_6 = arith.constant 0 : index
    %16 = vector.load %arg6[%c0_5, %c0_6] : memref<2x16xf32, #tpu.memory_space<vmem>>, vector<2x16xf32>
    %17 = vector.extract_strided_slice %16 {offsets = [0, 0], sizes = [1, 16], strides = [1, 1]} : vector<2x16xf32> to vector<1x16xf32>
    %18 = vector.broadcast %17 : vector<1x16xf32> to vector<64x16xf32>
    %19 = arith.mulf %15, %18 : vector<64x16xf32>
    %20 = vector.extract_strided_slice %16 {offsets = [1, 0], sizes = [1, 16], strides = [1, 1]} : vector<2x16xf32> to vector<1x16xf32>
    %21 = vector.broadcast %20 : vector<1x16xf32> to vector<64x16xf32>
    %22 = arith.addf %19, %21 : vector<64x16xf32>
    %cst_7 = arith.constant 0.000000e+00 : f32
    %23 = vector.broadcast %cst_7 : f32 to vector<64x16xf32>
    %24 = arith.maximumf %22, %23 : vector<64x16xf32>
    %c0_8 = arith.constant 0 : index
    %c0_9 = arith.constant 0 : index
    %25 = vector.load %arg7[%c0_8, %c0_9] : memref<16x32xbf16, #tpu.memory_space<vmem>>, vector<16x32xbf16>
    %26 = arith.truncf %24 : vector<64x16xf32> to vector<64x16xbf16>
    %cst_10 = arith.constant dense<0.000000e+00> : vector<64x32xf32>
    %27 = tpu.matmul %26, %25, %cst_10 {dimension_numbers = #tpu.dot_dimension_numbers<[1], [0], [0], [1], [0, 0, 1, 1], [], []>} : vector<64x16xbf16>, vector<16x32xbf16>, vector<64x32xf32> -> vector<64x32xf32>
    %c0_11 = arith.constant 0 : index
    %c0_12 = arith.constant 0 : index
    %28 = vector.load %arg8[%c0_11, %c0_12] : memref<2x32xf32, #tpu.memory_space<vmem>>, vector<2x32xf32>
    %29 = vector.extract_strided_slice %28 {offsets = [0, 0], sizes = [1, 32], strides = [1, 1]} : vector<2x32xf32> to vector<1x32xf32>
    %30 = vector.broadcast %29 : vector<1x32xf32> to vector<64x32xf32>
    %31 = arith.mulf %27, %30 : vector<64x32xf32>
    %32 = vector.extract_strided_slice %28 {offsets = [1, 0], sizes = [1, 32], strides = [1, 1]} : vector<2x32xf32> to vector<1x32xf32>
    %33 = vector.broadcast %32 : vector<1x32xf32> to vector<64x32xf32>
    %34 = arith.addf %31, %33 : vector<64x32xf32>
    %cst_13 = arith.constant 0.000000e+00 : f32
    %35 = vector.broadcast %cst_13 : f32 to vector<64x32xf32>
    %36 = arith.maximumf %34, %35 : vector<64x32xf32>
    %cst_14 = arith.constant dense<0.000000e+00> : vector<32xf32>
    %37 = vector.multi_reduction <add>, %36, %cst_14 [0] : vector<64x32xf32> to vector<32xf32>
    %38 = vector.shape_cast %37 : vector<32xf32> to vector<1x32xf32>
    %cst_15 = arith.constant 6.400000e+01 : f32
    %39 = vector.broadcast %cst_15 : f32 to vector<1x32xf32>
    %40 = arith.divf %38, %39 : vector<1x32xf32>
    %c0_16 = arith.constant 0 : index
    %c0_17 = arith.constant 0 : index
    %c0_18 = arith.constant 0 : index
    %c0_19 = arith.constant 0 : index
    %41 = vector.load %arg2[%c0_16, %c0_17, %c0_18, %c0_19] : memref<1x18x18x32xf32, #tpu.memory_space<vmem>>, vector<1x18x18x32xf32>
    %42 = vector.shape_cast %41 : vector<1x18x18x32xf32> to vector<18x18x32xf32>
    %43 = vector.extract_strided_slice %42 {offsets = [1, 1, 0], sizes = [16, 16, 32], strides = [1, 1, 1]} : vector<18x18x32xf32> to vector<16x16x32xf32>
    %44 = vector.shape_cast %43 : vector<16x16x32xf32> to vector<256x32xf32>
    %cst_20 = arith.constant dense<0.000000e+00> : vector<32xf32>
    %45 = vector.multi_reduction <add>, %44, %cst_20 [0] : vector<256x32xf32> to vector<32xf32>
    %46 = vector.shape_cast %45 : vector<32xf32> to vector<1x32xf32>
    %cst_21 = arith.constant 2.560000e+02 : f32
    %47 = vector.broadcast %cst_21 : f32 to vector<1x32xf32>
    %48 = arith.divf %46, %47 : vector<1x32xf32>
    %c0_22 = arith.constant 0 : index
    %c0_23 = arith.constant 0 : index
    %49 = vector.load %arg9[%c0_22, %c0_23] : memref<32x2xf32, #tpu.memory_space<vmem>>, vector<32x2xf32>
    %cst_24 = arith.constant dense<0.000000e+00> : vector<1x2xf32>
    %50 = tpu.matmul %40, %49, %cst_24 {dimension_numbers = #tpu.dot_dimension_numbers<[1], [0], [0], [1], [0, 0, 1, 1], [], []>} : vector<1x32xf32>, vector<32x2xf32>, vector<1x2xf32> -> vector<1x2xf32>
    %c0_25 = arith.constant 0 : index
    %c0_26 = arith.constant 0 : index
    %51 = vector.load %arg10[%c0_25, %c0_26] : memref<1x2xf32, #tpu.memory_space<vmem>>, vector<1x2xf32>
    %52 = arith.addf %50, %51 : vector<1x2xf32>
    %cst_27 = arith.constant 0.000000e+00 : f32
    %53 = vector.broadcast %cst_27 : f32 to vector<1x2xf32>
    %54 = arith.maximumf %52, %53 : vector<1x2xf32>
    %c0_28 = arith.constant 0 : index
    %c0_29 = arith.constant 0 : index
    %55 = vector.load %arg11[%c0_28, %c0_29] : memref<2x32xf32, #tpu.memory_space<vmem>>, vector<2x32xf32>
    %cst_30 = arith.constant dense<0.000000e+00> : vector<1x32xf32>
    %56 = tpu.matmul %54, %55, %cst_30 {dimension_numbers = #tpu.dot_dimension_numbers<[1], [0], [0], [1], [0, 0, 1, 1], [], []>} : vector<1x2xf32>, vector<2x32xf32>, vector<1x32xf32> -> vector<1x32xf32>
    %c0_31 = arith.constant 0 : index
    %c0_32 = arith.constant 0 : index
    %57 = vector.load %arg12[%c0_31, %c0_32] : memref<1x32xf32, #tpu.memory_space<vmem>>, vector<1x32xf32>
    %58 = arith.addf %56, %57 : vector<1x32xf32>
    %59 = arith.negf %58 : vector<1x32xf32>
    %60 = math.exp %59 : vector<1x32xf32>
    %cst_33 = arith.constant 1.000000e+00 : f32
    %61 = vector.broadcast %cst_33 : f32 to vector<1x32xf32>
    %62 = arith.addf %61, %60 : vector<1x32xf32>
    %63 = arith.divf %61, %62 : vector<1x32xf32>
    %c0_34 = arith.constant 0 : index
    %c0_35 = arith.constant 0 : index
    %64 = vector.load %arg13[%c0_34, %c0_35] : memref<32x2xf32, #tpu.memory_space<vmem>>, vector<32x2xf32>
    %cst_36 = arith.constant dense<0.000000e+00> : vector<1x2xf32>
    %65 = tpu.matmul %48, %64, %cst_36 {dimension_numbers = #tpu.dot_dimension_numbers<[1], [0], [0], [1], [0, 0, 1, 1], [], []>} : vector<1x32xf32>, vector<32x2xf32>, vector<1x2xf32> -> vector<1x2xf32>
    %c0_37 = arith.constant 0 : index
    %c0_38 = arith.constant 0 : index
    %66 = vector.load %arg14[%c0_37, %c0_38] : memref<1x2xf32, #tpu.memory_space<vmem>>, vector<1x2xf32>
    %67 = arith.addf %65, %66 : vector<1x2xf32>
    %cst_39 = arith.constant 0.000000e+00 : f32
    %68 = vector.broadcast %cst_39 : f32 to vector<1x2xf32>
    %69 = arith.maximumf %67, %68 : vector<1x2xf32>
    %c0_40 = arith.constant 0 : index
    %c0_41 = arith.constant 0 : index
    %70 = vector.load %arg15[%c0_40, %c0_41] : memref<2x32xf32, #tpu.memory_space<vmem>>, vector<2x32xf32>
    %cst_42 = arith.constant dense<0.000000e+00> : vector<1x32xf32>
    %71 = tpu.matmul %69, %70, %cst_42 {dimension_numbers = #tpu.dot_dimension_numbers<[1], [0], [0], [1], [0, 0, 1, 1], [], []>} : vector<1x2xf32>, vector<2x32xf32>, vector<1x32xf32> -> vector<1x32xf32>
    %c0_43 = arith.constant 0 : index
    %c0_44 = arith.constant 0 : index
    %72 = vector.load %arg16[%c0_43, %c0_44] : memref<1x32xf32, #tpu.memory_space<vmem>>, vector<1x32xf32>
    %73 = arith.addf %71, %72 : vector<1x32xf32>
    %74 = arith.negf %73 : vector<1x32xf32>
    %75 = math.exp %74 : vector<1x32xf32>
    %cst_45 = arith.constant 1.000000e+00 : f32
    %76 = vector.broadcast %cst_45 : f32 to vector<1x32xf32>
    %77 = arith.addf %76, %75 : vector<1x32xf32>
    %78 = arith.divf %76, %77 : vector<1x32xf32>
    %79 = arith.addf %63, %78 : vector<1x32xf32>
    %c0_46 = arith.constant 0 : index
    %c0_47 = arith.constant 0 : index
    %80 = vector.load %arg3[%c0_46, %c0_47] : memref<324x64xf32, #tpu.memory_space<vmem>>, vector<324x64xf32>
    %cst_48 = arith.constant dense<0.000000e+00> : vector<324x32xf32>
    %81 = tpu.matmul %80, %36, %cst_48 {dimension_numbers = #tpu.dot_dimension_numbers<[1], [0], [0], [1], [0, 0, 1, 1], [], []>} : vector<324x64xf32>, vector<64x32xf32>, vector<324x32xf32> -> vector<324x32xf32>
    %82 = vector.broadcast %79 : vector<1x32xf32> to vector<324x32xf32>
    %83 = arith.mulf %81, %82 : vector<324x32xf32>
    %84 = vector.shape_cast %83 : vector<324x32xf32> to vector<18x18x32xf32>
    %c0_49 = arith.constant 0 : index
    %c0_50 = arith.constant 0 : index
    %85 = vector.load %arg17[%c0_49, %c0_50] : memref<288x16xbf16, #tpu.memory_space<vmem>>, vector<288x16xbf16>
    %86 = vector.extract_strided_slice %84 {offsets = [0, 0, 0], sizes = [16, 16, 32], strides = [1, 1, 1]} : vector<18x18x32xf32> to vector<16x16x32xf32>
    %87 = vector.extract_strided_slice %84 {offsets = [0, 1, 0], sizes = [16, 16, 32], strides = [1, 1, 1]} : vector<18x18x32xf32> to vector<16x16x32xf32>
    %88 = vector.extract_strided_slice %84 {offsets = [0, 2, 0], sizes = [16, 16, 32], strides = [1, 1, 1]} : vector<18x18x32xf32> to vector<16x16x32xf32>
    %89 = vector.extract_strided_slice %84 {offsets = [1, 0, 0], sizes = [16, 16, 32], strides = [1, 1, 1]} : vector<18x18x32xf32> to vector<16x16x32xf32>
    %90 = vector.extract_strided_slice %84 {offsets = [1, 1, 0], sizes = [16, 16, 32], strides = [1, 1, 1]} : vector<18x18x32xf32> to vector<16x16x32xf32>
    %91 = vector.extract_strided_slice %84 {offsets = [1, 2, 0], sizes = [16, 16, 32], strides = [1, 1, 1]} : vector<18x18x32xf32> to vector<16x16x32xf32>
    %92 = vector.extract_strided_slice %84 {offsets = [2, 0, 0], sizes = [16, 16, 32], strides = [1, 1, 1]} : vector<18x18x32xf32> to vector<16x16x32xf32>
    %93 = vector.extract_strided_slice %84 {offsets = [2, 1, 0], sizes = [16, 16, 32], strides = [1, 1, 1]} : vector<18x18x32xf32> to vector<16x16x32xf32>
    %94 = vector.extract_strided_slice %84 {offsets = [2, 2, 0], sizes = [16, 16, 32], strides = [1, 1, 1]} : vector<18x18x32xf32> to vector<16x16x32xf32>
    %95 = tpu.concatenate %86, %87, %88, %89, %90, %91, %92, %93, %94 in 2 : vector<16x16x32xf32>, vector<16x16x32xf32>, vector<16x16x32xf32>, vector<16x16x32xf32>, vector<16x16x32xf32>, vector<16x16x32xf32>, vector<16x16x32xf32>, vector<16x16x32xf32>, vector<16x16x32xf32> -> vector<16x16x288xf32>
    %96 = vector.shape_cast %95 : vector<16x16x288xf32> to vector<256x288xf32>
    %97 = arith.truncf %96 : vector<256x288xf32> to vector<256x288xbf16>
    %cst_51 = arith.constant dense<0.000000e+00> : vector<256x16xf32>
    %98 = tpu.matmul %97, %85, %cst_51 {dimension_numbers = #tpu.dot_dimension_numbers<[1], [0], [0], [1], [0, 0, 1, 1], [], []>} : vector<256x288xbf16>, vector<288x16xbf16>, vector<256x16xf32> -> vector<256x16xf32>
    %c0_52 = arith.constant 0 : index
    %c0_53 = arith.constant 0 : index
    %99 = vector.load %arg18[%c0_52, %c0_53] : memref<288x16xbf16, #tpu.memory_space<vmem>>, vector<288x16xbf16>
    %100 = vector.extract_strided_slice %42 {offsets = [0, 0, 0], sizes = [16, 16, 32], strides = [1, 1, 1]} : vector<18x18x32xf32> to vector<16x16x32xf32>
    %101 = vector.extract_strided_slice %42 {offsets = [0, 1, 0], sizes = [16, 16, 32], strides = [1, 1, 1]} : vector<18x18x32xf32> to vector<16x16x32xf32>
    %102 = vector.extract_strided_slice %42 {offsets = [0, 2, 0], sizes = [16, 16, 32], strides = [1, 1, 1]} : vector<18x18x32xf32> to vector<16x16x32xf32>
    %103 = vector.extract_strided_slice %42 {offsets = [1, 0, 0], sizes = [16, 16, 32], strides = [1, 1, 1]} : vector<18x18x32xf32> to vector<16x16x32xf32>
    %104 = vector.extract_strided_slice %42 {offsets = [1, 1, 0], sizes = [16, 16, 32], strides = [1, 1, 1]} : vector<18x18x32xf32> to vector<16x16x32xf32>
    %105 = vector.extract_strided_slice %42 {offsets = [1, 2, 0], sizes = [16, 16, 32], strides = [1, 1, 1]} : vector<18x18x32xf32> to vector<16x16x32xf32>
    %106 = vector.extract_strided_slice %42 {offsets = [2, 0, 0], sizes = [16, 16, 32], strides = [1, 1, 1]} : vector<18x18x32xf32> to vector<16x16x32xf32>
    %107 = vector.extract_strided_slice %42 {offsets = [2, 1, 0], sizes = [16, 16, 32], strides = [1, 1, 1]} : vector<18x18x32xf32> to vector<16x16x32xf32>
    %108 = vector.extract_strided_slice %42 {offsets = [2, 2, 0], sizes = [16, 16, 32], strides = [1, 1, 1]} : vector<18x18x32xf32> to vector<16x16x32xf32>
    %109 = tpu.concatenate %100, %101, %102, %103, %104, %105, %106, %107, %108 in 2 : vector<16x16x32xf32>, vector<16x16x32xf32>, vector<16x16x32xf32>, vector<16x16x32xf32>, vector<16x16x32xf32>, vector<16x16x32xf32>, vector<16x16x32xf32>, vector<16x16x32xf32>, vector<16x16x32xf32> -> vector<16x16x288xf32>
    %110 = vector.shape_cast %109 : vector<16x16x288xf32> to vector<256x288xf32>
    %111 = arith.truncf %110 : vector<256x288xf32> to vector<256x288xbf16>
    %cst_54 = arith.constant dense<0.000000e+00> : vector<256x16xf32>
    %112 = tpu.matmul %111, %99, %cst_54 {dimension_numbers = #tpu.dot_dimension_numbers<[1], [0], [0], [1], [0, 0, 1, 1], [], []>} : vector<256x288xbf16>, vector<288x16xbf16>, vector<256x16xf32> -> vector<256x16xf32>
    %113 = arith.addf %98, %112 : vector<256x16xf32>
    %c0_55 = arith.constant 0 : index
    %c0_56 = arith.constant 0 : index
    %114 = vector.load %arg19[%c0_55, %c0_56] : memref<2x16xf32, #tpu.memory_space<vmem>>, vector<2x16xf32>
    %115 = vector.extract_strided_slice %114 {offsets = [0, 0], sizes = [1, 16], strides = [1, 1]} : vector<2x16xf32> to vector<1x16xf32>
    %116 = vector.broadcast %115 : vector<1x16xf32> to vector<256x16xf32>
    %117 = arith.mulf %113, %116 : vector<256x16xf32>
    %118 = vector.extract_strided_slice %114 {offsets = [1, 0], sizes = [1, 16], strides = [1, 1]} : vector<2x16xf32> to vector<1x16xf32>
    %119 = vector.broadcast %118 : vector<1x16xf32> to vector<256x16xf32>
    %120 = arith.addf %117, %119 : vector<256x16xf32>
    %cst_57 = arith.constant 0.000000e+00 : f32
    %121 = vector.broadcast %cst_57 : f32 to vector<256x16xf32>
    %122 = arith.maximumf %120, %121 : vector<256x16xf32>
    %c0_58 = arith.constant 0 : index
    %c0_59 = arith.constant 0 : index
    %123 = vector.load %arg4[%c0_58, %c0_59] : memref<324x256xf32, #tpu.memory_space<vmem>>, vector<324x256xf32>
    %cst_60 = arith.constant dense<0.000000e+00> : vector<324x16xf32>
    %124 = tpu.matmul %123, %122, %cst_60 {dimension_numbers = #tpu.dot_dimension_numbers<[1], [0], [0], [1], [0, 0, 1, 1], [], []>} : vector<324x256xf32>, vector<256x16xf32>, vector<324x16xf32> -> vector<324x16xf32>
    %125 = vector.shape_cast %124 : vector<324x16xf32> to vector<18x18x16xf32>
    %c0_61 = arith.constant 0 : index
    %c0_62 = arith.constant 0 : index
    %126 = vector.load %arg20[%c0_61, %c0_62] : memref<144x16xbf16, #tpu.memory_space<vmem>>, vector<144x16xbf16>
    %127 = vector.extract_strided_slice %125 {offsets = [0, 0, 0], sizes = [16, 16, 16], strides = [1, 1, 1]} : vector<18x18x16xf32> to vector<16x16x16xf32>
    %128 = vector.extract_strided_slice %125 {offsets = [0, 1, 0], sizes = [16, 16, 16], strides = [1, 1, 1]} : vector<18x18x16xf32> to vector<16x16x16xf32>
    %129 = vector.extract_strided_slice %125 {offsets = [0, 2, 0], sizes = [16, 16, 16], strides = [1, 1, 1]} : vector<18x18x16xf32> to vector<16x16x16xf32>
    %130 = vector.extract_strided_slice %125 {offsets = [1, 0, 0], sizes = [16, 16, 16], strides = [1, 1, 1]} : vector<18x18x16xf32> to vector<16x16x16xf32>
    %131 = vector.extract_strided_slice %125 {offsets = [1, 1, 0], sizes = [16, 16, 16], strides = [1, 1, 1]} : vector<18x18x16xf32> to vector<16x16x16xf32>
    %132 = vector.extract_strided_slice %125 {offsets = [1, 2, 0], sizes = [16, 16, 16], strides = [1, 1, 1]} : vector<18x18x16xf32> to vector<16x16x16xf32>
    %133 = vector.extract_strided_slice %125 {offsets = [2, 0, 0], sizes = [16, 16, 16], strides = [1, 1, 1]} : vector<18x18x16xf32> to vector<16x16x16xf32>
    %134 = vector.extract_strided_slice %125 {offsets = [2, 1, 0], sizes = [16, 16, 16], strides = [1, 1, 1]} : vector<18x18x16xf32> to vector<16x16x16xf32>
    %135 = vector.extract_strided_slice %125 {offsets = [2, 2, 0], sizes = [16, 16, 16], strides = [1, 1, 1]} : vector<18x18x16xf32> to vector<16x16x16xf32>
    %136 = tpu.concatenate %127, %128, %129, %130, %131, %132, %133, %134, %135 in 2 : vector<16x16x16xf32>, vector<16x16x16xf32>, vector<16x16x16xf32>, vector<16x16x16xf32>, vector<16x16x16xf32>, vector<16x16x16xf32>, vector<16x16x16xf32>, vector<16x16x16xf32>, vector<16x16x16xf32> -> vector<16x16x144xf32>
    %137 = vector.shape_cast %136 : vector<16x16x144xf32> to vector<256x144xf32>
    %138 = arith.truncf %137 : vector<256x144xf32> to vector<256x144xbf16>
    %cst_63 = arith.constant dense<0.000000e+00> : vector<256x16xf32>
    %139 = tpu.matmul %138, %126, %cst_63 {dimension_numbers = #tpu.dot_dimension_numbers<[1], [0], [0], [1], [0, 0, 1, 1], [], []>} : vector<256x144xbf16>, vector<144x16xbf16>, vector<256x16xf32> -> vector<256x16xf32>
    %c0_64 = arith.constant 0 : index
    %c0_65 = arith.constant 0 : index
    %140 = vector.load %arg21[%c0_64, %c0_65] : memref<2x16xf32, #tpu.memory_space<vmem>>, vector<2x16xf32>
    %141 = vector.extract_strided_slice %140 {offsets = [0, 0], sizes = [1, 16], strides = [1, 1]} : vector<2x16xf32> to vector<1x16xf32>
    %142 = vector.broadcast %141 : vector<1x16xf32> to vector<256x16xf32>
    %143 = arith.mulf %139, %142 : vector<256x16xf32>
    %144 = vector.extract_strided_slice %140 {offsets = [1, 0], sizes = [1, 16], strides = [1, 1]} : vector<2x16xf32> to vector<1x16xf32>
    %145 = vector.broadcast %144 : vector<1x16xf32> to vector<256x16xf32>
    %146 = arith.addf %143, %145 : vector<256x16xf32>
    %cst_66 = arith.constant 0.000000e+00 : f32
    %147 = vector.broadcast %cst_66 : f32 to vector<256x16xf32>
    %148 = arith.maximumf %146, %147 : vector<256x16xf32>
    %c0_67 = arith.constant 0 : index
    %c0_68 = arith.constant 0 : index
    %c0_69 = arith.constant 0 : index
    %149 = vector.load %arg22[%c0_67, %c0_68, %c0_69] : memref<1x256x16xf32, #tpu.memory_space<vmem>>, vector<1x256x16xf32>
    %150 = vector.shape_cast %149 : vector<1x256x16xf32> to vector<256x16xf32>
    %151 = vector.shape_cast %148 : vector<256x16xf32> to vector<1x256x16xf32>
    tpu.vector_store %arg22[%c0_67, %c0_68, %c0_69], %151 {strides = array<i32>} : memref<1x256x16xf32, #tpu.memory_space<vmem>>, vector<1x256x16xf32>,
    return
  }
  func.func @transform_0(%arg0: i32) -> (i32, i32, i32, i32) {
    %c0_i32 = arith.constant 0 : i32
    %c0_i32_0 = arith.constant 0 : i32
    %c0_i32_1 = arith.constant 0 : i32
    %c0_i32_2 = arith.constant 0 : i32
    return %arg0, %c0_i32, %c0_i32_0, %c0_i32_1 : i32, i32, i32, i32
  }
  func.func @transform_1(%arg0: i32) -> (i32, i32, i32, i32) {
    %c0_i32 = arith.constant 0 : i32
    %c0_i32_0 = arith.constant 0 : i32
    %c0_i32_1 = arith.constant 0 : i32
    %c0_i32_2 = arith.constant 0 : i32
    return %arg0, %c0_i32, %c0_i32_0, %c0_i32_1 : i32, i32, i32, i32
  }
  func.func @transform_2(%arg0: i32) -> (i32, i32) {
    %c0_i32 = arith.constant 0 : i32
    %c0_i32_0 = arith.constant 0 : i32
    %c0_i32_1 = arith.constant 0 : i32
    return %c0_i32, %c0_i32_0 : i32, i32
  }
  func.func @transform_3(%arg0: i32) -> (i32, i32) {
    %c0_i32 = arith.constant 0 : i32
    %c0_i32_0 = arith.constant 0 : i32
    %c0_i32_1 = arith.constant 0 : i32
    return %c0_i32, %c0_i32_0 : i32, i32
  }
  func.func @transform_4(%arg0: i32) -> (i32, i32) {
    %c0_i32 = arith.constant 0 : i32
    %c0_i32_0 = arith.constant 0 : i32
    %c0_i32_1 = arith.constant 0 : i32
    return %c0_i32, %c0_i32_0 : i32, i32
  }
  func.func @transform_5(%arg0: i32) -> (i32, i32) {
    %c0_i32 = arith.constant 0 : i32
    %c0_i32_0 = arith.constant 0 : i32
    %c0_i32_1 = arith.constant 0 : i32
    return %c0_i32, %c0_i32_0 : i32, i32
  }
  func.func @transform_6(%arg0: i32) -> (i32, i32) {
    %c0_i32 = arith.constant 0 : i32
    %c0_i32_0 = arith.constant 0 : i32
    %c0_i32_1 = arith.constant 0 : i32
    return %c0_i32, %c0_i32_0 : i32, i32
  }
  func.func @transform_7(%arg0: i32) -> (i32, i32) {
    %c0_i32 = arith.constant 0 : i32
    %c0_i32_0 = arith.constant 0 : i32
    %c0_i32_1 = arith.constant 0 : i32
    return %c0_i32, %c0_i32_0 : i32, i32
  }
  func.func @transform_8(%arg0: i32) -> (i32, i32) {
    %c0_i32 = arith.constant 0 : i32
    %c0_i32_0 = arith.constant 0 : i32
    %c0_i32_1 = arith.constant 0 : i32
    return %c0_i32, %c0_i32_0 : i32, i32
  }
  func.func @transform_9(%arg0: i32) -> (i32, i32) {
    %c0_i32 = arith.constant 0 : i32
    %c0_i32_0 = arith.constant 0 : i32
    %c0_i32_1 = arith.constant 0 : i32
    return %c0_i32, %c0_i32_0 : i32, i32
  }
  func.func @transform_10(%arg0: i32) -> (i32, i32) {
    %c0_i32 = arith.constant 0 : i32
    %c0_i32_0 = arith.constant 0 : i32
    %c0_i32_1 = arith.constant 0 : i32
    return %c0_i32, %c0_i32_0 : i32, i32
  }
  func.func @transform_11(%arg0: i32) -> (i32, i32) {
    %c0_i32 = arith.constant 0 : i32
    %c0_i32_0 = arith.constant 0 : i32
    %c0_i32_1 = arith.constant 0 : i32
    return %c0_i32, %c0_i32_0 : i32, i32
  }
  func.func @transform_12(%arg0: i32) -> (i32, i32) {
    %c0_i32 = arith.constant 0 : i32
    %c0_i32_0 = arith.constant 0 : i32
    %c0_i32_1 = arith.constant 0 : i32
    return %c0_i32, %c0_i32_0 : i32, i32
  }
  func.func @transform_13(%arg0: i32) -> (i32, i32) {
    %c0_i32 = arith.constant 0 : i32
    %c0_i32_0 = arith.constant 0 : i32
    %c0_i32_1 = arith.constant 0 : i32
    return %c0_i32, %c0_i32_0 : i32, i32
  }
  func.func @transform_14(%arg0: i32) -> (i32, i32) {
    %c0_i32 = arith.constant 0 : i32
    %c0_i32_0 = arith.constant 0 : i32
    %c0_i32_1 = arith.constant 0 : i32
    return %c0_i32, %c0_i32_0 : i32, i32
  }
  func.func @transform_15(%arg0: i32) -> (i32, i32) {
    %c0_i32 = arith.constant 0 : i32
    %c0_i32_0 = arith.constant 0 : i32
    %c0_i32_1 = arith.constant 0 : i32
    return %c0_i32, %c0_i32_0 : i32, i32
  }
  func.func @transform_16(%arg0: i32) -> (i32, i32) {
    %c0_i32 = arith.constant 0 : i32
    %c0_i32_0 = arith.constant 0 : i32
    %c0_i32_1 = arith.constant 0 : i32
    return %c0_i32, %c0_i32_0 : i32, i32
  }
  func.func @transform_17(%arg0: i32) -> (i32, i32) {
    %c0_i32 = arith.constant 0 : i32
    %c0_i32_0 = arith.constant 0 : i32
    %c0_i32_1 = arith.constant 0 : i32
    return %c0_i32, %c0_i32_0 : i32, i32
  }
  func.func @transform_18(%arg0: i32) -> (i32, i32) {
    %c0_i32 = arith.constant 0 : i32
    %c0_i32_0 = arith.constant 0 : i32
    %c0_i32_1 = arith.constant 0 : i32
    return %c0_i32, %c0_i32_0 : i32, i32
  }
  func.func @transform_19(%arg0: i32) -> (i32, i32) {
    %c0_i32 = arith.constant 0 : i32
    %c0_i32_0 = arith.constant 0 : i32
    %c0_i32_1 = arith.constant 0 : i32
    return %c0_i32, %c0_i32_0 : i32, i32
  }
  func.func @transform_20(%arg0: i32) -> (i32, i32) {
    %c0_i32 = arith.constant 0 : i32
    %c0_i32_0 = arith.constant 0 : i32
    %c0_i32_1 = arith.constant 0 : i32
    return %c0_i32, %c0_i32_0 : i32, i32
  }
  func.func @transform_21(%arg0: i32) -> (i32, i32, i32) {
    %c0_i32 = arith.constant 0 : i32
    %c0_i32_0 = arith.constant 0 : i32
    %c0_i32_1 = arith.constant 0 : i32
    return %arg0, %c0_i32, %c0_i32_0 : i32, i32, i32
  }
}

</mosaic_0001>

<llo_original>
// kernel: mfab2d_forward.1
$region0: #{mfab2d_forward.1}
  #allocation0 [shape = 'u32[]', space=smem, size = 0x4, offset = 0x4, fixed_abs, tag = 'smem constant byte address 0x4 - core index']
  #allocation1 [shape = 'u32[144,128]{1,0:T(1,128)}', space=vmem, size = 0x12000, scoped, tag = 'internal scratch']
  %s0 = inlined_call_operand.vmem [shape: f32[2,10,10,16], index: 0, kind: input, shape index: {}]
  %s1 = inlined_call_operand.vmem [shape: f32[2,18,18,32], index: 1, kind: input, shape index: {}]
  %s2 = inlined_call_operand.vmem [shape: f32[324,64], index: 2, kind: input, shape index: {}]
  %s3 = inlined_call_operand.vmem [shape: f32[324,256], index: 3, kind: input, shape index: {}]
  %s4 = inlined_call_operand.vmem [shape: bf16[144,16], index: 4, kind: input, shape index: {}]
  %s5 = inlined_call_operand.vmem [shape: f32[2,16], index: 5, kind: input, shape index: {}]
  %s6 = inlined_call_operand.vmem [shape: bf16[16,32], index: 6, kind: input, shape index: {}]
  %s7 = inlined_call_operand.vmem [shape: f32[2,32], index: 7, kind: input, shape index: {}]
  %s8 = inlined_call_operand.vmem [shape: f32[32,2], index: 8, kind: input, shape index: {}]
  %s9 = inlined_call_operand.vmem [shape: f32[1,2], index: 9, kind: input, shape index: {}]
  %s10 = inlined_call_operand.vmem [shape: f32[2,32], index: 10, kind: input, shape index: {}]
  %s11 = inlined_call_operand.vmem [shape: f32[1,32], index: 11, kind: input, shape index: {}]
  %s12 = inlined_call_operand.vmem [shape: f32[32,2], index: 12, kind: input, shape index: {}]
  %s13 = inlined_call_operand.vmem [shape: f32[1,2], index: 13, kind: input, shape index: {}]
  %s14 = inlined_call_operand.vmem [shape: f32[2,32], index: 14, kind: input, shape index: {}]
  %s15 = inlined_call_operand.vmem [shape: f32[1,32], index: 15, kind: input, shape index: {}]
  %s16 = inlined_call_operand.vmem [shape: bf16[288,16], index: 16, kind: input, shape index: {}]
  %s17 = inlined_call_operand.vmem [shape: bf16[288,16], index: 17, kind: input, shape index: {}]
  %s18 = inlined_call_operand.vmem [shape: f32[2,16], index: 18, kind: input, shape index: {}]
  %s19 = inlined_call_operand.vmem [shape: bf16[144,16], index: 19, kind: input, shape index: {}]
  %s20 = inlined_call_operand.vmem [shape: f32[2,16], index: 20, kind: input, shape index: {}]
  %s21 = inlined_call_operand.vmem [shape: f32[2,256,16], index: 21, kind: output, shape index: {}]
  %s22 = sld [smem:[#allocation0]]
  $region117: #{mfab2d_forward.1} parent=0
    _
  %s24 = ssub.s32 1, %s22
  %s25 = scalar_select 0, %s24, %s22
  loop: start=0, step=1, limit=4
  $region2: #{mfab2d_forward.1} parent=0 // loop_pre_header
    _
  $region3: #{mfab2d_forward.1} parent=0 // loop_header
    %s27 = sphi 0, %s31
    %p28 = scmp.ge.s32.totalorder %s27, 4
    %s37 = sphi 0, %s39
    %s40 = sphi 0, %s37
    %s41 = sphi 0, %s40
    %s57 = sphi 0, %s41
    %s63 = sphi 0, %s65
    %s66 = sphi 0, %s63
    %s67 = sphi 0, %s66
    %s83 = sphi 0, %s67
    %s87 = sphi 0, %s87
    %s89 = sphi 0, %s87
    %s90 = sphi 0, %s89
    %s104 = sphi 0, %s90
    %s108 = sphi 0, %s108
    %s110 = sphi 0, %s108
    %s111 = sphi 0, %s110
    %s125 = sphi 0, %s111
    %s129 = sphi 0, %s129
    %s131 = sphi 0, %s129
    %s132 = sphi 0, %s131
    %s146 = sphi 0, %s132
    %s150 = sphi 0, %s150
    %s152 = sphi 0, %s150
    %s153 = sphi 0, %s152
    %s167 = sphi 0, %s153
    %s171 = sphi 0, %s171
    %s173 = sphi 0, %s171
    %s174 = sphi 0, %s173
    %s188 = sphi 0, %s174
    %s192 = sphi 0, %s192
    %s194 = sphi 0, %s192
    %s195 = sphi 0, %s194
    %s209 = sphi 0, %s195
    %s213 = sphi 0, %s213
    %s215 = sphi 0, %s213
    %s216 = sphi 0, %s215
    %s230 = sphi 0, %s216
    %s234 = sphi 0, %s234
    %s236 = sphi 0, %s234
    %s237 = sphi 0, %s236
    %s251 = sphi 0, %s237
    %s255 = sphi 0, %s255
    %s257 = sphi 0, %s255
    %s258 = sphi 0, %s257
    %s272 = sphi 0, %s258
    %s276 = sphi 0, %s276
    %s278 = sphi 0, %s276
    %s279 = sphi 0, %s278
    %s293 = sphi 0, %s279
    %s297 = sphi 0, %s297
    %s299 = sphi 0, %s297
    %s300 = sphi 0, %s299
    %s314 = sphi 0, %s300
    %s318 = sphi 0, %s318
    %s320 = sphi 0, %s318
    %s321 = sphi 0, %s320
    %s335 = sphi 0, %s321
    %s339 = sphi 0, %s339
    %s341 = sphi 0, %s339
    %s342 = sphi 0, %s341
    %s356 = sphi 0, %s342
    %s360 = sphi 0, %s360
    %s362 = sphi 0, %s360
    %s363 = sphi 0, %s362
    %s377 = sphi 0, %s363
    %s381 = sphi 0, %s381
    %s383 = sphi 0, %s381
    %s384 = sphi 0, %s383
    %s398 = sphi 0, %s384
    %s402 = sphi 0, %s402
    %s404 = sphi 0, %s402
    %s405 = sphi 0, %s404
    %s419 = sphi 0, %s405
    %s423 = sphi 0, %s423
    %s425 = sphi 0, %s423
    %s426 = sphi 0, %s425
    %s440 = sphi 0, %s426
    %s444 = sphi 0, %s444
    %s446 = sphi 0, %s444
    %s447 = sphi 0, %s446
    %s461 = sphi 0, %s447
    %s465 = sphi 0, %s465
    %s467 = sphi 0, %s465
    %s468 = sphi 0, %s467
    %s482 = sphi 0, %s468
    %s488 = sphi 0, %s490
    %s491 = sphi 0, %s488
    %s492 = sphi 0, %s491
    %s508 = sphi 0, %s492
  $region4: #{mfab2d_forward.1} parent=0 // loop_header_branch
    %30 = sbr.rel (%p28) target = $region8
  $region5: #{mfab2d_forward.1} parent=0 // loop_body
    %s32 = ssub.s32 %s27, 1
    %s33 = ssub.s32 %s27, 2
    %s34 = sadd.s32 %s27, 1
    %s35 = ssub.s32 %s27, %s34
    %p36 = scmp.eq.s32.totalorder %s35, 0
    %s38 = sadd.s32 %s37, 1
    %s39 = scalar_select %p36, %s37, %s38
    %p42 = pneg %p36
    %p43 = scmp.eq.s32.totalorder %s27, 1
    %p44 = por %p42, %p43
    %p45 = scmp.ne.s32.totalorder %s37, %s40
    %p46 = scmp.eq.s32.totalorder %s27, 0
    %p47 = por %p45, %p46
    %p48 = scmp.ne.s32.totalorder %s37, %s40
    %p49 = scmp.eq.s32.totalorder %s32, 1
    %p50 = por %p48, %p49
    %p51 = scmp.ne.s32.totalorder %s40, %s41
    %p52 = scmp.eq.s32.totalorder %s32, 0
    %p53 = por %p51, %p52
    %p54 = scmp.ne.s32.totalorder %s40, %s41
    %p55 = scmp.eq.s32.totalorder %s33, 1
    %p56 = por %p54, %p55
    %p58 = scmp.ne.s32.totalorder %s41, %s57
    %p59 = scmp.eq.s32.totalorder %s33, 0
    %p60 = por %p58, %p59
    %s61 = ssub.s32 %s27, %s34
    %p62 = scmp.eq.s32.totalorder %s61, 0
    %s64 = sadd.s32 %s63, 1
    %s65 = scalar_select %p62, %s63, %s64
    %p68 = pneg %p62
    %p69 = scmp.eq.s32.totalorder %s27, 1
    %p70 = por %p68, %p69
    %p71 = scmp.ne.s32.totalorder %s63, %s66
    %p72 = scmp.eq.s32.totalorder %s27, 0
    %p73 = por %p71, %p72
    %p74 = scmp.ne.s32.totalorder %s63, %s66
    %p75 = scmp.eq.s32.totalorder %s32, 1
    %p76 = por %p74, %p75
    %p77 = scmp.ne.s32.totalorder %s66, %s67
    %p78 = scmp.eq.s32.totalorder %s32, 0
    %p79 = por %p77, %p78
    %p80 = scmp.ne.s32.totalorder %s66, %s67
    %p81 = scmp.eq.s32.totalorder %s33, 1
    %p82 = por %p80, %p81
    %p84 = scmp.ne.s32.totalorder %s67, %s83
    %p85 = scmp.eq.s32.totalorder %s33, 0
    %p86 = por %p84, %p85
    %s88 = sadd.s32 %s87, 1
    %p91 = scmp.eq.s32.totalorder %s27, 1
    %p92 = scmp.ne.s32.totalorder %s87, %s89
    %p93 = scmp.eq.s32.totalorder %s27, 0
    %p94 = por %p92, %p93
    %p95 = scmp.ne.s32.totalorder %s87, %s89
    %p96 = scmp.eq.s32.totalorder %s32, 1
    %p97 = por %p95, %p96
    %p98 = scmp.ne.s32.totalorder %s89, %s90
    %p99 = scmp.eq.s32.totalorder %s32, 0
    %p100 = por %p98, %p99
    %p101 = scmp.ne.s32.totalorder %s89, %s90
    %p102 = scmp.eq.s32.totalorder %s33, 1
    %p103 = por %p101, %p102
    %p105 = scmp.ne.s32.totalorder %s90, %s104
    %p106 = scmp.eq.s32.totalorder %s33, 0
    %p107 = por %p105, %p106
    %s109 = sadd.s32 %s108, 1
    %p112 = scmp.eq.s32.totalorder %s27, 1
    %p113 = scmp.ne.s32.totalorder %s108, %s110
    %p114 = scmp.eq.s32.totalorder %s27, 0
    %p115 = por %p113, %p114
    %p116 = scmp.ne.s32.totalorder %s108, %s110
    %p117 = scmp.eq.s32.totalorder %s32, 1
    %p118 = por %p116, %p117
    %p119 = scmp.ne.s32.totalorder %s110, %s111
    %p120 = scmp.eq.s32.totalorder %s32, 0
    %p121 = por %p119, %p120
    %p122 = scmp.ne.s32.totalorder %s110, %s111
    %p123 = scmp.eq.s32.totalorder %s33, 1
    %p124 = por %p122, %p123
    %p126 = scmp.ne.s32.totalorder %s111, %s125
    %p127 = scmp.eq.s32.totalorder %s33, 0
    %p128 = por %p126, %p127
    %s130 = sadd.s32 %s129, 1
    %p133 = scmp.eq.s32.totalorder %s27, 1
    %p134 = scmp.ne.s32.totalorder %s129, %s131
    %p135 = scmp.eq.s32.totalorder %s27, 0
    %p136 = por %p134, %p135
    %p137 = scmp.ne.s32.totalorder %s129, %s131
    %p138 = scmp.eq.s32.totalorder %s32, 1
    %p139 = por %p137, %p138
    %p140 = scmp.ne.s32.totalorder %s131, %s132
    %p141 = scmp.eq.s32.totalorder %s32, 0
    %p142 = por %p140, %p141
    %p143 = scmp.ne.s32.totalorder %s131, %s132
    %p144 = scmp.eq.s32.totalorder %s33, 1
    %p145 = por %p143, %p144
    %p147 = scmp.ne.s32.totalorder %s132, %s146
    %p148 = scmp.eq.s32.totalorder %s33, 0
    %p149 = por %p147, %p148
    %s151 = sadd.s32 %s150, 1
    %p154 = scmp.eq.s32.totalorder %s27, 1
    %p155 = scmp.ne.s32.totalorder %s150, %s152
    %p156 = scmp.eq.s32.totalorder %s27, 0
    %p157 = por %p155, %p156
    %p158 = scmp.ne.s32.totalorder %s150, %s152
    %p159 = scmp.eq.s32.totalorder %s32, 1
    %p160 = por %p158, %p159
    %p161 = scmp.ne.s32.totalorder %s152, %s153
    %p162 = scmp.eq.s32.totalorder %s32, 0
    %p163 = por %p161, %p162
    %p164 = scmp.ne.s32.totalorder %s152, %s153
    %p165 = scmp.eq.s32.totalorder %s33, 1
    %p166 = por %p164, %p165
    %p168 = scmp.ne.s32.totalorder %s153, %s167
    %p169 = scmp.eq.s32.totalorder %s33, 0
    %p170 = por %p168, %p169
    %s172 = sadd.s32 %s171, 1
    %p175 = scmp.eq.s32.totalorder %s27, 1
    %p176 = scmp.ne.s32.totalorder %s171, %s173
    %p177 = scmp.eq.s32.totalorder %s27, 0
    %p178 = por %p176, %p177
    %p179 = scmp.ne.s32.totalorder %s171, %s173
    %p180 = scmp.eq.s32.totalorder %s32, 1
    %p181 = por %p179, %p180
    %p182 = scmp.ne.s32.totalorder %s173, %s174
    %p183 = scmp.eq.s32.totalorder %s32, 0
    %p184 = por %p182, %p183
    %p185 = scmp.ne.s32.totalorder %s173, %s174
    %p186 = scmp.eq.s32.totalorder %s33, 1
    %p187 = por %p185, %p186
    %p189 = scmp.ne.s32.totalorder %s174, %s188
    %p190 = scmp.eq.s32.totalorder %s33, 0
    %p191 = por %p189, %p190
    %s193 = sadd.s32 %s192, 1
    %p196 = scmp.eq.s32.totalorder %s27, 1
    %p197 = scmp.ne.s32.totalorder %s192, %s194
    %p198 = scmp.eq.s32.totalorder %s27, 0
    %p199 = por %p197, %p198
    %p200 = scmp.ne.s32.totalorder %s192, %s194
    %p201 = scmp.eq.s32.totalorder %s32, 1
    %p202 = por %p200, %p201
    %p203 = scmp.ne.s32.totalorder %s194, %s195
    %p204 = scmp.eq.s32.totalorder %s32, 0
    %p205 = por %p203, %p204
    %p206 = scmp.ne.s32.totalorder %s194, %s195
    %p207 = scmp.eq.s32.totalorder %s33, 1
    %p208 = por %p206, %p207
    %p210 = scmp.ne.s32.totalorder %s195, %s209
    %p211 = scmp.eq.s32.totalorder %s33, 0
    %p212 = por %p210, %p211
    %s214 = sadd.s32 %s213, 1
    %p217 = scmp.eq.s32.totalorder %s27, 1
    %p218 = scmp.ne.s32.totalorder %s213, %s215
    %p219 = scmp.eq.s32.totalorder %s27, 0
    %p220 = por %p218, %p219
    %p221 = scmp.ne.s32.totalorder %s213, %s215
    %p222 = scmp.eq.s32.totalorder %s32, 1
    %p223 = por %p221, %p222
    %p224 = scmp.ne.s32.totalorder %s215, %s216
    %p225 = scmp.eq.s32.totalorder %s32, 0
    %p226 = por %p224, %p225
    %p227 = scmp.ne.s32.totalorder %s215, %s216
    %p228 = scmp.eq.s32.totalorder %s33, 1
    %p229 = por %p227, %p228
    %p231 = scmp.ne.s32.totalorder %s216, %s230
    %p232 = scmp.eq.s32.totalorder %s33, 0
    %p233 = por %p231, %p232
    %s235 = sadd.s32 %s234, 1
    %p238 = scmp.eq.s32.totalorder %s27, 1
    %p239 = scmp.ne.s32.totalorder %s234, %s236
    %p240 = scmp.eq.s32.totalorder %s27, 0
    %p241 = por %p239, %p240
    %p242 = scmp.ne.s32.totalorder %s234, %s236
    %p243 = scmp.eq.s32.totalorder %s32, 1
    %p244 = por %p242, %p243
    %p245 = scmp.ne.s32.totalorder %s236, %s237
    %p246 = scmp.eq.s32.totalorder %s32, 0
    %p247 = por %p245, %p246
    %p248 = scmp.ne.s32.totalorder %s236, %s237
    %p249 = scmp.eq.s32.totalorder %s33, 1
    %p250 = por %p248, %p249
    %p252 = scmp.ne.s32.totalorder %s237, %s251
    %p253 = scmp.eq.s32.totalorder %s33, 0
    %p254 = por %p252, %p253
    %s256 = sadd.s32 %s255, 1
    %p259 = scmp.eq.s32.totalorder %s27, 1
    %p260 = scmp.ne.s32.totalorder %s255, %s257
    %p261 = scmp.eq.s32.totalorder %s27, 0
    %p262 = por %p260, %p261
    %p263 = scmp.ne.s32.totalorder %s255, %s257
    %p264 = scmp.eq.s32.totalorder %s32, 1
    %p265 = por %p263, %p264
    %p266 = scmp.ne.s32.totalorder %s257, %s258
    %p267 = scmp.eq.s32.totalorder %s32, 0
    %p268 = por %p266, %p267
    %p269 = scmp.ne.s32.totalorder %s257, %s258
    %p270 = scmp.eq.s32.totalorder %s33, 1
    %p271 = por %p269, %p270
    %p273 = scmp.ne.s32.totalorder %s258, %s272
    %p274 = scmp.eq.s32.totalorder %s33, 0
    %p275 = por %p273, %p274
    %s277 = sadd.s32 %s276, 1
    %p280 = scmp.eq.s32.totalorder %s27, 1
    %p281 = scmp.ne.s32.totalorder %s276, %s278
    %p282 = scmp.eq.s32.totalorder %s27, 0
    %p283 = por %p281, %p282
    %p284 = scmp.ne.s32.totalorder %s276, %s278
    %p285 = scmp.eq.s32.totalorder %s32, 1
    %p286 = por %p284, %p285
    %p287 = scmp.ne.s32.totalorder %s278, %s279
    %p288 = scmp.eq.s32.totalorder %s32, 0
    %p289 = por %p287, %p288
    %p290 = scmp.ne.s32.totalorder %s278, %s279
    %p291 = scmp.eq.s32.totalorder %s33, 1
    %p292 = por %p290, %p291
    %p294 = scmp.ne.s32.totalorder %s279, %s293
    %p295 = scmp.eq.s32.totalorder %s33, 0
    %p296 = por %p294, %p295
    %s298 = sadd.s32 %s297, 1
    %p301 = scmp.eq.s32.totalorder %s27, 1
    %p302 = scmp.ne.s32.totalorder %s297, %s299
    %p303 = scmp.eq.s32.totalorder %s27, 0
    %p304 = por %p302, %p303
    %p305 = scmp.ne.s32.totalorder %s297, %s299
    %p306 = scmp.eq.s32.totalorder %s32, 1
    %p307 = por %p305, %p306
    %p308 = scmp.ne.s32.totalorder %s299, %s300
    %p309 = scmp.eq.s32.totalorder %s32, 0
    %p310 = por %p308, %p309
    %p311 = scmp.ne.s32.totalorder %s299, %s300
    %p312 = scmp.eq.s32.totalorder %s33, 1
    %p313 = por %p311, %p312
    %p315 = scmp.ne.s32.totalorder %s300, %s314
    %p316 = scmp.eq.s32.totalorder %s33, 0
    %p317 = por %p315, %p316
    %s319 = sadd.s32 %s318, 1
    %p322 = scmp.eq.s32.totalorder %s27, 1
    %p323 = scmp.ne.s32.totalorder %s318, %s320
    %p324 = scmp.eq.s32.totalorder %s27, 0
    %p325 = por %p323, %p324
    %p326 = scmp.ne.s32.totalorder %s318, %s320
    %p327 = scmp.eq.s32.totalorder %s32, 1
    %p328 = por %p326, %p327
    %p329 = scmp.ne.s32.totalorder %s320, %s321
    %p330 = scmp.eq.s32.totalorder %s32, 0
    %p331 = por %p329, %p330
    %p332 = scmp.ne.s32.totalorder %s320, %s321
    %p333 = scmp.eq.s32.totalorder %s33, 1
    %p334 = por %p332, %p333
    %p336 = scmp.ne.s32.totalorder %s321, %s335
    %p337 = scmp.eq.s32.totalorder %s33, 0
    %p338 = por %p336, %p337
    %s340 = sadd.s32 %s339, 1
    %p343 = scmp.eq.s32.totalorder %s27, 1
    %p344 = scmp.ne.s32.totalorder %s339, %s341
    %p345 = scmp.eq.s32.totalorder %s27, 0
    %p346 = por %p344, %p345
    %p347 = scmp.ne.s32.totalorder %s339, %s341
    %p348 = scmp.eq.s32.totalorder %s32, 1
    %p349 = por %p347, %p348
    %p350 = scmp.ne.s32.totalorder %s341, %s342
    %p351 = scmp.eq.s32.totalorder %s32, 0
    %p352 = por %p350, %p351
    %p353 = scmp.ne.s32.totalorder %s341, %s342
    %p354 = scmp.eq.s32.totalorder %s33, 1
    %p355 = por %p353, %p354
    %p357 = scmp.ne.s32.totalorder %s342, %s356
    %p358 = scmp.eq.s32.totalorder %s33, 0
    %p359 = por %p357, %p358
    %s361 = sadd.s32 %s360, 1
    %p364 = scmp.eq.s32.totalorder %s27, 1
    %p365 = scmp.ne.s32.totalorder %s360, %s362
    %p366 = scmp.eq.s32.totalorder %s27, 0
    %p367 = por %p365, %p366
    %p368 = scmp.ne.s32.totalorder %s360, %s362
    %p369 = scmp.eq.s32.totalorder %s32, 1
    %p370 = por %p368, %p369
    %p371 = scmp.ne.s32.totalorder %s362, %s363
    %p372 = scmp.eq.s32.totalorder %s32, 0
    %p373 = por %p371, %p372
    %p374 = scmp.ne.s32.totalorder %s362, %s363
    %p375 = scmp.eq.s32.totalorder %s33, 1
    %p376 = por %p374, %p375
    %p378 = scmp.ne.s32.totalorder %s363, %s377
    %p379 = scmp.eq.s32.totalorder %s33, 0
    %p380 = por %p378, %p379
    %s382 = sadd.s32 %s381, 1
    %p385 = scmp.eq.s32.totalorder %s27, 1
    %p386 = scmp.ne.s32.totalorder %s381, %s383
    %p387 = scmp.eq.s32.totalorder %s27, 0
    %p388 = por %p386, %p387
    %p389 = scmp.ne.s32.totalorder %s381, %s383
    %p390 = scmp.eq.s32.totalorder %s32, 1
    %p391 = por %p389, %p390
    %p392 = scmp.ne.s32.totalorder %s383, %s384
    %p393 = scmp.eq.s32.totalorder %s32, 0
    %p394 = por %p392, %p393
    %p395 = scmp.ne.s32.totalorder %s383, %s384
    %p396 = scmp.eq.s32.totalorder %s33, 1
    %p397 = por %p395, %p396
    %p399 = scmp.ne.s32.totalorder %s384, %s398
    %p400 = scmp.eq.s32.totalorder %s33, 0
    %p401 = por %p399, %p400
    %s403 = sadd.s32 %s402, 1
    %p406 = scmp.eq.s32.totalorder %s27, 1
    %p407 = scmp.ne.s32.totalorder %s402, %s404
    %p408 = scmp.eq.s32.totalorder %s27, 0
    %p409 = por %p407, %p408
    %p410 = scmp.ne.s32.totalorder %s402, %s404
    %p411 = scmp.eq.s32.totalorder %s32, 1
    %p412 = por %p410, %p411
    %p413 = scmp.ne.s32.totalorder %s404, %s405
    %p414 = scmp.eq.s32.totalorder %s32, 0
    %p415 = por %p413, %p414
    %p416 = scmp.ne.s32.totalorder %s404, %s405
    %p417 = scmp.eq.s32.totalorder %s33, 1
    %p418 = por %p416, %p417
    %p420 = scmp.ne.s32.totalorder %s405, %s419
    %p421 = scmp.eq.s32.totalorder %s33, 0
    %p422 = por %p420, %p421
    %s424 = sadd.s32 %s423, 1
    %p427 = scmp.eq.s32.totalorder %s27, 1
    %p428 = scmp.ne.s32.totalorder %s423, %s425
    %p429 = scmp.eq.s32.totalorder %s27, 0
    %p430 = por %p428, %p429
    %p431 = scmp.ne.s32.totalorder %s423, %s425
    %p432 = scmp.eq.s32.totalorder %s32, 1
    %p433 = por %p431, %p432
    %p434 = scmp.ne.s32.totalorder %s425, %s426
    %p435 = scmp.eq.s32.totalorder %s32, 0
    %p436 = por %p434, %p435
    %p437 = scmp.ne.s32.totalorder %s425, %s426
    %p438 = scmp.eq.s32.totalorder %s33, 1
    %p439 = por %p437, %p438
    %p441 = scmp.ne.s32.totalorder %s426, %s440
    %p442 = scmp.eq.s32.totalorder %s33, 0
    %p443 = por %p441, %p442
    %s445 = sadd.s32 %s444, 1
    %p448 = scmp.eq.s32.totalorder %s27, 1
    %p449 = scmp.ne.s32.totalorder %s444, %s446
    %p450 = scmp.eq.s32.totalorder %s27, 0
    %p451 = por %p449, %p450
    %p452 = scmp.ne.s32.totalorder %s444, %s446
    %p453 = scmp.eq.s32.totalorder %s32, 1
    %p454 = por %p452, %p453
    %p455 = scmp.ne.s32.totalorder %s446, %s447
    %p456 = scmp.eq.s32.totalorder %s32, 0
    %p457 = por %p455, %p456
    %p458 = scmp.ne.s32.totalorder %s446, %s447
    %p459 = scmp.eq.s32.totalorder %s33, 1
    %p460 = por %p458, %p459
    %p462 = scmp.ne.s32.totalorder %s447, %s461
    %p463 = scmp.eq.s32.totalorder %s33, 0
    %p464 = por %p462, %p463
    %s466 = sadd.s32 %s465, 1
    %p469 = scmp.eq.s32.totalorder %s27, 1
    %p470 = scmp.ne.s32.totalorder %s465, %s467
    %p471 = scmp.eq.s32.totalorder %s27, 0
    %p472 = por %p470, %p471
    %p473 = scmp.ne.s32.totalorder %s465, %s467
    %p474 = scmp.eq.s32.totalorder %s32, 1
    %p475 = por %p473, %p474
    %p476 = scmp.ne.s32.totalorder %s467, %s468
    %p477 = scmp.eq.s32.totalorder %s32, 0
    %p478 = por %p476, %p477
    %p479 = scmp.ne.s32.totalorder %s467, %s468
    %p480 = scmp.eq.s32.totalorder %s33, 1
    %p481 = por %p479, %p480
    %p483 = scmp.ne.s32.totalorder %s468, %s482
    %p484 = scmp.eq.s32.totalorder %s33, 0
    %p485 = por %p483, %p484
    %s486 = ssub.s32 %s27, %s34
    %p487 = scmp.eq.s32.totalorder %s486, 0
    %s489 = sadd.s32 %s488, 1
    %s490 = scalar_select %p487, %s488, %s489
    %p493 = pneg %p487
    %p494 = scmp.eq.s32.totalorder %s27, 1
    %p495 = por %p493, %p494
    %p496 = scmp.ne.s32.totalorder %s488, %s491
    %p497 = scmp.eq.s32.totalorder %s27, 0
    %p498 = por %p496, %p497
    %p499 = scmp.ne.s32.totalorder %s488, %s491
    %p500 = scmp.eq.s32.totalorder %s32, 1
    %p501 = por %p499, %p500
    %p502 = scmp.ne.s32.totalorder %s491, %s492
    %p503 = scmp.eq.s32.totalorder %s32, 0
    %p504 = por %p502, %p503
    %p505 = scmp.ne.s32.totalorder %s491, %s492
    %p506 = scmp.eq.s32.totalorder %s33, 1
    %p507 = por %p505, %p506
    %p509 = scmp.ne.s32.totalorder %s492, %s508
    %p510 = scmp.eq.s32.totalorder %s33, 0
    %p511 = por %p509, %p510
    %p512 = scmp.le.s32.totalorder 1, %s27
    %p513 = scmp.lt.s32.totalorder %s27, 3
    %p514 = pnand %p512, %p513
    %p515 = pneg %p514
    // Predicated region
    $region9: #{mfab2d_forward.1} parent=5 // pred_check
      _
    $region10: #{mfab2d_forward.1} parent=5 // pred_check_branch
      %517 = sbr.rel (%p514) target = $region12
    $region11: #{mfab2d_forward.1} parent=5 // pred_region
      %s518 = ssub.s32 %s27, 1
      // Predicated region
      $region13: #{mfab2d_forward.1} parent=11 // pred_check
        %p519 = pneg %p100
      $region14: #{mfab2d_forward.1} parent=11 // pred_check_branch
        %521 = sbr.rel (%p519) target = $region16
      $region15: #{mfab2d_forward.1} parent=11 // pred_region
        _
      $region16: #{mfab2d_forward.1} parent=11 // pred_fallthru
        _
      // Predicated region
      $region17: #{mfab2d_forward.1} parent=11 // pred_check
        %p522 = pneg %p121
      $region18: #{mfab2d_forward.1} parent=11 // pred_check_branch
        %524 = sbr.rel (%p522) target = $region20
      $region19: #{mfab2d_forward.1} parent=11 // pred_region
        _
      $region20: #{mfab2d_forward.1} parent=11 // pred_fallthru
        _
      // Predicated region
      $region21: #{mfab2d_forward.1} parent=11 // pred_check
        %p525 = pneg %p142
      $region22: #{mfab2d_forward.1} parent=11 // pred_check_branch
        %527 = sbr.rel (%p525) target = $region24
      $region23: #{mfab2d_forward.1} parent=11 // pred_region
        _
      $region24: #{mfab2d_forward.1} parent=11 // pred_fallthru
        _
      // Predicated region
      $region25: #{mfab2d_forward.1} parent=11 // pred_check
        %p528 = pneg %p163
      $region26: #{mfab2d_forward.1} parent=11 // pred_check_branch
        %530 = sbr.rel (%p528) target = $region28
      $region27: #{mfab2d_forward.1} parent=11 // pred_region
        _
      $region28: #{mfab2d_forward.1} parent=11 // pred_fallthru
        _
      // Predicated region
      $region29: #{mfab2d_forward.1} parent=11 // pred_check
        %p531 = pneg %p184
      $region30: #{mfab2d_forward.1} parent=11 // pred_check_branch
        %533 = sbr.rel (%p531) target = $region32
      $region31: #{mfab2d_forward.1} parent=11 // pred_region
        _
      $region32: #{mfab2d_forward.1} parent=11 // pred_fallthru
        _
      // Predicated region
      $region33: #{mfab2d_forward.1} parent=11 // pred_check
        %p534 = pneg %p205
      $region34: #{mfab2d_forward.1} parent=11 // pred_check_branch
        %536 = sbr.rel (%p534) target = $region36
      $region35: #{mfab2d_forward.1} parent=11 // pred_region
        _
      $region36: #{mfab2d_forward.1} parent=11 // pred_fallthru
        _
      // Predicated region
      $region37: #{mfab2d_forward.1} parent=11 // pred_check
        %p537 = pneg %p226
      $region38: #{mfab2d_forward.1} parent=11 // pred_check_branch
        %539 = sbr.rel (%p537) target = $region40
      $region39: #{mfab2d_forward.1} parent=11 // pred_region
        _
      $region40: #{mfab2d_forward.1} parent=11 // pred_fallthru
        _
      // Predicated region
      $region41: #{mfab2d_forward.1} parent=11 // pred_check
        %p540 = pneg %p247
      $region42: #{mfab2d_forward.1} parent=11 // pred_check_branch
        %542 = sbr.rel (%p540) target = $region44
      $region43: #{mfab2d_forward.1} parent=11 // pred_region
        _
      $region44: #{mfab2d_forward.1} parent=11 // pred_fallthru
        _
      // Predicated region
      $region45: #{mfab2d_forward.1} parent=11 // pred_check
        %p543 = pneg %p268
      $region46: #{mfab2d_forward.1} parent=11 // pred_check_branch
        %545 = sbr.rel (%p543) target = $region48
      $region47: #{mfab2d_forward.1} parent=11 // pred_region
        _
      $region48: #{mfab2d_forward.1} parent=11 // pred_fallthru
        _
      // Predicated region
      $region49: #{mfab2d_forward.1} parent=11 // pred_check
        %p546 = pneg %p289
      $region50: #{mfab2d_forward.1} parent=11 // pred_check_branch
        %548 = sbr.rel (%p546) target = $region52
      $region51: #{mfab2d_forward.1} parent=11 // pred_region
        _
      $region52: #{mfab2d_forward.1} parent=11 // pred_fallthru
        _
      // Predicated region
      $region53: #{mfab2d_forward.1} parent=11 // pred_check
        %p549 = pneg %p310
      $region54: #{mfab2d_forward.1} parent=11 // pred_check_branch
        %551 = sbr.rel (%p549) target = $region56
      $region55: #{mfab2d_forward.1} parent=11 // pred_region
        _
      $region56: #{mfab2d_forward.1} parent=11 // pred_fallthru
        _
      // Predicated region
      $region57: #{mfab2d_forward.1} parent=11 // pred_check
        %p552 = pneg %p331
      $region58: #{mfab2d_forward.1} parent=11 // pred_check_branch
        %554 = sbr.rel (%p552) target = $region60
      $region59: #{mfab2d_forward.1} parent=11 // pred_region
        _
      $region60: #{mfab2d_forward.1} parent=11 // pred_fallthru
        _
      // Predicated region
      $region61: #{mfab2d_forward.1} parent=11 // pred_check
        %p555 = pneg %p352
      $region62: #{mfab2d_forward.1} parent=11 // pred_check_branch
        %557 = sbr.rel (%p555) target = $region64
      $region63: #{mfab2d_forward.1} parent=11 // pred_region
        _
      $region64: #{mfab2d_forward.1} parent=11 // pred_fallthru
        _
      // Predicated region
      $region65: #{mfab2d_forward.1} parent=11 // pred_check
        %p558 = pneg %p373
      $region66: #{mfab2d_forward.1} parent=11 // pred_check_branch
        %560 = sbr.rel (%p558) target = $region68
      $region67: #{mfab2d_forward.1} parent=11 // pred_region
        _
      $region68: #{mfab2d_forward.1} parent=11 // pred_fallthru
        _
      // Predicated region
      $region69: #{mfab2d_forward.1} parent=11 // pred_check
        %p561 = pneg %p394
      $region70: #{mfab2d_forward.1} parent=11 // pred_check_branch
        %563 = sbr.rel (%p561) target = $region72
      $region71: #{mfab2d_forward.1} parent=11 // pred_region
        _
      $region72: #{mfab2d_forward.1} parent=11 // pred_fallthru
        _
      // Predicated region
      $region73: #{mfab2d_forward.1} parent=11 // pred_check
        %p564 = pneg %p415
      $region74: #{mfab2d_forward.1} parent=11 // pred_check_branch
        %566 = sbr.rel (%p564) target = $region76
      $region75: #{mfab2d_forward.1} parent=11 // pred_region
        _
      $region76: #{mfab2d_forward.1} parent=11 // pred_fallthru
        _
      // Predicated region
      $region77: #{mfab2d_forward.1} parent=11 // pred_check
        %p567 = pneg %p436
      $region78: #{mfab2d_forward.1} parent=11 // pred_check_branch
        %569 = sbr.rel (%p567) target = $region80
      $region79: #{mfab2d_forward.1} parent=11 // pred_region
        _
      $region80: #{mfab2d_forward.1} parent=11 // pred_fallthru
        _
      // Predicated region
      $region81: #{mfab2d_forward.1} parent=11 // pred_check
        %p570 = pneg %p457
      $region82: #{mfab2d_forward.1} parent=11 // pred_check_branch
        %572 = sbr.rel (%p570) target = $region84
      $region83: #{mfab2d_forward.1} parent=11 // pred_region
        _
      $region84: #{mfab2d_forward.1} parent=11 // pred_fallthru
        _
      // Predicated region
      $region85: #{mfab2d_forward.1} parent=11 // pred_check
        %p573 = pneg %p478
      $region86: #{mfab2d_forward.1} parent=11 // pred_check_branch
        %575 = sbr.rel (%p573) target = $region88
      $region87: #{mfab2d_forward.1} parent=11 // pred_region
        _
      $region88: #{mfab2d_forward.1} parent=11 // pred_fallthru
        _
    $region12: #{mfab2d_forward.1} parent=5 // pred_fallthru
      _
    %p576 = scmp.lt.s32.totalorder %s27, 2
    // Predicated region
    $region89: #{mfab2d_forward.1} parent=5 // pred_check
      %p577 = pneg %p576
    $region90: #{mfab2d_forward.1} parent=5 // pred_check_branch
      %579 = sbr.rel (%p577) target = $region92
    $region91: #{mfab2d_forward.1} parent=5 // pred_region
      // Predicated region
      $region93: #{mfab2d_forward.1} parent=91 // pred_check
        %p580 = pneg %p47
      $region94: #{mfab2d_forward.1} parent=91 // pred_check_branch
        %582 = sbr.rel (%p580) target = $region96
      $region95: #{mfab2d_forward.1} parent=91 // pred_region
        %p583 = scmp.lt.s32.totalorder %s27, 1
        %s584 = scalar_select %p583, %s27, 1
        %s585 = smul.addr %s584, 20
        %s586 = smul.addr %s585, 8
        %s587 = scalar_lea.vmem %s0, %s586
      $region96: #{mfab2d_forward.1} parent=91 // pred_fallthru
        _
      // Predicated region
      $region97: #{mfab2d_forward.1} parent=91 // pred_check
        %p588 = pneg %p73
      $region98: #{mfab2d_forward.1} parent=91 // pred_check_branch
        %590 = sbr.rel (%p588) target = $region100
      $region99: #{mfab2d_forward.1} parent=91 // pred_region
        %p591 = scmp.lt.s32.totalorder %s27, 1
        %s592 = scalar_select %p591, %s27, 1
        %s593 = smul.addr %s592, 54
        %s594 = smul.addr %s593, 8
        %s595 = scalar_lea.vmem %s1, %s594
      $region100: #{mfab2d_forward.1} parent=91 // pred_fallthru
        _
    $region92: #{mfab2d_forward.1} parent=5 // pred_fallthru
      _
    %p596 = scmp.le.s32.totalorder 1, %s27
    %p597 = scmp.lt.s32.totalorder %s27, 3
    %p598 = pnand %p596, %p597
    %p599 = pneg %p598
    // Predicated region
    $region101: #{mfab2d_forward.1} parent=5 // pred_check
      _
    $region102: #{mfab2d_forward.1} parent=5 // pred_check_branch
      %601 = sbr.rel (%p598) target = $region104
    $region103: #{mfab2d_forward.1} parent=5 // pred_region
      %s602 = ssub.s32 %s27, 1
      %p603 = scmp.lt.s32.totalorder %s32, 1
      %s604 = scalar_select %p603, %s32, 1
      %s605 = smul.addr %s604, 20
      %s606 = smul.addr %s605, 8
      %s607 = scalar_lea.vmem %s0, %s606
      %p608 = pneg %p53
      %p609 = pneg %p50
      %p610 = scmp.lt.s32.totalorder %s32, 1
      %s611 = scalar_select %p610, %s32, 1
      %s612 = smul.addr %s611, 54
      %s613 = smul.addr %s612, 8
      %s614 = scalar_lea.vmem %s1, %s613
      %p615 = pneg %p79
      %p616 = pneg %p76
      %p617 = pneg %p100
      %p618 = pneg %p97
      %p619 = pneg %p121
      %p620 = pneg %p118
      %p621 = pneg %p142
      %p622 = pneg %p139
      %p623 = pneg %p163
      %p624 = pneg %p160
      %p625 = pneg %p184
      %p626 = pneg %p181
      %p627 = pneg %p205
      %p628 = pneg %p202
      %p629 = pneg %p226
      %p630 = pneg %p223
      %p631 = pneg %p247
      %p632 = pneg %p244
      %p633 = pneg %p268
      %p634 = pneg %p265
      %p635 = pneg %p289
      %p636 = pneg %p286
      %p637 = pneg %p310
      %p638 = pneg %p307
      %p639 = pneg %p331
      %p640 = pneg %p328
      %p641 = pneg %p352
      %p642 = pneg %p349
      %p643 = pneg %p373
      %p644 = pneg %p370
      %p645 = pneg %p394
      %p646 = pneg %p391
      %p647 = pneg %p415
      %p648 = pneg %p412
      %p649 = pneg %p436
      %p650 = pneg %p433
      %p651 = pneg %p457
      %p652 = pneg %p454
      %p653 = pneg %p478
      %p654 = pneg %p475
      %p655 = pneg %p504
      %p656 = pneg %p501
      %p657 = scmp.lt.s32.totalorder %s32, 1
      %s658 = scalar_select %p657, %s32, 1
      %s659 = smul.addr %s658, 32
      %s660 = smul.addr %s659, 8
      %s661 = scalar_lea.vmem %s21, %s660
      %p662 = scmp.lt.s32.totalorder %s32, 1
      %s663 = scalar_select %p662, %s32, 1
      %s664 = smul.addr %s663, 20
      %s665 = smul.addr %s664, 8
      %s666 = scalar_lea.vmem %s0, %s665
      %p667 = scmp.lt.s32.totalorder %s32, 1
      %s668 = scalar_select %p667, %s32, 1
      %s669 = smul.addr %s668, 54
      %s670 = smul.addr %s669, 8
      %s671 = scalar_lea.vmem %s1, %s670
      %p672 = scmp.lt.s32.totalorder %s32, 1
      %s673 = scalar_select %p672, %s32, 1
      %s674 = smul.addr %s673, 32
      %s675 = smul.addr %s674, 8
      %s676 = scalar_lea.vmem %s21, %s675
      %v678 = vld [vmem:[%s666] sm:$0xff]
      %v679 = vld [vmem:[%s666 + $0x8] sm:$0x3]
      %v680 = vld [vmem:[%s666 + $0x10] sm:$0xff]
      %v681 = vld [vmem:[%s666 + $0x18] sm:$0x3]
      %v682 = vld [vmem:[%s666 + $0x20] sm:$0xff]
      %v683 = vld [vmem:[%s666 + $0x28] sm:$0x3]
      %v684 = vld [vmem:[%s666 + $0x30] sm:$0xff]
      %v685 = vld [vmem:[%s666 + $0x38] sm:$0x3]
      %v686 = vld [vmem:[%s666 + $0x40] sm:$0xff]
      %v687 = vld [vmem:[%s666 + $0x48] sm:$0x3]
      %v688 = vld [vmem:[%s666 + $0x50] sm:$0xff]
      %v689 = vld [vmem:[%s666 + $0x58] sm:$0x3]
      %v690 = vld [vmem:[%s666 + $0x60] sm:$0xff]
      %v691 = vld [vmem:[%s666 + $0x68] sm:$0x3]
      %v692 = vld [vmem:[%s666 + $0x70] sm:$0xff]
      %v693 = vld [vmem:[%s666 + $0x78] sm:$0x3]
      %v694 = vld [vmem:[%s666 + $0x80] sm:$0xff]
      %v695 = vld [vmem:[%s666 + $0x88] sm:$0x3]
      %v696 = vld [vmem:[%s666 + $0x90] sm:$0xff]
      %v697 = vld [vmem:[%s666 + $0x98] sm:$0x3]
      %v698 = vld [vmem:[%s4] sm:$0xf]
      %v699 = vld [vmem:[%s4 + $0x4] sm:$0xf]
      %v700 = vld [vmem:[%s4 + $0x8] sm:$0xf]
      %v701 = vld [vmem:[%s4 + $0xc] sm:$0xf]
      %v702 = vld [vmem:[%s4 + $0x10] sm:$0xf]
      %v703 = vld [vmem:[%s4 + $0x14] sm:$0xf]
      %v704 = vld [vmem:[%s4 + $0x18] sm:$0xf]
      %v705 = vld [vmem:[%s4 + $0x1c] sm:$0xf]
      %v706 = vld [vmem:[%s4 + $0x20] sm:$0xf]
      %v707 = vld [vmem:[%s4 + $0x24] sm:$0xf]
      %v708 = vld [vmem:[%s4 + $0x28] sm:$0xf]
      %v709 = vld [vmem:[%s4 + $0x2c] sm:$0xf]
      %v710 = vld [vmem:[%s4 + $0x30] sm:$0xf]
      %v711 = vld [vmem:[%s4 + $0x34] sm:$0xf]
      %v712 = vld [vmem:[%s4 + $0x38] sm:$0xf]
      %v713 = vld [vmem:[%s4 + $0x3c] sm:$0xf]
      %v714 = vld [vmem:[%s4 + $0x40] sm:$0xf]
      %v715 = vld [vmem:[%s4 + $0x44] sm:$0xf]
      %vm732 = vcmask 1046528
      %v733 = vrot.slane %v678, 1
      %v734 = vrot.slane %v679, 1
      %v735 = vsel %vm732, %v733, %v734
      %v736 = vrot.slane %v680, 1
      %v737 = vrot.slane %v681, 1
      %v738 = vsel %vm732, %v736, %v737
      %v739 = vrot.slane %v682, 1
      %v740 = vrot.slane %v683, 1
      %v741 = vsel %vm732, %v739, %v740
      %v742 = vrot.slane %v684, 1
      %v743 = vrot.slane %v685, 1
      %v744 = vsel %vm732, %v742, %v743
      %v745 = vrot.slane %v686, 1
      %v746 = vrot.slane %v687, 1
      %v747 = vsel %vm732, %v745, %v746
      %v748 = vrot.slane %v688, 1
      %v749 = vrot.slane %v689, 1
      %v750 = vsel %vm732, %v748, %v749
      %v751 = vrot.slane %v690, 1
      %v752 = vrot.slane %v691, 1
      %v753 = vsel %vm732, %v751, %v752
      %v754 = vrot.slane %v692, 1
      %v755 = vrot.slane %v693, 1
      %v756 = vsel %vm732, %v754, %v755
      %757 = vrot.lane.b32.xlu0 %v735, 16
      %v758 = vpop.permute.xlu0 %757
      %759 = vrot.lane.b32.xlu0 %v738, 16
      %v760 = vpop.permute.xlu0 %759
      %761 = vrot.lane.b32.xlu0 %v741, 16
      %v762 = vpop.permute.xlu0 %761
      %763 = vrot.lane.b32.xlu0 %v744, 16
      %v764 = vpop.permute.xlu0 %763
      %765 = vrot.lane.b32.xlu0 %v747, 16
      %v766 = vpop.permute.xlu0 %765
      %767 = vrot.lane.b32.xlu0 %v750, 16
      %v768 = vpop.permute.xlu0 %767
      %769 = vrot.lane.b32.xlu0 %v753, 16
      %v770 = vpop.permute.xlu0 %769
      %771 = vrot.lane.b32.xlu0 %v756, 16
      %v772 = vpop.permute.xlu0 %771
      %vm781 = vcmask 1045504
      %v782 = vrot.slane %v678, 2
      %v783 = vrot.slane %v679, 2
      %v784 = vsel %vm781, %v782, %v783
      %v785 = vrot.slane %v680, 2
      %v786 = vrot.slane %v681, 2
      %v787 = vsel %vm781, %v785, %v786
      %v788 = vrot.slane %v682, 2
      %v789 = vrot.slane %v683, 2
      %v790 = vsel %vm781, %v788, %v789
      %v791 = vrot.slane %v684, 2
      %v792 = vrot.slane %v685, 2
      %v793 = vsel %vm781, %v791, %v792
      %v794 = vrot.slane %v686, 2
      %v795 = vrot.slane %v687, 2
      %v796 = vsel %vm781, %v794, %v795
      %v797 = vrot.slane %v688, 2
      %v798 = vrot.slane %v689, 2
      %v799 = vsel %vm781, %v797, %v798
      %v800 = vrot.slane %v690, 2
      %v801 = vrot.slane %v691, 2
      %v802 = vsel %vm781, %v800, %v801
      %v803 = vrot.slane %v692, 2
      %v804 = vrot.slane %v693, 2
      %v805 = vsel %vm781, %v803, %v804
      %806 = vrot.lane.b32.xlu0 %v784, 32
      %v807 = vpop.permute.xlu0 %806
      %808 = vrot.lane.b32.xlu0 %v787, 32
      %v809 = vpop.permute.xlu0 %808
      %810 = vrot.lane.b32.xlu0 %v790, 32
      %v811 = vpop.permute.xlu0 %810
      %812 = vrot.lane.b32.xlu0 %v793, 32
      %v813 = vpop.permute.xlu0 %812
      %814 = vrot.lane.b32.xlu0 %v796, 32
      %v815 = vpop.permute.xlu0 %814
      %816 = vrot.lane.b32.xlu0 %v799, 32
      %v817 = vpop.permute.xlu0 %816
      %818 = vrot.lane.b32.xlu0 %v802, 32
      %v819 = vpop.permute.xlu0 %818
      %820 = vrot.lane.b32.xlu0 %v805, 32
      %v821 = vpop.permute.xlu0 %820
      %831 = vrot.lane.b32.xlu0 %v680, 48
      %v832 = vpop.permute.xlu0 %831
      %833 = vrot.lane.b32.xlu0 %v682, 48
      %v834 = vpop.permute.xlu0 %833
      %835 = vrot.lane.b32.xlu0 %v684, 48
      %v836 = vpop.permute.xlu0 %835
      %837 = vrot.lane.b32.xlu0 %v686, 48
      %v838 = vpop.permute.xlu0 %837
      %839 = vrot.lane.b32.xlu0 %v688, 48
      %v840 = vpop.permute.xlu0 %839
      %841 = vrot.lane.b32.xlu0 %v690, 48
      %v842 = vpop.permute.xlu0 %841
      %843 = vrot.lane.b32.xlu0 %v692, 48
      %v844 = vpop.permute.xlu0 %843
      %845 = vrot.lane.b32.xlu0 %v694, 48
      %v846 = vpop.permute.xlu0 %845
      %v856 = vrot.slane %v694, 1
      %v857 = vrot.slane %v695, 1
      %v858 = vsel %vm732, %v856, %v857
      %859 = vrot.lane.b32.xlu0 %v738, 64
      %v860 = vpop.permute.xlu0 %859
      %861 = vrot.lane.b32.xlu0 %v741, 64
      %v862 = vpop.permute.xlu0 %861
      %863 = vrot.lane.b32.xlu0 %v744, 64
      %v864 = vpop.permute.xlu0 %863
      %865 = vrot.lane.b32.xlu0 %v747, 64
      %v866 = vpop.permute.xlu0 %865
      %867 = vrot.lane.b32.xlu0 %v750, 64
      %v868 = vpop.permute.xlu0 %867
      %869 = vrot.lane.b32.xlu0 %v753, 64
      %v870 = vpop.permute.xlu0 %869
      %871 = vrot.lane.b32.xlu0 %v756, 64
      %v872 = vpop.permute.xlu0 %871
      %873 = vrot.lane.b32.xlu0 %v858, 64
      %v874 = vpop.permute.xlu0 %873
      %v883 = vrot.slane %v694, 2
      %v884 = vrot.slane %v695, 2
      %v885 = vsel %vm781, %v883, %v884
      %886 = vrot.lane.b32.xlu0 %v787, 80
      %v887 = vpop.permute.xlu0 %886
      %888 = vrot.lane.b32.xlu0 %v790, 80
      %v889 = vpop.permute.xlu0 %888
      %890 = vrot.lane.b32.xlu0 %v793, 80
      %v891 = vpop.permute.xlu0 %890
      %892 = vrot.lane.b32.xlu0 %v796, 80
      %v893 = vpop.permute.xlu0 %892
      %894 = vrot.lane.b32.xlu0 %v799, 80
      %v895 = vpop.permute.xlu0 %894
      %896 = vrot.lane.b32.xlu0 %v802, 80
      %v897 = vpop.permute.xlu0 %896
      %898 = vrot.lane.b32.xlu0 %v805, 80
      %v899 = vpop.permute.xlu0 %898
      %900 = vrot.lane.b32.xlu0 %v885, 80
      %v901 = vpop.permute.xlu0 %900
      %911 = vrot.lane.b32.xlu0 %v682, 96
      %v912 = vpop.permute.xlu0 %911
      %913 = vrot.lane.b32.xlu0 %v684, 96
      %v914 = vpop.permute.xlu0 %913
      %915 = vrot.lane.b32.xlu0 %v686, 96
      %v916 = vpop.permute.xlu0 %915
      %917 = vrot.lane.b32.xlu0 %v688, 96
      %v918 = vpop.permute.xlu0 %917
      %919 = vrot.lane.b32.xlu0 %v690, 96
      %v920 = vpop.permute.xlu0 %919
      %921 = vrot.lane.b32.xlu0 %v692, 96
      %v922 = vpop.permute.xlu0 %921
      %923 = vrot.lane.b32.xlu0 %v694, 96
      %v924 = vpop.permute.xlu0 %923
      %925 = vrot.lane.b32.xlu0 %v696, 96
      %v926 = vpop.permute.xlu0 %925
      %v936 = vrot.slane %v696, 1
      %v937 = vrot.slane %v697, 1
      %v938 = vsel %vm732, %v936, %v937
      %939 = vrot.lane.b32.xlu0 %v741, 112
      %v940 = vpop.permute.xlu0 %939
      %941 = vrot.lane.b32.xlu0 %v744, 112
      %v942 = vpop.permute.xlu0 %941
      %943 = vrot.lane.b32.xlu0 %v747, 112
      %v944 = vpop.permute.xlu0 %943
      %945 = vrot.lane.b32.xlu0 %v750, 112
      %v946 = vpop.permute.xlu0 %945
      %947 = vrot.lane.b32.xlu0 %v753, 112
      %v948 = vpop.permute.xlu0 %947
      %949 = vrot.lane.b32.xlu0 %v756, 112
      %v950 = vpop.permute.xlu0 %949
      %951 = vrot.lane.b32.xlu0 %v858, 112
      %v952 = vpop.permute.xlu0 %951
      %953 = vrot.lane.b32.xlu0 %v938, 112
      %v954 = vpop.permute.xlu0 %953
      %v963 = vrot.slane %v696, 2
      %v964 = vrot.slane %v697, 2
      %v965 = vsel %vm781, %v963, %v964
      %vm974 = vcmask 130048
      %v975 = vsel %vm974, %v678, %v758
      %v976 = vsel %vm974, %v680, %v760
      %v977 = vsel %vm974, %v682, %v762
      %v978 = vsel %vm974, %v684, %v764
      %v979 = vsel %vm974, %v686, %v766
      %v980 = vsel %vm974, %v688, %v768
      %v981 = vsel %vm974, %v690, %v770
      %v982 = vsel %vm974, %v692, %v772
      %vm983 = vcmask 261120
      %v984 = vsel %vm983, %v975, %v807
      %v985 = vsel %vm983, %v976, %v809
      %v986 = vsel %vm983, %v977, %v811
      %v987 = vsel %vm983, %v978, %v813
      %v988 = vsel %vm983, %v979, %v815
      %v989 = vsel %vm983, %v980, %v817
      %v990 = vsel %vm983, %v981, %v819
      %v991 = vsel %vm983, %v982, %v821
      %vm992 = vcmask 392192
      %v993 = vsel %vm992, %v984, %v832
      %v994 = vsel %vm992, %v985, %v834
      %v995 = vsel %vm992, %v986, %v836
      %v996 = vsel %vm992, %v987, %v838
      %v997 = vsel %vm992, %v988, %v840
      %v998 = vsel %vm992, %v989, %v842
      %v999 = vsel %vm992, %v990, %v844
      %v1000 = vsel %vm992, %v991, %v846
      %vm1001 = vcmask 523264
      %v1002 = vsel %vm1001, %v993, %v860
      %v1003 = vsel %vm1001, %v994, %v862
      %v1004 = vsel %vm1001, %v995, %v864
      %v1005 = vsel %vm1001, %v996, %v866
      %v1006 = vsel %vm1001, %v997, %v868
      %v1007 = vsel %vm1001, %v998, %v870
      %v1008 = vsel %vm1001, %v999, %v872
      %v1009 = vsel %vm1001, %v1000, %v874
      %vm1010 = vcmask 654336
      %v1011 = vsel %vm1010, %v1002, %v887
      %v1012 = vsel %vm1010, %v1003, %v889
      %v1013 = vsel %vm1010, %v1004, %v891
      %v1014 = vsel %vm1010, %v1005, %v893
      %v1015 = vsel %vm1010, %v1006, %v895
      %v1016 = vsel %vm1010, %v1007, %v897
      %v1017 = vsel %vm1010, %v1008, %v899
      %v1018 = vsel %vm1010, %v1009, %v901
      %vm1019 = vcmask 785408
      %v1020 = vsel %vm1019, %v1011, %v912
      %v1021 = vsel %vm1019, %v1012, %v914
      %v1022 = vsel %vm1019, %v1013, %v916
      %v1023 = vsel %vm1019, %v1014, %v918
      %v1024 = vsel %vm1019, %v1015, %v920
      %v1025 = vsel %vm1019, %v1016, %v922
      %v1026 = vsel %vm1019, %v1017, %v924
      %v1027 = vsel %vm1019, %v1018, %v926
      %vm1028 = vcmask 916480
      %v1029 = vsel %vm1028, %v1020, %v940
      %v1030 = vsel %vm1028, %v1021, %v942
      %v1031 = vsel %vm1028, %v1022, %v944
      %v1032 = vsel %vm1028, %v1023, %v946
      %v1033 = vsel %vm1028, %v1024, %v948
      %v1034 = vsel %vm1028, %v1025, %v950
      %v1035 = vsel %vm1028, %v1026, %v952
      %v1036 = vsel %vm1028, %v1027, %v954
      %v1037 = vpack.c.bf16 %v1030, %v1029
      %v1038 = vpack.c.bf16 %v793, %v790
      %v1039 = vpack.c.bf16 %v1032, %v1031
      %v1040 = vpack.c.bf16 %v799, %v796
      %v1041 = vpack.c.bf16 %v1034, %v1033
      %v1042 = vpack.c.bf16 %v805, %v802
      %v1043 = vpack.c.bf16 %v1036, %v1035
      %v1044 = vpack.c.bf16 %v965, %v885
      %v1063 = vunpack.c.l.b16 %v698
      %v1064 = vunpack.c.l.b16 %v699
      %v1065 = vunpack.c.l.b16 %v700
      %v1066 = vunpack.c.l.b16 %v701
      %v1067 = vunpack.c.l.b16 %v702
      %v1068 = vunpack.c.l.b16 %v703
      %v1069 = vunpack.c.l.b16 %v704
      %v1070 = vunpack.c.l.b16 %v705
      %v1071 = vunpack.c.l.b16 %v706
      %v1072 = vunpack.c.l.b16 %v707
      %v1073 = vunpack.c.l.b16 %v708
      %v1074 = vunpack.c.l.b16 %v709
      %v1075 = vunpack.c.l.b16 %v710
      %v1076 = vunpack.c.l.b16 %v711
      %v1077 = vunpack.c.l.b16 %v712
      %v1078 = vunpack.c.l.b16 %v713
      %v1079 = vunpack.c.l.b16 %v714
      %v1080 = vunpack.c.l.b16 %v715
      %v1081 = vpack.c.b16 %v1064, %v1063
      %v1082 = vpack.c.b16 %v1066, %v1065
      %v1083 = vpack.c.b16 %v1068, %v1067
      %v1084 = vpack.c.b16 %v1070, %v1069
      %v1085 = vpack.c.b16 %v1072, %v1071
      %v1086 = vpack.c.b16 %v1074, %v1073
      %v1087 = vpack.c.b16 %v1076, %v1075
      %v1088 = vpack.c.b16 %v1078, %v1077
      %v1089 = vpack.c.b16 %v1080, %v1079
      %v1100 = vsel %vm974, %v1038, 0
      %v1103 = vsel %vm974, %v1040, 0
      %v1106 = vsel %vm974, %v1042, 0
      %v1109 = vsel %vm974, %v1044, 0
      %1111 = vmatprep.subr.bf16.mxu0 0
      %1112 = vmatpush1.bf16.msra.mxu0 %v1081
      %1113 = vmatprep.subr.bf16.mxu0 0
      %1114 = vmatpush1.bf16.msra.mxu0 %v1082
      %1115 = vmatprep.subr.bf16.mxu0 0
      %1116 = vmatpush1.bf16.msra.mxu0 %v1083
      %1117 = vmatprep.subr.bf16.mxu0 0
      %1118 = vmatpush1.bf16.msra.mxu0 %v1084
      %1119 = vmatprep.subr.bf16.mxu0 0
      %1120 = vmatpush1.bf16.msra.mxu0 %v1085
      %1121 = vmatprep.subr.bf16.mxu0 0
      %1122 = vmatpush1.bf16.msra.mxu0 %v1086
      %1123 = vmatprep.subr.bf16.mxu0 0
      %1124 = vmatpush1.bf16.msra.mxu0 %v1087
      %1125 = vmatprep.subr.bf16.mxu0 0
      %1126 = vmatpush1.bf16.msra.mxu0 %v1088
      %1127 = vmatprep.subr.bf16.mxu0 0
      %1128 = vmatpush1.bf16.msra.mxu0 %v1089
      %1129 = vmatprep.subr.bf16.mxu0 0
      %1130 = vmatpush1.bf16.msra.mxu0 0
      %1131 = vmatprep.subr.bf16.mxu0 0
      %1132 = vmatpush1.bf16.msra.mxu0 0
      %1133 = vmatprep.subr.bf16.mxu0 0
      %1134 = vmatpush1.bf16.msra.mxu0 0
      %1135 = vmatprep.subr.bf16.mxu0 0
      %1136 = vmatpush1.bf16.msra.mxu0 0
      %1137 = vmatprep.subr.bf16.mxu0 0
      %1138 = vmatpush1.bf16.msra.mxu0 0
      %1139 = vmatprep.subr.bf16.mxu0 0
      %1140 = vmatpush1.bf16.msra.mxu0 0
      %1141 = vmatprep.subr.bf16.mxu0 0
      %1142 = vmatpush1.bf16.msra.mxu0 0
      %1143 = vmatprep.mubr.bf16.mxu0 %v1100
      %1144 = vmatmul.mubr.bf16.gmra.mrb[0].mxu0 %v1037
      %v1145 = vpop.f32.mrb[0].mxu0
      %v1146 = vadd.f32 0.0, %v1145
      %v1147 = vpop.f32.mrb[0].mxu0
      %v1148 = vpop.f32.mrb[0].mxu0
      %v1149 = vadd.f32 0.0, %v1148
      %v1150 = vpop.f32.mrb[0].mxu0
      %1151 = vmatprep.mubr.bf16.mxu0 %v1103
      %1152 = vmatmul.mubr.bf16.gmra.mrb[0].mxu0 %v1039
      %v1153 = vpop.f32.mrb[0].mxu0
      %v1154 = vadd.f32 0.0, %v1153
      %v1155 = vpop.f32.mrb[0].mxu0
      %v1156 = vpop.f32.mrb[0].mxu0
      %v1157 = vadd.f32 0.0, %v1156
      %v1158 = vpop.f32.mrb[0].mxu0
      %1159 = vmatprep.mubr.bf16.mxu0 %v1106
      %1160 = vmatmul.mubr.bf16.gmra.mrb[0].mxu0 %v1041
      %v1161 = vpop.f32.mrb[0].mxu0
      %v1162 = vadd.f32 0.0, %v1161
      %v1163 = vpop.f32.mrb[0].mxu0
      %v1164 = vpop.f32.mrb[0].mxu0
      %v1165 = vadd.f32 0.0, %v1164
      %v1166 = vpop.f32.mrb[0].mxu0
      %1167 = vmatprep.mubr.bf16.mxu0 %v1109
      %1168 = vmatmul.mubr.bf16.gmra.mrb[0].mxu0 %v1043
      %v1169 = vpop.f32.mrb[0].mxu0
      %v1170 = vadd.f32 0.0, %v1169
      %v1171 = vpop.f32.mrb[0].mxu0
      %v1172 = vpop.f32.mrb[0].mxu0
      %v1173 = vadd.f32 0.0, %v1172
      %v1174 = vpop.f32.mrb[0].mxu0
      %1175 = vdwg.mxu0
      %v1176 = vld [vmem:[%s5] sm:$0x3]
      %v1177 = vlaneseq
      %v1178 = vshrl.u32 %v1177, 7
      %v1179 = vsub.s32 0, %v1178
      %v1180 = vrot.slane %v1176, %v1179
      %v1181 = vmul.f32 %v1146, %v1180
      %v1182 = vmul.f32 %v1149, %v1180
      %v1183 = vmul.f32 %v1154, %v1180
      %v1184 = vmul.f32 %v1157, %v1180
      %v1185 = vmul.f32 %v1162, %v1180
      %v1186 = vmul.f32 %v1165, %v1180
      %v1187 = vmul.f32 %v1170, %v1180
      %v1188 = vmul.f32 %v1173, %v1180
      %v1189 = vlaneseq
      %v1190 = vshrl.u32 %v1189, 7
      %v1191 = vsub.s32 1, %v1190
      %v1192 = vrot.slane %v1176, %v1191
      %v1193 = vadd.f32 %v1181, %v1192
      %v1194 = vadd.f32 %v1182, %v1192
      %v1195 = vadd.f32 %v1183, %v1192
      %v1196 = vadd.f32 %v1184, %v1192
      %v1197 = vadd.f32 %v1185, %v1192
      %v1198 = vadd.f32 %v1186, %v1192
      %v1199 = vadd.f32 %v1187, %v1192
      %v1200 = vadd.f32 %v1188, %v1192
      %v1201 = vmax.f32 %v1193, 0.0
      %v1202 = vmax.f32 %v1194, 0.0
      %v1203 = vmax.f32 %v1195, 0.0
      %v1204 = vmax.f32 %v1196, 0.0
      %v1205 = vmax.f32 %v1197, 0.0
      %v1206 = vmax.f32 %v1198, 0.0
      %v1207 = vmax.f32 %v1199, 0.0
      %v1208 = vmax.f32 %v1200, 0.0
      %v1209 = vld [vmem:[%s6] sm:$0xf]
      %v1210 = vld [vmem:[%s6 + $0x4] sm:$0xf]
      %v1211 = vpack.c.bf16 %v1202, %v1201
      %v1212 = vpack.c.bf16 %v1204, %v1203
      %v1213 = vpack.c.bf16 %v1206, %v1205
      %v1214 = vpack.c.bf16 %v1208, %v1207
      %v1217 = vunpack.c.l.b16 %v1209
      %v1218 = vunpack.c.l.b16 %v1210
      %v1219 = vpack.c.b16 %v1218, %v1217
      %v1222 = vsel %vm974, %v1211, 0
      %v1225 = vsel %vm974, %v1212, 0
      %v1228 = vsel %vm974, %v1213, 0
      %v1231 = vsel %vm974, %v1214, 0
      %1233 = vmatprep.subr.bf16.mxu0 0
      %1234 = vmatpush1.bf16.msra.mxu0 %v1219
      %1235 = vmatprep.subr.bf16.mxu0 0
      %1236 = vmatpush1.bf16.msra.mxu0 0
      %1237 = vmatprep.subr.bf16.mxu0 0
      %1238 = vmatpush1.bf16.msra.mxu0 0
      %1239 = vmatprep.subr.bf16.mxu0 0
      %1240 = vmatpush1.bf16.msra.mxu0 0
      %1241 = vmatprep.subr.bf16.mxu0 0
      %1242 = vmatpush1.bf16.msra.mxu0 0
      %1243 = vmatprep.subr.bf16.mxu0 0
      %1244 = vmatpush1.bf16.msra.mxu0 0
      %1245 = vmatprep.subr.bf16.mxu0 0
      %1246 = vmatpush1.bf16.msra.mxu0 0
      %1247 = vmatprep.subr.bf16.mxu0 0
      %1248 = vmatpush1.bf16.msra.mxu0 0
      %1249 = vmatprep.subr.bf16.mxu0 0
      %1250 = vmatpush1.bf16.msra.mxu0 0
      %1251 = vmatprep.subr.bf16.mxu0 0
      %1252 = vmatpush1.bf16.msra.mxu0 0
      %1253 = vmatprep.subr.bf16.mxu0 0
      %1254 = vmatpush1.bf16.msra.mxu0 0
      %1255 = vmatprep.subr.bf16.mxu0 0
      %1256 = vmatpush1.bf16.msra.mxu0 0
      %1257 = vmatprep.subr.bf16.mxu0 0
      %1258 = vmatpush1.bf16.msra.mxu0 0
      %1259 = vmatprep.subr.bf16.mxu0 0
      %1260 = vmatpush1.bf16.msra.mxu0 0
      %1261 = vmatprep.subr.bf16.mxu0 0
      %1262 = vmatpush1.bf16.msra.mxu0 0
      %1263 = vmatprep.subr.bf16.mxu0 0
      %1264 = vmatpush1.bf16.msra.mxu0 0
      %1265 = vmatprep.mubr.bf16.mxu0 0
      %1266 = vmatmul.mubr.bf16.gmra.mrb[0].mxu0 %v1222
      %v1267 = vpop.f32.mrb[0].mxu0
      %v1268 = vadd.f32 0.0, %v1267
      %v1269 = vpop.f32.mrb[0].mxu0
      %v1270 = vpop.f32.mrb[0].mxu0
      %v1271 = vadd.f32 0.0, %v1270
      %v1272 = vpop.f32.mrb[0].mxu0
      %1273 = vmatprep.mubr.bf16.mxu0 0
      %1274 = vmatmul.mubr.bf16.gmra.mrb[0].mxu0 %v1225
      %v1275 = vpop.f32.mrb[0].mxu0
      %v1276 = vadd.f32 0.0, %v1275
      %v1277 = vpop.f32.mrb[0].mxu0
      %v1278 = vpop.f32.mrb[0].mxu0
      %v1279 = vadd.f32 0.0, %v1278
      %v1280 = vpop.f32.mrb[0].mxu0
      %1281 = vmatprep.mubr.bf16.mxu0 0
      %1282 = vmatmul.mubr.bf16.gmra.mrb[0].mxu0 %v1228
      %v1283 = vpop.f32.mrb[0].mxu0
      %v1284 = vadd.f32 0.0, %v1283
      %v1285 = vpop.f32.mrb[0].mxu0
      %v1286 = vpop.f32.mrb[0].mxu0
      %v1287 = vadd.f32 0.0, %v1286
      %v1288 = vpop.f32.mrb[0].mxu0
      %1289 = vmatprep.mubr.bf16.mxu0 0
      %1290 = vmatmul.mubr.bf16.gmra.mrb[0].mxu0 %v1231
      %v1291 = vpop.f32.mrb[0].mxu0
      %v1292 = vadd.f32 0.0, %v1291
      %v1293 = vpop.f32.mrb[0].mxu0
      %v1294 = vpop.f32.mrb[0].mxu0
      %v1295 = vadd.f32 0.0, %v1294
      %v1296 = vpop.f32.mrb[0].mxu0
      %1297 = vdwg.mxu0
      %v1298 = vld [vmem:[%s7] sm:$0x3]
      %v1299 = vlaneseq
      %v1300 = vshrl.u32 %v1299, 7
      %v1301 = vsub.s32 0, %v1300
      %v1302 = vrot.slane %v1298, %v1301
      %v1303 = vmul.f32 %v1268, %v1302
      %v1304 = vmul.f32 %v1271, %v1302
      %v1305 = vmul.f32 %v1276, %v1302
      %v1306 = vmul.f32 %v1279, %v1302
      %v1307 = vmul.f32 %v1284, %v1302
      %v1308 = vmul.f32 %v1287, %v1302
      %v1309 = vmul.f32 %v1292, %v1302
      %v1310 = vmul.f32 %v1295, %v1302
      %v1311 = vlaneseq
      %v1312 = vshrl.u32 %v1311, 7
      %v1313 = vsub.s32 1, %v1312
      %v1314 = vrot.slane %v1298, %v1313
      %v1315 = vadd.f32 %v1303, %v1314
      %v1316 = vadd.f32 %v1304, %v1314
      %v1317 = vadd.f32 %v1305, %v1314
      %v1318 = vadd.f32 %v1306, %v1314
      %v1319 = vadd.f32 %v1307, %v1314
      %v1320 = vadd.f32 %v1308, %v1314
      %v1321 = vadd.f32 %v1309, %v1314
      %v1322 = vadd.f32 %v1310, %v1314
      %v1323 = vmax.f32 %v1315, 0.0
      %v1324 = vmax.f32 %v1316, 0.0
      %v1325 = vmax.f32 %v1317, 0.0
      %v1326 = vmax.f32 %v1318, 0.0
      %v1327 = vmax.f32 %v1319, 0.0
      %v1328 = vmax.f32 %v1320, 0.0
      %v1329 = vmax.f32 %v1321, 0.0
      %v1330 = vmax.f32 %v1322, 0.0
      %v1331 = vsel %vm983, %v1323, 0.0
      %v1332 = vsel %vm983, %v1324, 0.0
      %v1333 = vadd.f32 %v1331, %v1332
      %v1334 = vsel %vm983, %v1325, 0.0
      %v1335 = vadd.f32 %v1333, %v1334
      %v1336 = vsel %vm983, %v1326, 0.0
      %v1337 = vadd.f32 %v1335, %v1336
      %v1338 = vsel %vm983, %v1327, 0.0
      %v1339 = vadd.f32 %v1337, %v1338
      %v1340 = vsel %vm983, %v1328, 0.0
      %v1341 = vadd.f32 %v1339, %v1340
      %v1342 = vsel %vm983, %v1329, 0.0
      %v1343 = vadd.f32 %v1341, %v1342
      %v1344 = vsel %vm983, %v1330, 0.0
      %v1345 = vadd.f32 %v1343, %v1344
      %v1346 = vrot.slane %v1345, 4
      %v1347 = vadd.f32 %v1345, %v1346
      %v1348 = vrot.slane %v1347, 2
      %v1349 = vadd.f32 %v1347, %v1348
      %v1350 = vrot.slane %v1349, 1
      %v1351 = vadd.f32 %v1349, %v1350
      %v1352 = vrcp.pop 64.0
      %v1353 = vmul.f32 %v1351, %v1352
      %v1354 = vld [vmem:[%s671] sm:$0xff]
      %v1355 = vld [vmem:[%s671 + $0x8] sm:$0xff]
      %v1356 = vld [vmem:[%s671 + $0x10] sm:$0x3]
      %v1357 = vld [vmem:[%s671 + $0x18] sm:$0xff]
      %v1358 = vld [vmem:[%s671 + $0x20] sm:$0xff]
      %v1359 = vld [vmem:[%s671 + $0x28] sm:$0x3]
      %v1360 = vld [vmem:[%s671 + $0x30] sm:$0xff]
      %v1361 = vld [vmem:[%s671 + $0x38] sm:$0xff]
      %v1362 = vld [vmem:[%s671 + $0x40] sm:$0x3]
      %v1363 = vld [vmem:[%s671 + $0x48] sm:$0xff]
      %v1364 = vld [vmem:[%s671 + $0x50] sm:$0xff]
      %v1365 = vld [vmem:[%s671 + $0x58] sm:$0x3]
      %v1366 = vld [vmem:[%s671 + $0x60] sm:$0xff]
      %v1367 = vld [vmem:[%s671 + $0x68] sm:$0xff]
      %v1368 = vld [vmem:[%s671 + $0x70] sm:$0x3]
      %v1369 = vld [vmem:[%s671 + $0x78] sm:$0xff]
      %v1370 = vld [vmem:[%s671 + $0x80] sm:$0xff]
      %v1371 = vld [vmem:[%s671 + $0x88] sm:$0x3]
      %v1372 = vld [vmem:[%s671 + $0x90] sm:$0xff]
      %v1373 = vld [vmem:[%s671 + $0x98] sm:$0xff]
      %v1374 = vld [vmem:[%s671 + $0xa0] sm:$0x3]
      %v1375 = vld [vmem:[%s671 + $0xa8] sm:$0xff]
      %v1376 = vld [vmem:[%s671 + $0xb0] sm:$0xff]
      %v1377 = vld [vmem:[%s671 + $0xb8] sm:$0x3]
      %v1378 = vld [vmem:[%s671 + $0xc0] sm:$0xff]
      %v1379 = vld [vmem:[%s671 + $0xc8] sm:$0xff]
      %v1380 = vld [vmem:[%s671 + $0xd0] sm:$0x3]
      %v1381 = vld [vmem:[%s671 + $0xd8] sm:$0xff]
      %v1382 = vld [vmem:[%s671 + $0xe0] sm:$0xff]
      %v1383 = vld [vmem:[%s671 + $0xe8] sm:$0x3]
      %v1384 = vld [vmem:[%s671 + $0xf0] sm:$0xff]
      %v1385 = vld [vmem:[%s671 + $0xf8] sm:$0xff]
      %v1386 = vld [vmem:[%s671 + $0x100] sm:$0x3]
      %v1387 = vld [vmem:[%s671 + $0x108] sm:$0xff]
      %v1388 = vld [vmem:[%s671 + $0x110] sm:$0xff]
      %v1389 = vld [vmem:[%s671 + $0x118] sm:$0x3]
      %v1390 = vld [vmem:[%s671 + $0x120] sm:$0xff]
      %v1391 = vld [vmem:[%s671 + $0x128] sm:$0xff]
      %v1392 = vld [vmem:[%s671 + $0x130] sm:$0x3]
      %v1393 = vld [vmem:[%s671 + $0x138] sm:$0xff]
      %v1394 = vld [vmem:[%s671 + $0x140] sm:$0xff]
      %v1395 = vld [vmem:[%s671 + $0x148] sm:$0x3]
      %v1396 = vld [vmem:[%s671 + $0x150] sm:$0xff]
      %v1397 = vld [vmem:[%s671 + $0x158] sm:$0xff]
      %v1398 = vld [vmem:[%s671 + $0x160] sm:$0x3]
      %v1399 = vld [vmem:[%s671 + $0x168] sm:$0xff]
      %v1400 = vld [vmem:[%s671 + $0x170] sm:$0xff]
      %v1401 = vld [vmem:[%s671 + $0x178] sm:$0x3]
      %v1402 = vld [vmem:[%s671 + $0x180] sm:$0xff]
      %v1403 = vld [vmem:[%s671 + $0x188] sm:$0xff]
      %v1404 = vld [vmem:[%s671 + $0x190] sm:$0x3]
      %v1405 = vld [vmem:[%s671 + $0x198] sm:$0xff]
      %v1406 = vld [vmem:[%s671 + $0x1a0] sm:$0xff]
      %v1407 = vld [vmem:[%s671 + $0x1a8] sm:$0x3]
      %v1456 = vrot.slane %v1357, 1
      %v1457 = vrot.slane %v1358, 1
      %v1458 = vsel %vm732, %v1456, %v1457
      %v1459 = vrot.slane %v1359, 1
      %v1460 = vsel %vm732, %v1457, %v1459
      %v1461 = vrot.slane %v1360, 1
      %v1462 = vrot.slane %v1361, 1
      %v1463 = vsel %vm732, %v1461, %v1462
      %v1464 = vrot.slane %v1362, 1
      %v1465 = vsel %vm732, %v1462, %v1464
      %v1466 = vrot.slane %v1363, 1
      %v1467 = vrot.slane %v1364, 1
      %v1468 = vsel %vm732, %v1466, %v1467
      %v1469 = vrot.slane %v1365, 1
      %v1470 = vsel %vm732, %v1467, %v1469
      %v1471 = vrot.slane %v1366, 1
      %v1472 = vrot.slane %v1367, 1
      %v1473 = vsel %vm732, %v1471, %v1472
      %v1474 = vrot.slane %v1368, 1
      %v1475 = vsel %vm732, %v1472, %v1474
      %v1476 = vrot.slane %v1369, 1
      %v1477 = vrot.slane %v1370, 1
      %v1478 = vsel %vm732, %v1476, %v1477
      %v1479 = vrot.slane %v1371, 1
      %v1480 = vsel %vm732, %v1477, %v1479
      %v1481 = vrot.slane %v1372, 1
      %v1482 = vrot.slane %v1373, 1
      %v1483 = vsel %vm732, %v1481, %v1482
      %v1484 = vrot.slane %v1374, 1
      %v1485 = vsel %vm732, %v1482, %v1484
      %v1486 = vrot.slane %v1375, 1
      %v1487 = vrot.slane %v1376, 1
      %v1488 = vsel %vm732, %v1486, %v1487
      %v1489 = vrot.slane %v1377, 1
      %v1490 = vsel %vm732, %v1487, %v1489
      %v1491 = vrot.slane %v1378, 1
      %v1492 = vrot.slane %v1379, 1
      %v1493 = vsel %vm732, %v1491, %v1492
      %v1494 = vrot.slane %v1380, 1
      %v1495 = vsel %vm732, %v1492, %v1494
      %v1496 = vrot.slane %v1381, 1
      %v1497 = vrot.slane %v1382, 1
      %v1498 = vsel %vm732, %v1496, %v1497
      %v1499 = vrot.slane %v1383, 1
      %v1500 = vsel %vm732, %v1497, %v1499
      %v1501 = vrot.slane %v1384, 1
      %v1502 = vrot.slane %v1385, 1
      %v1503 = vsel %vm732, %v1501, %v1502
      %v1504 = vrot.slane %v1386, 1
      %v1505 = vsel %vm732, %v1502, %v1504
      %v1506 = vrot.slane %v1387, 1
      %v1507 = vrot.slane %v1388, 1
      %v1508 = vsel %vm732, %v1506, %v1507
      %v1509 = vrot.slane %v1389, 1
      %v1510 = vsel %vm732, %v1507, %v1509
      %v1511 = vrot.slane %v1390, 1
      %v1512 = vrot.slane %v1391, 1
      %v1513 = vsel %vm732, %v1511, %v1512
      %v1514 = vrot.slane %v1392, 1
      %v1515 = vsel %vm732, %v1512, %v1514
      %v1516 = vrot.slane %v1393, 1
      %v1517 = vrot.slane %v1394, 1
      %v1518 = vsel %vm732, %v1516, %v1517
      %v1519 = vrot.slane %v1395, 1
      %v1520 = vsel %vm732, %v1517, %v1519
      %v1521 = vrot.slane %v1396, 1
      %v1522 = vrot.slane %v1397, 1
      %v1523 = vsel %vm732, %v1521, %v1522
      %v1524 = vrot.slane %v1398, 1
      %v1525 = vsel %vm732, %v1522, %v1524
      %v1526 = vrot.slane %v1399, 1
      %v1527 = vrot.slane %v1400, 1
      %v1528 = vsel %vm732, %v1526, %v1527
      %v1529 = vrot.slane %v1401, 1
      %v1530 = vsel %vm732, %v1527, %v1529
      %v1531 = vrot.slane %v1402, 1
      %v1532 = vrot.slane %v1403, 1
      %v1533 = vsel %vm732, %v1531, %v1532
      %v1534 = vrot.slane %v1404, 1
      %v1535 = vsel %vm732, %v1532, %v1534
      %v1568 = vsel %vm983, %v1458, 0.0
      %v1569 = vsel %vm983, %v1460, 0.0
      %v1570 = vadd.f32 %v1568, %v1569
      %v1571 = vsel %vm983, %v1463, 0.0
      %v1572 = vadd.f32 %v1570, %v1571
      %v1573 = vsel %vm983, %v1465, 0.0
      %v1574 = vadd.f32 %v1572, %v1573
      %v1575 = vsel %vm983, %v1468, 0.0
      %v1576 = vadd.f32 %v1574, %v1575
      %v1577 = vsel %vm983, %v1470, 0.0
      %v1578 = vadd.f32 %v1576, %v1577
      %v1579 = vsel %vm983, %v1473, 0.0
      %v1580 = vadd.f32 %v1578, %v1579
      %v1581 = vsel %vm983, %v1475, 0.0
      %v1582 = vadd.f32 %v1580, %v1581
      %v1583 = vsel %vm983, %v1478, 0.0
      %v1584 = vadd.f32 %v1582, %v1583
      %v1585 = vsel %vm983, %v1480, 0.0
      %v1586 = vadd.f32 %v1584, %v1585
      %v1587 = vsel %vm983, %v1483, 0.0
      %v1588 = vadd.f32 %v1586, %v1587
      %v1589 = vsel %vm983, %v1485, 0.0
      %v1590 = vadd.f32 %v1588, %v1589
      %v1591 = vsel %vm983, %v1488, 0.0
      %v1592 = vadd.f32 %v1590, %v1591
      %v1593 = vsel %vm983, %v1490, 0.0
      %v1594 = vadd.f32 %v1592, %v1593
      %v1595 = vsel %vm983, %v1493, 0.0
      %v1596 = vadd.f32 %v1594, %v1595
      %v1597 = vsel %vm983, %v1495, 0.0
      %v1598 = vadd.f32 %v1596, %v1597
      %v1599 = vsel %vm983, %v1498, 0.0
      %v1600 = vadd.f32 %v1598, %v1599
      %v1601 = vsel %vm983, %v1500, 0.0
      %v1602 = vadd.f32 %v1600, %v1601
      %v1603 = vsel %vm983, %v1503, 0.0
      %v1604 = vadd.f32 %v1602, %v1603
      %v1605 = vsel %vm983, %v1505, 0.0
      %v1606 = vadd.f32 %v1604, %v1605
      %v1607 = vsel %vm983, %v1508, 0.0
      %v1608 = vadd.f32 %v1606, %v1607
      %v1609 = vsel %vm983, %v1510, 0.0
      %v1610 = vadd.f32 %v1608, %v1609
      %v1611 = vsel %vm983, %v1513, 0.0
      %v1612 = vadd.f32 %v1610, %v1611
      %v1613 = vsel %vm983, %v1515, 0.0
      %v1614 = vadd.f32 %v1612, %v1613
      %v1615 = vsel %vm983, %v1518, 0.0
      %v1616 = vadd.f32 %v1614, %v1615
      %v1617 = vsel %vm983, %v1520, 0.0
      %v1618 = vadd.f32 %v1616, %v1617
      %v1619 = vsel %vm983, %v1523, 0.0
      %v1620 = vadd.f32 %v1618, %v1619
      %v1621 = vsel %vm983, %v1525, 0.0
      %v1622 = vadd.f32 %v1620, %v1621
      %v1623 = vsel %vm983, %v1528, 0.0
      %v1624 = vadd.f32 %v1622, %v1623
      %v1625 = vsel %vm983, %v1530, 0.0
      %v1626 = vadd.f32 %v1624, %v1625
      %v1627 = vsel %vm983, %v1533, 0.0
      %v1628 = vadd.f32 %v1626, %v1627
      %v1629 = vsel %vm983, %v1535, 0.0
      %v1630 = vadd.f32 %v1628, %v1629
      %v1631 = vrot.slane %v1630, 4
      %v1632 = vadd.f32 %v1630, %v1631
      %v1633 = vrot.slane %v1632, 2
      %v1634 = vadd.f32 %v1632, %v1633
      %v1635 = vrot.slane %v1634, 1
      %v1636 = vadd.f32 %v1634, %v1635
      %v1637 = vrcp.pop 256.0
      %v1638 = vmul.f32 %v1636, %v1637
      %v1639 = vld [vmem:[%s8] sm:$0xff]
      %v1640 = vld [vmem:[%s8 + $0x8] sm:$0xff]
      %v1641 = vld [vmem:[%s8 + $0x10] sm:$0xff]
      %v1642 = vld [vmem:[%s8 + $0x18] sm:$0xff]
      %v1643 = vld [vmem:[%s9] sm:$0x1]
      %v1645 = vsel %vm983, %v1353, 0
      %1647 = vmatprep.subr.mxu0 0.0
      %1648 = vmatpush1.msra.mxu0 %v1639
      %1649 = vmatprep.subr.mxu0 0.0
      %1650 = vmatpush1.msra.mxu0 %v1640
      %1651 = vmatprep.subr.mxu0 0.0
      %1652 = vmatpush1.msra.mxu0 %v1641
      %1653 = vmatprep.subr.mxu0 0.0
      %1654 = vmatpush1.msra.mxu0 %v1642
      %1655 = vmatprep.subr.mxu0 0.0
      %1656 = vmatpush1.msra.mxu0 0.0
      %1657 = vmatprep.subr.mxu0 0.0
      %1658 = vmatpush1.msra.mxu0 0.0
      %1659 = vmatprep.subr.mxu0 0.0
      %1660 = vmatpush1.msra.mxu0 0.0
      %1661 = vmatprep.subr.mxu0 0.0
      %1662 = vmatpush1.msra.mxu0 0.0
      %1663 = vmatprep.subr.mxu0 0.0
      %1664 = vmatpush1.msra.mxu0 0.0
      %1665 = vmatprep.subr.mxu0 0.0
      %1666 = vmatpush1.msra.mxu0 0.0
      %1667 = vmatprep.subr.mxu0 0.0
      %1668 = vmatpush1.msra.mxu0 0.0
      %1669 = vmatprep.subr.mxu0 0.0
      %1670 = vmatpush1.msra.mxu0 0.0
      %1671 = vmatprep.subr.mxu0 0.0
      %1672 = vmatpush1.msra.mxu0 0.0
      %1673 = vmatprep.subr.mxu0 0.0
      %1674 = vmatpush1.msra.mxu0 0.0
      %1675 = vmatprep.subr.mxu0 0.0
      %1676 = vmatpush1.msra.mxu0 0.0
      %1677 = vmatprep.subr.mxu0 0.0
      %1678 = vmatpush1.msra.mxu0 0.0
      %1679 = vmatprep.subr.mxu0 0.0
      %1680 = vmatpush1.msra.mxu0 0.0
      %1681 = vmatprep.subr.mxu0 0.0
      %1682 = vmatpush1.msra.mxu0 0.0
      %1683 = vmatprep.subr.mxu0 0.0
      %1684 = vmatpush1.msra.mxu0 0.0
      %1685 = vmatprep.subr.mxu0 0.0
      %1686 = vmatpush1.msra.mxu0 0.0
      %1687 = vmatprep.subr.mxu0 0.0
      %1688 = vmatpush1.msra.mxu0 0.0
      %1689 = vmatprep.subr.mxu0 0.0
      %1690 = vmatpush1.msra.mxu0 0.0
      %1691 = vmatprep.subr.mxu0 0.0
      %1692 = vmatpush1.msra.mxu0 0.0
      %1693 = vmatprep.subr.mxu0 0.0
      %1694 = vmatpush1.msra.mxu0 0.0
      %1695 = vmatprep.subr.mxu0 0.0
      %1696 = vmatpush1.msra.mxu0 0.0
      %1697 = vmatprep.subr.mxu0 0.0
      %1698 = vmatpush1.msra.mxu0 0.0
      %1699 = vmatprep.subr.mxu0 0.0
      %1700 = vmatpush1.msra.mxu0 0.0
      %1701 = vmatprep.subr.mxu0 0.0
      %1702 = vmatpush1.msra.mxu0 0.0
      %1703 = vmatprep.subr.mxu0 0.0
      %1704 = vmatpush1.msra.mxu0 0.0
      %1705 = vmatprep.subr.mxu0 0.0
      %1706 = vmatpush1.msra.mxu0 0.0
      %1707 = vmatprep.subr.mxu0 0.0
      %1708 = vmatpush1.msra.mxu0 0.0
      %1709 = vmatprep.subr.mxu0 0.0
      %1710 = vmatpush1.msra.mxu0 0.0
      %1711 = vmatprep.mubr.f32.mxu0 0.0
      %1712 = vmatmul.mubr.f32.gmra.mrb[0].mxu0 %v1645
      %v1713 = vpop.f32.mrb[0].mxu0
      %v1714 = vadd.f32 %v1643, %v1713
      %v1715 = vpop.f32.mrb[0].mxu0
      %1716 = vdwg.mxu0
      %v1717 = vmax.f32 %v1714, 0.0
      %v1718 = vld [vmem:[%s10] sm:$0x3]
      %v1719 = vld [vmem:[%s11] sm:$0x1]
      %vm1720 = vcmask 15360
      %v1722 = vsel %vm1720, %v1717, 0
      %vm1724 = vcmask 1041408
      %v1726 = vsel %vm1724, %v1718, 0
      %1728 = vmatprep.subr.mxu0 0.0
      %1729 = vmatpush1.msra.mxu0 %v1726
      %1730 = vmatprep.subr.mxu0 0.0
      %1731 = vmatpush1.msra.mxu0 0.0
      %1732 = vmatprep.subr.mxu0 0.0
      %1733 = vmatpush1.msra.mxu0 0.0
      %1734 = vmatprep.subr.mxu0 0.0
      %1735 = vmatpush1.msra.mxu0 0.0
      %1736 = vmatprep.subr.mxu0 0.0
      %1737 = vmatpush1.msra.mxu0 0.0
      %1738 = vmatprep.subr.mxu0 0.0
      %1739 = vmatpush1.msra.mxu0 0.0
      %1740 = vmatprep.subr.mxu0 0.0
      %1741 = vmatpush1.msra.mxu0 0.0
      %1742 = vmatprep.subr.mxu0 0.0
      %1743 = vmatpush1.msra.mxu0 0.0
      %1744 = vmatprep.subr.mxu0 0.0
      %1745 = vmatpush1.msra.mxu0 0.0
      %1746 = vmatprep.subr.mxu0 0.0
      %1747 = vmatpush1.msra.mxu0 0.0
      %1748 = vmatprep.subr.mxu0 0.0
      %1749 = vmatpush1.msra.mxu0 0.0
      %1750 = vmatprep.subr.mxu0 0.0
      %1751 = vmatpush1.msra.mxu0 0.0
      %1752 = vmatprep.subr.mxu0 0.0
      %1753 = vmatpush1.msra.mxu0 0.0
      %1754 = vmatprep.subr.mxu0 0.0
      %1755 = vmatpush1.msra.mxu0 0.0
      %1756 = vmatprep.subr.mxu0 0.0
      %1757 = vmatpush1.msra.mxu0 0.0
      %1758 = vmatprep.subr.mxu0 0.0
      %1759 = vmatpush1.msra.mxu0 0.0
      %1760 = vmatprep.subr.mxu0 0.0
      %1761 = vmatpush1.msra.mxu0 0.0
      %1762 = vmatprep.subr.mxu0 0.0
      %1763 = vmatpush1.msra.mxu0 0.0
      %1764 = vmatprep.subr.mxu0 0.0
      %1765 = vmatpush1.msra.mxu0 0.0
      %1766 = vmatprep.subr.mxu0 0.0
      %1767 = vmatpush1.msra.mxu0 0.0
      %1768 = vmatprep.subr.mxu0 0.0
      %1769 = vmatpush1.msra.mxu0 0.0
      %1770 = vmatprep.subr.mxu0 0.0
      %1771 = vmatpush1.msra.mxu0 0.0
      %1772 = vmatprep.subr.mxu0 0.0
      %1773 = vmatpush1.msra.mxu0 0.0
      %1774 = vmatprep.subr.mxu0 0.0
      %1775 = vmatpush1.msra.mxu0 0.0
      %1776 = vmatprep.subr.mxu0 0.0
      %1777 = vmatpush1.msra.mxu0 0.0
      %1778 = vmatprep.subr.mxu0 0.0
      %1779 = vmatpush1.msra.mxu0 0.0
      %1780 = vmatprep.subr.mxu0 0.0
      %1781 = vmatpush1.msra.mxu0 0.0
      %1782 = vmatprep.subr.mxu0 0.0
      %1783 = vmatpush1.msra.mxu0 0.0
      %1784 = vmatprep.subr.mxu0 0.0
      %1785 = vmatpush1.msra.mxu0 0.0
      %1786 = vmatprep.subr.mxu0 0.0
      %1787 = vmatpush1.msra.mxu0 0.0
      %1788 = vmatprep.subr.mxu0 0.0
      %1789 = vmatpush1.msra.mxu0 0.0
      %1790 = vmatprep.subr.mxu0 0.0
      %1791 = vmatpush1.msra.mxu0 0.0
      %1792 = vmatprep.mubr.f32.mxu0 0.0
      %1793 = vmatmul.mubr.f32.gmra.mrb[0].mxu0 %v1722
      %v1794 = vpop.f32.mrb[0].mxu0
      %v1795 = vadd.f32 %v1719, %v1794
      %v1796 = vpop.f32.mrb[0].mxu0
      %1797 = vdwg.mxu0
      %v1798 = vxor.u32 %v1795, 2147483648
      %v1799 = vmul.f32 %v1798, 1.442695
      %v1800 = vpow.pop %v1799
      %v1801 = vadd.f32 %v1800, 1.0
      %v1802 = vrcp.pop %v1801
      %v1803 = vmul.f32 1.0, %v1802
      %v1804 = vld [vmem:[%s12] sm:$0xff]
      %v1805 = vld [vmem:[%s12 + $0x8] sm:$0xff]
      %v1806 = vld [vmem:[%s12 + $0x10] sm:$0xff]
      %v1807 = vld [vmem:[%s12 + $0x18] sm:$0xff]
      %v1808 = vld [vmem:[%s13] sm:$0x1]
      %v1810 = vsel %vm983, %v1638, 0
      %1812 = vmatprep.subr.mxu0 0.0
      %1813 = vmatpush1.msra.mxu0 %v1804
      %1814 = vmatprep.subr.mxu0 0.0
      %1815 = vmatpush1.msra.mxu0 %v1805
      %1816 = vmatprep.subr.mxu0 0.0
      %1817 = vmatpush1.msra.mxu0 %v1806
      %1818 = vmatprep.subr.mxu0 0.0
      %1819 = vmatpush1.msra.mxu0 %v1807
      %1820 = vmatprep.subr.mxu0 0.0
      %1821 = vmatpush1.msra.mxu0 0.0
      %1822 = vmatprep.subr.mxu0 0.0
      %1823 = vmatpush1.msra.mxu0 0.0
      %1824 = vmatprep.subr.mxu0 0.0
      %1825 = vmatpush1.msra.mxu0 0.0
      %1826 = vmatprep.subr.mxu0 0.0
      %1827 = vmatpush1.msra.mxu0 0.0
      %1828 = vmatprep.subr.mxu0 0.0
      %1829 = vmatpush1.msra.mxu0 0.0
      %1830 = vmatprep.subr.mxu0 0.0
      %1831 = vmatpush1.msra.mxu0 0.0
      %1832 = vmatprep.subr.mxu0 0.0
      %1833 = vmatpush1.msra.mxu0 0.0
      %1834 = vmatprep.subr.mxu0 0.0
      %1835 = vmatpush1.msra.mxu0 0.0
      %1836 = vmatprep.subr.mxu0 0.0
      %1837 = vmatpush1.msra.mxu0 0.0
      %1838 = vmatprep.subr.mxu0 0.0
      %1839 = vmatpush1.msra.mxu0 0.0
      %1840 = vmatprep.subr.mxu0 0.0
      %1841 = vmatpush1.msra.mxu0 0.0
      %1842 = vmatprep.subr.mxu0 0.0
      %1843 = vmatpush1.msra.mxu0 0.0
      %1844 = vmatprep.subr.mxu0 0.0
      %1845 = vmatpush1.msra.mxu0 0.0
      %1846 = vmatprep.subr.mxu0 0.0
      %1847 = vmatpush1.msra.mxu0 0.0
      %1848 = vmatprep.subr.mxu0 0.0
      %1849 = vmatpush1.msra.mxu0 0.0
      %1850 = vmatprep.subr.mxu0 0.0
      %1851 = vmatpush1.msra.mxu0 0.0
      %1852 = vmatprep.subr.mxu0 0.0
      %1853 = vmatpush1.msra.mxu0 0.0
      %1854 = vmatprep.subr.mxu0 0.0
      %1855 = vmatpush1.msra.mxu0 0.0
      %1856 = vmatprep.subr.mxu0 0.0
      %1857 = vmatpush1.msra.mxu0 0.0
      %1858 = vmatprep.subr.mxu0 0.0
      %1859 = vmatpush1.msra.mxu0 0.0
      %1860 = vmatprep.subr.mxu0 0.0
      %1861 = vmatpush1.msra.mxu0 0.0
      %1862 = vmatprep.subr.mxu0 0.0
      %1863 = vmatpush1.msra.mxu0 0.0
      %1864 = vmatprep.subr.mxu0 0.0
      %1865 = vmatpush1.msra.mxu0 0.0
      %1866 = vmatprep.subr.mxu0 0.0
      %1867 = vmatpush1.msra.mxu0 0.0
      %1868 = vmatprep.subr.mxu0 0.0
      %1869 = vmatpush1.msra.mxu0 0.0
      %1870 = vmatprep.subr.mxu0 0.0
      %1871 = vmatpush1.msra.mxu0 0.0
      %1872 = vmatprep.subr.mxu0 0.0
      %1873 = vmatpush1.msra.mxu0 0.0
      %1874 = vmatprep.subr.mxu0 0.0
      %1875 = vmatpush1.msra.mxu0 0.0
      %1876 = vmatprep.mubr.f32.mxu0 0.0
      %1877 = vmatmul.mubr.f32.gmra.mrb[0].mxu0 %v1810
      %v1878 = vpop.f32.mrb[0].mxu0
      %v1879 = vadd.f32 %v1808, %v1878
      %v1880 = vpop.f32.mrb[0].mxu0
      %1881 = vdwg.mxu0
      %v1882 = vmax.f32 %v1879, 0.0
      %v1883 = vld [vmem:[%s14] sm:$0x3]
      %v1884 = vld [vmem:[%s15] sm:$0x1]
      %v1886 = vsel %vm1720, %v1882, 0
      %v1889 = vsel %vm1724, %v1883, 0
      %1891 = vmatprep.subr.mxu0 0.0
      %1892 = vmatpush1.msra.mxu0 %v1889
      %1893 = vmatprep.subr.mxu0 0.0
      %1894 = vmatpush1.msra.mxu0 0.0
      %1895 = vmatprep.subr.mxu0 0.0
      %1896 = vmatpush1.msra.mxu0 0.0
      %1897 = vmatprep.subr.mxu0 0.0
      %1898 = vmatpush1.msra.mxu0 0.0
      %1899 = vmatprep.subr.mxu0 0.0
      %1900 = vmatpush1.msra.mxu0 0.0
      %1901 = vmatprep.subr.mxu0 0.0
      %1902 = vmatpush1.msra.mxu0 0.0
      %1903 = vmatprep.subr.mxu0 0.0
      %1904 = vmatpush1.msra.mxu0 0.0
      %1905 = vmatprep.subr.mxu0 0.0
      %1906 = vmatpush1.msra.mxu0 0.0
      %1907 = vmatprep.subr.mxu0 0.0
      %1908 = vmatpush1.msra.mxu0 0.0
      %1909 = vmatprep.subr.mxu0 0.0
      %1910 = vmatpush1.msra.mxu0 0.0
      %1911 = vmatprep.subr.mxu0 0.0
      %1912 = vmatpush1.msra.mxu0 0.0
      %1913 = vmatprep.subr.mxu0 0.0
      %1914 = vmatpush1.msra.mxu0 0.0
      %1915 = vmatprep.subr.mxu0 0.0
      %1916 = vmatpush1.msra.mxu0 0.0
      %1917 = vmatprep.subr.mxu0 0.0
      %1918 = vmatpush1.msra.mxu0 0.0
      %1919 = vmatprep.subr.mxu0 0.0
      %1920 = vmatpush1.msra.mxu0 0.0
      %1921 = vmatprep.subr.mxu0 0.0
      %1922 = vmatpush1.msra.mxu0 0.0
      %1923 = vmatprep.subr.mxu0 0.0
      %1924 = vmatpush1.msra.mxu0 0.0
      %1925 = vmatprep.subr.mxu0 0.0
      %1926 = vmatpush1.msra.mxu0 0.0
      %1927 = vmatprep.subr.mxu0 0.0
      %1928 = vmatpush1.msra.mxu0 0.0
      %1929 = vmatprep.subr.mxu0 0.0
      %1930 = vmatpush1.msra.mxu0 0.0
      %1931 = vmatprep.subr.mxu0 0.0
      %1932 = vmatpush1.msra.mxu0 0.0
      %1933 = vmatprep.subr.mxu0 0.0
      %1934 = vmatpush1.msra.mxu0 0.0
      %1935 = vmatprep.subr.mxu0 0.0
      %1936 = vmatpush1.msra.mxu0 0.0
      %1937 = vmatprep.subr.mxu0 0.0
      %1938 = vmatpush1.msra.mxu0 0.0
      %1939 = vmatprep.subr.mxu0 0.0
      %1940 = vmatpush1.msra.mxu0 0.0
      %1941 = vmatprep.subr.mxu0 0.0
      %1942 = vmatpush1.msra.mxu0 0.0
      %1943 = vmatprep.subr.mxu0 0.0
      %1944 = vmatpush1.msra.mxu0 0.0
      %1945 = vmatprep.subr.mxu0 0.0
      %1946 = vmatpush1.msra.mxu0 0.0
      %1947 = vmatprep.subr.mxu0 0.0
      %1948 = vmatpush1.msra.mxu0 0.0
      %1949 = vmatprep.subr.mxu0 0.0
      %1950 = vmatpush1.msra.mxu0 0.0
      %1951 = vmatprep.subr.mxu0 0.0
      %1952 = vmatpush1.msra.mxu0 0.0
      %1953 = vmatprep.subr.mxu0 0.0
      %1954 = vmatpush1.msra.mxu0 0.0
      %1955 = vmatprep.mubr.f32.mxu0 0.0
      %1956 = vmatmul.mubr.f32.gmra.mrb[0].mxu0 %v1886
      %v1957 = vpop.f32.mrb[0].mxu0
      %v1958 = vadd.f32 %v1884, %v1957
      %v1959 = vpop.f32.mrb[0].mxu0
      %1960 = vdwg.mxu0
      %v1961 = vxor.u32 %v1958, 2147483648
      %v1962 = vmul.f32 %v1961, 1.442695
      %v1963 = vpow.pop %v1962
      %v1964 = vadd.f32 %v1963, 1.0
      %v1965 = vrcp.pop %v1964
      %v1966 = vmul.f32 1.0, %v1965
      %v1967 = vadd.f32 %v1803, %v1966
      %v1968 = vld [vmem:[%s2] sm:$0xff]
      %v1969 = vld [vmem:[%s2 + $0x8] sm:$0xff]
      %v1970 = vld [vmem:[%s2 + $0x10] sm:$0xff]
      %v1971 = vld [vmem:[%s2 + $0x18] sm:$0xff]
      %v1972 = vld [vmem:[%s2 + $0x20] sm:$0xff]
      %v1973 = vld [vmem:[%s2 + $0x28] sm:$0xff]
      %v1974 = vld [vmem:[%s2 + $0x30] sm:$0xff]
      %v1975 = vld [vmem:[%s2 + $0x38] sm:$0xff]
      %v1976 = vld [vmem:[%s2 + $0x40] sm:$0xff]
      %v1977 = vld [vmem:[%s2 + $0x48] sm:$0xff]
      %v1978 = vld [vmem:[%s2 + $0x50] sm:$0xff]
      %v1979 = vld [vmem:[%s2 + $0x58] sm:$0xff]
      %v1980 = vld [vmem:[%s2 + $0x60] sm:$0xff]
      %v1981 = vld [vmem:[%s2 + $0x68] sm:$0xff]
      %v1982 = vld [vmem:[%s2 + $0x70] sm:$0xff]
      %v1983 = vld [vmem:[%s2 + $0x78] sm:$0xff]
      %v1984 = vld [vmem:[%s2 + $0x80] sm:$0xff]
      %v1985 = vld [vmem:[%s2 + $0x88] sm:$0xff]
      %v1986 = vld [vmem:[%s2 + $0x90] sm:$0xff]
      %v1987 = vld [vmem:[%s2 + $0x98] sm:$0xff]
      %v1988 = vld [vmem:[%s2 + $0xa0] sm:$0xff]
      %v1989 = vld [vmem:[%s2 + $0xa8] sm:$0xff]
      %v1990 = vld [vmem:[%s2 + $0xb0] sm:$0xff]
      %v1991 = vld [vmem:[%s2 + $0xb8] sm:$0xff]
      %v1992 = vld [vmem:[%s2 + $0xc0] sm:$0xff]
      %v1993 = vld [vmem:[%s2 + $0xc8] sm:$0xff]
      %v1994 = vld [vmem:[%s2 + $0xd0] sm:$0xff]
      %v1995 = vld [vmem:[%s2 + $0xd8] sm:$0xff]
      %v1996 = vld [vmem:[%s2 + $0xe0] sm:$0xff]
      %v1997 = vld [vmem:[%s2 + $0xe8] sm:$0xff]
      %v1998 = vld [vmem:[%s2 + $0xf0] sm:$0xff]
      %v1999 = vld [vmem:[%s2 + $0xf8] sm:$0xff]
      %v2000 = vld [vmem:[%s2 + $0x100] sm:$0xff]
      %v2001 = vld [vmem:[%s2 + $0x108] sm:$0xff]
      %v2002 = vld [vmem:[%s2 + $0x110] sm:$0xff]
      %v2003 = vld [vmem:[%s2 + $0x118] sm:$0xff]
      %v2004 = vld [vmem:[%s2 + $0x120] sm:$0xff]
      %v2005 = vld [vmem:[%s2 + $0x128] sm:$0xff]
      %v2006 = vld [vmem:[%s2 + $0x130] sm:$0xff]
      %v2007 = vld [vmem:[%s2 + $0x138] sm:$0xff]
      %v2008 = vld [vmem:[%s2 + $0x140] sm:$0xf]
      %v2010 = vsel %vm1001, %v1968, 0
      %v2013 = vsel %vm1001, %v1969, 0
      %v2016 = vsel %vm1001, %v1970, 0
      %v2019 = vsel %vm1001, %v1971, 0
      %v2022 = vsel %vm1001, %v1972, 0
      %v2025 = vsel %vm1001, %v1973, 0
      %v2028 = vsel %vm1001, %v1974, 0
      %v2031 = vsel %vm1001, %v1975, 0
      %v2034 = vsel %vm1001, %v1976, 0
      %v2037 = vsel %vm1001, %v1977, 0
      %v2040 = vsel %vm1001, %v1978, 0
      %v2043 = vsel %vm1001, %v1979, 0
      %v2046 = vsel %vm1001, %v1980, 0
      %v2049 = vsel %vm1001, %v1981, 0
      %v2052 = vsel %vm1001, %v1982, 0
      %v2055 = vsel %vm1001, %v1983, 0
      %v2058 = vsel %vm1001, %v1984, 0
      %v2061 = vsel %vm1001, %v1985, 0
      %v2064 = vsel %vm1001, %v1986, 0
      %v2067 = vsel %vm1001, %v1987, 0
      %v2070 = vsel %vm1001, %v1988, 0
      %v2073 = vsel %vm1001, %v1989, 0
      %v2076 = vsel %vm1001, %v1990, 0
      %v2079 = vsel %vm1001, %v1991, 0
      %v2082 = vsel %vm1001, %v1992, 0
      %v2085 = vsel %vm1001, %v1993, 0
      %v2088 = vsel %vm1001, %v1994, 0
      %v2091 = vsel %vm1001, %v1995, 0
      %v2094 = vsel %vm1001, %v1996, 0
      %v2097 = vsel %vm1001, %v1997, 0
      %v2100 = vsel %vm1001, %v1998, 0
      %v2103 = vsel %vm1001, %v1999, 0
      %v2106 = vsel %vm1001, %v2000, 0
      %v2109 = vsel %vm1001, %v2001, 0
      %v2112 = vsel %vm1001, %v2002, 0
      %v2115 = vsel %vm1001, %v2003, 0
      %v2118 = vsel %vm1001, %v2004, 0
      %v2121 = vsel %vm1001, %v2005, 0
      %v2124 = vsel %vm1001, %v2006, 0
      %v2127 = vsel %vm1001, %v2007, 0
      %v2130 = vsel %vm1001, %v2008, 0
      %2132 = vmatprep.subr.mxu0 0.0
      %2133 = vmatpush1.msra.mxu0 %v1323
      %2134 = vmatprep.subr.mxu0 0.0
      %2135 = vmatpush1.msra.mxu0 %v1324
      %2136 = vmatprep.subr.mxu0 0.0
      %2137 = vmatpush1.msra.mxu0 %v1325
      %2138 = vmatprep.subr.mxu0 0.0
      %2139 = vmatpush1.msra.mxu0 %v1326
      %2140 = vmatprep.subr.mxu0 0.0
      %2141 = vmatpush1.msra.mxu0 %v1327
      %2142 = vmatprep.subr.mxu0 0.0
      %2143 = vmatpush1.msra.mxu0 %v1328
      %2144 = vmatprep.subr.mxu0 0.0
      %2145 = vmatpush1.msra.mxu0 %v1329
      %2146 = vmatprep.subr.mxu0 0.0
      %2147 = vmatpush1.msra.mxu0 %v1330
      %2148 = vmatprep.subr.mxu0 0.0
      %2149 = vmatpush1.msra.mxu0 0.0
      %2150 = vmatprep.subr.mxu0 0.0
      %2151 = vmatpush1.msra.mxu0 0.0
      %2152 = vmatprep.subr.mxu0 0.0
      %2153 = vmatpush1.msra.mxu0 0.0
      %2154 = vmatprep.subr.mxu0 0.0
      %2155 = vmatpush1.msra.mxu0 0.0
      %2156 = vmatprep.subr.mxu0 0.0
      %2157 = vmatpush1.msra.mxu0 0.0
      %2158 = vmatprep.subr.mxu0 0.0
      %2159 = vmatpush1.msra.mxu0 0.0
      %2160 = vmatprep.subr.mxu0 0.0
      %2161 = vmatpush1.msra.mxu0 0.0
      %2162 = vmatprep.subr.mxu0 0.0
      %2163 = vmatpush1.msra.mxu0 0.0
      %2164 = vmatprep.subr.mxu0 0.0
      %2165 = vmatpush1.msra.mxu0 0.0
      %2166 = vmatprep.subr.mxu0 0.0
      %2167 = vmatpush1.msra.mxu0 0.0
      %2168 = vmatprep.subr.mxu0 0.0
      %2169 = vmatpush1.msra.mxu0 0.0
      %2170 = vmatprep.subr.mxu0 0.0
      %2171 = vmatpush1.msra.mxu0 0.0
      %2172 = vmatprep.subr.mxu0 0.0
      %2173 = vmatpush1.msra.mxu0 0.0
      %2174 = vmatprep.subr.mxu0 0.0
      %2175 = vmatpush1.msra.mxu0 0.0
      %2176 = vmatprep.subr.mxu0 0.0
      %2177 = vmatpush1.msra.mxu0 0.0
      %2178 = vmatprep.subr.mxu0 0.0
      %2179 = vmatpush1.msra.mxu0 0.0
      %2180 = vmatprep.subr.mxu0 0.0
      %2181 = vmatpush1.msra.mxu0 0.0
      %2182 = vmatprep.subr.mxu0 0.0
      %2183 = vmatpush1.msra.mxu0 0.0
      %2184 = vmatprep.subr.mxu0 0.0
      %2185 = vmatpush1.msra.mxu0 0.0
      %2186 = vmatprep.subr.mxu0 0.0
      %2187 = vmatpush1.msra.mxu0 0.0
      %2188 = vmatprep.subr.mxu0 0.0
      %2189 = vmatpush1.msra.mxu0 0.0
      %2190 = vmatprep.subr.mxu0 0.0
      %2191 = vmatpush1.msra.mxu0 0.0
      %2192 = vmatprep.subr.mxu0 0.0
      %2193 = vmatpush1.msra.mxu0 0.0
      %2194 = vmatprep.subr.mxu0 0.0
      %2195 = vmatpush1.msra.mxu0 0.0
      %2196 = vmatprep.mubr.f32.mxu0 0.0
      %2197 = vmatmul.mubr.f32.gmra.mrb[0].mxu0 %v2010
      %v2198 = vpop.f32.mrb[0].mxu0
      %v2199 = vadd.f32 0.0, %v2198
      %v2200 = vpop.f32.mrb[0].mxu0
      %2201 = vmatprep.mubr.f32.mxu0 0.0
      %2202 = vmatmul.mubr.f32.gmra.mrb[0].mxu0 %v2013
      %v2203 = vpop.f32.mrb[0].mxu0
      %v2204 = vadd.f32 0.0, %v2203
      %v2205 = vpop.f32.mrb[0].mxu0
      %2206 = vmatprep.mubr.f32.mxu0 0.0
      %2207 = vmatmul.mubr.f32.gmra.mrb[0].mxu0 %v2016
      %v2208 = vpop.f32.mrb[0].mxu0
      %v2209 = vadd.f32 0.0, %v2208
      %v2210 = vpop.f32.mrb[0].mxu0
      %2211 = vmatprep.mubr.f32.mxu0 0.0
      %2212 = vmatmul.mubr.f32.gmra.mrb[0].mxu0 %v2019
      %v2213 = vpop.f32.mrb[0].mxu0
      %v2214 = vadd.f32 0.0, %v2213
      %v2215 = vpop.f32.mrb[0].mxu0
      %2216 = vmatprep.mubr.f32.mxu0 0.0
      %2217 = vmatmul.mubr.f32.gmra.mrb[0].mxu0 %v2022
      %v2218 = vpop.f32.mrb[0].mxu0
      %v2219 = vadd.f32 0.0, %v2218
      %v2220 = vpop.f32.mrb[0].mxu0
      %2221 = vmatprep.mubr.f32.mxu0 0.0
      %2222 = vmatmul.mubr.f32.gmra.mrb[0].mxu0 %v2025
      %v2223 = vpop.f32.mrb[0].mxu0
      %v2224 = vadd.f32 0.0, %v2223
      %v2225 = vpop.f32.mrb[0].mxu0
      %2226 = vmatprep.mubr.f32.mxu0 0.0
      %2227 = vmatmul.mubr.f32.gmra.mrb[0].mxu0 %v2028
      %v2228 = vpop.f32.mrb[0].mxu0
      %v2229 = vadd.f32 0.0, %v2228
      %v2230 = vpop.f32.mrb[0].mxu0
      %2231 = vmatprep.mubr.f32.mxu0 0.0
      %2232 = vmatmul.mubr.f32.gmra.mrb[0].mxu0 %v2031
      %v2233 = vpop.f32.mrb[0].mxu0
      %v2234 = vadd.f32 0.0, %v2233
      %v2235 = vpop.f32.mrb[0].mxu0
      %2236 = vmatprep.mubr.f32.mxu0 0.0
      %2237 = vmatmul.mubr.f32.gmra.mrb[0].mxu0 %v2034
      %v2238 = vpop.f32.mrb[0].mxu0
      %v2239 = vadd.f32 0.0, %v2238
      %v2240 = vpop.f32.mrb[0].mxu0
      %2241 = vmatprep.mubr.f32.mxu0 0.0
      %2242 = vmatmul.mubr.f32.gmra.mrb[0].mxu0 %v2037
      %v2243 = vpop.f32.mrb[0].mxu0
      %v2244 = vadd.f32 0.0, %v2243
      %v2245 = vpop.f32.mrb[0].mxu0
      %2246 = vmatprep.mubr.f32.mxu0 0.0
      %2247 = vmatmul.mubr.f32.gmra.mrb[0].mxu0 %v2040
      %v2248 = vpop.f32.mrb[0].mxu0
      %v2249 = vadd.f32 0.0, %v2248
      %v2250 = vpop.f32.mrb[0].mxu0
      %2251 = vmatprep.mubr.f32.mxu0 0.0
      %2252 = vmatmul.mubr.f32.gmra.mrb[0].mxu0 %v2043
      %v2253 = vpop.f32.mrb[0].mxu0
      %v2254 = vadd.f32 0.0, %v2253
      %v2255 = vpop.f32.mrb[0].mxu0
      %2256 = vmatprep.mubr.f32.mxu0 0.0
      %2257 = vmatmul.mubr.f32.gmra.mrb[0].mxu0 %v2046
      %v2258 = vpop.f32.mrb[0].mxu0
      %v2259 = vadd.f32 0.0, %v2258
      %v2260 = vpop.f32.mrb[0].mxu0
      %2261 = vmatprep.mubr.f32.mxu0 0.0
      %2262 = vmatmul.mubr.f32.gmra.mrb[0].mxu0 %v2049
      %v2263 = vpop.f32.mrb[0].mxu0
      %v2264 = vadd.f32 0.0, %v2263
      %v2265 = vpop.f32.mrb[0].mxu0
      %2266 = vmatprep.mubr.f32.mxu0 0.0
      %2267 = vmatmul.mubr.f32.gmra.mrb[0].mxu0 %v2052
      %v2268 = vpop.f32.mrb[0].mxu0
      %v2269 = vadd.f32 0.0, %v2268
      %v2270 = vpop.f32.mrb[0].mxu0
      %2271 = vmatprep.mubr.f32.mxu0 0.0
      %2272 = vmatmul.mubr.f32.gmra.mrb[0].mxu0 %v2055
      %v2273 = vpop.f32.mrb[0].mxu0
      %v2274 = vadd.f32 0.0, %v2273
      %v2275 = vpop.f32.mrb[0].mxu0
      %2276 = vmatprep.mubr.f32.mxu0 0.0
      %2277 = vmatmul.mubr.f32.gmra.mrb[0].mxu0 %v2058
      %v2278 = vpop.f32.mrb[0].mxu0
      %v2279 = vadd.f32 0.0, %v2278
      %v2280 = vpop.f32.mrb[0].mxu0
      %2281 = vmatprep.mubr.f32.mxu0 0.0
      %2282 = vmatmul.mubr.f32.gmra.mrb[0].mxu0 %v2061
      %v2283 = vpop.f32.mrb[0].mxu0
      %v2284 = vadd.f32 0.0, %v2283
      %v2285 = vpop.f32.mrb[0].mxu0
      %2286 = vmatprep.mubr.f32.mxu0 0.0
      %2287 = vmatmul.mubr.f32.gmra.mrb[0].mxu0 %v2064
      %v2288 = vpop.f32.mrb[0].mxu0
      %v2289 = vadd.f32 0.0, %v2288
      %v2290 = vpop.f32.mrb[0].mxu0
      %2291 = vmatprep.mubr.f32.mxu0 0.0
      %2292 = vmatmul.mubr.f32.gmra.mrb[0].mxu0 %v2067
      %v2293 = vpop.f32.mrb[0].mxu0
      %v2294 = vadd.f32 0.0, %v2293
      %v2295 = vpop.f32.mrb[0].mxu0
      %2296 = vmatprep.mubr.f32.mxu0 0.0
      %2297 = vmatmul.mubr.f32.gmra.mrb[0].mxu0 %v2070
      %v2298 = vpop.f32.mrb[0].mxu0
      %v2299 = vadd.f32 0.0, %v2298
      %v2300 = vpop.f32.mrb[0].mxu0
      %2301 = vmatprep.mubr.f32.mxu0 0.0
      %2302 = vmatmul.mubr.f32.gmra.mrb[0].mxu0 %v2073
      %v2303 = vpop.f32.mrb[0].mxu0
      %v2304 = vadd.f32 0.0, %v2303
      %v2305 = vpop.f32.mrb[0].mxu0
      %2306 = vmatprep.mubr.f32.mxu0 0.0
      %2307 = vmatmul.mubr.f32.gmra.mrb[0].mxu0 %v2076
      %v2308 = vpop.f32.mrb[0].mxu0
      %v2309 = vadd.f32 0.0, %v2308
      %v2310 = vpop.f32.mrb[0].mxu0
      %2311 = vmatprep.mubr.f32.mxu0 0.0
      %2312 = vmatmul.mubr.f32.gmra.mrb[0].mxu0 %v2079
      %v2313 = vpop.f32.mrb[0].mxu0
      %v2314 = vadd.f32 0.0, %v2313
      %v2315 = vpop.f32.mrb[0].mxu0
      %2316 = vmatprep.mubr.f32.mxu0 0.0
      %2317 = vmatmul.mubr.f32.gmra.mrb[0].mxu0 %v2082
      %v2318 = vpop.f32.mrb[0].mxu0
      %v2319 = vadd.f32 0.0, %v2318
      %v2320 = vpop.f32.mrb[0].mxu0
      %2321 = vmatprep.mubr.f32.mxu0 0.0
      %2322 = vmatmul.mubr.f32.gmra.mrb[0].mxu0 %v2085
      %v2323 = vpop.f32.mrb[0].mxu0
      %v2324 = vadd.f32 0.0, %v2323
      %v2325 = vpop.f32.mrb[0].mxu0
      %2326 = vmatprep.mubr.f32.mxu0 0.0
      %2327 = vmatmul.mubr.f32.gmra.mrb[0].mxu0 %v2088
      %v2328 = vpop.f32.mrb[0].mxu0
      %v2329 = vadd.f32 0.0, %v2328
      %v2330 = vpop.f32.mrb[0].mxu0
      %2331 = vmatprep.mubr.f32.mxu0 0.0
      %2332 = vmatmul.mubr.f32.gmra.mrb[0].mxu0 %v2091
      %v2333 = vpop.f32.mrb[0].mxu0
      %v2334 = vadd.f32 0.0, %v2333
      %v2335 = vpop.f32.mrb[0].mxu0
      %2336 = vmatprep.mubr.f32.mxu0 0.0
      %2337 = vmatmul.mubr.f32.gmra.mrb[0].mxu0 %v2094
      %v2338 = vpop.f32.mrb[0].mxu0
      %v2339 = vadd.f32 0.0, %v2338
      %v2340 = vpop.f32.mrb[0].mxu0
      %2341 = vmatprep.mubr.f32.mxu0 0.0
      %2342 = vmatmul.mubr.f32.gmra.mrb[0].mxu0 %v2097
      %v2343 = vpop.f32.mrb[0].mxu0
      %v2344 = vadd.f32 0.0, %v2343
      %v2345 = vpop.f32.mrb[0].mxu0
      %2346 = vmatprep.mubr.f32.mxu0 0.0
      %2347 = vmatmul.mubr.f32.gmra.mrb[0].mxu0 %v2100
      %v2348 = vpop.f32.mrb[0].mxu0
      %v2349 = vadd.f32 0.0, %v2348
      %v2350 = vpop.f32.mrb[0].mxu0
      %2351 = vmatprep.mubr.f32.mxu0 0.0
      %2352 = vmatmul.mubr.f32.gmra.mrb[0].mxu0 %v2103
      %v2353 = vpop.f32.mrb[0].mxu0
      %v2354 = vadd.f32 0.0, %v2353
      %v2355 = vpop.f32.mrb[0].mxu0
      %2356 = vmatprep.mubr.f32.mxu0 0.0
      %2357 = vmatmul.mubr.f32.gmra.mrb[0].mxu0 %v2106
      %v2358 = vpop.f32.mrb[0].mxu0
      %v2359 = vadd.f32 0.0, %v2358
      %v2360 = vpop.f32.mrb[0].mxu0
      %2361 = vmatprep.mubr.f32.mxu0 0.0
      %2362 = vmatmul.mubr.f32.gmra.mrb[0].mxu0 %v2109
      %v2363 = vpop.f32.mrb[0].mxu0
      %v2364 = vadd.f32 0.0, %v2363
      %v2365 = vpop.f32.mrb[0].mxu0
      %2366 = vmatprep.mubr.f32.mxu0 0.0
      %2367 = vmatmul.mubr.f32.gmra.mrb[0].mxu0 %v2112
      %v2368 = vpop.f32.mrb[0].mxu0
      %v2369 = vadd.f32 0.0, %v2368
      %v2370 = vpop.f32.mrb[0].mxu0
      %2371 = vmatprep.mubr.f32.mxu0 0.0
      %2372 = vmatmul.mubr.f32.gmra.mrb[0].mxu0 %v2115
      %v2373 = vpop.f32.mrb[0].mxu0
      %v2374 = vadd.f32 0.0, %v2373
      %v2375 = vpop.f32.mrb[0].mxu0
      %2376 = vmatprep.mubr.f32.mxu0 0.0
      %2377 = vmatmul.mubr.f32.gmra.mrb[0].mxu0 %v2118
      %v2378 = vpop.f32.mrb[0].mxu0
      %v2379 = vadd.f32 0.0, %v2378
      %v2380 = vpop.f32.mrb[0].mxu0
      %2381 = vmatprep.mubr.f32.mxu0 0.0
      %2382 = vmatmul.mubr.f32.gmra.mrb[0].mxu0 %v2121
      %v2383 = vpop.f32.mrb[0].mxu0
      %v2384 = vadd.f32 0.0, %v2383
      %v2385 = vpop.f32.mrb[0].mxu0
      %2386 = vmatprep.mubr.f32.mxu0 0.0
      %2387 = vmatmul.mubr.f32.gmra.mrb[0].mxu0 %v2124
      %v2388 = vpop.f32.mrb[0].mxu0
      %v2389 = vadd.f32 0.0, %v2388
      %v2390 = vpop.f32.mrb[0].mxu0
      %2391 = vmatprep.mubr.f32.mxu0 0.0
      %2392 = vmatmul.mubr.f32.gmra.mrb[0].mxu0 %v2127
      %v2393 = vpop.f32.mrb[0].mxu0
      %v2394 = vadd.f32 0.0, %v2393
      %v2395 = vpop.f32.mrb[0].mxu0
      %2396 = vmatprep.mubr.f32.mxu0 0.0
      %2397 = vmatmul.mubr.f32.gmra.mrb[0].mxu0 %v2130
      %v2398 = vpop.f32.mrb[0].mxu0
      %v2399 = vadd.f32 0.0, %v2398
      %v2400 = vpop.f32.mrb[0].mxu0
      %2401 = vdwg.mxu0
      %v2402 = vlaneseq
      %v2403 = vshrl.u32 %v2402, 7
      %v2404 = vsub.s32 0, %v2403
      %v2405 = vrot.slane %v1967, %v2404
      %v2406 = vmul.f32 %v2199, %v2405
      %v2407 = vmul.f32 %v2204, %v2405
      %v2408 = vmul.f32 %v2209, %v2405
      %v2409 = vmul.f32 %v2214, %v2405
      %v2410 = vmul.f32 %v2219, %v2405
      %v2411 = vmul.f32 %v2224, %v2405
      %v2412 = vmul.f32 %v2229, %v2405
      %v2413 = vmul.f32 %v2234, %v2405
      %v2414 = vmul.f32 %v2239, %v2405
      %v2415 = vmul.f32 %v2244, %v2405
      %v2416 = vmul.f32 %v2249, %v2405
      %v2417 = vmul.f32 %v2254, %v2405
      %v2418 = vmul.f32 %v2259, %v2405
      %v2419 = vmul.f32 %v2264, %v2405
      %v2420 = vmul.f32 %v2269, %v2405
      %v2421 = vmul.f32 %v2274, %v2405
      %v2422 = vmul.f32 %v2279, %v2405
      %v2423 = vmul.f32 %v2284, %v2405
      %v2424 = vmul.f32 %v2289, %v2405
      %v2425 = vmul.f32 %v2294, %v2405
      %v2426 = vmul.f32 %v2299, %v2405
      %v2427 = vmul.f32 %v2304, %v2405
      %v2428 = vmul.f32 %v2309, %v2405
      %v2429 = vmul.f32 %v2314, %v2405
      %v2430 = vmul.f32 %v2319, %v2405
      %v2431 = vmul.f32 %v2324, %v2405
      %v2432 = vmul.f32 %v2329, %v2405
      %v2433 = vmul.f32 %v2334, %v2405
      %v2434 = vmul.f32 %v2339, %v2405
      %v2435 = vmul.f32 %v2344, %v2405
      %v2436 = vmul.f32 %v2349, %v2405
      %v2437 = vmul.f32 %v2354, %v2405
      %v2438 = vmul.f32 %v2359, %v2405
      %v2439 = vmul.f32 %v2364, %v2405
      %v2440 = vmul.f32 %v2369, %v2405
      %v2441 = vmul.f32 %v2374, %v2405
      %v2442 = vmul.f32 %v2379, %v2405
      %v2443 = vmul.f32 %v2384, %v2405
      %v2444 = vmul.f32 %v2389, %v2405
      %v2445 = vmul.f32 %v2394, %v2405
      %v2446 = vmul.f32 %v2399, %v2405
      %v2488 = vcombine.high %v2406, %v2406
      %v2490 = vunpack.c.l.s4 1983009808
      %v2491 = vunpack.c.0.s8 %v2490
      %v2492 = vlaneseq
      %v2493 = vshrl.u32 %v2492, 7
      %v2494 = vsub.s32 %v2491, %v2493
      %v2495 = vrot.slane %v2406, %v2494
      %v2497 = vunpack.c.l.s4 1983009808
      %v2498 = vunpack.c.0.s8 %v2497
      %v2499 = vlaneseq
      %v2500 = vshrl.u32 %v2499, 7
      %v2501 = vsub.s32 %v2498, %v2500
      %v2502 = vrot.slane %v2488, %v2501
      %v2503 = vcombine.high %v2495, %v2495
      %v2504 = vcombine.high %v2502, %v2502
      %v2505 = vcombine.high %v2407, %v2407
      %v2507 = vunpack.c.l.s4 1983009808
      %v2508 = vunpack.c.0.s8 %v2507
      %v2509 = vlaneseq
      %v2510 = vshrl.u32 %v2509, 7
      %v2511 = vsub.s32 %v2508, %v2510
      %v2512 = vrot.slane %v2407, %v2511
      %v2514 = vunpack.c.l.s4 1983009808
      %v2515 = vunpack.c.0.s8 %v2514
      %v2516 = vlaneseq
      %v2517 = vshrl.u32 %v2516, 7
      %v2518 = vsub.s32 %v2515, %v2517
      %v2519 = vrot.slane %v2505, %v2518
      %v2520 = vcombine.high %v2512, %v2512
      %v2521 = vcombine.high %v2519, %v2519
      %v2522 = vcombine.high %v2408, %v2408
      %v2524 = vunpack.c.l.s4 1983009808
      %v2525 = vunpack.c.0.s8 %v2524
      %v2526 = vlaneseq
      %v2527 = vshrl.u32 %v2526, 7
      %v2528 = vsub.s32 %v2525, %v2527
      %v2529 = vrot.slane %v2408, %v2528
      %v2531 = vunpack.c.l.s4 1983009808
      %v2532 = vunpack.c.0.s8 %v2531
      %v2533 = vlaneseq
      %v2534 = vshrl.u32 %v2533, 7
      %v2535 = vsub.s32 %v2532, %v2534
      %v2536 = vrot.slane %v2522, %v2535
      %v2537 = vcombine.high %v2529, %v2529
      %v2538 = vcombine.high %v2536, %v2536
      %v2539 = vcombine.high %v2409, %v2409
      %v2541 = vunpack.c.l.s4 1983009808
      %v2542 = vunpack.c.0.s8 %v2541
      %v2543 = vlaneseq
      %v2544 = vshrl.u32 %v2543, 7
      %v2545 = vsub.s32 %v2542, %v2544
      %v2546 = vrot.slane %v2409, %v2545
      %v2548 = vunpack.c.l.s4 1983009808
      %v2549 = vunpack.c.0.s8 %v2548
      %v2550 = vlaneseq
      %v2551 = vshrl.u32 %v2550, 7
      %v2552 = vsub.s32 %v2549, %v2551
      %v2553 = vrot.slane %v2539, %v2552
      %v2554 = vcombine.high %v2546, %v2546
      %v2555 = vcombine.high %v2553, %v2553
      %v2556 = vcombine.high %v2410, %v2410
      %v2558 = vunpack.c.l.s4 1983009808
      %v2559 = vunpack.c.0.s8 %v2558
      %v2560 = vlaneseq
      %v2561 = vshrl.u32 %v2560, 7
      %v2562 = vsub.s32 %v2559, %v2561
      %v2563 = vrot.slane %v2410, %v2562
      %v2565 = vunpack.c.l.s4 1983009808
      %v2566 = vunpack.c.0.s8 %v2565
      %v2567 = vlaneseq
      %v2568 = vshrl.u32 %v2567, 7
      %v2569 = vsub.s32 %v2566, %v2568
      %v2570 = vrot.slane %v2556, %v2569
      %v2571 = vcombine.high %v2563, %v2563
      %v2572 = vcombine.high %v2570, %v2570
      %v2573 = vcombine.high %v2411, %v2411
      %v2575 = vunpack.c.l.s4 1983009808
      %v2576 = vunpack.c.0.s8 %v2575
      %v2577 = vlaneseq
      %v2578 = vshrl.u32 %v2577, 7
      %v2579 = vsub.s32 %v2576, %v2578
      %v2580 = vrot.slane %v2411, %v2579
      %v2582 = vunpack.c.l.s4 1983009808
      %v2583 = vunpack.c.0.s8 %v2582
      %v2584 = vlaneseq
      %v2585 = vshrl.u32 %v2584, 7
      %v2586 = vsub.s32 %v2583, %v2585
      %v2587 = vrot.slane %v2573, %v2586
      %v2588 = vcombine.high %v2580, %v2580
      %v2589 = vcombine.high %v2587, %v2587
      %v2590 = vcombine.high %v2412, %v2412
      %v2592 = vunpack.c.l.s4 1983009808
      %v2593 = vunpack.c.0.s8 %v2592
      %v2594 = vlaneseq
      %v2595 = vshrl.u32 %v2594, 7
      %v2596 = vsub.s32 %v2593, %v2595
      %v2597 = vrot.slane %v2412, %v2596
      %v2599 = vunpack.c.l.s4 1983009808
      %v2600 = vunpack.c.0.s8 %v2599
      %v2601 = vlaneseq
      %v2602 = vshrl.u32 %v2601, 7
      %v2603 = vsub.s32 %v2600, %v2602
      %v2604 = vrot.slane %v2590, %v2603
      %v2605 = vcombine.high %v2597, %v2597
      %v2606 = vcombine.high %v2604, %v2604
      %v2607 = vcombine.high %v2413, %v2413
      %v2609 = vunpack.c.l.s4 1983009808
      %v2610 = vunpack.c.0.s8 %v2609
      %v2611 = vlaneseq
      %v2612 = vshrl.u32 %v2611, 7
      %v2613 = vsub.s32 %v2610, %v2612
      %v2614 = vrot.slane %v2413, %v2613
      %v2616 = vunpack.c.l.s4 1983009808
      %v2617 = vunpack.c.0.s8 %v2616
      %v2618 = vlaneseq
      %v2619 = vshrl.u32 %v2618, 7
      %v2620 = vsub.s32 %v2617, %v2619
      %v2621 = vrot.slane %v2607, %v2620
      %v2622 = vcombine.high %v2614, %v2614
      %v2623 = vcombine.high %v2621, %v2621
      %v2624 = vcombine.high %v2414, %v2414
      %v2626 = vunpack.c.l.s4 1983009808
      %v2627 = vunpack.c.0.s8 %v2626
      %v2628 = vlaneseq
      %v2629 = vshrl.u32 %v2628, 7
      %v2630 = vsub.s32 %v2627, %v2629
      %v2631 = vrot.slane %v2414, %v2630
      %v2633 = vunpack.c.l.s4 1983009808
      %v2634 = vunpack.c.0.s8 %v2633
      %v2635 = vlaneseq
      %v2636 = vshrl.u32 %v2635, 7
      %v2637 = vsub.s32 %v2634, %v2636
      %v2638 = vrot.slane %v2624, %v2637
      %v2639 = vcombine.high %v2631, %v2631
      %v2640 = vcombine.high %v2638, %v2638
      %v2641 = vcombine.high %v2415, %v2415
      %v2643 = vunpack.c.l.s4 1983009808
      %v2644 = vunpack.c.0.s8 %v2643
      %v2645 = vlaneseq
      %v2646 = vshrl.u32 %v2645, 7
      %v2647 = vsub.s32 %v2644, %v2646
      %v2648 = vrot.slane %v2415, %v2647
      %v2650 = vunpack.c.l.s4 1983009808
      %v2651 = vunpack.c.0.s8 %v2650
      %v2652 = vlaneseq
      %v2653 = vshrl.u32 %v2652, 7
      %v2654 = vsub.s32 %v2651, %v2653
      %v2655 = vrot.slane %v2641, %v2654
      %v2656 = vcombine.high %v2648, %v2648
      %v2657 = vcombine.high %v2655, %v2655
      %v2658 = vcombine.high %v2416, %v2416
      %v2660 = vunpack.c.l.s4 1983009808
      %v2661 = vunpack.c.0.s8 %v2660
      %v2662 = vlaneseq
      %v2663 = vshrl.u32 %v2662, 7
      %v2664 = vsub.s32 %v2661, %v2663
      %v2665 = vrot.slane %v2416, %v2664
      %v2667 = vunpack.c.l.s4 1983009808
      %v2668 = vunpack.c.0.s8 %v2667
      %v2669 = vlaneseq
      %v2670 = vshrl.u32 %v2669, 7
      %v2671 = vsub.s32 %v2668, %v2670
      %v2672 = vrot.slane %v2658, %v2671
      %v2673 = vcombine.high %v2665, %v2665
      %v2674 = vcombine.high %v2672, %v2672
      %v2675 = vcombine.high %v2417, %v2417
      %v2677 = vunpack.c.l.s4 1983009808
      %v2678 = vunpack.c.0.s8 %v2677
      %v2679 = vlaneseq
      %v2680 = vshrl.u32 %v2679, 7
      %v2681 = vsub.s32 %v2678, %v2680
      %v2682 = vrot.slane %v2417, %v2681
      %v2684 = vunpack.c.l.s4 1983009808
      %v2685 = vunpack.c.0.s8 %v2684
      %v2686 = vlaneseq
      %v2687 = vshrl.u32 %v2686, 7
      %v2688 = vsub.s32 %v2685, %v2687
      %v2689 = vrot.slane %v2675, %v2688
      %v2690 = vcombine.high %v2682, %v2682
      %v2691 = vcombine.high %v2689, %v2689
      %v2692 = vcombine.high %v2418, %v2418
      %v2694 = vunpack.c.l.s4 1983009808
      %v2695 = vunpack.c.0.s8 %v2694
      %v2696 = vlaneseq
      %v2697 = vshrl.u32 %v2696, 7
      %v2698 = vsub.s32 %v2695, %v2697
      %v2699 = vrot.slane %v2418, %v2698
      %v2701 = vunpack.c.l.s4 1983009808
      %v2702 = vunpack.c.0.s8 %v2701
      %v2703 = vlaneseq
      %v2704 = vshrl.u32 %v2703, 7
      %v2705 = vsub.s32 %v2702, %v2704
      %v2706 = vrot.slane %v2692, %v2705
      %v2707 = vcombine.high %v2699, %v2699
      %v2708 = vcombine.high %v2706, %v2706
      %v2709 = vcombine.high %v2419, %v2419
      %v2711 = vunpack.c.l.s4 1983009808
      %v2712 = vunpack.c.0.s8 %v2711
      %v2713 = vlaneseq
      %v2714 = vshrl.u32 %v2713, 7
      %v2715 = vsub.s32 %v2712, %v2714
      %v2716 = vrot.slane %v2419, %v2715
      %v2718 = vunpack.c.l.s4 1983009808
      %v2719 = vunpack.c.0.s8 %v2718
      %v2720 = vlaneseq
      %v2721 = vshrl.u32 %v2720, 7
      %v2722 = vsub.s32 %v2719, %v2721
      %v2723 = vrot.slane %v2709, %v2722
      %v2724 = vcombine.high %v2716, %v2716
      %v2725 = vcombine.high %v2723, %v2723
      %v2726 = vcombine.high %v2420, %v2420
      %v2728 = vunpack.c.l.s4 1983009808
      %v2729 = vunpack.c.0.s8 %v2728
      %v2730 = vlaneseq
      %v2731 = vshrl.u32 %v2730, 7
      %v2732 = vsub.s32 %v2729, %v2731
      %v2733 = vrot.slane %v2420, %v2732
      %v2735 = vunpack.c.l.s4 1983009808
      %v2736 = vunpack.c.0.s8 %v2735
      %v2737 = vlaneseq
      %v2738 = vshrl.u32 %v2737, 7
      %v2739 = vsub.s32 %v2736, %v2738
      %v2740 = vrot.slane %v2726, %v2739
      %v2741 = vcombine.high %v2733, %v2733
      %v2742 = vcombine.high %v2740, %v2740
      %v2743 = vcombine.high %v2421, %v2421
      %v2745 = vunpack.c.l.s4 1983009808
      %v2746 = vunpack.c.0.s8 %v2745
      %v2747 = vlaneseq
      %v2748 = vshrl.u32 %v2747, 7
      %v2749 = vsub.s32 %v2746, %v2748
      %v2750 = vrot.slane %v2421, %v2749
      %v2752 = vunpack.c.l.s4 1983009808
      %v2753 = vunpack.c.0.s8 %v2752
      %v2754 = vlaneseq
      %v2755 = vshrl.u32 %v2754, 7
      %v2756 = vsub.s32 %v2753, %v2755
      %v2757 = vrot.slane %v2743, %v2756
      %v2758 = vcombine.high %v2750, %v2750
      %v2759 = vcombine.high %v2757, %v2757
      %v2760 = vcombine.high %v2422, %v2422
      %v2762 = vunpack.c.l.s4 1983009808
      %v2763 = vunpack.c.0.s8 %v2762
      %v2764 = vlaneseq
      %v2765 = vshrl.u32 %v2764, 7
      %v2766 = vsub.s32 %v2763, %v2765
      %v2767 = vrot.slane %v2422, %v2766
      %v2769 = vunpack.c.l.s4 1983009808
      %v2770 = vunpack.c.0.s8 %v2769
      %v2771 = vlaneseq
      %v2772 = vshrl.u32 %v2771, 7
      %v2773 = vsub.s32 %v2770, %v2772
      %v2774 = vrot.slane %v2760, %v2773
      %v2775 = vcombine.high %v2767, %v2767
      %v2776 = vcombine.high %v2774, %v2774
      %v2777 = vcombine.high %v2423, %v2423
      %v2779 = vunpack.c.l.s4 1983009808
      %v2780 = vunpack.c.0.s8 %v2779
      %v2781 = vlaneseq
      %v2782 = vshrl.u32 %v2781, 7
      %v2783 = vsub.s32 %v2780, %v2782
      %v2784 = vrot.slane %v2423, %v2783
      %v2786 = vunpack.c.l.s4 1983009808
      %v2787 = vunpack.c.0.s8 %v2786
      %v2788 = vlaneseq
      %v2789 = vshrl.u32 %v2788, 7
      %v2790 = vsub.s32 %v2787, %v2789
      %v2791 = vrot.slane %v2777, %v2790
      %v2792 = vcombine.high %v2784, %v2784
      %v2793 = vcombine.high %v2791, %v2791
      %v2794 = vcombine.high %v2424, %v2424
      %v2796 = vunpack.c.l.s4 1983009808
      %v2797 = vunpack.c.0.s8 %v2796
      %v2798 = vlaneseq
      %v2799 = vshrl.u32 %v2798, 7
      %v2800 = vsub.s32 %v2797, %v2799
      %v2801 = vrot.slane %v2424, %v2800
      %v2803 = vunpack.c.l.s4 1983009808
      %v2804 = vunpack.c.0.s8 %v2803
      %v2805 = vlaneseq
      %v2806 = vshrl.u32 %v2805, 7
      %v2807 = vsub.s32 %v2804, %v2806
      %v2808 = vrot.slane %v2794, %v2807
      %v2809 = vcombine.high %v2801, %v2801
      %v2810 = vcombine.high %v2808, %v2808
      %v2811 = vcombine.high %v2425, %v2425
      %v2813 = vunpack.c.l.s4 1983009808
      %v2814 = vunpack.c.0.s8 %v2813
      %v2815 = vlaneseq
      %v2816 = vshrl.u32 %v2815, 7
      %v2817 = vsub.s32 %v2814, %v2816
      %v2818 = vrot.slane %v2425, %v2817
      %v2820 = vunpack.c.l.s4 1983009808
      %v2821 = vunpack.c.0.s8 %v2820
      %v2822 = vlaneseq
      %v2823 = vshrl.u32 %v2822, 7
      %v2824 = vsub.s32 %v2821, %v2823
      %v2825 = vrot.slane %v2811, %v2824
      %v2826 = vcombine.high %v2818, %v2818
      %v2827 = vcombine.high %v2825, %v2825
      %v2828 = vcombine.high %v2426, %v2426
      %v2830 = vunpack.c.l.s4 1983009808
      %v2831 = vunpack.c.0.s8 %v2830
      %v2832 = vlaneseq
      %v2833 = vshrl.u32 %v2832, 7
      %v2834 = vsub.s32 %v2831, %v2833
      %v2835 = vrot.slane %v2426, %v2834
      %v2837 = vunpack.c.l.s4 1983009808
      %v2838 = vunpack.c.0.s8 %v2837
      %v2839 = vlaneseq
      %v2840 = vshrl.u32 %v2839, 7
      %v2841 = vsub.s32 %v2838, %v2840
      %v2842 = vrot.slane %v2828, %v2841
      %v2843 = vcombine.high %v2835, %v2835
      %v2844 = vcombine.high %v2842, %v2842
      %v2845 = vcombine.high %v2427, %v2427
      %v2847 = vunpack.c.l.s4 1983009808
      %v2848 = vunpack.c.0.s8 %v2847
      %v2849 = vlaneseq
      %v2850 = vshrl.u32 %v2849, 7
      %v2851 = vsub.s32 %v2848, %v2850
      %v2852 = vrot.slane %v2427, %v2851
      %v2854 = vunpack.c.l.s4 1983009808
      %v2855 = vunpack.c.0.s8 %v2854
      %v2856 = vlaneseq
      %v2857 = vshrl.u32 %v2856, 7
      %v2858 = vsub.s32 %v2855, %v2857
      %v2859 = vrot.slane %v2845, %v2858
      %v2860 = vcombine.high %v2852, %v2852
      %v2861 = vcombine.high %v2859, %v2859
      %v2862 = vcombine.high %v2428, %v2428
      %v2864 = vunpack.c.l.s4 1983009808
      %v2865 = vunpack.c.0.s8 %v2864
      %v2866 = vlaneseq
      %v2867 = vshrl.u32 %v2866, 7
      %v2868 = vsub.s32 %v2865, %v2867
      %v2869 = vrot.slane %v2428, %v2868
      %v2871 = vunpack.c.l.s4 1983009808
      %v2872 = vunpack.c.0.s8 %v2871
      %v2873 = vlaneseq
      %v2874 = vshrl.u32 %v2873, 7
      %v2875 = vsub.s32 %v2872, %v2874
      %v2876 = vrot.slane %v2862, %v2875
      %v2877 = vcombine.high %v2869, %v2869
      %v2878 = vcombine.high %v2876, %v2876
      %v2879 = vcombine.high %v2429, %v2429
      %v2881 = vunpack.c.l.s4 1983009808
      %v2882 = vunpack.c.0.s8 %v2881
      %v2883 = vlaneseq
      %v2884 = vshrl.u32 %v2883, 7
      %v2885 = vsub.s32 %v2882, %v2884
      %v2886 = vrot.slane %v2429, %v2885
      %v2888 = vunpack.c.l.s4 1983009808
      %v2889 = vunpack.c.0.s8 %v2888
      %v2890 = vlaneseq
      %v2891 = vshrl.u32 %v2890, 7
      %v2892 = vsub.s32 %v2889, %v2891
      %v2893 = vrot.slane %v2879, %v2892
      %v2894 = vcombine.high %v2886, %v2886
      %v2895 = vcombine.high %v2893, %v2893
      %v2896 = vcombine.high %v2430, %v2430
      %v2898 = vunpack.c.l.s4 1983009808
      %v2899 = vunpack.c.0.s8 %v2898
      %v2900 = vlaneseq
      %v2901 = vshrl.u32 %v2900, 7
      %v2902 = vsub.s32 %v2899, %v2901
      %v2903 = vrot.slane %v2430, %v2902
      %v2905 = vunpack.c.l.s4 1983009808
      %v2906 = vunpack.c.0.s8 %v2905
      %v2907 = vlaneseq
      %v2908 = vshrl.u32 %v2907, 7
      %v2909 = vsub.s32 %v2906, %v2908
      %v2910 = vrot.slane %v2896, %v2909
      %v2911 = vcombine.high %v2903, %v2903
      %v2912 = vcombine.high %v2910, %v2910
      %v2913 = vcombine.high %v2431, %v2431
      %v2915 = vunpack.c.l.s4 1983009808
      %v2916 = vunpack.c.0.s8 %v2915
      %v2917 = vlaneseq
      %v2918 = vshrl.u32 %v2917, 7
      %v2919 = vsub.s32 %v2916, %v2918
      %v2920 = vrot.slane %v2431, %v2919
      %v2922 = vunpack.c.l.s4 1983009808
      %v2923 = vunpack.c.0.s8 %v2922
      %v2924 = vlaneseq
      %v2925 = vshrl.u32 %v2924, 7
      %v2926 = vsub.s32 %v2923, %v2925
      %v2927 = vrot.slane %v2913, %v2926
      %v2928 = vcombine.high %v2920, %v2920
      %v2929 = vcombine.high %v2927, %v2927
      %v2930 = vcombine.high %v2432, %v2432
      %v2932 = vunpack.c.l.s4 1983009808
      %v2933 = vunpack.c.0.s8 %v2932
      %v2934 = vlaneseq
      %v2935 = vshrl.u32 %v2934, 7
      %v2936 = vsub.s32 %v2933, %v2935
      %v2937 = vrot.slane %v2432, %v2936
      %v2939 = vunpack.c.l.s4 1983009808
      %v2940 = vunpack.c.0.s8 %v2939
      %v2941 = vlaneseq
      %v2942 = vshrl.u32 %v2941, 7
      %v2943 = vsub.s32 %v2940, %v2942
      %v2944 = vrot.slane %v2930, %v2943
      %v2945 = vcombine.high %v2937, %v2937
      %v2946 = vcombine.high %v2944, %v2944
      %v2947 = vcombine.high %v2433, %v2433
      %v2949 = vunpack.c.l.s4 1983009808
      %v2950 = vunpack.c.0.s8 %v2949
      %v2951 = vlaneseq
      %v2952 = vshrl.u32 %v2951, 7
      %v2953 = vsub.s32 %v2950, %v2952
      %v2954 = vrot.slane %v2433, %v2953
      %v2956 = vunpack.c.l.s4 1983009808
      %v2957 = vunpack.c.0.s8 %v2956
      %v2958 = vlaneseq
      %v2959 = vshrl.u32 %v2958, 7
      %v2960 = vsub.s32 %v2957, %v2959
      %v2961 = vrot.slane %v2947, %v2960
      %v2962 = vcombine.high %v2954, %v2954
      %v2963 = vcombine.high %v2961, %v2961
      %v2964 = vcombine.high %v2434, %v2434
      %v2966 = vunpack.c.l.s4 1983009808
      %v2967 = vunpack.c.0.s8 %v2966
      %v2968 = vlaneseq
      %v2969 = vshrl.u32 %v2968, 7
      %v2970 = vsub.s32 %v2967, %v2969
      %v2971 = vrot.slane %v2434, %v2970
      %v2973 = vunpack.c.l.s4 1983009808
      %v2974 = vunpack.c.0.s8 %v2973
      %v2975 = vlaneseq
      %v2976 = vshrl.u32 %v2975, 7
      %v2977 = vsub.s32 %v2974, %v2976
      %v2978 = vrot.slane %v2964, %v2977
      %v2979 = vcombine.high %v2971, %v2971
      %v2980 = vcombine.high %v2978, %v2978
      %v2981 = vcombine.high %v2435, %v2435
      %v2983 = vunpack.c.l.s4 1983009808
      %v2984 = vunpack.c.0.s8 %v2983
      %v2985 = vlaneseq
      %v2986 = vshrl.u32 %v2985, 7
      %v2987 = vsub.s32 %v2984, %v2986
      %v2988 = vrot.slane %v2435, %v2987
      %v2990 = vunpack.c.l.s4 1983009808
      %v2991 = vunpack.c.0.s8 %v2990
      %v2992 = vlaneseq
      %v2993 = vshrl.u32 %v2992, 7
      %v2994 = vsub.s32 %v2991, %v2993
      %v2995 = vrot.slane %v2981, %v2994
      %v2996 = vcombine.high %v2988, %v2988
      %v2997 = vcombine.high %v2995, %v2995
      %v2998 = vcombine.high %v2436, %v2436
      %v3000 = vunpack.c.l.s4 1983009808
      %v3001 = vunpack.c.0.s8 %v3000
      %v3002 = vlaneseq
      %v3003 = vshrl.u32 %v3002, 7
      %v3004 = vsub.s32 %v3001, %v3003
      %v3005 = vrot.slane %v2436, %v3004
      %v3007 = vunpack.c.l.s4 1983009808
      %v3008 = vunpack.c.0.s8 %v3007
      %v3009 = vlaneseq
      %v3010 = vshrl.u32 %v3009, 7
      %v3011 = vsub.s32 %v3008, %v3010
      %v3012 = vrot.slane %v2998, %v3011
      %v3013 = vcombine.high %v3005, %v3005
      %v3014 = vcombine.high %v3012, %v3012
      %v3015 = vcombine.high %v2437, %v2437
      %v3017 = vunpack.c.l.s4 1983009808
      %v3018 = vunpack.c.0.s8 %v3017
      %v3019 = vlaneseq
      %v3020 = vshrl.u32 %v3019, 7
      %v3021 = vsub.s32 %v3018, %v3020
      %v3022 = vrot.slane %v2437, %v3021
      %v3024 = vunpack.c.l.s4 1983009808
      %v3025 = vunpack.c.0.s8 %v3024
      %v3026 = vlaneseq
      %v3027 = vshrl.u32 %v3026, 7
      %v3028 = vsub.s32 %v3025, %v3027
      %v3029 = vrot.slane %v3015, %v3028
      %v3030 = vcombine.high %v3022, %v3022
      %v3031 = vcombine.high %v3029, %v3029
      %v3032 = vcombine.high %v2438, %v2438
      %v3034 = vunpack.c.l.s4 1983009808
      %v3035 = vunpack.c.0.s8 %v3034
      %v3036 = vlaneseq
      %v3037 = vshrl.u32 %v3036, 7
      %v3038 = vsub.s32 %v3035, %v3037
      %v3039 = vrot.slane %v2438, %v3038
      %v3041 = vunpack.c.l.s4 1983009808
      %v3042 = vunpack.c.0.s8 %v3041
      %v3043 = vlaneseq
      %v3044 = vshrl.u32 %v3043, 7
      %v3045 = vsub.s32 %v3042, %v3044
      %v3046 = vrot.slane %v3032, %v3045
      %v3047 = vcombine.high %v3039, %v3039
      %v3048 = vcombine.high %v3046, %v3046
      %v3049 = vcombine.high %v2439, %v2439
      %v3051 = vunpack.c.l.s4 1983009808
      %v3052 = vunpack.c.0.s8 %v3051
      %v3053 = vlaneseq
      %v3054 = vshrl.u32 %v3053, 7
      %v3055 = vsub.s32 %v3052, %v3054
      %v3056 = vrot.slane %v2439, %v3055
      %v3058 = vunpack.c.l.s4 1983009808
      %v3059 = vunpack.c.0.s8 %v3058
      %v3060 = vlaneseq
      %v3061 = vshrl.u32 %v3060, 7
      %v3062 = vsub.s32 %v3059, %v3061
      %v3063 = vrot.slane %v3049, %v3062
      %v3064 = vcombine.high %v3056, %v3056
      %v3065 = vcombine.high %v3063, %v3063
      %v3066 = vcombine.high %v2440, %v2440
      %v3068 = vunpack.c.l.s4 1983009808
      %v3069 = vunpack.c.0.s8 %v3068
      %v3070 = vlaneseq
      %v3071 = vshrl.u32 %v3070, 7
      %v3072 = vsub.s32 %v3069, %v3071
      %v3073 = vrot.slane %v2440, %v3072
      %v3075 = vunpack.c.l.s4 1983009808
      %v3076 = vunpack.c.0.s8 %v3075
      %v3077 = vlaneseq
      %v3078 = vshrl.u32 %v3077, 7
      %v3079 = vsub.s32 %v3076, %v3078
      %v3080 = vrot.slane %v3066, %v3079
      %v3081 = vcombine.high %v3073, %v3073
      %v3082 = vcombine.high %v3080, %v3080
      %v3083 = vcombine.high %v2441, %v2441
      %v3085 = vunpack.c.l.s4 1983009808
      %v3086 = vunpack.c.0.s8 %v3085
      %v3087 = vlaneseq
      %v3088 = vshrl.u32 %v3087, 7
      %v3089 = vsub.s32 %v3086, %v3088
      %v3090 = vrot.slane %v2441, %v3089
      %v3092 = vunpack.c.l.s4 1983009808
      %v3093 = vunpack.c.0.s8 %v3092
      %v3094 = vlaneseq
      %v3095 = vshrl.u32 %v3094, 7
      %v3096 = vsub.s32 %v3093, %v3095
      %v3097 = vrot.slane %v3083, %v3096
      %v3098 = vcombine.high %v3090, %v3090
      %v3099 = vcombine.high %v3097, %v3097
      %v3100 = vcombine.high %v2442, %v2442
      %v3102 = vunpack.c.l.s4 1983009808
      %v3103 = vunpack.c.0.s8 %v3102
      %v3104 = vlaneseq
      %v3105 = vshrl.u32 %v3104, 7
      %v3106 = vsub.s32 %v3103, %v3105
      %v3107 = vrot.slane %v2442, %v3106
      %v3109 = vunpack.c.l.s4 1983009808
      %v3110 = vunpack.c.0.s8 %v3109
      %v3111 = vlaneseq
      %v3112 = vshrl.u32 %v3111, 7
      %v3113 = vsub.s32 %v3110, %v3112
      %v3114 = vrot.slane %v3100, %v3113
      %v3115 = vcombine.high %v3107, %v3107
      %v3116 = vcombine.high %v3114, %v3114
      %v3117 = vcombine.high %v2443, %v2443
      %v3119 = vunpack.c.l.s4 1983009808
      %v3120 = vunpack.c.0.s8 %v3119
      %v3121 = vlaneseq
      %v3122 = vshrl.u32 %v3121, 7
      %v3123 = vsub.s32 %v3120, %v3122
      %v3124 = vrot.slane %v2443, %v3123
      %v3126 = vunpack.c.l.s4 1983009808
      %v3127 = vunpack.c.0.s8 %v3126
      %v3128 = vlaneseq
      %v3129 = vshrl.u32 %v3128, 7
      %v3130 = vsub.s32 %v3127, %v3129
      %v3131 = vrot.slane %v3117, %v3130
      %v3132 = vcombine.high %v3124, %v3124
      %v3133 = vcombine.high %v3131, %v3131
      %v3134 = vcombine.high %v2444, %v2444
      %v3136 = vunpack.c.l.s4 1983009808
      %v3137 = vunpack.c.0.s8 %v3136
      %v3138 = vlaneseq
      %v3139 = vshrl.u32 %v3138, 7
      %v3140 = vsub.s32 %v3137, %v3139
      %v3141 = vrot.slane %v2444, %v3140
      %v3143 = vunpack.c.l.s4 1983009808
      %v3144 = vunpack.c.0.s8 %v3143
      %v3145 = vlaneseq
      %v3146 = vshrl.u32 %v3145, 7
      %v3147 = vsub.s32 %v3144, %v3146
      %v3148 = vrot.slane %v3134, %v3147
      %v3149 = vcombine.high %v3141, %v3141
      %v3150 = vcombine.high %v3148, %v3148
      %v3151 = vcombine.high %v2445, %v2445
      %v3153 = vunpack.c.l.s4 1983009808
      %v3154 = vunpack.c.0.s8 %v3153
      %v3155 = vlaneseq
      %v3156 = vshrl.u32 %v3155, 7
      %v3157 = vsub.s32 %v3154, %v3156
      %v3158 = vrot.slane %v2445, %v3157
      %v3160 = vunpack.c.l.s4 1983009808
      %v3161 = vunpack.c.0.s8 %v3160
      %v3162 = vlaneseq
      %v3163 = vshrl.u32 %v3162, 7
      %v3164 = vsub.s32 %v3161, %v3163
      %v3165 = vrot.slane %v3151, %v3164
      %v3166 = vcombine.high %v3158, %v3158
      %v3167 = vcombine.high %v3165, %v3165
      %v3169 = vunpack.c.l.s4 1983009808
      %v3170 = vunpack.c.0.s8 %v3169
      %v3171 = vlaneseq
      %v3172 = vshrl.u32 %v3171, 7
      %v3173 = vsub.s32 %v3170, %v3172
      %v3174 = vrot.slane %v2446, %v3173
      %v3175 = vcombine.high %v3174, %v3174
      %v3176 = vld [vmem:[%s16] sm:$0xf]
      %v3177 = vld [vmem:[%s16 + $0x4] sm:$0xf]
      %v3178 = vld [vmem:[%s16 + $0x8] sm:$0xf]
      %v3179 = vld [vmem:[%s16 + $0xc] sm:$0xf]
      %v3180 = vld [vmem:[%s16 + $0x10] sm:$0xf]
      %v3181 = vld [vmem:[%s16 + $0x14] sm:$0xf]
      %v3182 = vld [vmem:[%s16 + $0x18] sm:$0xf]
      %v3183 = vld [vmem:[%s16 + $0x1c] sm:$0xf]
      %v3184 = vld [vmem:[%s16 + $0x20] sm:$0xf]
      %v3185 = vld [vmem:[%s16 + $0x24] sm:$0xf]
      %v3186 = vld [vmem:[%s16 + $0x28] sm:$0xf]
      %v3187 = vld [vmem:[%s16 + $0x2c] sm:$0xf]
      %v3188 = vld [vmem:[%s16 + $0x30] sm:$0xf]
      %v3189 = vld [vmem:[%s16 + $0x34] sm:$0xf]
      %v3190 = vld [vmem:[%s16 + $0x38] sm:$0xf]
      %v3191 = vld [vmem:[%s16 + $0x3c] sm:$0xf]
      %v3192 = vld [vmem:[%s16 + $0x40] sm:$0xf]
      %v3193 = vld [vmem:[%s16 + $0x44] sm:$0xf]
      %v3194 = vld [vmem:[%s16 + $0x48] sm:$0xf]
      %v3195 = vld [vmem:[%s16 + $0x4c] sm:$0xf]
      %v3196 = vld [vmem:[%s16 + $0x50] sm:$0xf]
      %v3197 = vld [vmem:[%s16 + $0x54] sm:$0xf]
      %v3198 = vld [vmem:[%s16 + $0x58] sm:$0xf]
      %v3199 = vld [vmem:[%s16 + $0x5c] sm:$0xf]
      %v3200 = vld [vmem:[%s16 + $0x60] sm:$0xf]
      %v3201 = vld [vmem:[%s16 + $0x64] sm:$0xf]
      %v3202 = vld [vmem:[%s16 + $0x68] sm:$0xf]
      %v3203 = vld [vmem:[%s16 + $0x6c] sm:$0xf]
      %v3204 = vld [vmem:[%s16 + $0x70] sm:$0xf]
      %v3205 = vld [vmem:[%s16 + $0x74] sm:$0xf]
      %v3206 = vld [vmem:[%s16 + $0x78] sm:$0xf]
      %v3207 = vld [vmem:[%s16 + $0x7c] sm:$0xf]
      %v3208 = vld [vmem:[%s16 + $0x80] sm:$0xf]
      %v3209 = vld [vmem:[%s16 + $0x84] sm:$0xf]
      %v3210 = vld [vmem:[%s16 + $0x88] sm:$0xf]
      %v3211 = vld [vmem:[%s16 + $0x8c] sm:$0xf]
      %v3212 = vcombine.low %v2495, %v2503
      %v3213 = vcombine.low %v2502, %v2504
      %v3215 = vunpack.c.l.s4 1983009808
      %v3216 = vunpack.c.0.s8 %v3215
      %v3217 = vlaneseq
      %v3218 = vshrl.u32 %v3217, 7
      %v3219 = vsub.s32 %v3216, %v3218
      %v3220 = vrot.slane %v3212, %v3219
      %v3222 = vunpack.c.l.s4 1983009808
      %v3223 = vunpack.c.0.s8 %v3222
      %v3224 = vlaneseq
      %v3225 = vshrl.u32 %v3224, 7
      %v3226 = vsub.s32 %v3223, %v3225
      %v3227 = vrot.slane %v3213, %v3226
      %v3228 = vcombine.low %v3220, %v3227
      %v3229 = vcombine.low %v2512, %v2520
      %v3230 = vcombine.low %v2519, %v2521
      %v3232 = vunpack.c.l.s4 1983009808
      %v3233 = vunpack.c.0.s8 %v3232
      %v3234 = vlaneseq
      %v3235 = vshrl.u32 %v3234, 7
      %v3236 = vsub.s32 %v3233, %v3235
      %v3237 = vrot.slane %v3229, %v3236
      %v3239 = vunpack.c.l.s4 1983009808
      %v3240 = vunpack.c.0.s8 %v3239
      %v3241 = vlaneseq
      %v3242 = vshrl.u32 %v3241, 7
      %v3243 = vsub.s32 %v3240, %v3242
      %v3244 = vrot.slane %v3230, %v3243
      %v3245 = vcombine.low %v3237, %v3244
      %v3246 = vcombine.low %v2537, %v2536
      %v3247 = vcombine.low %v2538, %v2546
      %v3249 = vunpack.c.l.s4 1983009808
      %v3250 = vunpack.c.0.s8 %v3249
      %v3251 = vlaneseq
      %v3252 = vshrl.u32 %v3251, 7
      %v3253 = vsub.s32 %v3250, %v3252
      %v3254 = vrot.slane %v3246, %v3253
      %v3256 = vunpack.c.l.s4 1983009808
      %v3257 = vunpack.c.0.s8 %v3256
      %v3258 = vlaneseq
      %v3259 = vshrl.u32 %v3258, 7
      %v3260 = vsub.s32 %v3257, %v3259
      %v3261 = vrot.slane %v3247, %v3260
      %v3262 = vcombine.low %v3254, %v3261
      %v3263 = vcombine.low %v2554, %v2553
      %v3264 = vcombine.low %v2555, %v2563
      %v3266 = vunpack.c.l.s4 1983009808
      %v3267 = vunpack.c.0.s8 %v3266
      %v3268 = vlaneseq
      %v3269 = vshrl.u32 %v3268, 7
      %v3270 = vsub.s32 %v3267, %v3269
      %v3271 = vrot.slane %v3263, %v3270
      %v3273 = vunpack.c.l.s4 1983009808
      %v3274 = vunpack.c.0.s8 %v3273
      %v3275 = vlaneseq
      %v3276 = vshrl.u32 %v3275, 7
      %v3277 = vsub.s32 %v3274, %v3276
      %v3278 = vrot.slane %v3264, %v3277
      %v3279 = vcombine.low %v3271, %v3278
      %v3280 = vcombine.low %v2570, %v2572
      %v3281 = vcombine.low %v2580, %v2588
      %v3283 = vunpack.c.l.s4 1983009808
      %v3284 = vunpack.c.0.s8 %v3283
      %v3285 = vlaneseq
      %v3286 = vshrl.u32 %v3285, 7
      %v3287 = vsub.s32 %v3284, %v3286
      %v3288 = vrot.slane %v3280, %v3287
      %v3290 = vunpack.c.l.s4 1983009808
      %v3291 = vunpack.c.0.s8 %v3290
      %v3292 = vlaneseq
      %v3293 = vshrl.u32 %v3292, 7
      %v3294 = vsub.s32 %v3291, %v3293
      %v3295 = vrot.slane %v3281, %v3294
      %v3296 = vcombine.low %v3288, %v3295
      %v3297 = vcombine.low %v2587, %v2589
      %v3298 = vcombine.low %v2597, %v2605
      %v3300 = vunpack.c.l.s4 1983009808
      %v3301 = vunpack.c.0.s8 %v3300
      %v3302 = vlaneseq
      %v3303 = vshrl.u32 %v3302, 7
      %v3304 = vsub.s32 %v3301, %v3303
      %v3305 = vrot.slane %v3297, %v3304
      %v3307 = vunpack.c.l.s4 1983009808
      %v3308 = vunpack.c.0.s8 %v3307
      %v3309 = vlaneseq
      %v3310 = vshrl.u32 %v3309, 7
      %v3311 = vsub.s32 %v3308, %v3310
      %v3312 = vrot.slane %v3298, %v3311
      %v3313 = vcombine.low %v3305, %v3312
      %v3314 = vcombine.low %v2606, %v2614
      %v3315 = vcombine.low %v2622, %v2621
      %v3317 = vunpack.c.l.s4 1983009808
      %v3318 = vunpack.c.0.s8 %v3317
      %v3319 = vlaneseq
      %v3320 = vshrl.u32 %v3319, 7
      %v3321 = vsub.s32 %v3318, %v3320
      %v3322 = vrot.slane %v3314, %v3321
      %v3324 = vunpack.c.l.s4 1983009808
      %v3325 = vunpack.c.0.s8 %v3324
      %v3326 = vlaneseq
      %v3327 = vshrl.u32 %v3326, 7
      %v3328 = vsub.s32 %v3325, %v3327
      %v3329 = vrot.slane %v3315, %v3328
      %v3330 = vcombine.low %v3322, %v3329
      %v3331 = vcombine.low %v2623, %v2631
      %v3332 = vcombine.low %v2639, %v2638
      %v3334 = vunpack.c.l.s4 1983009808
      %v3335 = vunpack.c.0.s8 %v3334
      %v3336 = vlaneseq
      %v3337 = vshrl.u32 %v3336, 7
      %v3338 = vsub.s32 %v3335, %v3337
      %v3339 = vrot.slane %v3331, %v3338
      %v3341 = vunpack.c.l.s4 1983009808
      %v3342 = vunpack.c.0.s8 %v3341
      %v3343 = vlaneseq
      %v3344 = vshrl.u32 %v3343, 7
      %v3345 = vsub.s32 %v3342, %v3344
      %v3346 = vrot.slane %v3332, %v3345
      %v3347 = vcombine.low %v3339, %v3346
      %v3348 = vcombine.low %v2648, %v2656
      %v3349 = vcombine.low %v2655, %v2657
      %v3351 = vunpack.c.l.s4 1983009808
      %v3352 = vunpack.c.0.s8 %v3351
      %v3353 = vlaneseq
      %v3354 = vshrl.u32 %v3353, 7
      %v3355 = vsub.s32 %v3352, %v3354
      %v3356 = vrot.slane %v3348, %v3355
      %v3358 = vunpack.c.l.s4 1983009808
      %v3359 = vunpack.c.0.s8 %v3358
      %v3360 = vlaneseq
      %v3361 = vshrl.u32 %v3360, 7
      %v3362 = vsub.s32 %v3359, %v3361
      %v3363 = vrot.slane %v3349, %v3362
      %v3364 = vcombine.low %v3356, %v3363
      %v3365 = vcombine.low %v2665, %v2673
      %v3366 = vcombine.low %v2672, %v2674
      %v3368 = vunpack.c.l.s4 1983009808
      %v3369 = vunpack.c.0.s8 %v3368
      %v3370 = vlaneseq
      %v3371 = vshrl.u32 %v3370, 7
      %v3372 = vsub.s32 %v3369, %v3371
      %v3373 = vrot.slane %v3365, %v3372
      %v3375 = vunpack.c.l.s4 1983009808
      %v3376 = vunpack.c.0.s8 %v3375
      %v3377 = vlaneseq
      %v3378 = vshrl.u32 %v3377, 7
      %v3379 = vsub.s32 %v3376, %v3378
      %v3380 = vrot.slane %v3366, %v3379
      %v3381 = vcombine.low %v3373, %v3380
      %v3382 = vcombine.low %v2690, %v2689
      %v3383 = vcombine.low %v2691, %v2699
      %v3385 = vunpack.c.l.s4 1983009808
      %v3386 = vunpack.c.0.s8 %v3385
      %v3387 = vlaneseq
      %v3388 = vshrl.u32 %v3387, 7
      %v3389 = vsub.s32 %v3386, %v3388
      %v3390 = vrot.slane %v3382, %v3389
      %v3392 = vunpack.c.l.s4 1983009808
      %v3393 = vunpack.c.0.s8 %v3392
      %v3394 = vlaneseq
      %v3395 = vshrl.u32 %v3394, 7
      %v3396 = vsub.s32 %v3393, %v3395
      %v3397 = vrot.slane %v3383, %v3396
      %v3398 = vcombine.low %v3390, %v3397
      %v3399 = vcombine.low %v2707, %v2706
      %v3400 = vcombine.low %v2708, %v2716
      %v3402 = vunpack.c.l.s4 1983009808
      %v3403 = vunpack.c.0.s8 %v3402
      %v3404 = vlaneseq
      %v3405 = vshrl.u32 %v3404, 7
      %v3406 = vsub.s32 %v3403, %v3405
      %v3407 = vrot.slane %v3399, %v3406
      %v3409 = vunpack.c.l.s4 1983009808
      %v3410 = vunpack.c.0.s8 %v3409
      %v3411 = vlaneseq
      %v3412 = vshrl.u32 %v3411, 7
      %v3413 = vsub.s32 %v3410, %v3412
      %v3414 = vrot.slane %v3400, %v3413
      %v3415 = vcombine.low %v3407, %v3414
      %v3416 = vcombine.low %v2723, %v2725
      %v3417 = vcombine.low %v2733, %v2741
      %v3419 = vunpack.c.l.s4 1983009808
      %v3420 = vunpack.c.0.s8 %v3419
      %v3421 = vlaneseq
      %v3422 = vshrl.u32 %v3421, 7
      %v3423 = vsub.s32 %v3420, %v3422
      %v3424 = vrot.slane %v3416, %v3423
      %v3426 = vunpack.c.l.s4 1983009808
      %v3427 = vunpack.c.0.s8 %v3426
      %v3428 = vlaneseq
      %v3429 = vshrl.u32 %v3428, 7
      %v3430 = vsub.s32 %v3427, %v3429
      %v3431 = vrot.slane %v3417, %v3430
      %v3432 = vcombine.low %v3424, %v3431
      %v3433 = vcombine.low %v2740, %v2742
      %v3434 = vcombine.low %v2750, %v2758
      %v3436 = vunpack.c.l.s4 1983009808
      %v3437 = vunpack.c.0.s8 %v3436
      %v3438 = vlaneseq
      %v3439 = vshrl.u32 %v3438, 7
      %v3440 = vsub.s32 %v3437, %v3439
      %v3441 = vrot.slane %v3433, %v3440
      %v3443 = vunpack.c.l.s4 1983009808
      %v3444 = vunpack.c.0.s8 %v3443
      %v3445 = vlaneseq
      %v3446 = vshrl.u32 %v3445, 7
      %v3447 = vsub.s32 %v3444, %v3446
      %v3448 = vrot.slane %v3434, %v3447
      %v3449 = vcombine.low %v3441, %v3448
      %v3450 = vcombine.low %v2759, %v2767
      %v3451 = vcombine.low %v2775, %v2774
      %v3453 = vunpack.c.l.s4 1983009808
      %v3454 = vunpack.c.0.s8 %v3453
      %v3455 = vlaneseq
      %v3456 = vshrl.u32 %v3455, 7
      %v3457 = vsub.s32 %v3454, %v3456
      %v3458 = vrot.slane %v3450, %v3457
      %v3460 = vunpack.c.l.s4 1983009808
      %v3461 = vunpack.c.0.s8 %v3460
      %v3462 = vlaneseq
      %v3463 = vshrl.u32 %v3462, 7
      %v3464 = vsub.s32 %v3461, %v3463
      %v3465 = vrot.slane %v3451, %v3464
      %v3466 = vcombine.low %v3458, %v3465
      %v3467 = vcombine.low %v2776, %v2784
      %v3468 = vcombine.low %v2792, %v2791
      %v3470 = vunpack.c.l.s4 1983009808
      %v3471 = vunpack.c.0.s8 %v3470
      %v3472 = vlaneseq
      %v3473 = vshrl.u32 %v3472, 7
      %v3474 = vsub.s32 %v3471, %v3473
      %v3475 = vrot.slane %v3467, %v3474
      %v3477 = vunpack.c.l.s4 1983009808
      %v3478 = vunpack.c.0.s8 %v3477
      %v3479 = vlaneseq
      %v3480 = vshrl.u32 %v3479, 7
      %v3481 = vsub.s32 %v3478, %v3480
      %v3482 = vrot.slane %v3468, %v3481
      %v3483 = vcombine.low %v3475, %v3482
      %v3484 = vcombine.low %v2801, %v2809
      %v3485 = vcombine.low %v2808, %v2810
      %v3487 = vunpack.c.l.s4 1983009808
      %v3488 = vunpack.c.0.s8 %v3487
      %v3489 = vlaneseq
      %v3490 = vshrl.u32 %v3489, 7
      %v3491 = vsub.s32 %v3488, %v3490
      %v3492 = vrot.slane %v3484, %v3491
      %v3494 = vunpack.c.l.s4 1983009808
      %v3495 = vunpack.c.0.s8 %v3494
      %v3496 = vlaneseq
      %v3497 = vshrl.u32 %v3496, 7
      %v3498 = vsub.s32 %v3495, %v3497
      %v3499 = vrot.slane %v3485, %v3498
      %v3500 = vcombine.low %v3492, %v3499
      %v3501 = vcombine.low %v2818, %v2826
      %v3502 = vcombine.low %v2825, %v2827
      %v3504 = vunpack.c.l.s4 1983009808
      %v3505 = vunpack.c.0.s8 %v3504
      %v3506 = vlaneseq
      %v3507 = vshrl.u32 %v3506, 7
      %v3508 = vsub.s32 %v3505, %v3507
      %v3509 = vrot.slane %v3501, %v3508
      %v3511 = vunpack.c.l.s4 1983009808
      %v3512 = vunpack.c.0.s8 %v3511
      %v3513 = vlaneseq
      %v3514 = vshrl.u32 %v3513, 7
      %v3515 = vsub.s32 %v3512, %v3514
      %v3516 = vrot.slane %v3502, %v3515
      %v3517 = vcombine.low %v3509, %v3516
      %v3518 = vcombine.low %v2843, %v2842
      %v3519 = vcombine.low %v2844, %v2852
      %v3521 = vunpack.c.l.s4 1983009808
      %v3522 = vunpack.c.0.s8 %v3521
      %v3523 = vlaneseq
      %v3524 = vshrl.u32 %v3523, 7
      %v3525 = vsub.s32 %v3522, %v3524
      %v3526 = vrot.slane %v3518, %v3525
      %v3528 = vunpack.c.l.s4 1983009808
      %v3529 = vunpack.c.0.s8 %v3528
      %v3530 = vlaneseq
      %v3531 = vshrl.u32 %v3530, 7
      %v3532 = vsub.s32 %v3529, %v3531
      %v3533 = vrot.slane %v3519, %v3532
      %v3534 = vcombine.low %v3526, %v3533
      %v3535 = vcombine.low %v2860, %v2859
      %v3536 = vcombine.low %v2861, %v2869
      %v3538 = vunpack.c.l.s4 1983009808
      %v3539 = vunpack.c.0.s8 %v3538
      %v3540 = vlaneseq
      %v3541 = vshrl.u32 %v3540, 7
      %v3542 = vsub.s32 %v3539, %v3541
      %v3543 = vrot.slane %v3535, %v3542
      %v3545 = vunpack.c.l.s4 1983009808
      %v3546 = vunpack.c.0.s8 %v3545
      %v3547 = vlaneseq
      %v3548 = vshrl.u32 %v3547, 7
      %v3549 = vsub.s32 %v3546, %v3548
      %v3550 = vrot.slane %v3536, %v3549
      %v3551 = vcombine.low %v3543, %v3550
      %v3552 = vcombine.low %v2876, %v2878
      %v3553 = vcombine.low %v2886, %v2894
      %v3555 = vunpack.c.l.s4 1983009808
      %v3556 = vunpack.c.0.s8 %v3555
      %v3557 = vlaneseq
      %v3558 = vshrl.u32 %v3557, 7
      %v3559 = vsub.s32 %v3556, %v3558
      %v3560 = vrot.slane %v3552, %v3559
      %v3562 = vunpack.c.l.s4 1983009808
      %v3563 = vunpack.c.0.s8 %v3562
      %v3564 = vlaneseq
      %v3565 = vshrl.u32 %v3564, 7
      %v3566 = vsub.s32 %v3563, %v3565
      %v3567 = vrot.slane %v3553, %v3566
      %v3568 = vcombine.low %v3560, %v3567
      %v3569 = vcombine.low %v2893, %v2895
      %v3570 = vcombine.low %v2903, %v2911
      %v3572 = vunpack.c.l.s4 1983009808
      %v3573 = vunpack.c.0.s8 %v3572
      %v3574 = vlaneseq
      %v3575 = vshrl.u32 %v3574, 7
      %v3576 = vsub.s32 %v3573, %v3575
      %v3577 = vrot.slane %v3569, %v3576
      %v3579 = vunpack.c.l.s4 1983009808
      %v3580 = vunpack.c.0.s8 %v3579
      %v3581 = vlaneseq
      %v3582 = vshrl.u32 %v3581, 7
      %v3583 = vsub.s32 %v3580, %v3582
      %v3584 = vrot.slane %v3570, %v3583
      %v3585 = vcombine.low %v3577, %v3584
      %v3586 = vcombine.low %v2912, %v2920
      %v3587 = vcombine.low %v2928, %v2927
      %v3589 = vunpack.c.l.s4 1983009808
      %v3590 = vunpack.c.0.s8 %v3589
      %v3591 = vlaneseq
      %v3592 = vshrl.u32 %v3591, 7
      %v3593 = vsub.s32 %v3590, %v3592
      %v3594 = vrot.slane %v3586, %v3593
      %v3596 = vunpack.c.l.s4 1983009808
      %v3597 = vunpack.c.0.s8 %v3596
      %v3598 = vlaneseq
      %v3599 = vshrl.u32 %v3598, 7
      %v3600 = vsub.s32 %v3597, %v3599
      %v3601 = vrot.slane %v3587, %v3600
      %v3602 = vcombine.low %v3594, %v3601
      %v3603 = vcombine.low %v2929, %v2937
      %v3604 = vcombine.low %v2945, %v2944
      %v3606 = vunpack.c.l.s4 1983009808
      %v3607 = vunpack.c.0.s8 %v3606
      %v3608 = vlaneseq
      %v3609 = vshrl.u32 %v3608, 7
      %v3610 = vsub.s32 %v3607, %v3609
      %v3611 = vrot.slane %v3603, %v3610
      %v3613 = vunpack.c.l.s4 1983009808
      %v3614 = vunpack.c.0.s8 %v3613
      %v3615 = vlaneseq
      %v3616 = vshrl.u32 %v3615, 7
      %v3617 = vsub.s32 %v3614, %v3616
      %v3618 = vrot.slane %v3604, %v3617
      %v3619 = vcombine.low %v3611, %v3618
      %v3620 = vcombine.low %v2954, %v2962
      %v3621 = vcombine.low %v2961, %v2963
      %v3623 = vunpack.c.l.s4 1983009808
      %v3624 = vunpack.c.0.s8 %v3623
      %v3625 = vlaneseq
      %v3626 = vshrl.u32 %v3625, 7
      %v3627 = vsub.s32 %v3624, %v3626
      %v3628 = vrot.slane %v3620, %v3627
      %v3630 = vunpack.c.l.s4 1983009808
      %v3631 = vunpack.c.0.s8 %v3630
      %v3632 = vlaneseq
      %v3633 = vshrl.u32 %v3632, 7
      %v3634 = vsub.s32 %v3631, %v3633
      %v3635 = vrot.slane %v3621, %v3634
      %v3636 = vcombine.low %v3628, %v3635
      %v3637 = vcombine.low %v2971, %v2979
      %v3638 = vcombine.low %v2978, %v2980
      %v3640 = vunpack.c.l.s4 1983009808
      %v3641 = vunpack.c.0.s8 %v3640
      %v3642 = vlaneseq
      %v3643 = vshrl.u32 %v3642, 7
      %v3644 = vsub.s32 %v3641, %v3643
      %v3645 = vrot.slane %v3637, %v3644
      %v3647 = vunpack.c.l.s4 1983009808
      %v3648 = vunpack.c.0.s8 %v3647
      %v3649 = vlaneseq
      %v3650 = vshrl.u32 %v3649, 7
      %v3651 = vsub.s32 %v3648, %v3650
      %v3652 = vrot.slane %v3638, %v3651
      %v3653 = vcombine.low %v3645, %v3652
      %v3654 = vcombine.low %v2996, %v2995
      %v3655 = vcombine.low %v2997, %v3005
      %v3657 = vunpack.c.l.s4 1983009808
      %v3658 = vunpack.c.0.s8 %v3657
      %v3659 = vlaneseq
      %v3660 = vshrl.u32 %v3659, 7
      %v3661 = vsub.s32 %v3658, %v3660
      %v3662 = vrot.slane %v3654, %v3661
      %v3664 = vunpack.c.l.s4 1983009808
      %v3665 = vunpack.c.0.s8 %v3664
      %v3666 = vlaneseq
      %v3667 = vshrl.u32 %v3666, 7
      %v3668 = vsub.s32 %v3665, %v3667
      %v3669 = vrot.slane %v3655, %v3668
      %v3670 = vcombine.low %v3662, %v3669
      %v3671 = vcombine.low %v3013, %v3012
      %v3672 = vcombine.low %v3014, %v3022
      %v3674 = vunpack.c.l.s4 1983009808
      %v3675 = vunpack.c.0.s8 %v3674
      %v3676 = vlaneseq
      %v3677 = vshrl.u32 %v3676, 7
      %v3678 = vsub.s32 %v3675, %v3677
      %v3679 = vrot.slane %v3671, %v3678
      %v3681 = vunpack.c.l.s4 1983009808
      %v3682 = vunpack.c.0.s8 %v3681
      %v3683 = vlaneseq
      %v3684 = vshrl.u32 %v3683, 7
      %v3685 = vsub.s32 %v3682, %v3684
      %v3686 = vrot.slane %v3672, %v3685
      %v3687 = vcombine.low %v3679, %v3686
      %v3688 = vcombine.low %v3029, %v3031
      %v3689 = vcombine.low %v3039, %v3047
      %v3691 = vunpack.c.l.s4 1983009808
      %v3692 = vunpack.c.0.s8 %v3691
      %v3693 = vlaneseq
      %v3694 = vshrl.u32 %v3693, 7
      %v3695 = vsub.s32 %v3692, %v3694
      %v3696 = vrot.slane %v3688, %v3695
      %v3698 = vunpack.c.l.s4 1983009808
      %v3699 = vunpack.c.0.s8 %v3698
      %v3700 = vlaneseq
      %v3701 = vshrl.u32 %v3700, 7
      %v3702 = vsub.s32 %v3699, %v3701
      %v3703 = vrot.slane %v3689, %v3702
      %v3704 = vcombine.low %v3696, %v3703
      %v3705 = vcombine.low %v3046, %v3048
      %v3706 = vcombine.low %v3056, %v3064
      %v3708 = vunpack.c.l.s4 1983009808
      %v3709 = vunpack.c.0.s8 %v3708
      %v3710 = vlaneseq
      %v3711 = vshrl.u32 %v3710, 7
      %v3712 = vsub.s32 %v3709, %v3711
      %v3713 = vrot.slane %v3705, %v3712
      %v3715 = vunpack.c.l.s4 1983009808
      %v3716 = vunpack.c.0.s8 %v3715
      %v3717 = vlaneseq
      %v3718 = vshrl.u32 %v3717, 7
      %v3719 = vsub.s32 %v3716, %v3718
      %v3720 = vrot.slane %v3706, %v3719
      %v3721 = vcombine.low %v3713, %v3720
      %v3722 = vcombine.low %v3065, %v3073
      %v3723 = vcombine.low %v3081, %v3080
      %v3725 = vunpack.c.l.s4 1983009808
      %v3726 = vunpack.c.0.s8 %v3725
      %v3727 = vlaneseq
      %v3728 = vshrl.u32 %v3727, 7
      %v3729 = vsub.s32 %v3726, %v3728
      %v3730 = vrot.slane %v3722, %v3729
      %v3732 = vunpack.c.l.s4 1983009808
      %v3733 = vunpack.c.0.s8 %v3732
      %v3734 = vlaneseq
      %v3735 = vshrl.u32 %v3734, 7
      %v3736 = vsub.s32 %v3733, %v3735
      %v3737 = vrot.slane %v3723, %v3736
      %v3738 = vcombine.low %v3730, %v3737
      %v3739 = vcombine.low %v3082, %v3090
      %v3740 = vcombine.low %v3098, %v3097
      %v3742 = vunpack.c.l.s4 1983009808
      %v3743 = vunpack.c.0.s8 %v3742
      %v3744 = vlaneseq
      %v3745 = vshrl.u32 %v3744, 7
      %v3746 = vsub.s32 %v3743, %v3745
      %v3747 = vrot.slane %v3739, %v3746
      %v3749 = vunpack.c.l.s4 1983009808
      %v3750 = vunpack.c.0.s8 %v3749
      %v3751 = vlaneseq
      %v3752 = vshrl.u32 %v3751, 7
      %v3753 = vsub.s32 %v3750, %v3752
      %v3754 = vrot.slane %v3740, %v3753
      %v3755 = vcombine.low %v3747, %v3754
      %v3789 = vunpack.c.l.s4 1983009808
      %v3790 = vunpack.c.0.s8 %v3789
      %v3791 = vlaneseq
      %v3792 = vshrl.u32 %v3791, 7
      %v3793 = vsub.s32 %v3790, %v3792
      %v3794 = vrot.slane %v2529, %v3793
      %v3796 = vunpack.c.l.s4 1983009808
      %v3797 = vunpack.c.0.s8 %v3796
      %v3798 = vlaneseq
      %v3799 = vshrl.u32 %v3798, 7
      %v3800 = vsub.s32 %v3797, %v3799
      %v3801 = vrot.slane %v2571, %v3800
      %v3803 = vunpack.c.l.s4 1983009808
      %v3804 = vunpack.c.0.s8 %v3803
      %v3805 = vlaneseq
      %v3806 = vshrl.u32 %v3805, 7
      %v3807 = vsub.s32 %v3804, %v3806
      %v3808 = vrot.slane %v2604, %v3807
      %v3810 = vunpack.c.l.s4 1983009808
      %v3811 = vunpack.c.0.s8 %v3810
      %v3812 = vlaneseq
      %v3813 = vshrl.u32 %v3812, 7
      %v3814 = vsub.s32 %v3811, %v3813
      %v3815 = vrot.slane %v2640, %v3814
      %v3817 = vunpack.c.l.s4 1983009808
      %v3818 = vunpack.c.0.s8 %v3817
      %v3819 = vlaneseq
      %v3820 = vshrl.u32 %v3819, 7
      %v3821 = vsub.s32 %v3818, %v3820
      %v3822 = vrot.slane %v2682, %v3821
      %v3824 = vunpack.c.l.s4 1983009808
      %v3825 = vunpack.c.0.s8 %v3824
      %v3826 = vlaneseq
      %v3827 = vshrl.u32 %v3826, 7
      %v3828 = vsub.s32 %v3825, %v3827
      %v3829 = vrot.slane %v2724, %v3828
      %v3831 = vunpack.c.l.s4 1983009808
      %v3832 = vunpack.c.0.s8 %v3831
      %v3833 = vlaneseq
      %v3834 = vshrl.u32 %v3833, 7
      %v3835 = vsub.s32 %v3832, %v3834
      %v3836 = vrot.slane %v2757, %v3835
      %v3838 = vunpack.c.l.s4 1983009808
      %v3839 = vunpack.c.0.s8 %v3838
      %v3840 = vlaneseq
      %v3841 = vshrl.u32 %v3840, 7
      %v3842 = vsub.s32 %v3839, %v3841
      %v3843 = vrot.slane %v2793, %v3842
      %v3845 = vunpack.c.l.s4 1983009808
      %v3846 = vunpack.c.0.s8 %v3845
      %v3847 = vlaneseq
      %v3848 = vshrl.u32 %v3847, 7
      %v3849 = vsub.s32 %v3846, %v3848
      %v3850 = vrot.slane %v2835, %v3849
      %v3852 = vunpack.c.l.s4 1983009808
      %v3853 = vunpack.c.0.s8 %v3852
      %v3854 = vlaneseq
      %v3855 = vshrl.u32 %v3854, 7
      %v3856 = vsub.s32 %v3853, %v3855
      %v3857 = vrot.slane %v2877, %v3856
      %v3859 = vunpack.c.l.s4 1983009808
      %v3860 = vunpack.c.0.s8 %v3859
      %v3861 = vlaneseq
      %v3862 = vshrl.u32 %v3861, 7
      %v3863 = vsub.s32 %v3860, %v3862
      %v3864 = vrot.slane %v2910, %v3863
      %v3866 = vunpack.c.l.s4 1983009808
      %v3867 = vunpack.c.0.s8 %v3866
      %v3868 = vlaneseq
      %v3869 = vshrl.u32 %v3868, 7
      %v3870 = vsub.s32 %v3867, %v3869
      %v3871 = vrot.slane %v2946, %v3870
      %v3873 = vunpack.c.l.s4 1983009808
      %v3874 = vunpack.c.0.s8 %v3873
      %v3875 = vlaneseq
      %v3876 = vshrl.u32 %v3875, 7
      %v3877 = vsub.s32 %v3874, %v3876
      %v3878 = vrot.slane %v2988, %v3877
      %v3880 = vunpack.c.l.s4 1983009808
      %v3881 = vunpack.c.0.s8 %v3880
      %v3882 = vlaneseq
      %v3883 = vshrl.u32 %v3882, 7
      %v3884 = vsub.s32 %v3881, %v3883
      %v3885 = vrot.slane %v3030, %v3884
      %v3887 = vunpack.c.l.s4 1983009808
      %v3888 = vunpack.c.0.s8 %v3887
      %v3889 = vlaneseq
      %v3890 = vshrl.u32 %v3889, 7
      %v3891 = vsub.s32 %v3888, %v3890
      %v3892 = vrot.slane %v3063, %v3891
      %v3894 = vunpack.c.l.s4 1983009808
      %v3895 = vunpack.c.0.s8 %v3894
      %v3896 = vlaneseq
      %v3897 = vshrl.u32 %v3896, 7
      %v3898 = vsub.s32 %v3895, %v3897
      %v3899 = vrot.slane %v3099, %v3898
      %v3900 = vrot.slane %v3228, 1
      %v3901 = vrot.slane %v3245, 1
      %v3902 = vsel %vm732, %v3900, %v3901
      %v3903 = vrot.slane %v3794, 1
      %v3904 = vsel %vm732, %v3901, %v3903
      %v3905 = vrot.slane %v3262, 1
      %v3906 = vrot.slane %v3279, 1
      %v3907 = vsel %vm732, %v3905, %v3906
      %v3908 = vrot.slane %v3801, 1
      %v3909 = vsel %vm732, %v3906, %v3908
      %v3910 = vrot.slane %v3296, 1
      %v3911 = vrot.slane %v3313, 1
      %v3912 = vsel %vm732, %v3910, %v3911
      %v3913 = vrot.slane %v3808, 1
      %v3914 = vsel %vm732, %v3911, %v3913
      %v3915 = vrot.slane %v3330, 1
      %v3916 = vrot.slane %v3347, 1
      %v3917 = vsel %vm732, %v3915, %v3916
      %v3918 = vrot.slane %v3815, 1
      %v3919 = vsel %vm732, %v3916, %v3918
      %v3920 = vrot.slane %v3364, 1
      %v3921 = vrot.slane %v3381, 1
      %v3922 = vsel %vm732, %v3920, %v3921
      %v3923 = vrot.slane %v3822, 1
      %v3924 = vsel %vm732, %v3921, %v3923
      %v3925 = vrot.slane %v3398, 1
      %v3926 = vrot.slane %v3415, 1
      %v3927 = vsel %vm732, %v3925, %v3926
      %v3928 = vrot.slane %v3829, 1
      %v3929 = vsel %vm732, %v3926, %v3928
      %v3930 = vrot.slane %v3432, 1
      %v3931 = vrot.slane %v3449, 1
      %v3932 = vsel %vm732, %v3930, %v3931
      %v3933 = vrot.slane %v3836, 1
      %v3934 = vsel %vm732, %v3931, %v3933
      %v3935 = vrot.slane %v3466, 1
      %v3936 = vrot.slane %v3483, 1
      %v3937 = vsel %vm732, %v3935, %v3936
      %v3938 = vrot.slane %v3843, 1
      %v3939 = vsel %vm732, %v3936, %v3938
      %v3940 = vrot.slane %v3500, 1
      %v3941 = vrot.slane %v3517, 1
      %v3942 = vsel %vm732, %v3940, %v3941
      %v3943 = vrot.slane %v3850, 1
      %v3944 = vsel %vm732, %v3941, %v3943
      %v3945 = vrot.slane %v3534, 1
      %v3946 = vrot.slane %v3551, 1
      %v3947 = vsel %vm732, %v3945, %v3946
      %v3948 = vrot.slane %v3857, 1
      %v3949 = vsel %vm732, %v3946, %v3948
      %v3950 = vrot.slane %v3568, 1
      %v3951 = vrot.slane %v3585, 1
      %v3952 = vsel %vm732, %v3950, %v3951
      %v3953 = vrot.slane %v3864, 1
      %v3954 = vsel %vm732, %v3951, %v3953
      %v3955 = vrot.slane %v3602, 1
      %v3956 = vrot.slane %v3619, 1
      %v3957 = vsel %vm732, %v3955, %v3956
      %v3958 = vrot.slane %v3871, 1
      %v3959 = vsel %vm732, %v3956, %v3958
      %v3960 = vrot.slane %v3636, 1
      %v3961 = vrot.slane %v3653, 1
      %v3962 = vsel %vm732, %v3960, %v3961
      %v3963 = vrot.slane %v3878, 1
      %v3964 = vsel %vm732, %v3961, %v3963
      %v3965 = vrot.slane %v3670, 1
      %v3966 = vrot.slane %v3687, 1
      %v3967 = vsel %vm732, %v3965, %v3966
      %v3968 = vrot.slane %v3885, 1
      %v3969 = vsel %vm732, %v3966, %v3968
      %v3970 = vrot.slane %v3704, 1
      %v3971 = vrot.slane %v3721, 1
      %v3972 = vsel %vm732, %v3970, %v3971
      %v3973 = vrot.slane %v3892, 1
      %v3974 = vsel %vm732, %v3971, %v3973
      %v3975 = vrot.slane %v3738, 1
      %v3976 = vrot.slane %v3755, 1
      %v3977 = vsel %vm732, %v3975, %v3976
      %v3978 = vrot.slane %v3899, 1
      %v3979 = vsel %vm732, %v3976, %v3978
      %3980 = vrot.lane.b32.xlu0 %v3902, 32
      %v3981 = vpop.permute.xlu0 %3980
      %3982 = vrot.lane.b32.xlu0 %v3904, 32
      %v3983 = vpop.permute.xlu0 %3982
      %3984 = vrot.lane.b32.xlu0 %v3907, 32
      %v3985 = vpop.permute.xlu0 %3984
      %3986 = vrot.lane.b32.xlu0 %v3909, 32
      %v3987 = vpop.permute.xlu0 %3986
      %3988 = vrot.lane.b32.xlu0 %v3912, 32
      %v3989 = vpop.permute.xlu0 %3988
      %3990 = vrot.lane.b32.xlu0 %v3914, 32
      %v3991 = vpop.permute.xlu0 %3990
      %3992 = vrot.lane.b32.xlu0 %v3917, 32
      %v3993 = vpop.permute.xlu0 %3992
      %3994 = vrot.lane.b32.xlu0 %v3919, 32
      %v3995 = vpop.permute.xlu0 %3994
      %3996 = vrot.lane.b32.xlu0 %v3922, 32
      %v3997 = vpop.permute.xlu0 %3996
      %3998 = vrot.lane.b32.xlu0 %v3924, 32
      %v3999 = vpop.permute.xlu0 %3998
      %4000 = vrot.lane.b32.xlu0 %v3927, 32
      %v4001 = vpop.permute.xlu0 %4000
      %4002 = vrot.lane.b32.xlu0 %v3929, 32
      %v4003 = vpop.permute.xlu0 %4002
      %4004 = vrot.lane.b32.xlu0 %v3932, 32
      %v4005 = vpop.permute.xlu0 %4004
      %4006 = vrot.lane.b32.xlu0 %v3934, 32
      %v4007 = vpop.permute.xlu0 %4006
      %4008 = vrot.lane.b32.xlu0 %v3937, 32
      %v4009 = vpop.permute.xlu0 %4008
      %4010 = vrot.lane.b32.xlu0 %v3939, 32
      %v4011 = vpop.permute.xlu0 %4010
      %4012 = vrot.lane.b32.xlu0 %v3942, 32
      %v4013 = vpop.permute.xlu0 %4012
      %4014 = vrot.lane.b32.xlu0 %v3944, 32
      %v4015 = vpop.permute.xlu0 %4014
      %4016 = vrot.lane.b32.xlu0 %v3947, 32
      %v4017 = vpop.permute.xlu0 %4016
      %4018 = vrot.lane.b32.xlu0 %v3949, 32
      %v4019 = vpop.permute.xlu0 %4018
      %4020 = vrot.lane.b32.xlu0 %v3952, 32
      %v4021 = vpop.permute.xlu0 %4020
      %4022 = vrot.lane.b32.xlu0 %v3954, 32
      %v4023 = vpop.permute.xlu0 %4022
      %4024 = vrot.lane.b32.xlu0 %v3957, 32
      %v4025 = vpop.permute.xlu0 %4024
      %4026 = vrot.lane.b32.xlu0 %v3959, 32
      %v4027 = vpop.permute.xlu0 %4026
      %4028 = vrot.lane.b32.xlu0 %v3962, 32
      %v4029 = vpop.permute.xlu0 %4028
      %4030 = vrot.lane.b32.xlu0 %v3964, 32
      %v4031 = vpop.permute.xlu0 %4030
      %4032 = vrot.lane.b32.xlu0 %v3967, 32
      %v4033 = vpop.permute.xlu0 %4032
      %4034 = vrot.lane.b32.xlu0 %v3969, 32
      %v4035 = vpop.permute.xlu0 %4034
      %4036 = vrot.lane.b32.xlu0 %v3972, 32
      %v4037 = vpop.permute.xlu0 %4036
      %4038 = vrot.lane.b32.xlu0 %v3974, 32
      %v4039 = vpop.permute.xlu0 %4038
      %4040 = vrot.lane.b32.xlu0 %v3977, 32
      %v4041 = vpop.permute.xlu0 %4040
      %4042 = vrot.lane.b32.xlu0 %v3979, 32
      %v4043 = vpop.permute.xlu0 %4042
      %v4076 = vcombine.low %v2503, %v2502
      %v4077 = vcombine.low %v2504, %v2512
      %v4079 = vunpack.c.l.s4 1983009808
      %v4080 = vunpack.c.0.s8 %v4079
      %v4081 = vlaneseq
      %v4082 = vshrl.u32 %v4081, 7
      %v4083 = vsub.s32 %v4080, %v4082
      %v4084 = vrot.slane %v4076, %v4083
      %v4086 = vunpack.c.l.s4 1983009808
      %v4087 = vunpack.c.0.s8 %v4086
      %v4088 = vlaneseq
      %v4089 = vshrl.u32 %v4088, 7
      %v4090 = vsub.s32 %v4087, %v4089
      %v4091 = vrot.slane %v4077, %v4090
      %v4092 = vcombine.low %v4084, %v4091
      %v4093 = vcombine.low %v2520, %v2519
      %v4094 = vcombine.low %v2521, %v2529
      %v4096 = vunpack.c.l.s4 1983009808
      %v4097 = vunpack.c.0.s8 %v4096
      %v4098 = vlaneseq
      %v4099 = vshrl.u32 %v4098, 7
      %v4100 = vsub.s32 %v4097, %v4099
      %v4101 = vrot.slane %v4093, %v4100
      %v4103 = vunpack.c.l.s4 1983009808
      %v4104 = vunpack.c.0.s8 %v4103
      %v4105 = vlaneseq
      %v4106 = vshrl.u32 %v4105, 7
      %v4107 = vsub.s32 %v4104, %v4106
      %v4108 = vrot.slane %v4094, %v4107
      %v4109 = vcombine.low %v4101, %v4108
      %v4110 = vcombine.low %v2536, %v2538
      %v4111 = vcombine.low %v2546, %v2554
      %v4113 = vunpack.c.l.s4 1983009808
      %v4114 = vunpack.c.0.s8 %v4113
      %v4115 = vlaneseq
      %v4116 = vshrl.u32 %v4115, 7
      %v4117 = vsub.s32 %v4114, %v4116
      %v4118 = vrot.slane %v4110, %v4117
      %v4120 = vunpack.c.l.s4 1983009808
      %v4121 = vunpack.c.0.s8 %v4120
      %v4122 = vlaneseq
      %v4123 = vshrl.u32 %v4122, 7
      %v4124 = vsub.s32 %v4121, %v4123
      %v4125 = vrot.slane %v4111, %v4124
      %v4126 = vcombine.low %v4118, %v4125
      %v4127 = vcombine.low %v2553, %v2555
      %v4128 = vcombine.low %v2563, %v2571
      %v4130 = vunpack.c.l.s4 1983009808
      %v4131 = vunpack.c.0.s8 %v4130
      %v4132 = vlaneseq
      %v4133 = vshrl.u32 %v4132, 7
      %v4134 = vsub.s32 %v4131, %v4133
      %v4135 = vrot.slane %v4127, %v4134
      %v4137 = vunpack.c.l.s4 1983009808
      %v4138 = vunpack.c.0.s8 %v4137
      %v4139 = vlaneseq
      %v4140 = vshrl.u32 %v4139, 7
      %v4141 = vsub.s32 %v4138, %v4140
      %v4142 = vrot.slane %v4128, %v4141
      %v4143 = vcombine.low %v4135, %v4142
      %v4144 = vcombine.low %v2572, %v2580
      %v4145 = vcombine.low %v2588, %v2587
      %v4147 = vunpack.c.l.s4 1983009808
      %v4148 = vunpack.c.0.s8 %v4147
      %v4149 = vlaneseq
      %v4150 = vshrl.u32 %v4149, 7
      %v4151 = vsub.s32 %v4148, %v4150
      %v4152 = vrot.slane %v4144, %v4151
      %v4154 = vunpack.c.l.s4 1983009808
      %v4155 = vunpack.c.0.s8 %v4154
      %v4156 = vlaneseq
      %v4157 = vshrl.u32 %v4156, 7
      %v4158 = vsub.s32 %v4155, %v4157
      %v4159 = vrot.slane %v4145, %v4158
      %v4160 = vcombine.low %v4152, %v4159
      %v4161 = vcombine.low %v2589, %v2597
      %v4162 = vcombine.low %v2605, %v2604
      %v4164 = vunpack.c.l.s4 1983009808
      %v4165 = vunpack.c.0.s8 %v4164
      %v4166 = vlaneseq
      %v4167 = vshrl.u32 %v4166, 7
      %v4168 = vsub.s32 %v4165, %v4167
      %v4169 = vrot.slane %v4161, %v4168
      %v4171 = vunpack.c.l.s4 1983009808
      %v4172 = vunpack.c.0.s8 %v4171
      %v4173 = vlaneseq
      %v4174 = vshrl.u32 %v4173, 7
      %v4175 = vsub.s32 %v4172, %v4174
      %v4176 = vrot.slane %v4162, %v4175
      %v4177 = vcombine.low %v4169, %v4176
      %v4178 = vcombine.low %v2614, %v2622
      %v4179 = vcombine.low %v2621, %v2623
      %v4181 = vunpack.c.l.s4 1983009808
      %v4182 = vunpack.c.0.s8 %v4181
      %v4183 = vlaneseq
      %v4184 = vshrl.u32 %v4183, 7
      %v4185 = vsub.s32 %v4182, %v4184
      %v4186 = vrot.slane %v4178, %v4185
      %v4188 = vunpack.c.l.s4 1983009808
      %v4189 = vunpack.c.0.s8 %v4188
      %v4190 = vlaneseq
      %v4191 = vshrl.u32 %v4190, 7
      %v4192 = vsub.s32 %v4189, %v4191
      %v4193 = vrot.slane %v4179, %v4192
      %v4194 = vcombine.low %v4186, %v4193
      %v4195 = vcombine.low %v2631, %v2639
      %v4196 = vcombine.low %v2638, %v2640
      %v4198 = vunpack.c.l.s4 1983009808
      %v4199 = vunpack.c.0.s8 %v4198
      %v4200 = vlaneseq
      %v4201 = vshrl.u32 %v4200, 7
      %v4202 = vsub.s32 %v4199, %v4201
      %v4203 = vrot.slane %v4195, %v4202
      %v4205 = vunpack.c.l.s4 1983009808
      %v4206 = vunpack.c.0.s8 %v4205
      %v4207 = vlaneseq
      %v4208 = vshrl.u32 %v4207, 7
      %v4209 = vsub.s32 %v4206, %v4208
      %v4210 = vrot.slane %v4196, %v4209
      %v4211 = vcombine.low %v4203, %v4210
      %v4212 = vcombine.low %v2656, %v2655
      %v4213 = vcombine.low %v2657, %v2665
      %v4215 = vunpack.c.l.s4 1983009808
      %v4216 = vunpack.c.0.s8 %v4215
      %v4217 = vlaneseq
      %v4218 = vshrl.u32 %v4217, 7
      %v4219 = vsub.s32 %v4216, %v4218
      %v4220 = vrot.slane %v4212, %v4219
      %v4222 = vunpack.c.l.s4 1983009808
      %v4223 = vunpack.c.0.s8 %v4222
      %v4224 = vlaneseq
      %v4225 = vshrl.u32 %v4224, 7
      %v4226 = vsub.s32 %v4223, %v4225
      %v4227 = vrot.slane %v4213, %v4226
      %v4228 = vcombine.low %v4220, %v4227
      %v4229 = vcombine.low %v2673, %v2672
      %v4230 = vcombine.low %v2674, %v2682
      %v4232 = vunpack.c.l.s4 1983009808
      %v4233 = vunpack.c.0.s8 %v4232
      %v4234 = vlaneseq
      %v4235 = vshrl.u32 %v4234, 7
      %v4236 = vsub.s32 %v4233, %v4235
      %v4237 = vrot.slane %v4229, %v4236
      %v4239 = vunpack.c.l.s4 1983009808
      %v4240 = vunpack.c.0.s8 %v4239
      %v4241 = vlaneseq
      %v4242 = vshrl.u32 %v4241, 7
      %v4243 = vsub.s32 %v4240, %v4242
      %v4244 = vrot.slane %v4230, %v4243
      %v4245 = vcombine.low %v4237, %v4244
      %v4246 = vcombine.low %v2689, %v2691
      %v4247 = vcombine.low %v2699, %v2707
      %v4249 = vunpack.c.l.s4 1983009808
      %v4250 = vunpack.c.0.s8 %v4249
      %v4251 = vlaneseq
      %v4252 = vshrl.u32 %v4251, 7
      %v4253 = vsub.s32 %v4250, %v4252
      %v4254 = vrot.slane %v4246, %v4253
      %v4256 = vunpack.c.l.s4 1983009808
      %v4257 = vunpack.c.0.s8 %v4256
      %v4258 = vlaneseq
      %v4259 = vshrl.u32 %v4258, 7
      %v4260 = vsub.s32 %v4257, %v4259
      %v4261 = vrot.slane %v4247, %v4260
      %v4262 = vcombine.low %v4254, %v4261
      %v4263 = vcombine.low %v2706, %v2708
      %v4264 = vcombine.low %v2716, %v2724
      %v4266 = vunpack.c.l.s4 1983009808
      %v4267 = vunpack.c.0.s8 %v4266
      %v4268 = vlaneseq
      %v4269 = vshrl.u32 %v4268, 7
      %v4270 = vsub.s32 %v4267, %v4269
      %v4271 = vrot.slane %v4263, %v4270
      %v4273 = vunpack.c.l.s4 1983009808
      %v4274 = vunpack.c.0.s8 %v4273
      %v4275 = vlaneseq
      %v4276 = vshrl.u32 %v4275, 7
      %v4277 = vsub.s32 %v4274, %v4276
      %v4278 = vrot.slane %v4264, %v4277
      %v4279 = vcombine.low %v4271, %v4278
      %v4280 = vcombine.low %v2725, %v2733
      %v4281 = vcombine.low %v2741, %v2740
      %v4283 = vunpack.c.l.s4 1983009808
      %v4284 = vunpack.c.0.s8 %v4283
      %v4285 = vlaneseq
      %v4286 = vshrl.u32 %v4285, 7
      %v4287 = vsub.s32 %v4284, %v4286
      %v4288 = vrot.slane %v4280, %v4287
      %v4290 = vunpack.c.l.s4 1983009808
      %v4291 = vunpack.c.0.s8 %v4290
      %v4292 = vlaneseq
      %v4293 = vshrl.u32 %v4292, 7
      %v4294 = vsub.s32 %v4291, %v4293
      %v4295 = vrot.slane %v4281, %v4294
      %v4296 = vcombine.low %v4288, %v4295
      %v4297 = vcombine.low %v2742, %v2750
      %v4298 = vcombine.low %v2758, %v2757
      %v4300 = vunpack.c.l.s4 1983009808
      %v4301 = vunpack.c.0.s8 %v4300
      %v4302 = vlaneseq
      %v4303 = vshrl.u32 %v4302, 7
      %v4304 = vsub.s32 %v4301, %v4303
      %v4305 = vrot.slane %v4297, %v4304
      %v4307 = vunpack.c.l.s4 1983009808
      %v4308 = vunpack.c.0.s8 %v4307
      %v4309 = vlaneseq
      %v4310 = vshrl.u32 %v4309, 7
      %v4311 = vsub.s32 %v4308, %v4310
      %v4312 = vrot.slane %v4298, %v4311
      %v4313 = vcombine.low %v4305, %v4312
      %v4314 = vcombine.low %v2767, %v2775
      %v4315 = vcombine.low %v2774, %v2776
      %v4317 = vunpack.c.l.s4 1983009808
      %v4318 = vunpack.c.0.s8 %v4317
      %v4319 = vlaneseq
      %v4320 = vshrl.u32 %v4319, 7
      %v4321 = vsub.s32 %v4318, %v4320
      %v4322 = vrot.slane %v4314, %v4321
      %v4324 = vunpack.c.l.s4 1983009808
      %v4325 = vunpack.c.0.s8 %v4324
      %v4326 = vlaneseq
      %v4327 = vshrl.u32 %v4326, 7
      %v4328 = vsub.s32 %v4325, %v4327
      %v4329 = vrot.slane %v4315, %v4328
      %v4330 = vcombine.low %v4322, %v4329
      %v4331 = vcombine.low %v2784, %v2792
      %v4332 = vcombine.low %v2791, %v2793
      %v4334 = vunpack.c.l.s4 1983009808
      %v4335 = vunpack.c.0.s8 %v4334
      %v4336 = vlaneseq
      %v4337 = vshrl.u32 %v4336, 7
      %v4338 = vsub.s32 %v4335, %v4337
      %v4339 = vrot.slane %v4331, %v4338
      %v4341 = vunpack.c.l.s4 1983009808
      %v4342 = vunpack.c.0.s8 %v4341
      %v4343 = vlaneseq
      %v4344 = vshrl.u32 %v4343, 7
      %v4345 = vsub.s32 %v4342, %v4344
      %v4346 = vrot.slane %v4332, %v4345
      %v4347 = vcombine.low %v4339, %v4346
      %v4348 = vcombine.low %v2809, %v2808
      %v4349 = vcombine.low %v2810, %v2818
      %v4351 = vunpack.c.l.s4 1983009808
      %v4352 = vunpack.c.0.s8 %v4351
      %v4353 = vlaneseq
      %v4354 = vshrl.u32 %v4353, 7
      %v4355 = vsub.s32 %v4352, %v4354
      %v4356 = vrot.slane %v4348, %v4355
      %v4358 = vunpack.c.l.s4 1983009808
      %v4359 = vunpack.c.0.s8 %v4358
      %v4360 = vlaneseq
      %v4361 = vshrl.u32 %v4360, 7
      %v4362 = vsub.s32 %v4359, %v4361
      %v4363 = vrot.slane %v4349, %v4362
      %v4364 = vcombine.low %v4356, %v4363
      %v4365 = vcombine.low %v2826, %v2825
      %v4366 = vcombine.low %v2827, %v2835
      %v4368 = vunpack.c.l.s4 1983009808
      %v4369 = vunpack.c.0.s8 %v4368
      %v4370 = vlaneseq
      %v4371 = vshrl.u32 %v4370, 7
      %v4372 = vsub.s32 %v4369, %v4371
      %v4373 = vrot.slane %v4365, %v4372
      %v4375 = vunpack.c.l.s4 1983009808
      %v4376 = vunpack.c.0.s8 %v4375
      %v4377 = vlaneseq
      %v4378 = vshrl.u32 %v4377, 7
      %v4379 = vsub.s32 %v4376, %v4378
      %v4380 = vrot.slane %v4366, %v4379
      %v4381 = vcombine.low %v4373, %v4380
      %v4382 = vcombine.low %v2842, %v2844
      %v4383 = vcombine.low %v2852, %v2860
      %v4385 = vunpack.c.l.s4 1983009808
      %v4386 = vunpack.c.0.s8 %v4385
      %v4387 = vlaneseq
      %v4388 = vshrl.u32 %v4387, 7
      %v4389 = vsub.s32 %v4386, %v4388
      %v4390 = vrot.slane %v4382, %v4389
      %v4392 = vunpack.c.l.s4 1983009808
      %v4393 = vunpack.c.0.s8 %v4392
      %v4394 = vlaneseq
      %v4395 = vshrl.u32 %v4394, 7
      %v4396 = vsub.s32 %v4393, %v4395
      %v4397 = vrot.slane %v4383, %v4396
      %v4398 = vcombine.low %v4390, %v4397
      %v4399 = vcombine.low %v2859, %v2861
      %v4400 = vcombine.low %v2869, %v2877
      %v4402 = vunpack.c.l.s4 1983009808
      %v4403 = vunpack.c.0.s8 %v4402
      %v4404 = vlaneseq
      %v4405 = vshrl.u32 %v4404, 7
      %v4406 = vsub.s32 %v4403, %v4405
      %v4407 = vrot.slane %v4399, %v4406
      %v4409 = vunpack.c.l.s4 1983009808
      %v4410 = vunpack.c.0.s8 %v4409
      %v4411 = vlaneseq
      %v4412 = vshrl.u32 %v4411, 7
      %v4413 = vsub.s32 %v4410, %v4412
      %v4414 = vrot.slane %v4400, %v4413
      %v4415 = vcombine.low %v4407, %v4414
      %v4416 = vcombine.low %v2878, %v2886
      %v4417 = vcombine.low %v2894, %v2893
      %v4419 = vunpack.c.l.s4 1983009808
      %v4420 = vunpack.c.0.s8 %v4419
      %v4421 = vlaneseq
      %v4422 = vshrl.u32 %v4421, 7
      %v4423 = vsub.s32 %v4420, %v4422
      %v4424 = vrot.slane %v4416, %v4423
      %v4426 = vunpack.c.l.s4 1983009808
      %v4427 = vunpack.c.0.s8 %v4426
      %v4428 = vlaneseq
      %v4429 = vshrl.u32 %v4428, 7
      %v4430 = vsub.s32 %v4427, %v4429
      %v4431 = vrot.slane %v4417, %v4430
      %v4432 = vcombine.low %v4424, %v4431
      %v4433 = vcombine.low %v2895, %v2903
      %v4434 = vcombine.low %v2911, %v2910
      %v4436 = vunpack.c.l.s4 1983009808
      %v4437 = vunpack.c.0.s8 %v4436
      %v4438 = vlaneseq
      %v4439 = vshrl.u32 %v4438, 7
      %v4440 = vsub.s32 %v4437, %v4439
      %v4441 = vrot.slane %v4433, %v4440
      %v4443 = vunpack.c.l.s4 1983009808
      %v4444 = vunpack.c.0.s8 %v4443
      %v4445 = vlaneseq
      %v4446 = vshrl.u32 %v4445, 7
      %v4447 = vsub.s32 %v4444, %v4446
      %v4448 = vrot.slane %v4434, %v4447
      %v4449 = vcombine.low %v4441, %v4448
      %v4450 = vcombine.low %v2920, %v2928
      %v4451 = vcombine.low %v2927, %v2929
      %v4453 = vunpack.c.l.s4 1983009808
      %v4454 = vunpack.c.0.s8 %v4453
      %v4455 = vlaneseq
      %v4456 = vshrl.u32 %v4455, 7
      %v4457 = vsub.s32 %v4454, %v4456
      %v4458 = vrot.slane %v4450, %v4457
      %v4460 = vunpack.c.l.s4 1983009808
      %v4461 = vunpack.c.0.s8 %v4460
      %v4462 = vlaneseq
      %v4463 = vshrl.u32 %v4462, 7
      %v4464 = vsub.s32 %v4461, %v4463
      %v4465 = vrot.slane %v4451, %v4464
      %v4466 = vcombine.low %v4458, %v4465
      %v4467 = vcombine.low %v2937, %v2945
      %v4468 = vcombine.low %v2944, %v2946
      %v4470 = vunpack.c.l.s4 1983009808
      %v4471 = vunpack.c.0.s8 %v4470
      %v4472 = vlaneseq
      %v4473 = vshrl.u32 %v4472, 7
      %v4474 = vsub.s32 %v4471, %v4473
      %v4475 = vrot.slane %v4467, %v4474
      %v4477 = vunpack.c.l.s4 1983009808
      %v4478 = vunpack.c.0.s8 %v4477
      %v4479 = vlaneseq
      %v4480 = vshrl.u32 %v4479, 7
      %v4481 = vsub.s32 %v4478, %v4480
      %v4482 = vrot.slane %v4468, %v4481
      %v4483 = vcombine.low %v4475, %v4482
      %v4484 = vcombine.low %v2962, %v2961
      %v4485 = vcombine.low %v2963, %v2971
      %v4487 = vunpack.c.l.s4 1983009808
      %v4488 = vunpack.c.0.s8 %v4487
      %v4489 = vlaneseq
      %v4490 = vshrl.u32 %v4489, 7
      %v4491 = vsub.s32 %v4488, %v4490
      %v4492 = vrot.slane %v4484, %v4491
      %v4494 = vunpack.c.l.s4 1983009808
      %v4495 = vunpack.c.0.s8 %v4494
      %v4496 = vlaneseq
      %v4497 = vshrl.u32 %v4496, 7
      %v4498 = vsub.s32 %v4495, %v4497
      %v4499 = vrot.slane %v4485, %v4498
      %v4500 = vcombine.low %v4492, %v4499
      %v4501 = vcombine.low %v2979, %v2978
      %v4502 = vcombine.low %v2980, %v2988
      %v4504 = vunpack.c.l.s4 1983009808
      %v4505 = vunpack.c.0.s8 %v4504
      %v4506 = vlaneseq
      %v4507 = vshrl.u32 %v4506, 7
      %v4508 = vsub.s32 %v4505, %v4507
      %v4509 = vrot.slane %v4501, %v4508
      %v4511 = vunpack.c.l.s4 1983009808
      %v4512 = vunpack.c.0.s8 %v4511
      %v4513 = vlaneseq
      %v4514 = vshrl.u32 %v4513, 7
      %v4515 = vsub.s32 %v4512, %v4514
      %v4516 = vrot.slane %v4502, %v4515
      %v4517 = vcombine.low %v4509, %v4516
      %v4518 = vcombine.low %v2995, %v2997
      %v4519 = vcombine.low %v3005, %v3013
      %v4521 = vunpack.c.l.s4 1983009808
      %v4522 = vunpack.c.0.s8 %v4521
      %v4523 = vlaneseq
      %v4524 = vshrl.u32 %v4523, 7
      %v4525 = vsub.s32 %v4522, %v4524
      %v4526 = vrot.slane %v4518, %v4525
      %v4528 = vunpack.c.l.s4 1983009808
      %v4529 = vunpack.c.0.s8 %v4528
      %v4530 = vlaneseq
      %v4531 = vshrl.u32 %v4530, 7
      %v4532 = vsub.s32 %v4529, %v4531
      %v4533 = vrot.slane %v4519, %v4532
      %v4534 = vcombine.low %v4526, %v4533
      %v4535 = vcombine.low %v3012, %v3014
      %v4536 = vcombine.low %v3022, %v3030
      %v4538 = vunpack.c.l.s4 1983009808
      %v4539 = vunpack.c.0.s8 %v4538
      %v4540 = vlaneseq
      %v4541 = vshrl.u32 %v4540, 7
      %v4542 = vsub.s32 %v4539, %v4541
      %v4543 = vrot.slane %v4535, %v4542
      %v4545 = vunpack.c.l.s4 1983009808
      %v4546 = vunpack.c.0.s8 %v4545
      %v4547 = vlaneseq
      %v4548 = vshrl.u32 %v4547, 7
      %v4549 = vsub.s32 %v4546, %v4548
      %v4550 = vrot.slane %v4536, %v4549
      %v4551 = vcombine.low %v4543, %v4550
      %v4552 = vcombine.low %v3031, %v3039
      %v4553 = vcombine.low %v3047, %v3046
      %v4555 = vunpack.c.l.s4 1983009808
      %v4556 = vunpack.c.0.s8 %v4555
      %v4557 = vlaneseq
      %v4558 = vshrl.u32 %v4557, 7
      %v4559 = vsub.s32 %v4556, %v4558
      %v4560 = vrot.slane %v4552, %v4559
      %v4562 = vunpack.c.l.s4 1983009808
      %v4563 = vunpack.c.0.s8 %v4562
      %v4564 = vlaneseq
      %v4565 = vshrl.u32 %v4564, 7
      %v4566 = vsub.s32 %v4563, %v4565
      %v4567 = vrot.slane %v4553, %v4566
      %v4568 = vcombine.low %v4560, %v4567
      %v4569 = vcombine.low %v3048, %v3056
      %v4570 = vcombine.low %v3064, %v3063
      %v4572 = vunpack.c.l.s4 1983009808
      %v4573 = vunpack.c.0.s8 %v4572
      %v4574 = vlaneseq
      %v4575 = vshrl.u32 %v4574, 7
      %v4576 = vsub.s32 %v4573, %v4575
      %v4577 = vrot.slane %v4569, %v4576
      %v4579 = vunpack.c.l.s4 1983009808
      %v4580 = vunpack.c.0.s8 %v4579
      %v4581 = vlaneseq
      %v4582 = vshrl.u32 %v4581, 7
      %v4583 = vsub.s32 %v4580, %v4582
      %v4584 = vrot.slane %v4570, %v4583
      %v4585 = vcombine.low %v4577, %v4584
      %v4586 = vcombine.low %v3073, %v3081
      %v4587 = vcombine.low %v3080, %v3082
      %v4589 = vunpack.c.l.s4 1983009808
      %v4590 = vunpack.c.0.s8 %v4589
      %v4591 = vlaneseq
      %v4592 = vshrl.u32 %v4591, 7
      %v4593 = vsub.s32 %v4590, %v4592
      %v4594 = vrot.slane %v4586, %v4593
      %v4596 = vunpack.c.l.s4 1983009808
      %v4597 = vunpack.c.0.s8 %v4596
      %v4598 = vlaneseq
      %v4599 = vshrl.u32 %v4598, 7
      %v4600 = vsub.s32 %v4597, %v4599
      %v4601 = vrot.slane %v4587, %v4600
      %v4602 = vcombine.low %v4594, %v4601
      %v4603 = vcombine.low %v3090, %v3098
      %v4604 = vcombine.low %v3097, %v3099
      %v4606 = vunpack.c.l.s4 1983009808
      %v4607 = vunpack.c.0.s8 %v4606
      %v4608 = vlaneseq
      %v4609 = vshrl.u32 %v4608, 7
      %v4610 = vsub.s32 %v4607, %v4609
      %v4611 = vrot.slane %v4603, %v4610
      %v4613 = vunpack.c.l.s4 1983009808
      %v4614 = vunpack.c.0.s8 %v4613
      %v4615 = vlaneseq
      %v4616 = vshrl.u32 %v4615, 7
      %v4617 = vsub.s32 %v4614, %v4616
      %v4618 = vrot.slane %v4604, %v4617
      %v4619 = vcombine.low %v4611, %v4618
      %4620 = vrot.lane.b32.xlu0 %v4092, 64
      %v4621 = vpop.permute.xlu0 %4620
      %4622 = vrot.lane.b32.xlu0 %v4109, 64
      %v4623 = vpop.permute.xlu0 %4622
      %4624 = vrot.lane.b32.xlu0 %v4126, 64
      %v4625 = vpop.permute.xlu0 %4624
      %4626 = vrot.lane.b32.xlu0 %v4143, 64
      %v4627 = vpop.permute.xlu0 %4626
      %4628 = vrot.lane.b32.xlu0 %v4160, 64
      %v4629 = vpop.permute.xlu0 %4628
      %4630 = vrot.lane.b32.xlu0 %v4177, 64
      %v4631 = vpop.permute.xlu0 %4630
      %4632 = vrot.lane.b32.xlu0 %v4194, 64
      %v4633 = vpop.permute.xlu0 %4632
      %4634 = vrot.lane.b32.xlu0 %v4211, 64
      %v4635 = vpop.permute.xlu0 %4634
      %4636 = vrot.lane.b32.xlu0 %v4228, 64
      %v4637 = vpop.permute.xlu0 %4636
      %4638 = vrot.lane.b32.xlu0 %v4245, 64
      %v4639 = vpop.permute.xlu0 %4638
      %4640 = vrot.lane.b32.xlu0 %v4262, 64
      %v4641 = vpop.permute.xlu0 %4640
      %4642 = vrot.lane.b32.xlu0 %v4279, 64
      %v4643 = vpop.permute.xlu0 %4642
      %4644 = vrot.lane.b32.xlu0 %v4296, 64
      %v4645 = vpop.permute.xlu0 %4644
      %4646 = vrot.lane.b32.xlu0 %v4313, 64
      %v4647 = vpop.permute.xlu0 %4646
      %4648 = vrot.lane.b32.xlu0 %v4330, 64
      %v4649 = vpop.permute.xlu0 %4648
      %4650 = vrot.lane.b32.xlu0 %v4347, 64
      %v4651 = vpop.permute.xlu0 %4650
      %4652 = vrot.lane.b32.xlu0 %v4364, 64
      %v4653 = vpop.permute.xlu0 %4652
      %4654 = vrot.lane.b32.xlu0 %v4381, 64
      %v4655 = vpop.permute.xlu0 %4654
      %4656 = vrot.lane.b32.xlu0 %v4398, 64
      %v4657 = vpop.permute.xlu0 %4656
      %4658 = vrot.lane.b32.xlu0 %v4415, 64
      %v4659 = vpop.permute.xlu0 %4658
      %4660 = vrot.lane.b32.xlu0 %v4432, 64
      %v4661 = vpop.permute.xlu0 %4660
      %4662 = vrot.lane.b32.xlu0 %v4449, 64
      %v4663 = vpop.permute.xlu0 %4662
      %4664 = vrot.lane.b32.xlu0 %v4466, 64
      %v4665 = vpop.permute.xlu0 %4664
      %4666 = vrot.lane.b32.xlu0 %v4483, 64
      %v4667 = vpop.permute.xlu0 %4666
      %4668 = vrot.lane.b32.xlu0 %v4500, 64
      %v4669 = vpop.permute.xlu0 %4668
      %4670 = vrot.lane.b32.xlu0 %v4517, 64
      %v4671 = vpop.permute.xlu0 %4670
      %4672 = vrot.lane.b32.xlu0 %v4534, 64
      %v4673 = vpop.permute.xlu0 %4672
      %4674 = vrot.lane.b32.xlu0 %v4551, 64
      %v4675 = vpop.permute.xlu0 %4674
      %4676 = vrot.lane.b32.xlu0 %v4568, 64
      %v4677 = vpop.permute.xlu0 %4676
      %4678 = vrot.lane.b32.xlu0 %v4585, 64
      %v4679 = vpop.permute.xlu0 %4678
      %4680 = vrot.lane.b32.xlu0 %v4602, 64
      %v4681 = vpop.permute.xlu0 %4680
      %4682 = vrot.lane.b32.xlu0 %v4619, 64
      %v4683 = vpop.permute.xlu0 %4682
      %v4716 = vcombine.low %v3107, %v3115
      %v4717 = vcombine.low %v3114, %v3116
      %v4719 = vunpack.c.l.s4 1983009808
      %v4720 = vunpack.c.0.s8 %v4719
      %v4721 = vlaneseq
      %v4722 = vshrl.u32 %v4721, 7
      %v4723 = vsub.s32 %v4720, %v4722
      %v4724 = vrot.slane %v4716, %v4723
      %v4726 = vunpack.c.l.s4 1983009808
      %v4727 = vunpack.c.0.s8 %v4726
      %v4728 = vlaneseq
      %v4729 = vshrl.u32 %v4728, 7
      %v4730 = vsub.s32 %v4727, %v4729
      %v4731 = vrot.slane %v4717, %v4730
      %v4732 = vcombine.low %v4724, %v4731
      %v4733 = vcombine.low %v3124, %v3132
      %v4734 = vcombine.low %v3131, %v3133
      %v4736 = vunpack.c.l.s4 1983009808
      %v4737 = vunpack.c.0.s8 %v4736
      %v4738 = vlaneseq
      %v4739 = vshrl.u32 %v4738, 7
      %v4740 = vsub.s32 %v4737, %v4739
      %v4741 = vrot.slane %v4733, %v4740
      %v4743 = vunpack.c.l.s4 1983009808
      %v4744 = vunpack.c.0.s8 %v4743
      %v4745 = vlaneseq
      %v4746 = vshrl.u32 %v4745, 7
      %v4747 = vsub.s32 %v4744, %v4746
      %v4748 = vrot.slane %v4734, %v4747
      %v4749 = vcombine.low %v4741, %v4748
      %4750 = vrot.lane.b32.xlu0 %v3262, 96
      %v4751 = vpop.permute.xlu0 %4750
      %4752 = vrot.lane.b32.xlu0 %v3279, 96
      %v4753 = vpop.permute.xlu0 %4752
      %4754 = vrot.lane.b32.xlu0 %v3296, 96
      %v4755 = vpop.permute.xlu0 %4754
      %4756 = vrot.lane.b32.xlu0 %v3313, 96
      %v4757 = vpop.permute.xlu0 %4756
      %4758 = vrot.lane.b32.xlu0 %v3330, 96
      %v4759 = vpop.permute.xlu0 %4758
      %4760 = vrot.lane.b32.xlu0 %v3347, 96
      %v4761 = vpop.permute.xlu0 %4760
      %4762 = vrot.lane.b32.xlu0 %v3364, 96
      %v4763 = vpop.permute.xlu0 %4762
      %4764 = vrot.lane.b32.xlu0 %v3381, 96
      %v4765 = vpop.permute.xlu0 %4764
      %4766 = vrot.lane.b32.xlu0 %v3398, 96
      %v4767 = vpop.permute.xlu0 %4766
      %4768 = vrot.lane.b32.xlu0 %v3415, 96
      %v4769 = vpop.permute.xlu0 %4768
      %4770 = vrot.lane.b32.xlu0 %v3432, 96
      %v4771 = vpop.permute.xlu0 %4770
      %4772 = vrot.lane.b32.xlu0 %v3449, 96
      %v4773 = vpop.permute.xlu0 %4772
      %4774 = vrot.lane.b32.xlu0 %v3466, 96
      %v4775 = vpop.permute.xlu0 %4774
      %4776 = vrot.lane.b32.xlu0 %v3483, 96
      %v4777 = vpop.permute.xlu0 %4776
      %4778 = vrot.lane.b32.xlu0 %v3500, 96
      %v4779 = vpop.permute.xlu0 %4778
      %4780 = vrot.lane.b32.xlu0 %v3517, 96
      %v4781 = vpop.permute.xlu0 %4780
      %4782 = vrot.lane.b32.xlu0 %v3534, 96
      %v4783 = vpop.permute.xlu0 %4782
      %4784 = vrot.lane.b32.xlu0 %v3551, 96
      %v4785 = vpop.permute.xlu0 %4784
      %4786 = vrot.lane.b32.xlu0 %v3568, 96
      %v4787 = vpop.permute.xlu0 %4786
      %4788 = vrot.lane.b32.xlu0 %v3585, 96
      %v4789 = vpop.permute.xlu0 %4788
      %4790 = vrot.lane.b32.xlu0 %v3602, 96
      %v4791 = vpop.permute.xlu0 %4790
      %4792 = vrot.lane.b32.xlu0 %v3619, 96
      %v4793 = vpop.permute.xlu0 %4792
      %4794 = vrot.lane.b32.xlu0 %v3636, 96
      %v4795 = vpop.permute.xlu0 %4794
      %4796 = vrot.lane.b32.xlu0 %v3653, 96
      %v4797 = vpop.permute.xlu0 %4796
      %4798 = vrot.lane.b32.xlu0 %v3670, 96
      %v4799 = vpop.permute.xlu0 %4798
      %4800 = vrot.lane.b32.xlu0 %v3687, 96
      %v4801 = vpop.permute.xlu0 %4800
      %4802 = vrot.lane.b32.xlu0 %v3704, 96
      %v4803 = vpop.permute.xlu0 %4802
      %4804 = vrot.lane.b32.xlu0 %v3721, 96
      %v4805 = vpop.permute.xlu0 %4804
      %4806 = vrot.lane.b32.xlu0 %v3738, 96
      %v4807 = vpop.permute.xlu0 %4806
      %4808 = vrot.lane.b32.xlu0 %v3755, 96
      %v4809 = vpop.permute.xlu0 %4808
      %4810 = vrot.lane.b32.xlu0 %v4732, 96
      %v4811 = vpop.permute.xlu0 %4810
      %4812 = vrot.lane.b32.xlu0 %v4749, 96
      %v4813 = vpop.permute.xlu0 %4812
      %v4847 = vunpack.c.l.s4 1983009808
      %v4848 = vunpack.c.0.s8 %v4847
      %v4849 = vlaneseq
      %v4850 = vshrl.u32 %v4849, 7
      %v4851 = vsub.s32 %v4848, %v4850
      %v4852 = vrot.slane %v3141, %v4851
      %v4853 = vrot.slane %v4732, 1
      %v4854 = vrot.slane %v4749, 1
      %v4855 = vsel %vm732, %v4853, %v4854
      %v4856 = vrot.slane %v4852, 1
      %v4857 = vsel %vm732, %v4854, %v4856
      %v4890 = vcombine.low %v3115, %v3114
      %v4891 = vcombine.low %v3116, %v3124
      %v4893 = vunpack.c.l.s4 1983009808
      %v4894 = vunpack.c.0.s8 %v4893
      %v4895 = vlaneseq
      %v4896 = vshrl.u32 %v4895, 7
      %v4897 = vsub.s32 %v4894, %v4896
      %v4898 = vrot.slane %v4890, %v4897
      %v4900 = vunpack.c.l.s4 1983009808
      %v4901 = vunpack.c.0.s8 %v4900
      %v4902 = vlaneseq
      %v4903 = vshrl.u32 %v4902, 7
      %v4904 = vsub.s32 %v4901, %v4903
      %v4905 = vrot.slane %v4891, %v4904
      %v4906 = vcombine.low %v4898, %v4905
      %v4907 = vcombine.low %v3132, %v3131
      %v4908 = vcombine.low %v3133, %v3141
      %v4910 = vunpack.c.l.s4 1983009808
      %v4911 = vunpack.c.0.s8 %v4910
      %v4912 = vlaneseq
      %v4913 = vshrl.u32 %v4912, 7
      %v4914 = vsub.s32 %v4911, %v4913
      %v4915 = vrot.slane %v4907, %v4914
      %v4917 = vunpack.c.l.s4 1983009808
      %v4918 = vunpack.c.0.s8 %v4917
      %v4919 = vlaneseq
      %v4920 = vshrl.u32 %v4919, 7
      %v4921 = vsub.s32 %v4918, %v4920
      %v4922 = vrot.slane %v4908, %v4921
      %v4923 = vcombine.low %v4915, %v4922
      %4924 = vrot.lane.b32.xlu0 %v4126, 32
      %v4925 = vpop.permute.xlu0 %4924
      %4926 = vrot.lane.b32.xlu0 %v4143, 32
      %v4927 = vpop.permute.xlu0 %4926
      %4928 = vrot.lane.b32.xlu0 %v4160, 32
      %v4929 = vpop.permute.xlu0 %4928
      %4930 = vrot.lane.b32.xlu0 %v4177, 32
      %v4931 = vpop.permute.xlu0 %4930
      %4932 = vrot.lane.b32.xlu0 %v4194, 32
      %v4933 = vpop.permute.xlu0 %4932
      %4934 = vrot.lane.b32.xlu0 %v4211, 32
      %v4935 = vpop.permute.xlu0 %4934
      %4936 = vrot.lane.b32.xlu0 %v4228, 32
      %v4937 = vpop.permute.xlu0 %4936
      %4938 = vrot.lane.b32.xlu0 %v4245, 32
      %v4939 = vpop.permute.xlu0 %4938
      %4940 = vrot.lane.b32.xlu0 %v4262, 32
      %v4941 = vpop.permute.xlu0 %4940
      %4942 = vrot.lane.b32.xlu0 %v4279, 32
      %v4943 = vpop.permute.xlu0 %4942
      %4944 = vrot.lane.b32.xlu0 %v4296, 32
      %v4945 = vpop.permute.xlu0 %4944
      %4946 = vrot.lane.b32.xlu0 %v4313, 32
      %v4947 = vpop.permute.xlu0 %4946
      %4948 = vrot.lane.b32.xlu0 %v4330, 32
      %v4949 = vpop.permute.xlu0 %4948
      %4950 = vrot.lane.b32.xlu0 %v4347, 32
      %v4951 = vpop.permute.xlu0 %4950
      %4952 = vrot.lane.b32.xlu0 %v4364, 32
      %v4953 = vpop.permute.xlu0 %4952
      %4954 = vrot.lane.b32.xlu0 %v4381, 32
      %v4955 = vpop.permute.xlu0 %4954
      %4956 = vrot.lane.b32.xlu0 %v4398, 32
      %v4957 = vpop.permute.xlu0 %4956
      %4958 = vrot.lane.b32.xlu0 %v4415, 32
      %v4959 = vpop.permute.xlu0 %4958
      %4960 = vrot.lane.b32.xlu0 %v4432, 32
      %v4961 = vpop.permute.xlu0 %4960
      %4962 = vrot.lane.b32.xlu0 %v4449, 32
      %v4963 = vpop.permute.xlu0 %4962
      %4964 = vrot.lane.b32.xlu0 %v4466, 32
      %v4965 = vpop.permute.xlu0 %4964
      %4966 = vrot.lane.b32.xlu0 %v4483, 32
      %v4967 = vpop.permute.xlu0 %4966
      %4968 = vrot.lane.b32.xlu0 %v4500, 32
      %v4969 = vpop.permute.xlu0 %4968
      %4970 = vrot.lane.b32.xlu0 %v4517, 32
      %v4971 = vpop.permute.xlu0 %4970
      %4972 = vrot.lane.b32.xlu0 %v4534, 32
      %v4973 = vpop.permute.xlu0 %4972
      %4974 = vrot.lane.b32.xlu0 %v4551, 32
      %v4975 = vpop.permute.xlu0 %4974
      %4976 = vrot.lane.b32.xlu0 %v4568, 32
      %v4977 = vpop.permute.xlu0 %4976
      %4978 = vrot.lane.b32.xlu0 %v4585, 32
      %v4979 = vpop.permute.xlu0 %4978
      %4980 = vrot.lane.b32.xlu0 %v4602, 32
      %v4981 = vpop.permute.xlu0 %4980
      %4982 = vrot.lane.b32.xlu0 %v4619, 32
      %v4983 = vpop.permute.xlu0 %4982
      %4984 = vrot.lane.b32.xlu0 %v4906, 32
      %v4985 = vpop.permute.xlu0 %4984
      %4986 = vrot.lane.b32.xlu0 %v4923, 32
      %v4987 = vpop.permute.xlu0 %4986
      %v5020 = vcombine.low %v3149, %v3148
      %v5021 = vcombine.low %v3150, %v3158
      %v5023 = vunpack.c.l.s4 1983009808
      %v5024 = vunpack.c.0.s8 %v5023
      %v5025 = vlaneseq
      %v5026 = vshrl.u32 %v5025, 7
      %v5027 = vsub.s32 %v5024, %v5026
      %v5028 = vrot.slane %v5020, %v5027
      %v5030 = vunpack.c.l.s4 1983009808
      %v5031 = vunpack.c.0.s8 %v5030
      %v5032 = vlaneseq
      %v5033 = vshrl.u32 %v5032, 7
      %v5034 = vsub.s32 %v5031, %v5033
      %v5035 = vrot.slane %v5021, %v5034
      %v5036 = vcombine.low %v5028, %v5035
      %v5037 = vcombine.low %v3166, %v3165
      %v5038 = vcombine.low %v3167, %v3174
      %v5040 = vunpack.c.l.s4 1983009808
      %v5041 = vunpack.c.0.s8 %v5040
      %v5042 = vlaneseq
      %v5043 = vshrl.u32 %v5042, 7
      %v5044 = vsub.s32 %v5041, %v5043
      %v5045 = vrot.slane %v5037, %v5044
      %v5047 = vunpack.c.l.s4 1983009808
      %v5048 = vunpack.c.0.s8 %v5047
      %v5049 = vlaneseq
      %v5050 = vshrl.u32 %v5049, 7
      %v5051 = vsub.s32 %v5048, %v5050
      %v5052 = vrot.slane %v5038, %v5051
      %v5053 = vcombine.low %v5045, %v5052
      %5054 = vrot.lane.b32.xlu0 %v3296, 64
      %v5055 = vpop.permute.xlu0 %5054
      %5056 = vrot.lane.b32.xlu0 %v3313, 64
      %v5057 = vpop.permute.xlu0 %5056
      %5058 = vrot.lane.b32.xlu0 %v3330, 64
      %v5059 = vpop.permute.xlu0 %5058
      %5060 = vrot.lane.b32.xlu0 %v3347, 64
      %v5061 = vpop.permute.xlu0 %5060
      %5062 = vrot.lane.b32.xlu0 %v3364, 64
      %v5063 = vpop.permute.xlu0 %5062
      %5064 = vrot.lane.b32.xlu0 %v3381, 64
      %v5065 = vpop.permute.xlu0 %5064
      %5066 = vrot.lane.b32.xlu0 %v3398, 64
      %v5067 = vpop.permute.xlu0 %5066
      %5068 = vrot.lane.b32.xlu0 %v3415, 64
      %v5069 = vpop.permute.xlu0 %5068
      %5070 = vrot.lane.b32.xlu0 %v3432, 64
      %v5071 = vpop.permute.xlu0 %5070
      %5072 = vrot.lane.b32.xlu0 %v3449, 64
      %v5073 = vpop.permute.xlu0 %5072
      %5074 = vrot.lane.b32.xlu0 %v3466, 64
      %v5075 = vpop.permute.xlu0 %5074
      %5076 = vrot.lane.b32.xlu0 %v3483, 64
      %v5077 = vpop.permute.xlu0 %5076
      %5078 = vrot.lane.b32.xlu0 %v3500, 64
      %v5079 = vpop.permute.xlu0 %5078
      %5080 = vrot.lane.b32.xlu0 %v3517, 64
      %v5081 = vpop.permute.xlu0 %5080
      %5082 = vrot.lane.b32.xlu0 %v3534, 64
      %v5083 = vpop.permute.xlu0 %5082
      %5084 = vrot.lane.b32.xlu0 %v3551, 64
      %v5085 = vpop.permute.xlu0 %5084
      %5086 = vrot.lane.b32.xlu0 %v3568, 64
      %v5087 = vpop.permute.xlu0 %5086
      %5088 = vrot.lane.b32.xlu0 %v3585, 64
      %v5089 = vpop.permute.xlu0 %5088
      %5090 = vrot.lane.b32.xlu0 %v3602, 64
      %v5091 = vpop.permute.xlu0 %5090
      %5092 = vrot.lane.b32.xlu0 %v3619, 64
      %v5093 = vpop.permute.xlu0 %5092
      %5094 = vrot.lane.b32.xlu0 %v3636, 64
      %v5095 = vpop.permute.xlu0 %5094
      %5096 = vrot.lane.b32.xlu0 %v3653, 64
      %v5097 = vpop.permute.xlu0 %5096
      %5098 = vrot.lane.b32.xlu0 %v3670, 64
      %v5099 = vpop.permute.xlu0 %5098
      %5100 = vrot.lane.b32.xlu0 %v3687, 64
      %v5101 = vpop.permute.xlu0 %5100
      %5102 = vrot.lane.b32.xlu0 %v3704, 64
      %v5103 = vpop.permute.xlu0 %5102
      %5104 = vrot.lane.b32.xlu0 %v3721, 64
      %v5105 = vpop.permute.xlu0 %5104
      %5106 = vrot.lane.b32.xlu0 %v3738, 64
      %v5107 = vpop.permute.xlu0 %5106
      %5108 = vrot.lane.b32.xlu0 %v3755, 64
      %v5109 = vpop.permute.xlu0 %5108
      %5110 = vrot.lane.b32.xlu0 %v4732, 64
      %v5111 = vpop.permute.xlu0 %5110
      %5112 = vrot.lane.b32.xlu0 %v4749, 64
      %v5113 = vpop.permute.xlu0 %5112
      %5114 = vrot.lane.b32.xlu0 %v5036, 64
      %v5115 = vpop.permute.xlu0 %5114
      %5116 = vrot.lane.b32.xlu0 %v5053, 64
      %v5117 = vpop.permute.xlu0 %5116
      %v5151 = vunpack.c.l.s4 1983009808
      %v5152 = vunpack.c.0.s8 %v5151
      %v5153 = vlaneseq
      %v5154 = vshrl.u32 %v5153, 7
      %v5155 = vsub.s32 %v5152, %v5154
      %v5156 = vrot.slane %v3175, %v5155
      %v5157 = vrot.slane %v5036, 1
      %v5158 = vrot.slane %v5053, 1
      %v5159 = vsel %vm732, %v5157, %v5158
      %v5160 = vrot.slane %v5156, 1
      %v5161 = vsel %vm732, %v5158, %v5160
      %5162 = vrot.lane.b32.xlu0 %v3912, 96
      %v5163 = vpop.permute.xlu0 %5162
      %5164 = vrot.lane.b32.xlu0 %v3914, 96
      %v5165 = vpop.permute.xlu0 %5164
      %5166 = vrot.lane.b32.xlu0 %v3917, 96
      %v5167 = vpop.permute.xlu0 %5166
      %5168 = vrot.lane.b32.xlu0 %v3919, 96
      %v5169 = vpop.permute.xlu0 %5168
      %5170 = vrot.lane.b32.xlu0 %v3922, 96
      %v5171 = vpop.permute.xlu0 %5170
      %5172 = vrot.lane.b32.xlu0 %v3924, 96
      %v5173 = vpop.permute.xlu0 %5172
      %5174 = vrot.lane.b32.xlu0 %v3927, 96
      %v5175 = vpop.permute.xlu0 %5174
      %5176 = vrot.lane.b32.xlu0 %v3929, 96
      %v5177 = vpop.permute.xlu0 %5176
      %5178 = vrot.lane.b32.xlu0 %v3932, 96
      %v5179 = vpop.permute.xlu0 %5178
      %5180 = vrot.lane.b32.xlu0 %v3934, 96
      %v5181 = vpop.permute.xlu0 %5180
      %5182 = vrot.lane.b32.xlu0 %v3937, 96
      %v5183 = vpop.permute.xlu0 %5182
      %5184 = vrot.lane.b32.xlu0 %v3939, 96
      %v5185 = vpop.permute.xlu0 %5184
      %5186 = vrot.lane.b32.xlu0 %v3942, 96
      %v5187 = vpop.permute.xlu0 %5186
      %5188 = vrot.lane.b32.xlu0 %v3944, 96
      %v5189 = vpop.permute.xlu0 %5188
      %5190 = vrot.lane.b32.xlu0 %v3947, 96
      %v5191 = vpop.permute.xlu0 %5190
      %5192 = vrot.lane.b32.xlu0 %v3949, 96
      %v5193 = vpop.permute.xlu0 %5192
      %5194 = vrot.lane.b32.xlu0 %v3952, 96
      %v5195 = vpop.permute.xlu0 %5194
      %5196 = vrot.lane.b32.xlu0 %v3954, 96
      %v5197 = vpop.permute.xlu0 %5196
      %5198 = vrot.lane.b32.xlu0 %v3957, 96
      %v5199 = vpop.permute.xlu0 %5198
      %5200 = vrot.lane.b32.xlu0 %v3959, 96
      %v5201 = vpop.permute.xlu0 %5200
      %5202 = vrot.lane.b32.xlu0 %v3962, 96
      %v5203 = vpop.permute.xlu0 %5202
      %5204 = vrot.lane.b32.xlu0 %v3964, 96
      %v5205 = vpop.permute.xlu0 %5204
      %5206 = vrot.lane.b32.xlu0 %v3967, 96
      %v5207 = vpop.permute.xlu0 %5206
      %5208 = vrot.lane.b32.xlu0 %v3969, 96
      %v5209 = vpop.permute.xlu0 %5208
      %5210 = vrot.lane.b32.xlu0 %v3972, 96
      %v5211 = vpop.permute.xlu0 %5210
      %5212 = vrot.lane.b32.xlu0 %v3974, 96
      %v5213 = vpop.permute.xlu0 %5212
      %5214 = vrot.lane.b32.xlu0 %v3977, 96
      %v5215 = vpop.permute.xlu0 %5214
      %5216 = vrot.lane.b32.xlu0 %v3979, 96
      %v5217 = vpop.permute.xlu0 %5216
      %5218 = vrot.lane.b32.xlu0 %v4855, 96
      %v5219 = vpop.permute.xlu0 %5218
      %5220 = vrot.lane.b32.xlu0 %v4857, 96
      %v5221 = vpop.permute.xlu0 %5220
      %5222 = vrot.lane.b32.xlu0 %v5159, 96
      %v5223 = vpop.permute.xlu0 %5222
      %5224 = vrot.lane.b32.xlu0 %v5161, 96
      %v5225 = vpop.permute.xlu0 %5224
      %v5258 = vcombine.low %v3148, %v3150
      %v5259 = vcombine.low %v3158, %v3166
      %v5261 = vunpack.c.l.s4 1983009808
      %v5262 = vunpack.c.0.s8 %v5261
      %v5263 = vlaneseq
      %v5264 = vshrl.u32 %v5263, 7
      %v5265 = vsub.s32 %v5262, %v5264
      %v5266 = vrot.slane %v5258, %v5265
      %v5268 = vunpack.c.l.s4 1983009808
      %v5269 = vunpack.c.0.s8 %v5268
      %v5270 = vlaneseq
      %v5271 = vshrl.u32 %v5270, 7
      %v5272 = vsub.s32 %v5269, %v5271
      %v5273 = vrot.slane %v5259, %v5272
      %v5274 = vcombine.low %v5266, %v5273
      %v5275 = vcombine.low %v3165, %v3167
      %v5276 = vcombine.low %v3174, %v3175
      %v5278 = vunpack.c.l.s4 1983009808
      %v5279 = vunpack.c.0.s8 %v5278
      %v5280 = vlaneseq
      %v5281 = vshrl.u32 %v5280, 7
      %v5282 = vsub.s32 %v5279, %v5281
      %v5283 = vrot.slane %v5275, %v5282
      %v5285 = vunpack.c.l.s4 1983009808
      %v5286 = vunpack.c.0.s8 %v5285
      %v5287 = vlaneseq
      %v5288 = vshrl.u32 %v5287, 7
      %v5289 = vsub.s32 %v5286, %v5288
      %v5290 = vrot.slane %v5276, %v5289
      %v5291 = vcombine.low %v5283, %v5290
      %v5324 = vsel %vm983, %v3228, %v3981
      %v5325 = vsel %vm983, %v3245, %v3983
      %v5326 = vsel %vm983, %v3262, %v3985
      %v5327 = vsel %vm983, %v3279, %v3987
      %v5328 = vsel %vm983, %v3296, %v3989
      %v5329 = vsel %vm983, %v3313, %v3991
      %v5330 = vsel %vm983, %v3330, %v3993
      %v5331 = vsel %vm983, %v3347, %v3995
      %v5332 = vsel %vm983, %v3364, %v3997
      %v5333 = vsel %vm983, %v3381, %v3999
      %v5334 = vsel %vm983, %v3398, %v4001
      %v5335 = vsel %vm983, %v3415, %v4003
      %v5336 = vsel %vm983, %v3432, %v4005
      %v5337 = vsel %vm983, %v3449, %v4007
      %v5338 = vsel %vm983, %v3466, %v4009
      %v5339 = vsel %vm983, %v3483, %v4011
      %v5340 = vsel %vm983, %v3500, %v4013
      %v5341 = vsel %vm983, %v3517, %v4015
      %v5342 = vsel %vm983, %v3534, %v4017
      %v5343 = vsel %vm983, %v3551, %v4019
      %v5344 = vsel %vm983, %v3568, %v4021
      %v5345 = vsel %vm983, %v3585, %v4023
      %v5346 = vsel %vm983, %v3602, %v4025
      %v5347 = vsel %vm983, %v3619, %v4027
      %v5348 = vsel %vm983, %v3636, %v4029
      %v5349 = vsel %vm983, %v3653, %v4031
      %v5350 = vsel %vm983, %v3670, %v4033
      %v5351 = vsel %vm983, %v3687, %v4035
      %v5352 = vsel %vm983, %v3704, %v4037
      %v5353 = vsel %vm983, %v3721, %v4039
      %v5354 = vsel %vm983, %v3738, %v4041
      %v5355 = vsel %vm983, %v3755, %v4043
      %v5356 = vsel %vm1001, %v5324, %v4621
      %v5357 = vsel %vm1001, %v5325, %v4623
      %v5358 = vsel %vm1001, %v5326, %v4625
      %v5359 = vsel %vm1001, %v5327, %v4627
      %v5360 = vsel %vm1001, %v5328, %v4629
      %v5361 = vsel %vm1001, %v5329, %v4631
      %v5362 = vsel %vm1001, %v5330, %v4633
      %v5363 = vsel %vm1001, %v5331, %v4635
      %v5364 = vsel %vm1001, %v5332, %v4637
      %v5365 = vsel %vm1001, %v5333, %v4639
      %v5366 = vsel %vm1001, %v5334, %v4641
      %v5367 = vsel %vm1001, %v5335, %v4643
      %v5368 = vsel %vm1001, %v5336, %v4645
      %v5369 = vsel %vm1001, %v5337, %v4647
      %v5370 = vsel %vm1001, %v5338, %v4649
      %v5371 = vsel %vm1001, %v5339, %v4651
      %v5372 = vsel %vm1001, %v5340, %v4653
      %v5373 = vsel %vm1001, %v5341, %v4655
      %v5374 = vsel %vm1001, %v5342, %v4657
      %v5375 = vsel %vm1001, %v5343, %v4659
      %v5376 = vsel %vm1001, %v5344, %v4661
      %v5377 = vsel %vm1001, %v5345, %v4663
      %v5378 = vsel %vm1001, %v5346, %v4665
      %v5379 = vsel %vm1001, %v5347, %v4667
      %v5380 = vsel %vm1001, %v5348, %v4669
      %v5381 = vsel %vm1001, %v5349, %v4671
      %v5382 = vsel %vm1001, %v5350, %v4673
      %v5383 = vsel %vm1001, %v5351, %v4675
      %v5384 = vsel %vm1001, %v5352, %v4677
      %v5385 = vsel %vm1001, %v5353, %v4679
      %v5386 = vsel %vm1001, %v5354, %v4681
      %v5387 = vsel %vm1001, %v5355, %v4683
      %v5388 = vsel %vm1019, %v5356, %v4751
      %v5389 = vsel %vm1019, %v5357, %v4753
      %v5390 = vsel %vm1019, %v5358, %v4755
      %v5391 = vsel %vm1019, %v5359, %v4757
      %v5392 = vsel %vm1019, %v5360, %v4759
      %v5393 = vsel %vm1019, %v5361, %v4761
      %v5394 = vsel %vm1019, %v5362, %v4763
      %v5395 = vsel %vm1019, %v5363, %v4765
      %v5396 = vsel %vm1019, %v5364, %v4767
      %v5397 = vsel %vm1019, %v5365, %v4769
      %v5398 = vsel %vm1019, %v5366, %v4771
      %v5399 = vsel %vm1019, %v5367, %v4773
      %v5400 = vsel %vm1019, %v5368, %v4775
      %v5401 = vsel %vm1019, %v5369, %v4777
      %v5402 = vsel %vm1019, %v5370, %v4779
      %v5403 = vsel %vm1019, %v5371, %v4781
      %v5404 = vsel %vm1019, %v5372, %v4783
      %v5405 = vsel %vm1019, %v5373, %v4785
      %v5406 = vsel %vm1019, %v5374, %v4787
      %v5407 = vsel %vm1019, %v5375, %v4789
      %v5408 = vsel %vm1019, %v5376, %v4791
      %v5409 = vsel %vm1019, %v5377, %v4793
      %v5410 = vsel %vm1019, %v5378, %v4795
      %v5411 = vsel %vm1019, %v5379, %v4797
      %v5412 = vsel %vm1019, %v5380, %v4799
      %v5413 = vsel %vm1019, %v5381, %v4801
      %v5414 = vsel %vm1019, %v5382, %v4803
      %v5415 = vsel %vm1019, %v5383, %v4805
      %v5416 = vsel %vm1019, %v5384, %v4807
      %v5417 = vsel %vm1019, %v5385, %v4809
      %v5418 = vsel %vm1019, %v5386, %v4811
      %v5419 = vsel %vm1019, %v5387, %v4813
      %v5420 = vsel %vm983, %v3907, %v4925
      %v5421 = vsel %vm983, %v3909, %v4927
      %v5422 = vsel %vm983, %v3912, %v4929
      %v5423 = vsel %vm983, %v3914, %v4931
      %v5424 = vsel %vm983, %v3917, %v4933
      %v5425 = vsel %vm983, %v3919, %v4935
      %v5426 = vsel %vm983, %v3922, %v4937
      %v5427 = vsel %vm983, %v3924, %v4939
      %v5428 = vsel %vm983, %v3927, %v4941
      %v5429 = vsel %vm983, %v3929, %v4943
      %v5430 = vsel %vm983, %v3932, %v4945
      %v5431 = vsel %vm983, %v3934, %v4947
      %v5432 = vsel %vm983, %v3937, %v4949
      %v5433 = vsel %vm983, %v3939, %v4951
      %v5434 = vsel %vm983, %v3942, %v4953
      %v5435 = vsel %vm983, %v3944, %v4955
      %v5436 = vsel %vm983, %v3947, %v4957
      %v5437 = vsel %vm983, %v3949, %v4959
      %v5438 = vsel %vm983, %v3952, %v4961
      %v5439 = vsel %vm983, %v3954, %v4963
      %v5440 = vsel %vm983, %v3957, %v4965
      %v5441 = vsel %vm983, %v3959, %v4967
      %v5442 = vsel %vm983, %v3962, %v4969
      %v5443 = vsel %vm983, %v3964, %v4971
      %v5444 = vsel %vm983, %v3967, %v4973
      %v5445 = vsel %vm983, %v3969, %v4975
      %v5446 = vsel %vm983, %v3972, %v4977
      %v5447 = vsel %vm983, %v3974, %v4979
      %v5448 = vsel %vm983, %v3977, %v4981
      %v5449 = vsel %vm983, %v3979, %v4983
      %v5450 = vsel %vm983, %v4855, %v4985
      %v5451 = vsel %vm983, %v4857, %v4987
      %v5452 = vsel %vm1001, %v5420, %v5055
      %v5453 = vsel %vm1001, %v5421, %v5057
      %v5454 = vsel %vm1001, %v5422, %v5059
      %v5455 = vsel %vm1001, %v5423, %v5061
      %v5456 = vsel %vm1001, %v5424, %v5063
      %v5457 = vsel %vm1001, %v5425, %v5065
      %v5458 = vsel %vm1001, %v5426, %v5067
      %v5459 = vsel %vm1001, %v5427, %v5069
      %v5460 = vsel %vm1001, %v5428, %v5071
      %v5461 = vsel %vm1001, %v5429, %v5073
      %v5462 = vsel %vm1001, %v5430, %v5075
      %v5463 = vsel %vm1001, %v5431, %v5077
      %v5464 = vsel %vm1001, %v5432, %v5079
      %v5465 = vsel %vm1001, %v5433, %v5081
      %v5466 = vsel %vm1001, %v5434, %v5083
      %v5467 = vsel %vm1001, %v5435, %v5085
      %v5468 = vsel %vm1001, %v5436, %v5087
      %v5469 = vsel %vm1001, %v5437, %v5089
      %v5470 = vsel %vm1001, %v5438, %v5091
      %v5471 = vsel %vm1001, %v5439, %v5093
      %v5472 = vsel %vm1001, %v5440, %v5095
      %v5473 = vsel %vm1001, %v5441, %v5097
      %v5474 = vsel %vm1001, %v5442, %v5099
      %v5475 = vsel %vm1001, %v5443, %v5101
      %v5476 = vsel %vm1001, %v5444, %v5103
      %v5477 = vsel %vm1001, %v5445, %v5105
      %v5478 = vsel %vm1001, %v5446, %v5107
      %v5479 = vsel %vm1001, %v5447, %v5109
      %v5480 = vsel %vm1001, %v5448, %v5111
      %v5481 = vsel %vm1001, %v5449, %v5113
      %v5482 = vsel %vm1001, %v5450, %v5115
      %v5483 = vsel %vm1001, %v5451, %v5117
      %v5484 = vsel %vm1019, %v5452, %v5163
      %v5485 = vsel %vm1019, %v5453, %v5165
      %v5486 = vsel %vm1019, %v5454, %v5167
      %v5487 = vsel %vm1019, %v5455, %v5169
      %v5488 = vsel %vm1019, %v5456, %v5171
      %v5489 = vsel %vm1019, %v5457, %v5173
      %v5490 = vsel %vm1019, %v5458, %v5175
      %v5491 = vsel %vm1019, %v5459, %v5177
      %v5492 = vsel %vm1019, %v5460, %v5179
      %v5493 = vsel %vm1019, %v5461, %v5181
      %v5494 = vsel %vm1019, %v5462, %v5183
      %v5495 = vsel %vm1019, %v5463, %v5185
      %v5496 = vsel %vm1019, %v5464, %v5187
      %v5497 = vsel %vm1019, %v5465, %v5189
      %v5498 = vsel %vm1019, %v5466, %v5191
      %v5499 = vsel %vm1019, %v5467, %v5193
      %v5500 = vsel %vm1019, %v5468, %v5195
      %v5501 = vsel %vm1019, %v5469, %v5197
      %v5502 = vsel %vm1019, %v5470, %v5199
      %v5503 = vsel %vm1019, %v5471, %v5201
      %v5504 = vsel %vm1019, %v5472, %v5203
      %v5505 = vsel %vm1019, %v5473, %v5205
      %v5506 = vsel %vm1019, %v5474, %v5207
      %v5507 = vsel %vm1019, %v5475, %v5209
      %v5508 = vsel %vm1019, %v5476, %v5211
      %v5509 = vsel %vm1019, %v5477, %v5213
      %v5510 = vsel %vm1019, %v5478, %v5215
      %v5511 = vsel %vm1019, %v5479, %v5217
      %v5512 = vsel %vm1019, %v5480, %v5219
      %v5513 = vsel %vm1019, %v5481, %v5221
      %v5514 = vsel %vm1019, %v5482, %v5223
      %v5515 = vsel %vm1019, %v5483, %v5225
      %v5516 = vpack.c.bf16 %v5389, %v5388
      %v5517 = vpack.c.bf16 %v5485, %v5484
      %v5518 = vpack.c.bf16 %v4177, %v4160
      %v5519 = vpack.c.bf16 %v5391, %v5390
      %v5520 = vpack.c.bf16 %v5487, %v5486
      %v5521 = vpack.c.bf16 %v4211, %v4194
      %v5522 = vpack.c.bf16 %v5393, %v5392
      %v5523 = vpack.c.bf16 %v5489, %v5488
      %v5524 = vpack.c.bf16 %v4245, %v4228
      %v5525 = vpack.c.bf16 %v5395, %v5394
      %v5526 = vpack.c.bf16 %v5491, %v5490
      %v5527 = vpack.c.bf16 %v4279, %v4262
      %v5528 = vpack.c.bf16 %v5397, %v5396
      %v5529 = vpack.c.bf16 %v5493, %v5492
      %v5530 = vpack.c.bf16 %v4313, %v4296
      %v5531 = vpack.c.bf16 %v5399, %v5398
      %v5532 = vpack.c.bf16 %v5495, %v5494
      %v5533 = vpack.c.bf16 %v4347, %v4330
      %v5534 = vpack.c.bf16 %v5401, %v5400
      %v5535 = vpack.c.bf16 %v5497, %v5496
      %v5536 = vpack.c.bf16 %v4381, %v4364
      %v5537 = vpack.c.bf16 %v5403, %v5402
      %v5538 = vpack.c.bf16 %v5499, %v5498
      %v5539 = vpack.c.bf16 %v4415, %v4398
      %v5540 = vpack.c.bf16 %v5405, %v5404
      %v5541 = vpack.c.bf16 %v5501, %v5500
      %v5542 = vpack.c.bf16 %v4449, %v4432
      %v5543 = vpack.c.bf16 %v5407, %v5406
      %v5544 = vpack.c.bf16 %v5503, %v5502
      %v5545 = vpack.c.bf16 %v4483, %v4466
      %v5546 = vpack.c.bf16 %v5409, %v5408
      %v5547 = vpack.c.bf16 %v5505, %v5504
      %v5548 = vpack.c.bf16 %v4517, %v4500
      %v5549 = vpack.c.bf16 %v5411, %v5410
      %v5550 = vpack.c.bf16 %v5507, %v5506
      %v5551 = vpack.c.bf16 %v4551, %v4534
      %v5552 = vpack.c.bf16 %v5413, %v5412
      %v5553 = vpack.c.bf16 %v5509, %v5508
      %v5554 = vpack.c.bf16 %v4585, %v4568
      %v5555 = vpack.c.bf16 %v5415, %v5414
      %v5556 = vpack.c.bf16 %v5511, %v5510
      %v5557 = vpack.c.bf16 %v4619, %v4602
      %v5558 = vpack.c.bf16 %v5417, %v5416
      %v5559 = vpack.c.bf16 %v5513, %v5512
      %v5560 = vpack.c.bf16 %v4923, %v4906
      %v5561 = vpack.c.bf16 %v5419, %v5418
      %v5562 = vpack.c.bf16 %v5515, %v5514
      %v5563 = vpack.c.bf16 %v5291, %v5274
      %v5564 = vld [vmem:[%s17] sm:$0xf]
      %v5565 = vld [vmem:[%s17 + $0x4] sm:$0xf]
      %v5566 = vld [vmem:[%s17 + $0x8] sm:$0xf]
      %v5567 = vld [vmem:[%s17 + $0xc] sm:$0xf]
      %v5568 = vld [vmem:[%s17 + $0x10] sm:$0xf]
      %v5569 = vld [vmem:[%s17 + $0x14] sm:$0xf]
      %v5570 = vld [vmem:[%s17 + $0x18] sm:$0xf]
      %v5571 = vld [vmem:[%s17 + $0x1c] sm:$0xf]
      %v5572 = vld [vmem:[%s17 + $0x20] sm:$0xf]
      %v5573 = vld [vmem:[%s17 + $0x24] sm:$0xf]
      %v5574 = vld [vmem:[%s17 + $0x28] sm:$0xf]
      %v5575 = vld [vmem:[%s17 + $0x2c] sm:$0xf]
      %v5576 = vld [vmem:[%s17 + $0x30] sm:$0xf]
      %v5577 = vld [vmem:[%s17 + $0x34] sm:$0xf]
      %v5578 = vld [vmem:[%s17 + $0x38] sm:$0xf]
      %v5579 = vld [vmem:[%s17 + $0x3c] sm:$0xf]
      %v5580 = vld [vmem:[%s17 + $0x40] sm:$0xf]
      %v5581 = vld [vmem:[%s17 + $0x44] sm:$0xf]
      %v5582 = vld [vmem:[%s17 + $0x48] sm:$0xf]
      %v5583 = vld [vmem:[%s17 + $0x4c] sm:$0xf]
      %v5584 = vld [vmem:[%s17 + $0x50] sm:$0xf]
      %v5585 = vld [vmem:[%s17 + $0x54] sm:$0xf]
      %v5586 = vld [vmem:[%s17 + $0x58] sm:$0xf]
      %v5587 = vld [vmem:[%s17 + $0x5c] sm:$0xf]
      %v5588 = vld [vmem:[%s17 + $0x60] sm:$0xf]
      %v5589 = vld [vmem:[%s17 + $0x64] sm:$0xf]
      %v5590 = vld [vmem:[%s17 + $0x68] sm:$0xf]
      %v5591 = vld [vmem:[%s17 + $0x6c] sm:$0xf]
      %v5592 = vld [vmem:[%s17 + $0x70] sm:$0xf]
      %v5593 = vld [vmem:[%s17 + $0x74] sm:$0xf]
      %v5594 = vld [vmem:[%s17 + $0x78] sm:$0xf]
      %v5595 = vld [vmem:[%s17 + $0x7c] sm:$0xf]
      %v5596 = vld [vmem:[%s17 + $0x80] sm:$0xf]
      %v5597 = vld [vmem:[%s17 + $0x84] sm:$0xf]
      %v5598 = vld [vmem:[%s17 + $0x88] sm:$0xf]
      %v5599 = vld [vmem:[%s17 + $0x8c] sm:$0xf]
      %v5603 = vrot.slane %v1354, 1
      %v5604 = vrot.slane %v1355, 1
      %v5605 = vsel %vm732, %v5603, %v5604
      %v5606 = vrot.slane %v1356, 1
      %v5607 = vsel %vm732, %v5604, %v5606
      %5608 = vrot.lane.b32.xlu0 %v5605, 32
      %v5609 = vpop.permute.xlu0 %5608
      %5610 = vrot.lane.b32.xlu0 %v5607, 32
      %v5611 = vpop.permute.xlu0 %5610
      %5612 = vrot.lane.b32.xlu0 %v1458, 32
      %v5613 = vpop.permute.xlu0 %5612
      %5614 = vrot.lane.b32.xlu0 %v1460, 32
      %v5615 = vpop.permute.xlu0 %5614
      %5616 = vrot.lane.b32.xlu0 %v1463, 32
      %v5617 = vpop.permute.xlu0 %5616
      %5618 = vrot.lane.b32.xlu0 %v1465, 32
      %v5619 = vpop.permute.xlu0 %5618
      %5620 = vrot.lane.b32.xlu0 %v1468, 32
      %v5621 = vpop.permute.xlu0 %5620
      %5622 = vrot.lane.b32.xlu0 %v1470, 32
      %v5623 = vpop.permute.xlu0 %5622
      %5624 = vrot.lane.b32.xlu0 %v1473, 32
      %v5625 = vpop.permute.xlu0 %5624
      %5626 = vrot.lane.b32.xlu0 %v1475, 32
      %v5627 = vpop.permute.xlu0 %5626
      %5628 = vrot.lane.b32.xlu0 %v1478, 32
      %v5629 = vpop.permute.xlu0 %5628
      %5630 = vrot.lane.b32.xlu0 %v1480, 32
      %v5631 = vpop.permute.xlu0 %5630
      %5632 = vrot.lane.b32.xlu0 %v1483, 32
      %v5633 = vpop.permute.xlu0 %5632
      %5634 = vrot.lane.b32.xlu0 %v1485, 32
      %v5635 = vpop.permute.xlu0 %5634
      %5636 = vrot.lane.b32.xlu0 %v1488, 32
      %v5637 = vpop.permute.xlu0 %5636
      %5638 = vrot.lane.b32.xlu0 %v1490, 32
      %v5639 = vpop.permute.xlu0 %5638
      %5640 = vrot.lane.b32.xlu0 %v1493, 32
      %v5641 = vpop.permute.xlu0 %5640
      %5642 = vrot.lane.b32.xlu0 %v1495, 32
      %v5643 = vpop.permute.xlu0 %5642
      %5644 = vrot.lane.b32.xlu0 %v1498, 32
      %v5645 = vpop.permute.xlu0 %5644
      %5646 = vrot.lane.b32.xlu0 %v1500, 32
      %v5647 = vpop.permute.xlu0 %5646
      %5648 = vrot.lane.b32.xlu0 %v1503, 32
      %v5649 = vpop.permute.xlu0 %5648
      %5650 = vrot.lane.b32.xlu0 %v1505, 32
      %v5651 = vpop.permute.xlu0 %5650
      %5652 = vrot.lane.b32.xlu0 %v1508, 32
      %v5653 = vpop.permute.xlu0 %5652
      %5654 = vrot.lane.b32.xlu0 %v1510, 32
      %v5655 = vpop.permute.xlu0 %5654
      %5656 = vrot.lane.b32.xlu0 %v1513, 32
      %v5657 = vpop.permute.xlu0 %5656
      %5658 = vrot.lane.b32.xlu0 %v1515, 32
      %v5659 = vpop.permute.xlu0 %5658
      %5660 = vrot.lane.b32.xlu0 %v1518, 32
      %v5661 = vpop.permute.xlu0 %5660
      %5662 = vrot.lane.b32.xlu0 %v1520, 32
      %v5663 = vpop.permute.xlu0 %5662
      %5664 = vrot.lane.b32.xlu0 %v1523, 32
      %v5665 = vpop.permute.xlu0 %5664
      %5666 = vrot.lane.b32.xlu0 %v1525, 32
      %v5667 = vpop.permute.xlu0 %5666
      %5668 = vrot.lane.b32.xlu0 %v1528, 32
      %v5669 = vpop.permute.xlu0 %5668
      %5670 = vrot.lane.b32.xlu0 %v1530, 32
      %v5671 = vpop.permute.xlu0 %5670
      %v5704 = vrot.slane %v1354, 2
      %v5705 = vrot.slane %v1355, 2
      %v5706 = vsel %vm781, %v5704, %v5705
      %v5707 = vrot.slane %v1356, 2
      %v5708 = vsel %vm781, %v5705, %v5707
      %v5709 = vrot.slane %v1357, 2
      %v5710 = vrot.slane %v1358, 2
      %v5711 = vsel %vm781, %v5709, %v5710
      %v5712 = vrot.slane %v1359, 2
      %v5713 = vsel %vm781, %v5710, %v5712
      %v5714 = vrot.slane %v1360, 2
      %v5715 = vrot.slane %v1361, 2
      %v5716 = vsel %vm781, %v5714, %v5715
      %v5717 = vrot.slane %v1362, 2
      %v5718 = vsel %vm781, %v5715, %v5717
      %v5719 = vrot.slane %v1363, 2
      %v5720 = vrot.slane %v1364, 2
      %v5721 = vsel %vm781, %v5719, %v5720
      %v5722 = vrot.slane %v1365, 2
      %v5723 = vsel %vm781, %v5720, %v5722
      %v5724 = vrot.slane %v1366, 2
      %v5725 = vrot.slane %v1367, 2
      %v5726 = vsel %vm781, %v5724, %v5725
      %v5727 = vrot.slane %v1368, 2
      %v5728 = vsel %vm781, %v5725, %v5727
      %v5729 = vrot.slane %v1369, 2
      %v5730 = vrot.slane %v1370, 2
      %v5731 = vsel %vm781, %v5729, %v5730
      %v5732 = vrot.slane %v1371, 2
      %v5733 = vsel %vm781, %v5730, %v5732
      %v5734 = vrot.slane %v1372, 2
      %v5735 = vrot.slane %v1373, 2
      %v5736 = vsel %vm781, %v5734, %v5735
      %v5737 = vrot.slane %v1374, 2
      %v5738 = vsel %vm781, %v5735, %v5737
      %v5739 = vrot.slane %v1375, 2
      %v5740 = vrot.slane %v1376, 2
      %v5741 = vsel %vm781, %v5739, %v5740
      %v5742 = vrot.slane %v1377, 2
      %v5743 = vsel %vm781, %v5740, %v5742
      %v5744 = vrot.slane %v1378, 2
      %v5745 = vrot.slane %v1379, 2
      %v5746 = vsel %vm781, %v5744, %v5745
      %v5747 = vrot.slane %v1380, 2
      %v5748 = vsel %vm781, %v5745, %v5747
      %v5749 = vrot.slane %v1381, 2
      %v5750 = vrot.slane %v1382, 2
      %v5751 = vsel %vm781, %v5749, %v5750
      %v5752 = vrot.slane %v1383, 2
      %v5753 = vsel %vm781, %v5750, %v5752
      %v5754 = vrot.slane %v1384, 2
      %v5755 = vrot.slane %v1385, 2
      %v5756 = vsel %vm781, %v5754, %v5755
      %v5757 = vrot.slane %v1386, 2
      %v5758 = vsel %vm781, %v5755, %v5757
      %v5759 = vrot.slane %v1387, 2
      %v5760 = vrot.slane %v1388, 2
      %v5761 = vsel %vm781, %v5759, %v5760
      %v5762 = vrot.slane %v1389, 2
      %v5763 = vsel %vm781, %v5760, %v5762
      %v5764 = vrot.slane %v1390, 2
      %v5765 = vrot.slane %v1391, 2
      %v5766 = vsel %vm781, %v5764, %v5765
      %v5767 = vrot.slane %v1392, 2
      %v5768 = vsel %vm781, %v5765, %v5767
      %v5769 = vrot.slane %v1393, 2
      %v5770 = vrot.slane %v1394, 2
      %v5771 = vsel %vm781, %v5769, %v5770
      %v5772 = vrot.slane %v1395, 2
      %v5773 = vsel %vm781, %v5770, %v5772
      %v5774 = vrot.slane %v1396, 2
      %v5775 = vrot.slane %v1397, 2
      %v5776 = vsel %vm781, %v5774, %v5775
      %v5777 = vrot.slane %v1398, 2
      %v5778 = vsel %vm781, %v5775, %v5777
      %v5779 = vrot.slane %v1399, 2
      %v5780 = vrot.slane %v1400, 2
      %v5781 = vsel %vm781, %v5779, %v5780
      %v5782 = vrot.slane %v1401, 2
      %v5783 = vsel %vm781, %v5780, %v5782
      %5784 = vrot.lane.b32.xlu0 %v5706, 64
      %v5785 = vpop.permute.xlu0 %5784
      %5786 = vrot.lane.b32.xlu0 %v5708, 64
      %v5787 = vpop.permute.xlu0 %5786
      %5788 = vrot.lane.b32.xlu0 %v5711, 64
      %v5789 = vpop.permute.xlu0 %5788
      %5790 = vrot.lane.b32.xlu0 %v5713, 64
      %v5791 = vpop.permute.xlu0 %5790
      %5792 = vrot.lane.b32.xlu0 %v5716, 64
      %v5793 = vpop.permute.xlu0 %5792
      %5794 = vrot.lane.b32.xlu0 %v5718, 64
      %v5795 = vpop.permute.xlu0 %5794
      %5796 = vrot.lane.b32.xlu0 %v5721, 64
      %v5797 = vpop.permute.xlu0 %5796
      %5798 = vrot.lane.b32.xlu0 %v5723, 64
      %v5799 = vpop.permute.xlu0 %5798
      %5800 = vrot.lane.b32.xlu0 %v5726, 64
      %v5801 = vpop.permute.xlu0 %5800
      %5802 = vrot.lane.b32.xlu0 %v5728, 64
      %v5803 = vpop.permute.xlu0 %5802
      %5804 = vrot.lane.b32.xlu0 %v5731, 64
      %v5805 = vpop.permute.xlu0 %5804
      %5806 = vrot.lane.b32.xlu0 %v5733, 64
      %v5807 = vpop.permute.xlu0 %5806
      %5808 = vrot.lane.b32.xlu0 %v5736, 64
      %v5809 = vpop.permute.xlu0 %5808
      %5810 = vrot.lane.b32.xlu0 %v5738, 64
      %v5811 = vpop.permute.xlu0 %5810
      %5812 = vrot.lane.b32.xlu0 %v5741, 64
      %v5813 = vpop.permute.xlu0 %5812
      %5814 = vrot.lane.b32.xlu0 %v5743, 64
      %v5815 = vpop.permute.xlu0 %5814
      %5816 = vrot.lane.b32.xlu0 %v5746, 64
      %v5817 = vpop.permute.xlu0 %5816
      %5818 = vrot.lane.b32.xlu0 %v5748, 64
      %v5819 = vpop.permute.xlu0 %5818
      %5820 = vrot.lane.b32.xlu0 %v5751, 64
      %v5821 = vpop.permute.xlu0 %5820
      %5822 = vrot.lane.b32.xlu0 %v5753, 64
      %v5823 = vpop.permute.xlu0 %5822
      %5824 = vrot.lane.b32.xlu0 %v5756, 64
      %v5825 = vpop.permute.xlu0 %5824
      %5826 = vrot.lane.b32.xlu0 %v5758, 64
      %v5827 = vpop.permute.xlu0 %5826
      %5828 = vrot.lane.b32.xlu0 %v5761, 64
      %v5829 = vpop.permute.xlu0 %5828
      %5830 = vrot.lane.b32.xlu0 %v5763, 64
      %v5831 = vpop.permute.xlu0 %5830
      %5832 = vrot.lane.b32.xlu0 %v5766, 64
      %v5833 = vpop.permute.xlu0 %5832
      %5834 = vrot.lane.b32.xlu0 %v5768, 64
      %v5835 = vpop.permute.xlu0 %5834
      %5836 = vrot.lane.b32.xlu0 %v5771, 64
      %v5837 = vpop.permute.xlu0 %5836
      %5838 = vrot.lane.b32.xlu0 %v5773, 64
      %v5839 = vpop.permute.xlu0 %5838
      %5840 = vrot.lane.b32.xlu0 %v5776, 64
      %v5841 = vpop.permute.xlu0 %5840
      %5842 = vrot.lane.b32.xlu0 %v5778, 64
      %v5843 = vpop.permute.xlu0 %5842
      %5844 = vrot.lane.b32.xlu0 %v5781, 64
      %v5845 = vpop.permute.xlu0 %5844
      %5846 = vrot.lane.b32.xlu0 %v5783, 64
      %v5847 = vpop.permute.xlu0 %5846
      %5880 = vrot.lane.b32.xlu0 %v1357, 96
      %v5881 = vpop.permute.xlu0 %5880
      %5882 = vrot.lane.b32.xlu0 %v1358, 96
      %v5883 = vpop.permute.xlu0 %5882
      %5884 = vrot.lane.b32.xlu0 %v1360, 96
      %v5885 = vpop.permute.xlu0 %5884
      %5886 = vrot.lane.b32.xlu0 %v1361, 96
      %v5887 = vpop.permute.xlu0 %5886
      %5888 = vrot.lane.b32.xlu0 %v1363, 96
      %v5889 = vpop.permute.xlu0 %5888
      %5890 = vrot.lane.b32.xlu0 %v1364, 96
      %v5891 = vpop.permute.xlu0 %5890
      %5892 = vrot.lane.b32.xlu0 %v1366, 96
      %v5893 = vpop.permute.xlu0 %5892
      %5894 = vrot.lane.b32.xlu0 %v1367, 96
      %v5895 = vpop.permute.xlu0 %5894
      %5896 = vrot.lane.b32.xlu0 %v1369, 96
      %v5897 = vpop.permute.xlu0 %5896
      %5898 = vrot.lane.b32.xlu0 %v1370, 96
      %v5899 = vpop.permute.xlu0 %5898
      %5900 = vrot.lane.b32.xlu0 %v1372, 96
      %v5901 = vpop.permute.xlu0 %5900
      %5902 = vrot.lane.b32.xlu0 %v1373, 96
      %v5903 = vpop.permute.xlu0 %5902
      %5904 = vrot.lane.b32.xlu0 %v1375, 96
      %v5905 = vpop.permute.xlu0 %5904
      %5906 = vrot.lane.b32.xlu0 %v1376, 96
      %v5907 = vpop.permute.xlu0 %5906
      %5908 = vrot.lane.b32.xlu0 %v1378, 96
      %v5909 = vpop.permute.xlu0 %5908
      %5910 = vrot.lane.b32.xlu0 %v1379, 96
      %v5911 = vpop.permute.xlu0 %5910
      %5912 = vrot.lane.b32.xlu0 %v1381, 96
      %v5913 = vpop.permute.xlu0 %5912
      %5914 = vrot.lane.b32.xlu0 %v1382, 96
      %v5915 = vpop.permute.xlu0 %5914
      %5916 = vrot.lane.b32.xlu0 %v1384, 96
      %v5917 = vpop.permute.xlu0 %5916
      %5918 = vrot.lane.b32.xlu0 %v1385, 96
      %v5919 = vpop.permute.xlu0 %5918
      %5920 = vrot.lane.b32.xlu0 %v1387, 96
      %v5921 = vpop.permute.xlu0 %5920
      %5922 = vrot.lane.b32.xlu0 %v1388, 96
      %v5923 = vpop.permute.xlu0 %5922
      %5924 = vrot.lane.b32.xlu0 %v1390, 96
      %v5925 = vpop.permute.xlu0 %5924
      %5926 = vrot.lane.b32.xlu0 %v1391, 96
      %v5927 = vpop.permute.xlu0 %5926
      %5928 = vrot.lane.b32.xlu0 %v1393, 96
      %v5929 = vpop.permute.xlu0 %5928
      %5930 = vrot.lane.b32.xlu0 %v1394, 96
      %v5931 = vpop.permute.xlu0 %5930
      %5932 = vrot.lane.b32.xlu0 %v1396, 96
      %v5933 = vpop.permute.xlu0 %5932
      %5934 = vrot.lane.b32.xlu0 %v1397, 96
      %v5935 = vpop.permute.xlu0 %5934
      %5936 = vrot.lane.b32.xlu0 %v1399, 96
      %v5937 = vpop.permute.xlu0 %5936
      %5938 = vrot.lane.b32.xlu0 %v1400, 96
      %v5939 = vpop.permute.xlu0 %5938
      %5940 = vrot.lane.b32.xlu0 %v1402, 96
      %v5941 = vpop.permute.xlu0 %5940
      %5942 = vrot.lane.b32.xlu0 %v1403, 96
      %v5943 = vpop.permute.xlu0 %5942
      %v5976 = vrot.slane %v1402, 2
      %v5977 = vrot.slane %v1403, 2
      %v5978 = vsel %vm781, %v5976, %v5977
      %v5979 = vrot.slane %v1404, 2
      %v5980 = vsel %vm781, %v5977, %v5979
      %5981 = vrot.lane.b32.xlu0 %v5711, 32
      %v5982 = vpop.permute.xlu0 %5981
      %5983 = vrot.lane.b32.xlu0 %v5713, 32
      %v5984 = vpop.permute.xlu0 %5983
      %5985 = vrot.lane.b32.xlu0 %v5716, 32
      %v5986 = vpop.permute.xlu0 %5985
      %5987 = vrot.lane.b32.xlu0 %v5718, 32
      %v5988 = vpop.permute.xlu0 %5987
      %5989 = vrot.lane.b32.xlu0 %v5721, 32
      %v5990 = vpop.permute.xlu0 %5989
      %5991 = vrot.lane.b32.xlu0 %v5723, 32
      %v5992 = vpop.permute.xlu0 %5991
      %5993 = vrot.lane.b32.xlu0 %v5726, 32
      %v5994 = vpop.permute.xlu0 %5993
      %5995 = vrot.lane.b32.xlu0 %v5728, 32
      %v5996 = vpop.permute.xlu0 %5995
      %5997 = vrot.lane.b32.xlu0 %v5731, 32
      %v5998 = vpop.permute.xlu0 %5997
      %5999 = vrot.lane.b32.xlu0 %v5733, 32
      %v6000 = vpop.permute.xlu0 %5999
      %6001 = vrot.lane.b32.xlu0 %v5736, 32
      %v6002 = vpop.permute.xlu0 %6001
      %6003 = vrot.lane.b32.xlu0 %v5738, 32
      %v6004 = vpop.permute.xlu0 %6003
      %6005 = vrot.lane.b32.xlu0 %v5741, 32
      %v6006 = vpop.permute.xlu0 %6005
      %6007 = vrot.lane.b32.xlu0 %v5743, 32
      %v6008 = vpop.permute.xlu0 %6007
      %6009 = vrot.lane.b32.xlu0 %v5746, 32
      %v6010 = vpop.permute.xlu0 %6009
      %6011 = vrot.lane.b32.xlu0 %v5748, 32
      %v6012 = vpop.permute.xlu0 %6011
      %6013 = vrot.lane.b32.xlu0 %v5751, 32
      %v6014 = vpop.permute.xlu0 %6013
      %6015 = vrot.lane.b32.xlu0 %v5753, 32
      %v6016 = vpop.permute.xlu0 %6015
      %6017 = vrot.lane.b32.xlu0 %v5756, 32
      %v6018 = vpop.permute.xlu0 %6017
      %6019 = vrot.lane.b32.xlu0 %v5758, 32
      %v6020 = vpop.permute.xlu0 %6019
      %6021 = vrot.lane.b32.xlu0 %v5761, 32
      %v6022 = vpop.permute.xlu0 %6021
      %6023 = vrot.lane.b32.xlu0 %v5763, 32
      %v6024 = vpop.permute.xlu0 %6023
      %6025 = vrot.lane.b32.xlu0 %v5766, 32
      %v6026 = vpop.permute.xlu0 %6025
      %6027 = vrot.lane.b32.xlu0 %v5768, 32
      %v6028 = vpop.permute.xlu0 %6027
      %6029 = vrot.lane.b32.xlu0 %v5771, 32
      %v6030 = vpop.permute.xlu0 %6029
      %6031 = vrot.lane.b32.xlu0 %v5773, 32
      %v6032 = vpop.permute.xlu0 %6031
      %6033 = vrot.lane.b32.xlu0 %v5776, 32
      %v6034 = vpop.permute.xlu0 %6033
      %6035 = vrot.lane.b32.xlu0 %v5778, 32
      %v6036 = vpop.permute.xlu0 %6035
      %6037 = vrot.lane.b32.xlu0 %v5781, 32
      %v6038 = vpop.permute.xlu0 %6037
      %6039 = vrot.lane.b32.xlu0 %v5783, 32
      %v6040 = vpop.permute.xlu0 %6039
      %6041 = vrot.lane.b32.xlu0 %v5978, 32
      %v6042 = vpop.permute.xlu0 %6041
      %6043 = vrot.lane.b32.xlu0 %v5980, 32
      %v6044 = vpop.permute.xlu0 %6043
      %6079 = vrot.lane.b32.xlu0 %v1360, 64
      %v6080 = vpop.permute.xlu0 %6079
      %6081 = vrot.lane.b32.xlu0 %v1361, 64
      %v6082 = vpop.permute.xlu0 %6081
      %6083 = vrot.lane.b32.xlu0 %v1363, 64
      %v6084 = vpop.permute.xlu0 %6083
      %6085 = vrot.lane.b32.xlu0 %v1364, 64
      %v6086 = vpop.permute.xlu0 %6085
      %6087 = vrot.lane.b32.xlu0 %v1366, 64
      %v6088 = vpop.permute.xlu0 %6087
      %6089 = vrot.lane.b32.xlu0 %v1367, 64
      %v6090 = vpop.permute.xlu0 %6089
      %6091 = vrot.lane.b32.xlu0 %v1369, 64
      %v6092 = vpop.permute.xlu0 %6091
      %6093 = vrot.lane.b32.xlu0 %v1370, 64
      %v6094 = vpop.permute.xlu0 %6093
      %6095 = vrot.lane.b32.xlu0 %v1372, 64
      %v6096 = vpop.permute.xlu0 %6095
      %6097 = vrot.lane.b32.xlu0 %v1373, 64
      %v6098 = vpop.permute.xlu0 %6097
      %6099 = vrot.lane.b32.xlu0 %v1375, 64
      %v6100 = vpop.permute.xlu0 %6099
      %6101 = vrot.lane.b32.xlu0 %v1376, 64
      %v6102 = vpop.permute.xlu0 %6101
      %6103 = vrot.lane.b32.xlu0 %v1378, 64
      %v6104 = vpop.permute.xlu0 %6103
      %6105 = vrot.lane.b32.xlu0 %v1379, 64
      %v6106 = vpop.permute.xlu0 %6105
      %6107 = vrot.lane.b32.xlu0 %v1381, 64
      %v6108 = vpop.permute.xlu0 %6107
      %6109 = vrot.lane.b32.xlu0 %v1382, 64
      %v6110 = vpop.permute.xlu0 %6109
      %6111 = vrot.lane.b32.xlu0 %v1384, 64
      %v6112 = vpop.permute.xlu0 %6111
      %6113 = vrot.lane.b32.xlu0 %v1385, 64
      %v6114 = vpop.permute.xlu0 %6113
      %6115 = vrot.lane.b32.xlu0 %v1387, 64
      %v6116 = vpop.permute.xlu0 %6115
      %6117 = vrot.lane.b32.xlu0 %v1388, 64
      %v6118 = vpop.permute.xlu0 %6117
      %6119 = vrot.lane.b32.xlu0 %v1390, 64
      %v6120 = vpop.permute.xlu0 %6119
      %6121 = vrot.lane.b32.xlu0 %v1391, 64
      %v6122 = vpop.permute.xlu0 %6121
      %6123 = vrot.lane.b32.xlu0 %v1393, 64
      %v6124 = vpop.permute.xlu0 %6123
      %6125 = vrot.lane.b32.xlu0 %v1394, 64
      %v6126 = vpop.permute.xlu0 %6125
      %6127 = vrot.lane.b32.xlu0 %v1396, 64
      %v6128 = vpop.permute.xlu0 %6127
      %6129 = vrot.lane.b32.xlu0 %v1397, 64
      %v6130 = vpop.permute.xlu0 %6129
      %6131 = vrot.lane.b32.xlu0 %v1399, 64
      %v6132 = vpop.permute.xlu0 %6131
      %6133 = vrot.lane.b32.xlu0 %v1400, 64
      %v6134 = vpop.permute.xlu0 %6133
      %6135 = vrot.lane.b32.xlu0 %v1402, 64
      %v6136 = vpop.permute.xlu0 %6135
      %6137 = vrot.lane.b32.xlu0 %v1403, 64
      %v6138 = vpop.permute.xlu0 %6137
      %6139 = vrot.lane.b32.xlu0 %v1405, 64
      %v6140 = vpop.permute.xlu0 %6139
      %6141 = vrot.lane.b32.xlu0 %v1406, 64
      %v6142 = vpop.permute.xlu0 %6141
      %v6176 = vrot.slane %v1405, 1
      %v6177 = vrot.slane %v1406, 1
      %v6178 = vsel %vm732, %v6176, %v6177
      %v6179 = vrot.slane %v1407, 1
      %v6180 = vsel %vm732, %v6177, %v6179
      %6181 = vrot.lane.b32.xlu0 %v1463, 96
      %v6182 = vpop.permute.xlu0 %6181
      %6183 = vrot.lane.b32.xlu0 %v1465, 96
      %v6184 = vpop.permute.xlu0 %6183
      %6185 = vrot.lane.b32.xlu0 %v1468, 96
      %v6186 = vpop.permute.xlu0 %6185
      %6187 = vrot.lane.b32.xlu0 %v1470, 96
      %v6188 = vpop.permute.xlu0 %6187
      %6189 = vrot.lane.b32.xlu0 %v1473, 96
      %v6190 = vpop.permute.xlu0 %6189
      %6191 = vrot.lane.b32.xlu0 %v1475, 96
      %v6192 = vpop.permute.xlu0 %6191
      %6193 = vrot.lane.b32.xlu0 %v1478, 96
      %v6194 = vpop.permute.xlu0 %6193
      %6195 = vrot.lane.b32.xlu0 %v1480, 96
      %v6196 = vpop.permute.xlu0 %6195
      %6197 = vrot.lane.b32.xlu0 %v1483, 96
      %v6198 = vpop.permute.xlu0 %6197
      %6199 = vrot.lane.b32.xlu0 %v1485, 96
      %v6200 = vpop.permute.xlu0 %6199
      %6201 = vrot.lane.b32.xlu0 %v1488, 96
      %v6202 = vpop.permute.xlu0 %6201
      %6203 = vrot.lane.b32.xlu0 %v1490, 96
      %v6204 = vpop.permute.xlu0 %6203
      %6205 = vrot.lane.b32.xlu0 %v1493, 96
      %v6206 = vpop.permute.xlu0 %6205
      %6207 = vrot.lane.b32.xlu0 %v1495, 96
      %v6208 = vpop.permute.xlu0 %6207
      %6209 = vrot.lane.b32.xlu0 %v1498, 96
      %v6210 = vpop.permute.xlu0 %6209
      %6211 = vrot.lane.b32.xlu0 %v1500, 96
      %v6212 = vpop.permute.xlu0 %6211
      %6213 = vrot.lane.b32.xlu0 %v1503, 96
      %v6214 = vpop.permute.xlu0 %6213
      %6215 = vrot.lane.b32.xlu0 %v1505, 96
      %v6216 = vpop.permute.xlu0 %6215
      %6217 = vrot.lane.b32.xlu0 %v1508, 96
      %v6218 = vpop.permute.xlu0 %6217
      %6219 = vrot.lane.b32.xlu0 %v1510, 96
      %v6220 = vpop.permute.xlu0 %6219
      %6221 = vrot.lane.b32.xlu0 %v1513, 96
      %v6222 = vpop.permute.xlu0 %6221
      %6223 = vrot.lane.b32.xlu0 %v1515, 96
      %v6224 = vpop.permute.xlu0 %6223
      %6225 = vrot.lane.b32.xlu0 %v1518, 96
      %v6226 = vpop.permute.xlu0 %6225
      %6227 = vrot.lane.b32.xlu0 %v1520, 96
      %v6228 = vpop.permute.xlu0 %6227
      %6229 = vrot.lane.b32.xlu0 %v1523, 96
      %v6230 = vpop.permute.xlu0 %6229
      %6231 = vrot.lane.b32.xlu0 %v1525, 96
      %v6232 = vpop.permute.xlu0 %6231
      %6233 = vrot.lane.b32.xlu0 %v1528, 96
      %v6234 = vpop.permute.xlu0 %6233
      %6235 = vrot.lane.b32.xlu0 %v1530, 96
      %v6236 = vpop.permute.xlu0 %6235
      %6237 = vrot.lane.b32.xlu0 %v1533, 96
      %v6238 = vpop.permute.xlu0 %6237
      %6239 = vrot.lane.b32.xlu0 %v1535, 96
      %v6240 = vpop.permute.xlu0 %6239
      %6241 = vrot.lane.b32.xlu0 %v6178, 96
      %v6242 = vpop.permute.xlu0 %6241
      %6243 = vrot.lane.b32.xlu0 %v6180, 96
      %v6244 = vpop.permute.xlu0 %6243
      %v6277 = vrot.slane %v1405, 2
      %v6278 = vrot.slane %v1406, 2
      %v6279 = vsel %vm781, %v6277, %v6278
      %v6280 = vrot.slane %v1407, 2
      %v6281 = vsel %vm781, %v6278, %v6280
      %v6314 = vsel %vm983, %v1354, %v5609
      %v6315 = vsel %vm983, %v1355, %v5611
      %v6316 = vsel %vm983, %v1357, %v5613
      %v6317 = vsel %vm983, %v1358, %v5615
      %v6318 = vsel %vm983, %v1360, %v5617
      %v6319 = vsel %vm983, %v1361, %v5619
      %v6320 = vsel %vm983, %v1363, %v5621
      %v6321 = vsel %vm983, %v1364, %v5623
      %v6322 = vsel %vm983, %v1366, %v5625
      %v6323 = vsel %vm983, %v1367, %v5627
      %v6324 = vsel %vm983, %v1369, %v5629
      %v6325 = vsel %vm983, %v1370, %v5631
      %v6326 = vsel %vm983, %v1372, %v5633
      %v6327 = vsel %vm983, %v1373, %v5635
      %v6328 = vsel %vm983, %v1375, %v5637
      %v6329 = vsel %vm983, %v1376, %v5639
      %v6330 = vsel %vm983, %v1378, %v5641
      %v6331 = vsel %vm983, %v1379, %v5643
      %v6332 = vsel %vm983, %v1381, %v5645
      %v6333 = vsel %vm983, %v1382, %v5647
      %v6334 = vsel %vm983, %v1384, %v5649
      %v6335 = vsel %vm983, %v1385, %v5651
      %v6336 = vsel %vm983, %v1387, %v5653
      %v6337 = vsel %vm983, %v1388, %v5655
      %v6338 = vsel %vm983, %v1390, %v5657
      %v6339 = vsel %vm983, %v1391, %v5659
      %v6340 = vsel %vm983, %v1393, %v5661
      %v6341 = vsel %vm983, %v1394, %v5663
      %v6342 = vsel %vm983, %v1396, %v5665
      %v6343 = vsel %vm983, %v1397, %v5667
      %v6344 = vsel %vm983, %v1399, %v5669
      %v6345 = vsel %vm983, %v1400, %v5671
      %v6346 = vsel %vm1001, %v6314, %v5785
      %v6347 = vsel %vm1001, %v6315, %v5787
      %v6348 = vsel %vm1001, %v6316, %v5789
      %v6349 = vsel %vm1001, %v6317, %v5791
      %v6350 = vsel %vm1001, %v6318, %v5793
      %v6351 = vsel %vm1001, %v6319, %v5795
      %v6352 = vsel %vm1001, %v6320, %v5797
      %v6353 = vsel %vm1001, %v6321, %v5799
      %v6354 = vsel %vm1001, %v6322, %v5801
      %v6355 = vsel %vm1001, %v6323, %v5803
      %v6356 = vsel %vm1001, %v6324, %v5805
      %v6357 = vsel %vm1001, %v6325, %v5807
      %v6358 = vsel %vm1001, %v6326, %v5809
      %v6359 = vsel %vm1001, %v6327, %v5811
      %v6360 = vsel %vm1001, %v6328, %v5813
      %v6361 = vsel %vm1001, %v6329, %v5815
      %v6362 = vsel %vm1001, %v6330, %v5817
      %v6363 = vsel %vm1001, %v6331, %v5819
      %v6364 = vsel %vm1001, %v6332, %v5821
      %v6365 = vsel %vm1001, %v6333, %v5823
      %v6366 = vsel %vm1001, %v6334, %v5825
      %v6367 = vsel %vm1001, %v6335, %v5827
      %v6368 = vsel %vm1001, %v6336, %v5829
      %v6369 = vsel %vm1001, %v6337, %v5831
      %v6370 = vsel %vm1001, %v6338, %v5833
      %v6371 = vsel %vm1001, %v6339, %v5835
      %v6372 = vsel %vm1001, %v6340, %v5837
      %v6373 = vsel %vm1001, %v6341, %v5839
      %v6374 = vsel %vm1001, %v6342, %v5841
      %v6375 = vsel %vm1001, %v6343, %v5843
      %v6376 = vsel %vm1001, %v6344, %v5845
      %v6377 = vsel %vm1001, %v6345, %v5847
      %v6378 = vsel %vm1019, %v6346, %v5881
      %v6379 = vsel %vm1019, %v6347, %v5883
      %v6380 = vsel %vm1019, %v6348, %v5885
      %v6381 = vsel %vm1019, %v6349, %v5887
      %v6382 = vsel %vm1019, %v6350, %v5889
      %v6383 = vsel %vm1019, %v6351, %v5891
      %v6384 = vsel %vm1019, %v6352, %v5893
      %v6385 = vsel %vm1019, %v6353, %v5895
      %v6386 = vsel %vm1019, %v6354, %v5897
      %v6387 = vsel %vm1019, %v6355, %v5899
      %v6388 = vsel %vm1019, %v6356, %v5901
      %v6389 = vsel %vm1019, %v6357, %v5903
      %v6390 = vsel %vm1019, %v6358, %v5905
      %v6391 = vsel %vm1019, %v6359, %v5907
      %v6392 = vsel %vm1019, %v6360, %v5909
      %v6393 = vsel %vm1019, %v6361, %v5911
      %v6394 = vsel %vm1019, %v6362, %v5913
      %v6395 = vsel %vm1019, %v6363, %v5915
      %v6396 = vsel %vm1019, %v6364, %v5917
      %v6397 = vsel %vm1019, %v6365, %v5919
      %v6398 = vsel %vm1019, %v6366, %v5921
      %v6399 = vsel %vm1019, %v6367, %v5923
      %v6400 = vsel %vm1019, %v6368, %v5925
      %v6401 = vsel %vm1019, %v6369, %v5927
      %v6402 = vsel %vm1019, %v6370, %v5929
      %v6403 = vsel %vm1019, %v6371, %v5931
      %v6404 = vsel %vm1019, %v6372, %v5933
      %v6405 = vsel %vm1019, %v6373, %v5935
      %v6406 = vsel %vm1019, %v6374, %v5937
      %v6407 = vsel %vm1019, %v6375, %v5939
      %v6408 = vsel %vm1019, %v6376, %v5941
      %v6409 = vsel %vm1019, %v6377, %v5943
      %v6410 = vsel %vm983, %v1458, %v5982
      %v6411 = vsel %vm983, %v1460, %v5984
      %v6412 = vsel %vm983, %v1463, %v5986
      %v6413 = vsel %vm983, %v1465, %v5988
      %v6414 = vsel %vm983, %v1468, %v5990
      %v6415 = vsel %vm983, %v1470, %v5992
      %v6416 = vsel %vm983, %v1473, %v5994
      %v6417 = vsel %vm983, %v1475, %v5996
      %v6418 = vsel %vm983, %v1478, %v5998
      %v6419 = vsel %vm983, %v1480, %v6000
      %v6420 = vsel %vm983, %v1483, %v6002
      %v6421 = vsel %vm983, %v1485, %v6004
      %v6422 = vsel %vm983, %v1488, %v6006
      %v6423 = vsel %vm983, %v1490, %v6008
      %v6424 = vsel %vm983, %v1493, %v6010
      %v6425 = vsel %vm983, %v1495, %v6012
      %v6426 = vsel %vm983, %v1498, %v6014
      %v6427 = vsel %vm983, %v1500, %v6016
      %v6428 = vsel %vm983, %v1503, %v6018
      %v6429 = vsel %vm983, %v1505, %v6020
      %v6430 = vsel %vm983, %v1508, %v6022
      %v6431 = vsel %vm983, %v1510, %v6024
      %v6432 = vsel %vm983, %v1513, %v6026
      %v6433 = vsel %vm983, %v1515, %v6028
      %v6434 = vsel %vm983, %v1518, %v6030
      %v6435 = vsel %vm983, %v1520, %v6032
      %v6436 = vsel %vm983, %v1523, %v6034
      %v6437 = vsel %vm983, %v1525, %v6036
      %v6438 = vsel %vm983, %v1528, %v6038
      %v6439 = vsel %vm983, %v1530, %v6040
      %v6440 = vsel %vm983, %v1533, %v6042
      %v6441 = vsel %vm983, %v1535, %v6044
      %v6442 = vsel %vm1001, %v6410, %v6080
      %v6443 = vsel %vm1001, %v6411, %v6082
      %v6444 = vsel %vm1001, %v6412, %v6084
      %v6445 = vsel %vm1001, %v6413, %v6086
      %v6446 = vsel %vm1001, %v6414, %v6088
      %v6447 = vsel %vm1001, %v6415, %v6090
      %v6448 = vsel %vm1001, %v6416, %v6092
      %v6449 = vsel %vm1001, %v6417, %v6094
      %v6450 = vsel %vm1001, %v6418, %v6096
      %v6451 = vsel %vm1001, %v6419, %v6098
      %v6452 = vsel %vm1001, %v6420, %v6100
      %v6453 = vsel %vm1001, %v6421, %v6102
      %v6454 = vsel %vm1001, %v6422, %v6104
      %v6455 = vsel %vm1001, %v6423, %v6106
      %v6456 = vsel %vm1001, %v6424, %v6108
      %v6457 = vsel %vm1001, %v6425, %v6110
      %v6458 = vsel %vm1001, %v6426, %v6112
      %v6459 = vsel %vm1001, %v6427, %v6114
      %v6460 = vsel %vm1001, %v6428, %v6116
      %v6461 = vsel %vm1001, %v6429, %v6118
      %v6462 = vsel %vm1001, %v6430, %v6120
      %v6463 = vsel %vm1001, %v6431, %v6122
      %v6464 = vsel %vm1001, %v6432, %v6124
      %v6465 = vsel %vm1001, %v6433, %v6126
      %v6466 = vsel %vm1001, %v6434, %v6128
      %v6467 = vsel %vm1001, %v6435, %v6130
      %v6468 = vsel %vm1001, %v6436, %v6132
      %v6469 = vsel %vm1001, %v6437, %v6134
      %v6470 = vsel %vm1001, %v6438, %v6136
      %v6471 = vsel %vm1001, %v6439, %v6138
      %v6472 = vsel %vm1001, %v6440, %v6140
      %v6473 = vsel %vm1001, %v6441, %v6142
      %v6474 = vsel %vm1019, %v6442, %v6182
      %v6475 = vsel %vm1019, %v6443, %v6184
      %v6476 = vsel %vm1019, %v6444, %v6186
      %v6477 = vsel %vm1019, %v6445, %v6188
      %v6478 = vsel %vm1019, %v6446, %v6190
      %v6479 = vsel %vm1019, %v6447, %v6192
      %v6480 = vsel %vm1019, %v6448, %v6194
      %v6481 = vsel %vm1019, %v6449, %v6196
      %v6482 = vsel %vm1019, %v6450, %v6198
      %v6483 = vsel %vm1019, %v6451, %v6200
      %v6484 = vsel %vm1019, %v6452, %v6202
      %v6485 = vsel %vm1019, %v6453, %v6204
      %v6486 = vsel %vm1019, %v6454, %v6206
      %v6487 = vsel %vm1019, %v6455, %v6208
      %v6488 = vsel %vm1019, %v6456, %v6210
      %v6489 = vsel %vm1019, %v6457, %v6212
      %v6490 = vsel %vm1019, %v6458, %v6214
      %v6491 = vsel %vm1019, %v6459, %v6216
      %v6492 = vsel %vm1019, %v6460, %v6218
      %v6493 = vsel %vm1019, %v6461, %v6220
      %v6494 = vsel %vm1019, %v6462, %v6222
      %v6495 = vsel %vm1019, %v6463, %v6224
      %v6496 = vsel %vm1019, %v6464, %v6226
      %v6497 = vsel %vm1019, %v6465, %v6228
      %v6498 = vsel %vm1019, %v6466, %v6230
      %v6499 = vsel %vm1019, %v6467, %v6232
      %v6500 = vsel %vm1019, %v6468, %v6234
      %v6501 = vsel %vm1019, %v6469, %v6236
      %v6502 = vsel %vm1019, %v6470, %v6238
      %v6503 = vsel %vm1019, %v6471, %v6240
      %v6504 = vsel %vm1019, %v6472, %v6242
      %v6505 = vsel %vm1019, %v6473, %v6244
      %v6506 = vpack.c.bf16 %v6379, %v6378
      %v6507 = vpack.c.bf16 %v6475, %v6474
      %v6508 = vpack.c.bf16 %v5718, %v5716
      %v6509 = vpack.c.bf16 %v6381, %v6380
      %v6510 = vpack.c.bf16 %v6477, %v6476
      %v6511 = vpack.c.bf16 %v5723, %v5721
      %v6512 = vpack.c.bf16 %v6383, %v6382
      %v6513 = vpack.c.bf16 %v6479, %v6478
      %v6514 = vpack.c.bf16 %v5728, %v5726
      %v6515 = vpack.c.bf16 %v6385, %v6384
      %v6516 = vpack.c.bf16 %v6481, %v6480
      %v6517 = vpack.c.bf16 %v5733, %v5731
      %v6518 = vpack.c.bf16 %v6387, %v6386
      %v6519 = vpack.c.bf16 %v6483, %v6482
      %v6520 = vpack.c.bf16 %v5738, %v5736
      %v6521 = vpack.c.bf16 %v6389, %v6388
      %v6522 = vpack.c.bf16 %v6485, %v6484
      %v6523 = vpack.c.bf16 %v5743, %v5741
      %v6524 = vpack.c.bf16 %v6391, %v6390
      %v6525 = vpack.c.bf16 %v6487, %v6486
      %v6526 = vpack.c.bf16 %v5748, %v5746
      %v6527 = vpack.c.bf16 %v6393, %v6392
      %v6528 = vpack.c.bf16 %v6489, %v6488
      %v6529 = vpack.c.bf16 %v5753, %v5751
      %v6530 = vpack.c.bf16 %v6395, %v6394
      %v6531 = vpack.c.bf16 %v6491, %v6490
      %v6532 = vpack.c.bf16 %v5758, %v5756
      %v6533 = vpack.c.bf16 %v6397, %v6396
      %v6534 = vpack.c.bf16 %v6493, %v6492
      %v6535 = vpack.c.bf16 %v5763, %v5761
      %v6536 = vpack.c.bf16 %v6399, %v6398
      %v6537 = vpack.c.bf16 %v6495, %v6494
      %v6538 = vpack.c.bf16 %v5768, %v5766
      %v6539 = vpack.c.bf16 %v6401, %v6400
      %v6540 = vpack.c.bf16 %v6497, %v6496
      %v6541 = vpack.c.bf16 %v5773, %v5771
      %v6542 = vpack.c.bf16 %v6403, %v6402
      %v6543 = vpack.c.bf16 %v6499, %v6498
      %v6544 = vpack.c.bf16 %v5778, %v5776
      %v6545 = vpack.c.bf16 %v6405, %v6404
      %v6546 = vpack.c.bf16 %v6501, %v6500
      %v6547 = vpack.c.bf16 %v5783, %v5781
      %v6548 = vpack.c.bf16 %v6407, %v6406
      %v6549 = vpack.c.bf16 %v6503, %v6502
      %v6550 = vpack.c.bf16 %v5980, %v5978
      %v6551 = vpack.c.bf16 %v6409, %v6408
      %v6552 = vpack.c.bf16 %v6505, %v6504
      %v6553 = vpack.c.bf16 %v6281, %v6279
      %v6590 = vunpack.c.l.b16 %v5564
      %v6591 = vunpack.c.l.b16 %v5565
      %v6592 = vunpack.c.l.b16 %v5566
      %v6593 = vunpack.c.l.b16 %v5567
      %v6594 = vunpack.c.l.b16 %v5568
      %v6595 = vunpack.c.l.b16 %v5569
      %v6596 = vunpack.c.l.b16 %v5570
      %v6597 = vunpack.c.l.b16 %v5571
      %v6598 = vunpack.c.l.b16 %v5572
      %v6599 = vunpack.c.l.b16 %v5573
      %v6600 = vunpack.c.l.b16 %v5574
      %v6601 = vunpack.c.l.b16 %v5575
      %v6602 = vunpack.c.l.b16 %v5576
      %v6603 = vunpack.c.l.b16 %v5577
      %v6604 = vunpack.c.l.b16 %v5578
      %v6605 = vunpack.c.l.b16 %v5579
      %v6606 = vunpack.c.l.b16 %v5580
      %v6607 = vunpack.c.l.b16 %v5581
      %v6608 = vunpack.c.l.b16 %v5582
      %v6609 = vunpack.c.l.b16 %v5583
      %v6610 = vunpack.c.l.b16 %v5584
      %v6611 = vunpack.c.l.b16 %v5585
      %v6612 = vunpack.c.l.b16 %v5586
      %v6613 = vunpack.c.l.b16 %v5587
      %v6614 = vunpack.c.l.b16 %v5588
      %v6615 = vunpack.c.l.b16 %v5589
      %v6616 = vunpack.c.l.b16 %v5590
      %v6617 = vunpack.c.l.b16 %v5591
      %v6618 = vunpack.c.l.b16 %v5592
      %v6619 = vunpack.c.l.b16 %v5593
      %v6620 = vunpack.c.l.b16 %v5594
      %v6621 = vunpack.c.l.b16 %v5595
      %v6622 = vunpack.c.l.b16 %v5596
      %v6623 = vunpack.c.l.b16 %v5597
      %v6624 = vunpack.c.l.b16 %v5598
      %v6625 = vunpack.c.l.b16 %v5599
      %v6626 = vpack.c.b16 %v6591, %v6590
      %v6627 = vpack.c.b16 %v6593, %v6592
      %v6628 = vpack.c.b16 %v6595, %v6594
      %v6629 = vpack.c.b16 %v6597, %v6596
      %v6630 = vpack.c.b16 %v6599, %v6598
      %v6631 = vpack.c.b16 %v6601, %v6600
      %v6632 = vpack.c.b16 %v6603, %v6602
      %v6633 = vpack.c.b16 %v6605, %v6604
      %v6634 = vpack.c.b16 %v6607, %v6606
      %v6635 = vpack.c.b16 %v6609, %v6608
      %v6636 = vpack.c.b16 %v6611, %v6610
      %v6637 = vpack.c.b16 %v6613, %v6612
      %v6638 = vpack.c.b16 %v6615, %v6614
      %v6639 = vpack.c.b16 %v6617, %v6616
      %v6640 = vpack.c.b16 %v6619, %v6618
      %v6641 = vpack.c.b16 %v6621, %v6620
      %v6642 = vpack.c.b16 %v6623, %v6622
      %v6643 = vpack.c.b16 %v6625, %v6624
      %v6663 = vsel %vm983, %v6508, 0
      %v6666 = vsel %vm983, %v6511, 0
      %v6669 = vsel %vm983, %v6514, 0
      %v6672 = vsel %vm983, %v6517, 0
      %v6675 = vsel %vm983, %v6520, 0
      %v6678 = vsel %vm983, %v6523, 0
      %v6681 = vsel %vm983, %v6526, 0
      %v6684 = vsel %vm983, %v6529, 0
      %v6687 = vsel %vm983, %v6532, 0
      %v6690 = vsel %vm983, %v6535, 0
      %v6693 = vsel %vm983, %v6538, 0
      %v6696 = vsel %vm983, %v6541, 0
      %v6699 = vsel %vm983, %v6544, 0
      %v6702 = vsel %vm983, %v6547, 0
      %v6705 = vsel %vm983, %v6550, 0
      %v6708 = vsel %vm983, %v6553, 0
      %6710 = vmatprep.subr.bf16.mxu0 0
      %6711 = vmatpush1.bf16.msra.mxu0 %v6626
      %6712 = vmatprep.subr.bf16.mxu0 0
      %6713 = vmatpush1.bf16.msra.mxu0 %v6627
      %6714 = vmatprep.subr.bf16.mxu0 0
      %6715 = vmatpush1.bf16.msra.mxu0 %v6628
      %6716 = vmatprep.subr.bf16.mxu0 0
      %6717 = vmatpush1.bf16.msra.mxu0 %v6629
      %6718 = vmatprep.subr.bf16.mxu0 0
      %6719 = vmatpush1.bf16.msra.mxu0 %v6630
      %6720 = vmatprep.subr.bf16.mxu0 0
      %6721 = vmatpush1.bf16.msra.mxu0 %v6631
      %6722 = vmatprep.subr.bf16.mxu0 0
      %6723 = vmatpush1.bf16.msra.mxu0 %v6632
      %6724 = vmatprep.subr.bf16.mxu0 0
      %6725 = vmatpush1.bf16.msra.mxu0 %v6633
      %6726 = vmatprep.subr.bf16.mxu0 0
      %6727 = vmatpush1.bf16.msra.mxu0 %v6634
      %6728 = vmatprep.subr.bf16.mxu0 0
      %6729 = vmatpush1.bf16.msra.mxu0 %v6635
      %6730 = vmatprep.subr.bf16.mxu0 0
      %6731 = vmatpush1.bf16.msra.mxu0 %v6636
      %6732 = vmatprep.subr.bf16.mxu0 0
      %6733 = vmatpush1.bf16.msra.mxu0 %v6637
      %6734 = vmatprep.subr.bf16.mxu0 0
      %6735 = vmatpush1.bf16.msra.mxu0 %v6638
      %6736 = vmatprep.subr.bf16.mxu0 0
      %6737 = vmatpush1.bf16.msra.mxu0 %v6639
      %6738 = vmatprep.subr.bf16.mxu0 0
      %6739 = vmatpush1.bf16.msra.mxu0 %v6640
      %6740 = vmatprep.subr.bf16.mxu0 0
      %6741 = vmatpush1.bf16.msra.mxu0 %v6641
      %6742 = vmatprep.mubr.bf16.mxu0 %v6507
      %6743 = vmatmul.mubr.bf16.gmra.mrb[0].mxu0 %v6506
      %v6744 = vpop.f32.mrb[0].mxu0
      %v6745 = vadd.f32 0.0, %v6744
      %v6746 = vpop.f32.mrb[0].mxu0
      %v6747 = vpop.f32.mrb[0].mxu0
      %v6748 = vadd.f32 0.0, %v6747
      %v6749 = vpop.f32.mrb[0].mxu0
      %6750 = vmatprep.mubr.bf16.mxu0 %v6510
      %6751 = vmatmul.mubr.bf16.gmra.mrb[0].mxu0 %v6509
      %v6752 = vpop.f32.mrb[0].mxu0
      %v6753 = vadd.f32 0.0, %v6752
      %v6754 = vpop.f32.mrb[0].mxu0
      %v6755 = vpop.f32.mrb[0].mxu0
      %v6756 = vadd.f32 0.0, %v6755
      %v6757 = vpop.f32.mrb[0].mxu0
      %6758 = vmatprep.mubr.bf16.mxu0 %v6513
      %6759 = vmatmul.mubr.bf16.gmra.mrb[0].mxu0 %v6512
      %v6760 = vpop.f32.mrb[0].mxu0
      %v6761 = vadd.f32 0.0, %v6760
      %v6762 = vpop.f32.mrb[0].mxu0
      %v6763 = vpop.f32.mrb[0].mxu0
      %v6764 = vadd.f32 0.0, %v6763
      %v6765 = vpop.f32.mrb[0].mxu0
      %6766 = vmatprep.mubr.bf16.mxu0 %v6516
      %6767 = vmatmul.mubr.bf16.gmra.mrb[0].mxu0 %v6515
      %v6768 = vpop.f32.mrb[0].mxu0
      %v6769 = vadd.f32 0.0, %v6768
      %v6770 = vpop.f32.mrb[0].mxu0
      %v6771 = vpop.f32.mrb[0].mxu0
      %v6772 = vadd.f32 0.0, %v6771
      %v6773 = vpop.f32.mrb[0].mxu0
      %6774 = vmatprep.mubr.bf16.mxu0 %v6519
      %6775 = vmatmul.mubr.bf16.gmra.mrb[0].mxu0 %v6518
      %v6776 = vpop.f32.mrb[0].mxu0
      %v6777 = vadd.f32 0.0, %v6776
      %v6778 = vpop.f32.mrb[0].mxu0
      %v6779 = vpop.f32.mrb[0].mxu0
      %v6780 = vadd.f32 0.0, %v6779
      %v6781 = vpop.f32.mrb[0].mxu0
      %6782 = vmatprep.mubr.bf16.mxu0 %v6522
      %6783 = vmatmul.mubr.bf16.gmra.mrb[0].mxu0 %v6521
      %v6784 = vpop.f32.mrb[0].mxu0
      %v6785 = vadd.f32 0.0, %v6784
      %v6786 = vpop.f32.mrb[0].mxu0
      %v6787 = vpop.f32.mrb[0].mxu0
      %v6788 = vadd.f32 0.0, %v6787
      %v6789 = vpop.f32.mrb[0].mxu0
      %6790 = vmatprep.mubr.bf16.mxu0 %v6525
      %6791 = vmatmul.mubr.bf16.gmra.mrb[0].mxu0 %v6524
      %v6792 = vpop.f32.mrb[0].mxu0
      %v6793 = vadd.f32 0.0, %v6792
      %v6794 = vpop.f32.mrb[0].mxu0
      %v6795 = vpop.f32.mrb[0].mxu0
      %v6796 = vadd.f32 0.0, %v6795
      %v6797 = vpop.f32.mrb[0].mxu0
      %6798 = vmatprep.mubr.bf16.mxu0 %v6528
      %6799 = vmatmul.mubr.bf16.gmra.mrb[0].mxu0 %v6527
      %v6800 = vpop.f32.mrb[0].mxu0
      %v6801 = vadd.f32 0.0, %v6800
      %v6802 = vpop.f32.mrb[0].mxu0
      %v6803 = vpop.f32.mrb[0].mxu0
      %v6804 = vadd.f32 0.0, %v6803
      %v6805 = vpop.f32.mrb[0].mxu0
      %6806 = vmatprep.mubr.bf16.mxu0 %v6531
      %6807 = vmatmul.mubr.bf16.gmra.mrb[0].mxu0 %v6530
      %v6808 = vpop.f32.mrb[0].mxu0
      %v6809 = vadd.f32 0.0, %v6808
      %v6810 = vpop.f32.mrb[0].mxu0
      %v6811 = vpop.f32.mrb[0].mxu0
      %v6812 = vadd.f32 0.0, %v6811
      %v6813 = vpop.f32.mrb[0].mxu0
      %6814 = vmatprep.mubr.bf16.mxu0 %v6534
      %6815 = vmatmul.mubr.bf16.gmra.mrb[0].mxu0 %v6533
      %v6816 = vpop.f32.mrb[0].mxu0
      %v6817 = vadd.f32 0.0, %v6816
      %v6818 = vpop.f32.mrb[0].mxu0
      %v6819 = vpop.f32.mrb[0].mxu0
      %v6820 = vadd.f32 0.0, %v6819
      %v6821 = vpop.f32.mrb[0].mxu0
      %6822 = vmatprep.mubr.bf16.mxu0 %v6537
      %6823 = vmatmul.mubr.bf16.gmra.mrb[0].mxu0 %v6536
      %v6824 = vpop.f32.mrb[0].mxu0
      %v6825 = vadd.f32 0.0, %v6824
      %v6826 = vpop.f32.mrb[0].mxu0
      %v6827 = vpop.f32.mrb[0].mxu0
      %v6828 = vadd.f32 0.0, %v6827
      %v6829 = vpop.f32.mrb[0].mxu0
      %6830 = vmatprep.mubr.bf16.mxu0 %v6540
      %6831 = vmatmul.mubr.bf16.gmra.mrb[0].mxu0 %v6539
      %v6832 = vpop.f32.mrb[0].mxu0
      %v6833 = vadd.f32 0.0, %v6832
      %v6834 = vpop.f32.mrb[0].mxu0
      %v6835 = vpop.f32.mrb[0].mxu0
      %v6836 = vadd.f32 0.0, %v6835
      %v6837 = vpop.f32.mrb[0].mxu0
      %6838 = vmatprep.mubr.bf16.mxu0 %v6543
      %6839 = vmatmul.mubr.bf16.gmra.mrb[0].mxu0 %v6542
      %v6840 = vpop.f32.mrb[0].mxu0
      %v6841 = vadd.f32 0.0, %v6840
      %v6842 = vpop.f32.mrb[0].mxu0
      %v6843 = vpop.f32.mrb[0].mxu0
      %v6844 = vadd.f32 0.0, %v6843
      %v6845 = vpop.f32.mrb[0].mxu0
      %6846 = vmatprep.mubr.bf16.mxu0 %v6546
      %6847 = vmatmul.mubr.bf16.gmra.mrb[0].mxu0 %v6545
      %v6848 = vpop.f32.mrb[0].mxu0
      %v6849 = vadd.f32 0.0, %v6848
      %v6850 = vpop.f32.mrb[0].mxu0
      %v6851 = vpop.f32.mrb[0].mxu0
      %v6852 = vadd.f32 0.0, %v6851
      %v6853 = vpop.f32.mrb[0].mxu0
      %6854 = vmatprep.mubr.bf16.mxu0 %v6549
      %6855 = vmatmul.mubr.bf16.gmra.mrb[0].mxu0 %v6548
      %v6856 = vpop.f32.mrb[0].mxu0
      %v6857 = vadd.f32 0.0, %v6856
      %v6858 = vpop.f32.mrb[0].mxu0
      %v6859 = vpop.f32.mrb[0].mxu0
      %v6860 = vadd.f32 0.0, %v6859
      %v6861 = vpop.f32.mrb[0].mxu0
      %6862 = vmatprep.mubr.bf16.mxu0 %v6552
      %6863 = vmatmul.mubr.bf16.gmra.mrb[0].mxu0 %v6551
      %v6864 = vpop.f32.mrb[0].mxu0
      %v6865 = vadd.f32 0.0, %v6864
      %v6866 = vpop.f32.mrb[0].mxu0
      %v6867 = vpop.f32.mrb[0].mxu0
      %v6868 = vadd.f32 0.0, %v6867
      %v6869 = vpop.f32.mrb[0].mxu0
      %6870 = vdwg.mxu0
      %6871 = vmatprep.subr.bf16.mxu0 0
      %6872 = vmatpush1.bf16.msra.mxu0 %v6642
      %6873 = vmatprep.subr.bf16.mxu0 0
      %6874 = vmatpush1.bf16.msra.mxu0 %v6643
      %6875 = vmatprep.subr.bf16.mxu0 0
      %6876 = vmatpush1.bf16.msra.mxu0 0
      %6877 = vmatprep.subr.bf16.mxu0 0
      %6878 = vmatpush1.bf16.msra.mxu0 0
      %6879 = vmatprep.subr.bf16.mxu0 0
      %6880 = vmatpush1.bf16.msra.mxu0 0
      %6881 = vmatprep.subr.bf16.mxu0 0
      %6882 = vmatpush1.bf16.msra.mxu0 0
      %6883 = vmatprep.subr.bf16.mxu0 0
      %6884 = vmatpush1.bf16.msra.mxu0 0
      %6885 = vmatprep.subr.bf16.mxu0 0
      %6886 = vmatpush1.bf16.msra.mxu0 0
      %6887 = vmatprep.subr.bf16.mxu0 0
      %6888 = vmatpush1.bf16.msra.mxu0 0
      %6889 = vmatprep.subr.bf16.mxu0 0
      %6890 = vmatpush1.bf16.msra.mxu0 0
      %6891 = vmatprep.subr.bf16.mxu0 0
      %6892 = vmatpush1.bf16.msra.mxu0 0
      %6893 = vmatprep.subr.bf16.mxu0 0
      %6894 = vmatpush1.bf16.msra.mxu0 0
      %6895 = vmatprep.subr.bf16.mxu0 0
      %6896 = vmatpush1.bf16.msra.mxu0 0
      %6897 = vmatprep.subr.bf16.mxu0 0
      %6898 = vmatpush1.bf16.msra.mxu0 0
      %6899 = vmatprep.subr.bf16.mxu0 0
      %6900 = vmatpush1.bf16.msra.mxu0 0
      %6901 = vmatprep.subr.bf16.mxu0 0
      %6902 = vmatpush1.bf16.msra.mxu0 0
      %6903 = vmatprep.mubr.bf16.mxu0 0
      %6904 = vmatmul.mubr.bf16.gmra.mrb[0].mxu0 %v6663
      %v6905 = vpop.f32.mrb[0].mxu0
      %v6906 = vadd.f32 %v6745, %v6905
      %v6907 = vpop.f32.mrb[0].mxu0
      %v6908 = vpop.f32.mrb[0].mxu0
      %v6909 = vadd.f32 %v6748, %v6908
      %v6910 = vpop.f32.mrb[0].mxu0
      %6911 = vmatprep.mubr.bf16.mxu0 0
      %6912 = vmatmul.mubr.bf16.gmra.mrb[0].mxu0 %v6666
      %v6913 = vpop.f32.mrb[0].mxu0
      %v6914 = vadd.f32 %v6753, %v6913
      %v6915 = vpop.f32.mrb[0].mxu0
      %v6916 = vpop.f32.mrb[0].mxu0
      %v6917 = vadd.f32 %v6756, %v6916
      %v6918 = vpop.f32.mrb[0].mxu0
      %6919 = vmatprep.mubr.bf16.mxu0 0
      %6920 = vmatmul.mubr.bf16.gmra.mrb[0].mxu0 %v6669
      %v6921 = vpop.f32.mrb[0].mxu0
      %v6922 = vadd.f32 %v6761, %v6921
      %v6923 = vpop.f32.mrb[0].mxu0
      %v6924 = vpop.f32.mrb[0].mxu0
      %v6925 = vadd.f32 %v6764, %v6924
      %v6926 = vpop.f32.mrb[0].mxu0
      %6927 = vmatprep.mubr.bf16.mxu0 0
      %6928 = vmatmul.mubr.bf16.gmra.mrb[0].mxu0 %v6672
      %v6929 = vpop.f32.mrb[0].mxu0
      %v6930 = vadd.f32 %v6769, %v6929
      %v6931 = vpop.f32.mrb[0].mxu0
      %v6932 = vpop.f32.mrb[0].mxu0
      %v6933 = vadd.f32 %v6772, %v6932
      %v6934 = vpop.f32.mrb[0].mxu0
      %6935 = vmatprep.mubr.bf16.mxu0 0
      %6936 = vmatmul.mubr.bf16.gmra.mrb[0].mxu0 %v6675
      %v6937 = vpop.f32.mrb[0].mxu0
      %v6938 = vadd.f32 %v6777, %v6937
      %v6939 = vpop.f32.mrb[0].mxu0
      %v6940 = vpop.f32.mrb[0].mxu0
      %v6941 = vadd.f32 %v6780, %v6940
      %v6942 = vpop.f32.mrb[0].mxu0
      %6943 = vmatprep.mubr.bf16.mxu0 0
      %6944 = vmatmul.mubr.bf16.gmra.mrb[0].mxu0 %v6678
      %v6945 = vpop.f32.mrb[0].mxu0
      %v6946 = vadd.f32 %v6785, %v6945
      %v6947 = vpop.f32.mrb[0].mxu0
      %v6948 = vpop.f32.mrb[0].mxu0
      %v6949 = vadd.f32 %v6788, %v6948
      %v6950 = vpop.f32.mrb[0].mxu0
      %6951 = vmatprep.mubr.bf16.mxu0 0
      %6952 = vmatmul.mubr.bf16.gmra.mrb[0].mxu0 %v6681
      %v6953 = vpop.f32.mrb[0].mxu0
      %v6954 = vadd.f32 %v6793, %v6953
      %v6955 = vpop.f32.mrb[0].mxu0
      %v6956 = vpop.f32.mrb[0].mxu0
      %v6957 = vadd.f32 %v6796, %v6956
      %v6958 = vpop.f32.mrb[0].mxu0
      %6959 = vmatprep.mubr.bf16.mxu0 0
      %6960 = vmatmul.mubr.bf16.gmra.mrb[0].mxu0 %v6684
      %v6961 = vpop.f32.mrb[0].mxu0
      %v6962 = vadd.f32 %v6801, %v6961
      %v6963 = vpop.f32.mrb[0].mxu0
      %v6964 = vpop.f32.mrb[0].mxu0
      %v6965 = vadd.f32 %v6804, %v6964
      %v6966 = vpop.f32.mrb[0].mxu0
      %6967 = vmatprep.mubr.bf16.mxu0 0
      %6968 = vmatmul.mubr.bf16.gmra.mrb[0].mxu0 %v6687
      %v6969 = vpop.f32.mrb[0].mxu0
      %v6970 = vadd.f32 %v6809, %v6969
      %v6971 = vpop.f32.mrb[0].mxu0
      %v6972 = vpop.f32.mrb[0].mxu0
      %v6973 = vadd.f32 %v6812, %v6972
      %v6974 = vpop.f32.mrb[0].mxu0
      %6975 = vmatprep.mubr.bf16.mxu0 0
      %6976 = vmatmul.mubr.bf16.gmra.mrb[0].mxu0 %v6690
      %v6977 = vpop.f32.mrb[0].mxu0
      %v6978 = vadd.f32 %v6817, %v6977
      %v6979 = vpop.f32.mrb[0].mxu0
      %v6980 = vpop.f32.mrb[0].mxu0
      %v6981 = vadd.f32 %v6820, %v6980
      %v6982 = vpop.f32.mrb[0].mxu0
      %6983 = vmatprep.mubr.bf16.mxu0 0
      %6984 = vmatmul.mubr.bf16.gmra.mrb[0].mxu0 %v6693
      %v6985 = vpop.f32.mrb[0].mxu0
      %v6986 = vadd.f32 %v6825, %v6985
      %v6987 = vpop.f32.mrb[0].mxu0
      %v6988 = vpop.f32.mrb[0].mxu0
      %v6989 = vadd.f32 %v6828, %v6988
      %v6990 = vpop.f32.mrb[0].mxu0
      %6991 = vmatprep.mubr.bf16.mxu0 0
      %6992 = vmatmul.mubr.bf16.gmra.mrb[0].mxu0 %v6696
      %v6993 = vpop.f32.mrb[0].mxu0
      %v6994 = vadd.f32 %v6833, %v6993
      %v6995 = vpop.f32.mrb[0].mxu0
      %v6996 = vpop.f32.mrb[0].mxu0
      %v6997 = vadd.f32 %v6836, %v6996
      %v6998 = vpop.f32.mrb[0].mxu0
      %6999 = vmatprep.mubr.bf16.mxu0 0
      %7000 = vmatmul.mubr.bf16.gmra.mrb[0].mxu0 %v6699
      %v7001 = vpop.f32.mrb[0].mxu0
      %v7002 = vadd.f32 %v6841, %v7001
      %v7003 = vpop.f32.mrb[0].mxu0
      %v7004 = vpop.f32.mrb[0].mxu0
      %v7005 = vadd.f32 %v6844, %v7004
      %v7006 = vpop.f32.mrb[0].mxu0
      %7007 = vmatprep.mubr.bf16.mxu0 0
      %7008 = vmatmul.mubr.bf16.gmra.mrb[0].mxu0 %v6702
      %v7009 = vpop.f32.mrb[0].mxu0
      %v7010 = vadd.f32 %v6849, %v7009
      %v7011 = vpop.f32.mrb[0].mxu0
      %v7012 = vpop.f32.mrb[0].mxu0
      %v7013 = vadd.f32 %v6852, %v7012
      %v7014 = vpop.f32.mrb[0].mxu0
      %7015 = vmatprep.mubr.bf16.mxu0 0
      %7016 = vmatmul.mubr.bf16.gmra.mrb[0].mxu0 %v6705
      %v7017 = vpop.f32.mrb[0].mxu0
      %v7018 = vadd.f32 %v6857, %v7017
      %v7019 = vpop.f32.mrb[0].mxu0
      %v7020 = vpop.f32.mrb[0].mxu0
      %v7021 = vadd.f32 %v6860, %v7020
      %v7022 = vpop.f32.mrb[0].mxu0
      %7023 = vmatprep.mubr.bf16.mxu0 0
      %7024 = vmatmul.mubr.bf16.gmra.mrb[0].mxu0 %v6708
      %v7025 = vpop.f32.mrb[0].mxu0
      %v7026 = vadd.f32 %v6865, %v7025
      %v7027 = vpop.f32.mrb[0].mxu0
      %v7028 = vpop.f32.mrb[0].mxu0
      %v7029 = vadd.f32 %v6868, %v7028
      %v7030 = vpop.f32.mrb[0].mxu0
      %7031 = vdwg.mxu0
      %v7068 = vunpack.c.l.b16 %v3176
      %v7069 = vunpack.c.l.b16 %v3177
      %v7070 = vunpack.c.l.b16 %v3178
      %v7071 = vunpack.c.l.b16 %v3179
      %v7072 = vunpack.c.l.b16 %v3180
      %v7073 = vunpack.c.l.b16 %v3181
      %v7074 = vunpack.c.l.b16 %v3182
      %v7075 = vunpack.c.l.b16 %v3183
      %v7076 = vunpack.c.l.b16 %v3184
      %v7077 = vunpack.c.l.b16 %v3185
      %v7078 = vunpack.c.l.b16 %v3186
      %v7079 = vunpack.c.l.b16 %v3187
      %v7080 = vunpack.c.l.b16 %v3188
      %v7081 = vunpack.c.l.b16 %v3189
      %v7082 = vunpack.c.l.b16 %v3190
      %v7083 = vunpack.c.l.b16 %v3191
      %v7084 = vunpack.c.l.b16 %v3192
      %v7085 = vunpack.c.l.b16 %v3193
      %v7086 = vunpack.c.l.b16 %v3194
      %v7087 = vunpack.c.l.b16 %v3195
      %v7088 = vunpack.c.l.b16 %v3196
      %v7089 = vunpack.c.l.b16 %v3197
      %v7090 = vunpack.c.l.b16 %v3198
      %v7091 = vunpack.c.l.b16 %v3199
      %v7092 = vunpack.c.l.b16 %v3200
      %v7093 = vunpack.c.l.b16 %v3201
      %v7094 = vunpack.c.l.b16 %v3202
      %v7095 = vunpack.c.l.b16 %v3203
      %v7096 = vunpack.c.l.b16 %v3204
      %v7097 = vunpack.c.l.b16 %v3205
      %v7098 = vunpack.c.l.b16 %v3206
      %v7099 = vunpack.c.l.b16 %v3207
      %v7100 = vunpack.c.l.b16 %v3208
      %v7101 = vunpack.c.l.b16 %v3209
      %v7102 = vunpack.c.l.b16 %v3210
      %v7103 = vunpack.c.l.b16 %v3211
      %v7104 = vpack.c.b16 %v7069, %v7068
      %v7105 = vpack.c.b16 %v7071, %v7070
      %v7106 = vpack.c.b16 %v7073, %v7072
      %v7107 = vpack.c.b16 %v7075, %v7074
      %v7108 = vpack.c.b16 %v7077, %v7076
      %v7109 = vpack.c.b16 %v7079, %v7078
      %v7110 = vpack.c.b16 %v7081, %v7080
      %v7111 = vpack.c.b16 %v7083, %v7082
      %v7112 = vpack.c.b16 %v7085, %v7084
      %v7113 = vpack.c.b16 %v7087, %v7086
      %v7114 = vpack.c.b16 %v7089, %v7088
      %v7115 = vpack.c.b16 %v7091, %v7090
      %v7116 = vpack.c.b16 %v7093, %v7092
      %v7117 = vpack.c.b16 %v7095, %v7094
      %v7118 = vpack.c.b16 %v7097, %v7096
      %v7119 = vpack.c.b16 %v7099, %v7098
      %v7120 = vpack.c.b16 %v7101, %v7100
      %v7121 = vpack.c.b16 %v7103, %v7102
      %v7141 = vsel %vm983, %v5518, 0
      %v7144 = vsel %vm983, %v5521, 0
      %v7147 = vsel %vm983, %v5524, 0
      %v7150 = vsel %vm983, %v5527, 0
      %v7153 = vsel %vm983, %v5530, 0
      %v7156 = vsel %vm983, %v5533, 0
      %v7159 = vsel %vm983, %v5536, 0
      %v7162 = vsel %vm983, %v5539, 0
      %v7165 = vsel %vm983, %v5542, 0
      %v7168 = vsel %vm983, %v5545, 0
      %v7171 = vsel %vm983, %v5548, 0
      %v7174 = vsel %vm983, %v5551, 0
      %v7177 = vsel %vm983, %v5554, 0
      %v7180 = vsel %vm983, %v5557, 0
      %v7183 = vsel %vm983, %v5560, 0
      %v7186 = vsel %vm983, %v5563, 0
      %7188 = vmatprep.subr.bf16.mxu0 0
      %7189 = vmatpush1.bf16.msra.mxu0 %v7104
      %7190 = vmatprep.subr.bf16.mxu0 0
      %7191 = vmatpush1.bf16.msra.mxu0 %v7105
      %7192 = vmatprep.subr.bf16.mxu0 0
      %7193 = vmatpush1.bf16.msra.mxu0 %v7106
      %7194 = vmatprep.subr.bf16.mxu0 0
      %7195 = vmatpush1.bf16.msra.mxu0 %v7107
      %7196 = vmatprep.subr.bf16.mxu0 0
      %7197 = vmatpush1.bf16.msra.mxu0 %v7108
      %7198 = vmatprep.subr.bf16.mxu0 0
      %7199 = vmatpush1.bf16.msra.mxu0 %v7109
      %7200 = vmatprep.subr.bf16.mxu0 0
      %7201 = vmatpush1.bf16.msra.mxu0 %v7110
      %7202 = vmatprep.subr.bf16.mxu0 0
      %7203 = vmatpush1.bf16.msra.mxu0 %v7111
      %7204 = vmatprep.subr.bf16.mxu0 0
      %7205 = vmatpush1.bf16.msra.mxu0 %v7112
      %7206 = vmatprep.subr.bf16.mxu0 0
      %7207 = vmatpush1.bf16.msra.mxu0 %v7113
      %7208 = vmatprep.subr.bf16.mxu0 0
      %7209 = vmatpush1.bf16.msra.mxu0 %v7114
      %7210 = vmatprep.subr.bf16.mxu0 0
      %7211 = vmatpush1.bf16.msra.mxu0 %v7115
      %7212 = vmatprep.subr.bf16.mxu0 0
      %7213 = vmatpush1.bf16.msra.mxu0 %v7116
      %7214 = vmatprep.subr.bf16.mxu0 0
      %7215 = vmatpush1.bf16.msra.mxu0 %v7117
      %7216 = vmatprep.subr.bf16.mxu0 0
      %7217 = vmatpush1.bf16.msra.mxu0 %v7118
      %7218 = vmatprep.subr.bf16.mxu0 0
      %7219 = vmatpush1.bf16.msra.mxu0 %v7119
      %7220 = vmatprep.mubr.bf16.mxu0 %v5517
      %7221 = vmatmul.mubr.bf16.gmra.mrb[0].mxu0 %v5516
      %v7222 = vpop.f32.mrb[0].mxu0
      %v7223 = vadd.f32 %v6906, %v7222
      %v7224 = vpop.f32.mrb[0].mxu0
      %v7225 = vpop.f32.mrb[0].mxu0
      %v7226 = vadd.f32 %v6909, %v7225
      %v7227 = vpop.f32.mrb[0].mxu0
      %7228 = vmatprep.mubr.bf16.mxu0 %v5520
      %7229 = vmatmul.mubr.bf16.gmra.mrb[0].mxu0 %v5519
      %v7230 = vpop.f32.mrb[0].mxu0
      %v7231 = vadd.f32 %v6914, %v7230
      %v7232 = vpop.f32.mrb[0].mxu0
      %v7233 = vpop.f32.mrb[0].mxu0
      %v7234 = vadd.f32 %v6917, %v7233
      %v7235 = vpop.f32.mrb[0].mxu0
      %7236 = vmatprep.mubr.bf16.mxu0 %v5523
      %7237 = vmatmul.mubr.bf16.gmra.mrb[0].mxu0 %v5522
      %v7238 = vpop.f32.mrb[0].mxu0
      %v7239 = vadd.f32 %v6922, %v7238
      %v7240 = vpop.f32.mrb[0].mxu0
      %v7241 = vpop.f32.mrb[0].mxu0
      %v7242 = vadd.f32 %v6925, %v7241
      %v7243 = vpop.f32.mrb[0].mxu0
      %7244 = vmatprep.mubr.bf16.mxu0 %v5526
      %7245 = vmatmul.mubr.bf16.gmra.mrb[0].mxu0 %v5525
      %v7246 = vpop.f32.mrb[0].mxu0
      %v7247 = vadd.f32 %v6930, %v7246
      %v7248 = vpop.f32.mrb[0].mxu0
      %v7249 = vpop.f32.mrb[0].mxu0
      %v7250 = vadd.f32 %v6933, %v7249
      %v7251 = vpop.f32.mrb[0].mxu0
      %7252 = vmatprep.mubr.bf16.mxu0 %v5529
      %7253 = vmatmul.mubr.bf16.gmra.mrb[0].mxu0 %v5528
      %v7254 = vpop.f32.mrb[0].mxu0
      %v7255 = vadd.f32 %v6938, %v7254
      %v7256 = vpop.f32.mrb[0].mxu0
      %v7257 = vpop.f32.mrb[0].mxu0
      %v7258 = vadd.f32 %v6941, %v7257
      %v7259 = vpop.f32.mrb[0].mxu0
      %7260 = vmatprep.mubr.bf16.mxu0 %v5532
      %7261 = vmatmul.mubr.bf16.gmra.mrb[0].mxu0 %v5531
      %v7262 = vpop.f32.mrb[0].mxu0
      %v7263 = vadd.f32 %v6946, %v7262
      %v7264 = vpop.f32.mrb[0].mxu0
      %v7265 = vpop.f32.mrb[0].mxu0
      %v7266 = vadd.f32 %v6949, %v7265
      %v7267 = vpop.f32.mrb[0].mxu0
      %7268 = vmatprep.mubr.bf16.mxu0 %v5535
      %7269 = vmatmul.mubr.bf16.gmra.mrb[0].mxu0 %v5534
      %v7270 = vpop.f32.mrb[0].mxu0
      %v7271 = vadd.f32 %v6954, %v7270
      %v7272 = vpop.f32.mrb[0].mxu0
      %v7273 = vpop.f32.mrb[0].mxu0
      %v7274 = vadd.f32 %v6957, %v7273
      %v7275 = vpop.f32.mrb[0].mxu0
      %7276 = vmatprep.mubr.bf16.mxu0 %v5538
      %7277 = vmatmul.mubr.bf16.gmra.mrb[0].mxu0 %v5537
      %v7278 = vpop.f32.mrb[0].mxu0
      %v7279 = vadd.f32 %v6962, %v7278
      %v7280 = vpop.f32.mrb[0].mxu0
      %v7281 = vpop.f32.mrb[0].mxu0
      %v7282 = vadd.f32 %v6965, %v7281
      %v7283 = vpop.f32.mrb[0].mxu0
      %7284 = vmatprep.mubr.bf16.mxu0 %v5541
      %7285 = vmatmul.mubr.bf16.gmra.mrb[0].mxu0 %v5540
      %v7286 = vpop.f32.mrb[0].mxu0
      %v7287 = vadd.f32 %v6970, %v7286
      %v7288 = vpop.f32.mrb[0].mxu0
      %v7289 = vpop.f32.mrb[0].mxu0
      %v7290 = vadd.f32 %v6973, %v7289
      %v7291 = vpop.f32.mrb[0].mxu0
      %7292 = vmatprep.mubr.bf16.mxu0 %v5544
      %7293 = vmatmul.mubr.bf16.gmra.mrb[0].mxu0 %v5543
      %v7294 = vpop.f32.mrb[0].mxu0
      %v7295 = vadd.f32 %v6978, %v7294
      %v7296 = vpop.f32.mrb[0].mxu0
      %v7297 = vpop.f32.mrb[0].mxu0
      %v7298 = vadd.f32 %v6981, %v7297
      %v7299 = vpop.f32.mrb[0].mxu0
      %7300 = vmatprep.mubr.bf16.mxu0 %v5547
      %7301 = vmatmul.mubr.bf16.gmra.mrb[0].mxu0 %v5546
      %v7302 = vpop.f32.mrb[0].mxu0
      %v7303 = vadd.f32 %v6986, %v7302
      %v7304 = vpop.f32.mrb[0].mxu0
      %v7305 = vpop.f32.mrb[0].mxu0
      %v7306 = vadd.f32 %v6989, %v7305
      %v7307 = vpop.f32.mrb[0].mxu0
      %7308 = vmatprep.mubr.bf16.mxu0 %v5550
      %7309 = vmatmul.mubr.bf16.gmra.mrb[0].mxu0 %v5549
      %v7310 = vpop.f32.mrb[0].mxu0
      %v7311 = vadd.f32 %v6994, %v7310
      %v7312 = vpop.f32.mrb[0].mxu0
      %v7313 = vpop.f32.mrb[0].mxu0
      %v7314 = vadd.f32 %v6997, %v7313
      %v7315 = vpop.f32.mrb[0].mxu0
      %7316 = vmatprep.mubr.bf16.mxu0 %v5553
      %7317 = vmatmul.mubr.bf16.gmra.mrb[0].mxu0 %v5552
      %v7318 = vpop.f32.mrb[0].mxu0
      %v7319 = vadd.f32 %v7002, %v7318
      %v7320 = vpop.f32.mrb[0].mxu0
      %v7321 = vpop.f32.mrb[0].mxu0
      %v7322 = vadd.f32 %v7005, %v7321
      %v7323 = vpop.f32.mrb[0].mxu0
      %7324 = vmatprep.mubr.bf16.mxu0 %v5556
      %7325 = vmatmul.mubr.bf16.gmra.mrb[0].mxu0 %v5555
      %v7326 = vpop.f32.mrb[0].mxu0
      %v7327 = vadd.f32 %v7010, %v7326
      %v7328 = vpop.f32.mrb[0].mxu0
      %v7329 = vpop.f32.mrb[0].mxu0
      %v7330 = vadd.f32 %v7013, %v7329
      %v7331 = vpop.f32.mrb[0].mxu0
      %7332 = vmatprep.mubr.bf16.mxu0 %v5559
      %7333 = vmatmul.mubr.bf16.gmra.mrb[0].mxu0 %v5558
      %v7334 = vpop.f32.mrb[0].mxu0
      %v7335 = vadd.f32 %v7018, %v7334
      %v7336 = vpop.f32.mrb[0].mxu0
      %v7337 = vpop.f32.mrb[0].mxu0
      %v7338 = vadd.f32 %v7021, %v7337
      %v7339 = vpop.f32.mrb[0].mxu0
      %7340 = vmatprep.mubr.bf16.mxu0 %v5562
      %7341 = vmatmul.mubr.bf16.gmra.mrb[0].mxu0 %v5561
      %v7342 = vpop.f32.mrb[0].mxu0
      %v7343 = vadd.f32 %v7026, %v7342
      %v7344 = vpop.f32.mrb[0].mxu0
      %v7345 = vpop.f32.mrb[0].mxu0
      %v7346 = vadd.f32 %v7029, %v7345
      %v7347 = vpop.f32.mrb[0].mxu0
      %7348 = vdwg.mxu0
      %7349 = vmatprep.subr.bf16.mxu0 0
      %7350 = vmatpush1.bf16.msra.mxu0 %v7120
      %7351 = vmatprep.subr.bf16.mxu0 0
      %7352 = vmatpush1.bf16.msra.mxu0 %v7121
      %7353 = vmatprep.subr.bf16.mxu0 0
      %7354 = vmatpush1.bf16.msra.mxu0 0
      %7355 = vmatprep.subr.bf16.mxu0 0
      %7356 = vmatpush1.bf16.msra.mxu0 0
      %7357 = vmatprep.subr.bf16.mxu0 0
      %7358 = vmatpush1.bf16.msra.mxu0 0
      %7359 = vmatprep.subr.bf16.mxu0 0
      %7360 = vmatpush1.bf16.msra.mxu0 0
      %7361 = vmatprep.subr.bf16.mxu0 0
      %7362 = vmatpush1.bf16.msra.mxu0 0
      %7363 = vmatprep.subr.bf16.mxu0 0
      %7364 = vmatpush1.bf16.msra.mxu0 0
      %7365 = vmatprep.subr.bf16.mxu0 0
      %7366 = vmatpush1.bf16.msra.mxu0 0
      %7367 = vmatprep.subr.bf16.mxu0 0
      %7368 = vmatpush1.bf16.msra.mxu0 0
      %7369 = vmatprep.subr.bf16.mxu0 0
      %7370 = vmatpush1.bf16.msra.mxu0 0
      %7371 = vmatprep.subr.bf16.mxu0 0
      %7372 = vmatpush1.bf16.msra.mxu0 0
      %7373 = vmatprep.subr.bf16.mxu0 0
      %7374 = vmatpush1.bf16.msra.mxu0 0
      %7375 = vmatprep.subr.bf16.mxu0 0
      %7376 = vmatpush1.bf16.msra.mxu0 0
      %7377 = vmatprep.subr.bf16.mxu0 0
      %7378 = vmatpush1.bf16.msra.mxu0 0
      %7379 = vmatprep.subr.bf16.mxu0 0
      %7380 = vmatpush1.bf16.msra.mxu0 0
      %7381 = vmatprep.mubr.bf16.mxu0 0
      %7382 = vmatmul.mubr.bf16.gmra.mrb[0].mxu0 %v7141
      %v7383 = vpop.f32.mrb[0].mxu0
      %v7384 = vadd.f32 %v7223, %v7383
      %v7385 = vpop.f32.mrb[0].mxu0
      %v7386 = vpop.f32.mrb[0].mxu0
      %v7387 = vadd.f32 %v7226, %v7386
      %v7388 = vpop.f32.mrb[0].mxu0
      %7389 = vmatprep.mubr.bf16.mxu0 0
      %7390 = vmatmul.mubr.bf16.gmra.mrb[0].mxu0 %v7144
      %v7391 = vpop.f32.mrb[0].mxu0
      %v7392 = vadd.f32 %v7231, %v7391
      %v7393 = vpop.f32.mrb[0].mxu0
      %v7394 = vpop.f32.mrb[0].mxu0
      %v7395 = vadd.f32 %v7234, %v7394
      %v7396 = vpop.f32.mrb[0].mxu0
      %7397 = vmatprep.mubr.bf16.mxu0 0
      %7398 = vmatmul.mubr.bf16.gmra.mrb[0].mxu0 %v7147
      %v7399 = vpop.f32.mrb[0].mxu0
      %v7400 = vadd.f32 %v7239, %v7399
      %v7401 = vpop.f32.mrb[0].mxu0
      %v7402 = vpop.f32.mrb[0].mxu0
      %v7403 = vadd.f32 %v7242, %v7402
      %v7404 = vpop.f32.mrb[0].mxu0
      %7405 = vmatprep.mubr.bf16.mxu0 0
      %7406 = vmatmul.mubr.bf16.gmra.mrb[0].mxu0 %v7150
      %v7407 = vpop.f32.mrb[0].mxu0
      %v7408 = vadd.f32 %v7247, %v7407
      %v7409 = vpop.f32.mrb[0].mxu0
      %v7410 = vpop.f32.mrb[0].mxu0
      %v7411 = vadd.f32 %v7250, %v7410
      %v7412 = vpop.f32.mrb[0].mxu0
      %7413 = vmatprep.mubr.bf16.mxu0 0
      %7414 = vmatmul.mubr.bf16.gmra.mrb[0].mxu0 %v7153
      %v7415 = vpop.f32.mrb[0].mxu0
      %v7416 = vadd.f32 %v7255, %v7415
      %v7417 = vpop.f32.mrb[0].mxu0
      %v7418 = vpop.f32.mrb[0].mxu0
      %v7419 = vadd.f32 %v7258, %v7418
      %v7420 = vpop.f32.mrb[0].mxu0
      %7421 = vmatprep.mubr.bf16.mxu0 0
      %7422 = vmatmul.mubr.bf16.gmra.mrb[0].mxu0 %v7156
      %v7423 = vpop.f32.mrb[0].mxu0
      %v7424 = vadd.f32 %v7263, %v7423
      %v7425 = vpop.f32.mrb[0].mxu0
      %v7426 = vpop.f32.mrb[0].mxu0
      %v7427 = vadd.f32 %v7266, %v7426
      %v7428 = vpop.f32.mrb[0].mxu0
      %7429 = vmatprep.mubr.bf16.mxu0 0
      %7430 = vmatmul.mubr.bf16.gmra.mrb[0].mxu0 %v7159
      %v7431 = vpop.f32.mrb[0].mxu0
      %v7432 = vadd.f32 %v7271, %v7431
      %v7433 = vpop.f32.mrb[0].mxu0
      %v7434 = vpop.f32.mrb[0].mxu0
      %v7435 = vadd.f32 %v7274, %v7434
      %v7436 = vpop.f32.mrb[0].mxu0
      %7437 = vmatprep.mubr.bf16.mxu0 0
      %7438 = vmatmul.mubr.bf16.gmra.mrb[0].mxu0 %v7162
      %v7439 = vpop.f32.mrb[0].mxu0
      %v7440 = vadd.f32 %v7279, %v7439
      %v7441 = vpop.f32.mrb[0].mxu0
      %v7442 = vpop.f32.mrb[0].mxu0
      %v7443 = vadd.f32 %v7282, %v7442
      %v7444 = vpop.f32.mrb[0].mxu0
      %7445 = vmatprep.mubr.bf16.mxu0 0
      %7446 = vmatmul.mubr.bf16.gmra.mrb[0].mxu0 %v7165
      %v7447 = vpop.f32.mrb[0].mxu0
      %v7448 = vadd.f32 %v7287, %v7447
      %v7449 = vpop.f32.mrb[0].mxu0
      %v7450 = vpop.f32.mrb[0].mxu0
      %v7451 = vadd.f32 %v7290, %v7450
      %v7452 = vpop.f32.mrb[0].mxu0
      %7453 = vmatprep.mubr.bf16.mxu0 0
      %7454 = vmatmul.mubr.bf16.gmra.mrb[0].mxu0 %v7168
      %v7455 = vpop.f32.mrb[0].mxu0
      %v7456 = vadd.f32 %v7295, %v7455
      %v7457 = vpop.f32.mrb[0].mxu0
      %v7458 = vpop.f32.mrb[0].mxu0
      %v7459 = vadd.f32 %v7298, %v7458
      %v7460 = vpop.f32.mrb[0].mxu0
      %7461 = vmatprep.mubr.bf16.mxu0 0
      %7462 = vmatmul.mubr.bf16.gmra.mrb[0].mxu0 %v7171
      %v7463 = vpop.f32.mrb[0].mxu0
      %v7464 = vadd.f32 %v7303, %v7463
      %v7465 = vpop.f32.mrb[0].mxu0
      %v7466 = vpop.f32.mrb[0].mxu0
      %v7467 = vadd.f32 %v7306, %v7466
      %v7468 = vpop.f32.mrb[0].mxu0
      %7469 = vmatprep.mubr.bf16.mxu0 0
      %7470 = vmatmul.mubr.bf16.gmra.mrb[0].mxu0 %v7174
      %v7471 = vpop.f32.mrb[0].mxu0
      %v7472 = vadd.f32 %v7311, %v7471
      %v7473 = vpop.f32.mrb[0].mxu0
      %v7474 = vpop.f32.mrb[0].mxu0
      %v7475 = vadd.f32 %v7314, %v7474
      %v7476 = vpop.f32.mrb[0].mxu0
      %7477 = vmatprep.mubr.bf16.mxu0 0
      %7478 = vmatmul.mubr.bf16.gmra.mrb[0].mxu0 %v7177
      %v7479 = vpop.f32.mrb[0].mxu0
      %v7480 = vadd.f32 %v7319, %v7479
      %v7481 = vpop.f32.mrb[0].mxu0
      %v7482 = vpop.f32.mrb[0].mxu0
      %v7483 = vadd.f32 %v7322, %v7482
      %v7484 = vpop.f32.mrb[0].mxu0
      %7485 = vmatprep.mubr.bf16.mxu0 0
      %7486 = vmatmul.mubr.bf16.gmra.mrb[0].mxu0 %v7180
      %v7487 = vpop.f32.mrb[0].mxu0
      %v7488 = vadd.f32 %v7327, %v7487
      %v7489 = vpop.f32.mrb[0].mxu0
      %v7490 = vpop.f32.mrb[0].mxu0
      %v7491 = vadd.f32 %v7330, %v7490
      %v7492 = vpop.f32.mrb[0].mxu0
      %7493 = vmatprep.mubr.bf16.mxu0 0
      %7494 = vmatmul.mubr.bf16.gmra.mrb[0].mxu0 %v7183
      %v7495 = vpop.f32.mrb[0].mxu0
      %v7496 = vadd.f32 %v7335, %v7495
      %v7497 = vpop.f32.mrb[0].mxu0
      %v7498 = vpop.f32.mrb[0].mxu0
      %v7499 = vadd.f32 %v7338, %v7498
      %v7500 = vpop.f32.mrb[0].mxu0
      %7501 = vmatprep.mubr.bf16.mxu0 0
      %7502 = vmatmul.mubr.bf16.gmra.mrb[0].mxu0 %v7186
      %v7503 = vpop.f32.mrb[0].mxu0
      %v7504 = vadd.f32 %v7343, %v7503
      %v7505 = vpop.f32.mrb[0].mxu0
      %v7506 = vpop.f32.mrb[0].mxu0
      %v7507 = vadd.f32 %v7346, %v7506
      %v7508 = vpop.f32.mrb[0].mxu0
      %7509 = vdwg.mxu0
      %v7510 = vld [vmem:[%s18] sm:$0x3]
      %v7511 = vlaneseq
      %v7512 = vshrl.u32 %v7511, 7
      %v7513 = vsub.s32 0, %v7512
      %v7514 = vrot.slane %v7510, %v7513
      %v7515 = vmul.f32 %v7384, %v7514
      %v7516 = vmul.f32 %v7387, %v7514
      %v7517 = vmul.f32 %v7392, %v7514
      %v7518 = vmul.f32 %v7395, %v7514
      %v7519 = vmul.f32 %v7400, %v7514
      %v7520 = vmul.f32 %v7403, %v7514
      %v7521 = vmul.f32 %v7408, %v7514
      %v7522 = vmul.f32 %v7411, %v7514
      %v7523 = vmul.f32 %v7416, %v7514
      %v7524 = vmul.f32 %v7419, %v7514
      %v7525 = vmul.f32 %v7424, %v7514
      %v7526 = vmul.f32 %v7427, %v7514
      %v7527 = vmul.f32 %v7432, %v7514
      %v7528 = vmul.f32 %v7435, %v7514
      %v7529 = vmul.f32 %v7440, %v7514
      %v7530 = vmul.f32 %v7443, %v7514
      %v7531 = vmul.f32 %v7448, %v7514
      %v7532 = vmul.f32 %v7451, %v7514
      %v7533 = vmul.f32 %v7456, %v7514
      %v7534 = vmul.f32 %v7459, %v7514
      %v7535 = vmul.f32 %v7464, %v7514
      %v7536 = vmul.f32 %v7467, %v7514
      %v7537 = vmul.f32 %v7472, %v7514
      %v7538 = vmul.f32 %v7475, %v7514
      %v7539 = vmul.f32 %v7480, %v7514
      %v7540 = vmul.f32 %v7483, %v7514
      %v7541 = vmul.f32 %v7488, %v7514
      %v7542 = vmul.f32 %v7491, %v7514
      %v7543 = vmul.f32 %v7496, %v7514
      %v7544 = vmul.f32 %v7499, %v7514
      %v7545 = vmul.f32 %v7504, %v7514
      %v7546 = vmul.f32 %v7507, %v7514
      %v7547 = vlaneseq
      %v7548 = vshrl.u32 %v7547, 7
      %v7549 = vsub.s32 1, %v7548
      %v7550 = vrot.slane %v7510, %v7549
      %v7551 = vadd.f32 %v7515, %v7550
      %v7552 = vadd.f32 %v7516, %v7550
      %v7553 = vadd.f32 %v7517, %v7550
      %v7554 = vadd.f32 %v7518, %v7550
      %v7555 = vadd.f32 %v7519, %v7550
      %v7556 = vadd.f32 %v7520, %v7550
      %v7557 = vadd.f32 %v7521, %v7550
      %v7558 = vadd.f32 %v7522, %v7550
      %v7559 = vadd.f32 %v7523, %v7550
      %v7560 = vadd.f32 %v7524, %v7550
      %v7561 = vadd.f32 %v7525, %v7550
      %v7562 = vadd.f32 %v7526, %v7550
      %v7563 = vadd.f32 %v7527, %v7550
      %v7564 = vadd.f32 %v7528, %v7550
      %v7565 = vadd.f32 %v7529, %v7550
      %v7566 = vadd.f32 %v7530, %v7550
      %v7567 = vadd.f32 %v7531, %v7550
      %v7568 = vadd.f32 %v7532, %v7550
      %v7569 = vadd.f32 %v7533, %v7550
      %v7570 = vadd.f32 %v7534, %v7550
      %v7571 = vadd.f32 %v7535, %v7550
      %v7572 = vadd.f32 %v7536, %v7550
      %v7573 = vadd.f32 %v7537, %v7550
      %v7574 = vadd.f32 %v7538, %v7550
      %v7575 = vadd.f32 %v7539, %v7550
      %v7576 = vadd.f32 %v7540, %v7550
      %v7577 = vadd.f32 %v7541, %v7550
      %v7578 = vadd.f32 %v7542, %v7550
      %v7579 = vadd.f32 %v7543, %v7550
      %v7580 = vadd.f32 %v7544, %v7550
      %v7581 = vadd.f32 %v7545, %v7550
      %v7582 = vadd.f32 %v7546, %v7550
      %v7583 = vmax.f32 %v7551, 0.0
      %v7584 = vmax.f32 %v7552, 0.0
      %v7585 = vmax.f32 %v7553, 0.0
      %v7586 = vmax.f32 %v7554, 0.0
      %v7587 = vmax.f32 %v7555, 0.0
      %v7588 = vmax.f32 %v7556, 0.0
      %v7589 = vmax.f32 %v7557, 0.0
      %v7590 = vmax.f32 %v7558, 0.0
      %v7591 = vmax.f32 %v7559, 0.0
      %v7592 = vmax.f32 %v7560, 0.0
      %v7593 = vmax.f32 %v7561, 0.0
      %v7594 = vmax.f32 %v7562, 0.0
      %v7595 = vmax.f32 %v7563, 0.0
      %v7596 = vmax.f32 %v7564, 0.0
      %v7597 = vmax.f32 %v7565, 0.0
      %v7598 = vmax.f32 %v7566, 0.0
      %v7599 = vmax.f32 %v7567, 0.0
      %v7600 = vmax.f32 %v7568, 0.0
      %v7601 = vmax.f32 %v7569, 0.0
      %v7602 = vmax.f32 %v7570, 0.0
      %v7603 = vmax.f32 %v7571, 0.0
      %v7604 = vmax.f32 %v7572, 0.0
      %v7605 = vmax.f32 %v7573, 0.0
      %v7606 = vmax.f32 %v7574, 0.0
      %v7607 = vmax.f32 %v7575, 0.0
      %v7608 = vmax.f32 %v7576, 0.0
      %v7609 = vmax.f32 %v7577, 0.0
      %v7610 = vmax.f32 %v7578, 0.0
      %v7611 = vmax.f32 %v7579, 0.0
      %v7612 = vmax.f32 %v7580, 0.0
      %v7613 = vmax.f32 %v7581, 0.0
      %v7614 = vmax.f32 %v7582, 0.0
      %v7615 = vld [vmem:[%s3] sm:$0xff]
      %v7616 = vld [vmem:[%s3 + $0x8] sm:$0xff]
      %v7617 = vld [vmem:[%s3 + $0x10] sm:$0xff]
      %v7618 = vld [vmem:[%s3 + $0x18] sm:$0xff]
      %v7619 = vld [vmem:[%s3 + $0x20] sm:$0xff]
      %v7620 = vld [vmem:[%s3 + $0x28] sm:$0xff]
      %v7621 = vld [vmem:[%s3 + $0x30] sm:$0xff]
      %v7622 = vld [vmem:[%s3 + $0x38] sm:$0xff]
      %v7623 = vld [vmem:[%s3 + $0x40] sm:$0xff]
      %v7624 = vld [vmem:[%s3 + $0x48] sm:$0xff]
      %v7625 = vld [vmem:[%s3 + $0x50] sm:$0xff]
      %v7626 = vld [vmem:[%s3 + $0x58] sm:$0xff]
      %v7627 = vld [vmem:[%s3 + $0x60] sm:$0xff]
      %v7628 = vld [vmem:[%s3 + $0x68] sm:$0xff]
      %v7629 = vld [vmem:[%s3 + $0x70] sm:$0xff]
      %v7630 = vld [vmem:[%s3 + $0x78] sm:$0xff]
      %v7631 = vld [vmem:[%s3 + $0x80] sm:$0xff]
      %v7632 = vld [vmem:[%s3 + $0x88] sm:$0xff]
      %v7633 = vld [vmem:[%s3 + $0x90] sm:$0xff]
      %v7634 = vld [vmem:[%s3 + $0x98] sm:$0xff]
      %v7635 = vld [vmem:[%s3 + $0xa0] sm:$0xff]
      %v7636 = vld [vmem:[%s3 + $0xa8] sm:$0xff]
      %v7637 = vld [vmem:[%s3 + $0xb0] sm:$0xff]
      %v7638 = vld [vmem:[%s3 + $0xb8] sm:$0xff]
      %v7639 = vld [vmem:[%s3 + $0xc0] sm:$0xff]
      %v7640 = vld [vmem:[%s3 + $0xc8] sm:$0xff]
      %v7641 = vld [vmem:[%s3 + $0xd0] sm:$0xff]
      %v7642 = vld [vmem:[%s3 + $0xd8] sm:$0xff]
      %v7643 = vld [vmem:[%s3 + $0xe0] sm:$0xff]
      %v7644 = vld [vmem:[%s3 + $0xe8] sm:$0xff]
      %v7645 = vld [vmem:[%s3 + $0xf0] sm:$0xff]
      %v7646 = vld [vmem:[%s3 + $0xf8] sm:$0xff]
      %v7647 = vld [vmem:[%s3 + $0x100] sm:$0xff]
      %v7648 = vld [vmem:[%s3 + $0x108] sm:$0xff]
      %v7649 = vld [vmem:[%s3 + $0x110] sm:$0xff]
      %v7650 = vld [vmem:[%s3 + $0x118] sm:$0xff]
      %v7651 = vld [vmem:[%s3 + $0x120] sm:$0xff]
      %v7652 = vld [vmem:[%s3 + $0x128] sm:$0xff]
      %v7653 = vld [vmem:[%s3 + $0x130] sm:$0xff]
      %v7654 = vld [vmem:[%s3 + $0x138] sm:$0xff]
      %v7655 = vld [vmem:[%s3 + $0x140] sm:$0xff]
      %v7656 = vld [vmem:[%s3 + $0x148] sm:$0xff]
      %v7657 = vld [vmem:[%s3 + $0x150] sm:$0xff]
      %v7658 = vld [vmem:[%s3 + $0x158] sm:$0xff]
      %v7659 = vld [vmem:[%s3 + $0x160] sm:$0xff]
      %v7660 = vld [vmem:[%s3 + $0x168] sm:$0xff]
      %v7661 = vld [vmem:[%s3 + $0x170] sm:$0xff]
      %v7662 = vld [vmem:[%s3 + $0x178] sm:$0xff]
      %v7663 = vld [vmem:[%s3 + $0x180] sm:$0xff]
      %v7664 = vld [vmem:[%s3 + $0x188] sm:$0xff]
      %v7665 = vld [vmem:[%s3 + $0x190] sm:$0xff]
      %v7666 = vld [vmem:[%s3 + $0x198] sm:$0xff]
      %v7667 = vld [vmem:[%s3 + $0x1a0] sm:$0xff]
      %v7668 = vld [vmem:[%s3 + $0x1a8] sm:$0xff]
      %v7669 = vld [vmem:[%s3 + $0x1b0] sm:$0xff]
      %v7670 = vld [vmem:[%s3 + $0x1b8] sm:$0xff]
      %v7671 = vld [vmem:[%s3 + $0x1c0] sm:$0xff]
      %v7672 = vld [vmem:[%s3 + $0x1c8] sm:$0xff]
      %v7673 = vld [vmem:[%s3 + $0x1d0] sm:$0xff]
      %v7674 = vld [vmem:[%s3 + $0x1d8] sm:$0xff]
      %v7675 = vld [vmem:[%s3 + $0x1e0] sm:$0xff]
      %v7676 = vld [vmem:[%s3 + $0x1e8] sm:$0xff]
      %v7677 = vld [vmem:[%s3 + $0x1f0] sm:$0xff]
      %v7678 = vld [vmem:[%s3 + $0x1f8] sm:$0xff]
      %v7679 = vld [vmem:[%s3 + $0x200] sm:$0xff]
      %v7680 = vld [vmem:[%s3 + $0x208] sm:$0xff]
      %v7681 = vld [vmem:[%s3 + $0x210] sm:$0xff]
      %v7682 = vld [vmem:[%s3 + $0x218] sm:$0xff]
      %v7683 = vld [vmem:[%s3 + $0x220] sm:$0xff]
      %v7684 = vld [vmem:[%s3 + $0x228] sm:$0xff]
      %v7685 = vld [vmem:[%s3 + $0x230] sm:$0xff]
      %v7686 = vld [vmem:[%s3 + $0x238] sm:$0xff]
      %v7687 = vld [vmem:[%s3 + $0x240] sm:$0xff]
      %v7688 = vld [vmem:[%s3 + $0x248] sm:$0xff]
      %v7689 = vld [vmem:[%s3 + $0x250] sm:$0xff]
      %v7690 = vld [vmem:[%s3 + $0x258] sm:$0xff]
      %v7691 = vld [vmem:[%s3 + $0x260] sm:$0xff]
      %v7692 = vld [vmem:[%s3 + $0x268] sm:$0xff]
      %v7693 = vld [vmem:[%s3 + $0x270] sm:$0xff]
      %v7694 = vld [vmem:[%s3 + $0x278] sm:$0xff]
      %v7695 = vld [vmem:[%s3 + $0x280] sm:$0xf]
      %v7696 = vld [vmem:[%s3 + $0x288] sm:$0xf]
      %7697 = vmatprep.subr.mxu0 0.0
      %7698 = vmatpush1.msra.mxu0 %v7583
      %7699 = vmatprep.subr.mxu0 0.0
      %7700 = vmatpush1.msra.mxu0 %v7584
      %7701 = vmatprep.subr.mxu0 0.0
      %7702 = vmatpush1.msra.mxu0 %v7585
      %7703 = vmatprep.subr.mxu0 0.0
      %7704 = vmatpush1.msra.mxu0 %v7586
      %7705 = vmatprep.subr.mxu0 0.0
      %7706 = vmatpush1.msra.mxu0 %v7587
      %7707 = vmatprep.subr.mxu0 0.0
      %7708 = vmatpush1.msra.mxu0 %v7588
      %7709 = vmatprep.subr.mxu0 0.0
      %7710 = vmatpush1.msra.mxu0 %v7589
      %7711 = vmatprep.subr.mxu0 0.0
      %7712 = vmatpush1.msra.mxu0 %v7590
      %7713 = vmatprep.subr.mxu0 0.0
      %7714 = vmatpush1.msra.mxu0 %v7591
      %7715 = vmatprep.subr.mxu0 0.0
      %7716 = vmatpush1.msra.mxu0 %v7592
      %7717 = vmatprep.subr.mxu0 0.0
      %7718 = vmatpush1.msra.mxu0 %v7593
      %7719 = vmatprep.subr.mxu0 0.0
      %7720 = vmatpush1.msra.mxu0 %v7594
      %7721 = vmatprep.subr.mxu0 0.0
      %7722 = vmatpush1.msra.mxu0 %v7595
      %7723 = vmatprep.subr.mxu0 0.0
      %7724 = vmatpush1.msra.mxu0 %v7596
      %7725 = vmatprep.subr.mxu0 0.0
      %7726 = vmatpush1.msra.mxu0 %v7597
      %7727 = vmatprep.subr.mxu0 0.0
      %7728 = vmatpush1.msra.mxu0 %v7598
      %7729 = vmatprep.subr.mxu0 0.0
      %7730 = vmatpush1.msra.mxu0 %v7599
      %7731 = vmatprep.subr.mxu0 0.0
      %7732 = vmatpush1.msra.mxu0 %v7600
      %7733 = vmatprep.subr.mxu0 0.0
      %7734 = vmatpush1.msra.mxu0 %v7601
      %7735 = vmatprep.subr.mxu0 0.0
      %7736 = vmatpush1.msra.mxu0 %v7602
      %7737 = vmatprep.subr.mxu0 0.0
      %7738 = vmatpush1.msra.mxu0 %v7603
      %7739 = vmatprep.subr.mxu0 0.0
      %7740 = vmatpush1.msra.mxu0 %v7604
      %7741 = vmatprep.subr.mxu0 0.0
      %7742 = vmatpush1.msra.mxu0 %v7605
      %7743 = vmatprep.subr.mxu0 0.0
      %7744 = vmatpush1.msra.mxu0 %v7606
      %7745 = vmatprep.subr.mxu0 0.0
      %7746 = vmatpush1.msra.mxu0 %v7607
      %7747 = vmatprep.subr.mxu0 0.0
      %7748 = vmatpush1.msra.mxu0 %v7608
      %7749 = vmatprep.subr.mxu0 0.0
      %7750 = vmatpush1.msra.mxu0 %v7609
      %7751 = vmatprep.subr.mxu0 0.0
      %7752 = vmatpush1.msra.mxu0 %v7610
      %7753 = vmatprep.subr.mxu0 0.0
      %7754 = vmatpush1.msra.mxu0 %v7611
      %7755 = vmatprep.subr.mxu0 0.0
      %7756 = vmatpush1.msra.mxu0 %v7612
      %7757 = vmatprep.subr.mxu0 0.0
      %7758 = vmatpush1.msra.mxu0 %v7613
      %7759 = vmatprep.subr.mxu0 0.0
      %7760 = vmatpush1.msra.mxu0 %v7614
      %7761 = vmatprep.mubr.f32.mxu0 %v7616
      %7762 = vmatmul.mubr.f32.gmra.mrb[0].mxu0 %v7615
      %v7763 = vpop.f32.mrb[0].mxu0
      %v7764 = vadd.f32 0.0, %v7763
      %v7765 = vpop.f32.mrb[0].mxu0
      %7766 = vmatprep.mubr.f32.mxu0 %v7618
      %7767 = vmatmul.mubr.f32.gmra.mrb[0].mxu0 %v7617
      %v7768 = vpop.f32.mrb[0].mxu0
      %v7769 = vadd.f32 0.0, %v7768
      %v7770 = vpop.f32.mrb[0].mxu0
      %7771 = vmatprep.mubr.f32.mxu0 %v7620
      %7772 = vmatmul.mubr.f32.gmra.mrb[0].mxu0 %v7619
      %v7773 = vpop.f32.mrb[0].mxu0
      %v7774 = vadd.f32 0.0, %v7773
      %v7775 = vpop.f32.mrb[0].mxu0
      %7776 = vmatprep.mubr.f32.mxu0 %v7622
      %7777 = vmatmul.mubr.f32.gmra.mrb[0].mxu0 %v7621
      %v7778 = vpop.f32.mrb[0].mxu0
      %v7779 = vadd.f32 0.0, %v7778
      %v7780 = vpop.f32.mrb[0].mxu0
      %7781 = vmatprep.mubr.f32.mxu0 %v7624
      %7782 = vmatmul.mubr.f32.gmra.mrb[0].mxu0 %v7623
      %v7783 = vpop.f32.mrb[0].mxu0
      %v7784 = vadd.f32 0.0, %v7783
      %v7785 = vpop.f32.mrb[0].mxu0
      %7786 = vmatprep.mubr.f32.mxu0 %v7626
      %7787 = vmatmul.mubr.f32.gmra.mrb[0].mxu0 %v7625
      %v7788 = vpop.f32.mrb[0].mxu0
      %v7789 = vadd.f32 0.0, %v7788
      %v7790 = vpop.f32.mrb[0].mxu0
      %7791 = vmatprep.mubr.f32.mxu0 %v7628
      %7792 = vmatmul.mubr.f32.gmra.mrb[0].mxu0 %v7627
      %v7793 = vpop.f32.mrb[0].mxu0
      %v7794 = vadd.f32 0.0, %v7793
      %v7795 = vpop.f32.mrb[0].mxu0
      %7796 = vmatprep.mubr.f32.mxu0 %v7630
      %7797 = vmatmul.mubr.f32.gmra.mrb[0].mxu0 %v7629
      %v7798 = vpop.f32.mrb[0].mxu0
      %v7799 = vadd.f32 0.0, %v7798
      %v7800 = vpop.f32.mrb[0].mxu0
      %7801 = vmatprep.mubr.f32.mxu0 %v7632
      %7802 = vmatmul.mubr.f32.gmra.mrb[0].mxu0 %v7631
      %v7803 = vpop.f32.mrb[0].mxu0
      %v7804 = vadd.f32 0.0, %v7803
      %v7805 = vpop.f32.mrb[0].mxu0
      %7806 = vmatprep.mubr.f32.mxu0 %v7634
      %7807 = vmatmul.mubr.f32.gmra.mrb[0].mxu0 %v7633
      %v7808 = vpop.f32.mrb[0].mxu0
      %v7809 = vadd.f32 0.0, %v7808
      %v7810 = vpop.f32.mrb[0].mxu0
      %7811 = vmatprep.mubr.f32.mxu0 %v7636
      %7812 = vmatmul.mubr.f32.gmra.mrb[0].mxu0 %v7635
      %v7813 = vpop.f32.mrb[0].mxu0
      %v7814 = vadd.f32 0.0, %v7813
      %v7815 = vpop.f32.mrb[0].mxu0
      %7816 = vmatprep.mubr.f32.mxu0 %v7638
      %7817 = vmatmul.mubr.f32.gmra.mrb[0].mxu0 %v7637
      %v7818 = vpop.f32.mrb[0].mxu0
      %v7819 = vadd.f32 0.0, %v7818
      %v7820 = vpop.f32.mrb[0].mxu0
      %7821 = vmatprep.mubr.f32.mxu0 %v7640
      %7822 = vmatmul.mubr.f32.gmra.mrb[0].mxu0 %v7639
      %v7823 = vpop.f32.mrb[0].mxu0
      %v7824 = vadd.f32 0.0, %v7823
      %v7825 = vpop.f32.mrb[0].mxu0
      %7826 = vmatprep.mubr.f32.mxu0 %v7642
      %7827 = vmatmul.mubr.f32.gmra.mrb[0].mxu0 %v7641
      %v7828 = vpop.f32.mrb[0].mxu0
      %v7829 = vadd.f32 0.0, %v7828
      %v7830 = vpop.f32.mrb[0].mxu0
      %7831 = vmatprep.mubr.f32.mxu0 %v7644
      %7832 = vmatmul.mubr.f32.gmra.mrb[0].mxu0 %v7643
      %v7833 = vpop.f32.mrb[0].mxu0
      %v7834 = vadd.f32 0.0, %v7833
      %v7835 = vpop.f32.mrb[0].mxu0
      %7836 = vmatprep.mubr.f32.mxu0 %v7646
      %7837 = vmatmul.mubr.f32.gmra.mrb[0].mxu0 %v7645
      %v7838 = vpop.f32.mrb[0].mxu0
      %v7839 = vadd.f32 0.0, %v7838
      %v7840 = vpop.f32.mrb[0].mxu0
      %7841 = vmatprep.mubr.f32.mxu0 %v7648
      %7842 = vmatmul.mubr.f32.gmra.mrb[0].mxu0 %v7647
      %v7843 = vpop.f32.mrb[0].mxu0
      %v7844 = vadd.f32 0.0, %v7843
      %v7845 = vpop.f32.mrb[0].mxu0
      %7846 = vmatprep.mubr.f32.mxu0 %v7650
      %7847 = vmatmul.mubr.f32.gmra.mrb[0].mxu0 %v7649
      %v7848 = vpop.f32.mrb[0].mxu0
      %v7849 = vadd.f32 0.0, %v7848
      %v7850 = vpop.f32.mrb[0].mxu0
      %7851 = vmatprep.mubr.f32.mxu0 %v7652
      %7852 = vmatmul.mubr.f32.gmra.mrb[0].mxu0 %v7651
      %v7853 = vpop.f32.mrb[0].mxu0
      %v7854 = vadd.f32 0.0, %v7853
      %v7855 = vpop.f32.mrb[0].mxu0
      %7856 = vmatprep.mubr.f32.mxu0 %v7654
      %7857 = vmatmul.mubr.f32.gmra.mrb[0].mxu0 %v7653
      %v7858 = vpop.f32.mrb[0].mxu0
      %v7859 = vadd.f32 0.0, %v7858
      %v7860 = vpop.f32.mrb[0].mxu0
      %7861 = vmatprep.mubr.f32.mxu0 %v7656
      %7862 = vmatmul.mubr.f32.gmra.mrb[0].mxu0 %v7655
      %v7863 = vpop.f32.mrb[0].mxu0
      %v7864 = vadd.f32 0.0, %v7863
      %v7865 = vpop.f32.mrb[0].mxu0
      %7866 = vmatprep.mubr.f32.mxu0 %v7658
      %7867 = vmatmul.mubr.f32.gmra.mrb[0].mxu0 %v7657
      %v7868 = vpop.f32.mrb[0].mxu0
      %v7869 = vadd.f32 0.0, %v7868
      %v7870 = vpop.f32.mrb[0].mxu0
      %7871 = vmatprep.mubr.f32.mxu0 %v7660
      %7872 = vmatmul.mubr.f32.gmra.mrb[0].mxu0 %v7659
      %v7873 = vpop.f32.mrb[0].mxu0
      %v7874 = vadd.f32 0.0, %v7873
      %v7875 = vpop.f32.mrb[0].mxu0
      %7876 = vmatprep.mubr.f32.mxu0 %v7662
      %7877 = vmatmul.mubr.f32.gmra.mrb[0].mxu0 %v7661
      %v7878 = vpop.f32.mrb[0].mxu0
      %v7879 = vadd.f32 0.0, %v7878
      %v7880 = vpop.f32.mrb[0].mxu0
      %7881 = vmatprep.mubr.f32.mxu0 %v7664
      %7882 = vmatmul.mubr.f32.gmra.mrb[0].mxu0 %v7663
      %v7883 = vpop.f32.mrb[0].mxu0
      %v7884 = vadd.f32 0.0, %v7883
      %v7885 = vpop.f32.mrb[0].mxu0
      %7886 = vmatprep.mubr.f32.mxu0 %v7666
      %7887 = vmatmul.mubr.f32.gmra.mrb[0].mxu0 %v7665
      %v7888 = vpop.f32.mrb[0].mxu0
      %v7889 = vadd.f32 0.0, %v7888
      %v7890 = vpop.f32.mrb[0].mxu0
      %7891 = vmatprep.mubr.f32.mxu0 %v7668
      %7892 = vmatmul.mubr.f32.gmra.mrb[0].mxu0 %v7667
      %v7893 = vpop.f32.mrb[0].mxu0
      %v7894 = vadd.f32 0.0, %v7893
      %v7895 = vpop.f32.mrb[0].mxu0
      %7896 = vmatprep.mubr.f32.mxu0 %v7670
      %7897 = vmatmul.mubr.f32.gmra.mrb[0].mxu0 %v7669
      %v7898 = vpop.f32.mrb[0].mxu0
      %v7899 = vadd.f32 0.0, %v7898
      %v7900 = vpop.f32.mrb[0].mxu0
      %7901 = vmatprep.mubr.f32.mxu0 %v7672
      %7902 = vmatmul.mubr.f32.gmra.mrb[0].mxu0 %v7671
      %v7903 = vpop.f32.mrb[0].mxu0
      %v7904 = vadd.f32 0.0, %v7903
      %v7905 = vpop.f32.mrb[0].mxu0
      %7906 = vmatprep.mubr.f32.mxu0 %v7674
      %7907 = vmatmul.mubr.f32.gmra.mrb[0].mxu0 %v7673
      %v7908 = vpop.f32.mrb[0].mxu0
      %v7909 = vadd.f32 0.0, %v7908
      %v7910 = vpop.f32.mrb[0].mxu0
      %7911 = vmatprep.mubr.f32.mxu0 %v7676
      %7912 = vmatmul.mubr.f32.gmra.mrb[0].mxu0 %v7675
      %v7913 = vpop.f32.mrb[0].mxu0
      %v7914 = vadd.f32 0.0, %v7913
      %v7915 = vpop.f32.mrb[0].mxu0
      %7916 = vmatprep.mubr.f32.mxu0 %v7678
      %7917 = vmatmul.mubr.f32.gmra.mrb[0].mxu0 %v7677
      %v7918 = vpop.f32.mrb[0].mxu0
      %v7919 = vadd.f32 0.0, %v7918
      %v7920 = vpop.f32.mrb[0].mxu0
      %7921 = vmatprep.mubr.f32.mxu0 %v7680
      %7922 = vmatmul.mubr.f32.gmra.mrb[0].mxu0 %v7679
      %v7923 = vpop.f32.mrb[0].mxu0
      %v7924 = vadd.f32 0.0, %v7923
      %v7925 = vpop.f32.mrb[0].mxu0
      %7926 = vmatprep.mubr.f32.mxu0 %v7682
      %7927 = vmatmul.mubr.f32.gmra.mrb[0].mxu0 %v7681
      %v7928 = vpop.f32.mrb[0].mxu0
      %v7929 = vadd.f32 0.0, %v7928
      %v7930 = vpop.f32.mrb[0].mxu0
      %7931 = vmatprep.mubr.f32.mxu0 %v7684
      %7932 = vmatmul.mubr.f32.gmra.mrb[0].mxu0 %v7683
      %v7933 = vpop.f32.mrb[0].mxu0
      %v7934 = vadd.f32 0.0, %v7933
      %v7935 = vpop.f32.mrb[0].mxu0
      %7936 = vmatprep.mubr.f32.mxu0 %v7686
      %7937 = vmatmul.mubr.f32.gmra.mrb[0].mxu0 %v7685
      %v7938 = vpop.f32.mrb[0].mxu0
      %v7939 = vadd.f32 0.0, %v7938
      %v7940 = vpop.f32.mrb[0].mxu0
      %7941 = vmatprep.mubr.f32.mxu0 %v7688
      %7942 = vmatmul.mubr.f32.gmra.mrb[0].mxu0 %v7687
      %v7943 = vpop.f32.mrb[0].mxu0
      %v7944 = vadd.f32 0.0, %v7943
      %v7945 = vpop.f32.mrb[0].mxu0
      %7946 = vmatprep.mubr.f32.mxu0 %v7690
      %7947 = vmatmul.mubr.f32.gmra.mrb[0].mxu0 %v7689
      %v7948 = vpop.f32.mrb[0].mxu0
      %v7949 = vadd.f32 0.0, %v7948
      %v7950 = vpop.f32.mrb[0].mxu0
      %7951 = vmatprep.mubr.f32.mxu0 %v7692
      %7952 = vmatmul.mubr.f32.gmra.mrb[0].mxu0 %v7691
      %v7953 = vpop.f32.mrb[0].mxu0
      %v7954 = vadd.f32 0.0, %v7953
      %v7955 = vpop.f32.mrb[0].mxu0
      %7956 = vmatprep.mubr.f32.mxu0 %v7694
      %7957 = vmatmul.mubr.f32.gmra.mrb[0].mxu0 %v7693
      %v7958 = vpop.f32.mrb[0].mxu0
      %v7959 = vadd.f32 0.0, %v7958
      %v7960 = vpop.f32.mrb[0].mxu0
      %7961 = vmatprep.mubr.f32.mxu0 %v7696
      %7962 = vmatmul.mubr.f32.gmra.mrb[0].mxu0 %v7695
      %v7963 = vpop.f32.mrb[0].mxu0
      %v7964 = vadd.f32 0.0, %v7963
      %v7965 = vpop.f32.mrb[0].mxu0
      %7966 = vdwg.mxu0
      %v8008 = vcombine.high %v7764, %v7764
      %v8010 = vunpack.c.l.s4 1983009808
      %v8011 = vunpack.c.0.s8 %v8010
      %v8012 = vlaneseq
      %v8013 = vshrl.u32 %v8012, 7
      %v8014 = vsub.s32 %v8011, %v8013
      %v8015 = vrot.slane %v7764, %v8014
      %v8017 = vunpack.c.l.s4 1983009808
      %v8018 = vunpack.c.0.s8 %v8017
      %v8019 = vlaneseq
      %v8020 = vshrl.u32 %v8019, 7
      %v8021 = vsub.s32 %v8018, %v8020
      %v8022 = vrot.slane %v8008, %v8021
      %v8023 = vcombine.high %v8015, %v8015
      %v8024 = vcombine.high %v8022, %v8022
      %v8025 = vcombine.high %v7769, %v7769
      %v8027 = vunpack.c.l.s4 1983009808
      %v8028 = vunpack.c.0.s8 %v8027
      %v8029 = vlaneseq
      %v8030 = vshrl.u32 %v8029, 7
      %v8031 = vsub.s32 %v8028, %v8030
      %v8032 = vrot.slane %v7769, %v8031
      %v8034 = vunpack.c.l.s4 1983009808
      %v8035 = vunpack.c.0.s8 %v8034
      %v8036 = vlaneseq
      %v8037 = vshrl.u32 %v8036, 7
      %v8038 = vsub.s32 %v8035, %v8037
      %v8039 = vrot.slane %v8025, %v8038
      %v8040 = vcombine.high %v8032, %v8032
      %v8041 = vcombine.high %v8039, %v8039
      %v8042 = vcombine.high %v7774, %v7774
      %v8044 = vunpack.c.l.s4 1983009808
      %v8045 = vunpack.c.0.s8 %v8044
      %v8046 = vlaneseq
      %v8047 = vshrl.u32 %v8046, 7
      %v8048 = vsub.s32 %v8045, %v8047
      %v8049 = vrot.slane %v7774, %v8048
      %v8051 = vunpack.c.l.s4 1983009808
      %v8052 = vunpack.c.0.s8 %v8051
      %v8053 = vlaneseq
      %v8054 = vshrl.u32 %v8053, 7
      %v8055 = vsub.s32 %v8052, %v8054
      %v8056 = vrot.slane %v8042, %v8055
      %v8057 = vcombine.high %v8049, %v8049
      %v8058 = vcombine.high %v8056, %v8056
      %v8059 = vcombine.high %v7779, %v7779
      %v8061 = vunpack.c.l.s4 1983009808
      %v8062 = vunpack.c.0.s8 %v8061
      %v8063 = vlaneseq
      %v8064 = vshrl.u32 %v8063, 7
      %v8065 = vsub.s32 %v8062, %v8064
      %v8066 = vrot.slane %v7779, %v8065
      %v8068 = vunpack.c.l.s4 1983009808
      %v8069 = vunpack.c.0.s8 %v8068
      %v8070 = vlaneseq
      %v8071 = vshrl.u32 %v8070, 7
      %v8072 = vsub.s32 %v8069, %v8071
      %v8073 = vrot.slane %v8059, %v8072
      %v8074 = vcombine.high %v8066, %v8066
      %v8075 = vcombine.high %v8073, %v8073
      %v8076 = vcombine.high %v7784, %v7784
      %v8078 = vunpack.c.l.s4 1983009808
      %v8079 = vunpack.c.0.s8 %v8078
      %v8080 = vlaneseq
      %v8081 = vshrl.u32 %v8080, 7
      %v8082 = vsub.s32 %v8079, %v8081
      %v8083 = vrot.slane %v7784, %v8082
      %v8085 = vunpack.c.l.s4 1983009808
      %v8086 = vunpack.c.0.s8 %v8085
      %v8087 = vlaneseq
      %v8088 = vshrl.u32 %v8087, 7
      %v8089 = vsub.s32 %v8086, %v8088
      %v8090 = vrot.slane %v8076, %v8089
      %v8091 = vcombine.high %v8083, %v8083
      %v8092 = vcombine.high %v8090, %v8090
      %v8093 = vcombine.high %v7789, %v7789
      %v8095 = vunpack.c.l.s4 1983009808
      %v8096 = vunpack.c.0.s8 %v8095
      %v8097 = vlaneseq
      %v8098 = vshrl.u32 %v8097, 7
      %v8099 = vsub.s32 %v8096, %v8098
      %v8100 = vrot.slane %v7789, %v8099
      %v8102 = vunpack.c.l.s4 1983009808
      %v8103 = vunpack.c.0.s8 %v8102
      %v8104 = vlaneseq
      %v8105 = vshrl.u32 %v8104, 7
      %v8106 = vsub.s32 %v8103, %v8105
      %v8107 = vrot.slane %v8093, %v8106
      %v8108 = vcombine.high %v8100, %v8100
      %v8109 = vcombine.high %v8107, %v8107
      %v8110 = vcombine.high %v7794, %v7794
      %v8112 = vunpack.c.l.s4 1983009808
      %v8113 = vunpack.c.0.s8 %v8112
      %v8114 = vlaneseq
      %v8115 = vshrl.u32 %v8114, 7
      %v8116 = vsub.s32 %v8113, %v8115
      %v8117 = vrot.slane %v7794, %v8116
      %v8119 = vunpack.c.l.s4 1983009808
      %v8120 = vunpack.c.0.s8 %v8119
      %v8121 = vlaneseq
      %v8122 = vshrl.u32 %v8121, 7
      %v8123 = vsub.s32 %v8120, %v8122
      %v8124 = vrot.slane %v8110, %v8123
      %v8125 = vcombine.high %v8117, %v8117
      %v8126 = vcombine.high %v8124, %v8124
      %v8127 = vcombine.high %v7799, %v7799
      %v8129 = vunpack.c.l.s4 1983009808
      %v8130 = vunpack.c.0.s8 %v8129
      %v8131 = vlaneseq
      %v8132 = vshrl.u32 %v8131, 7
      %v8133 = vsub.s32 %v8130, %v8132
      %v8134 = vrot.slane %v7799, %v8133
      %v8136 = vunpack.c.l.s4 1983009808
      %v8137 = vunpack.c.0.s8 %v8136
      %v8138 = vlaneseq
      %v8139 = vshrl.u32 %v8138, 7
      %v8140 = vsub.s32 %v8137, %v8139
      %v8141 = vrot.slane %v8127, %v8140
      %v8142 = vcombine.high %v8134, %v8134
      %v8143 = vcombine.high %v8141, %v8141
      %v8144 = vcombine.high %v7804, %v7804
      %v8146 = vunpack.c.l.s4 1983009808
      %v8147 = vunpack.c.0.s8 %v8146
      %v8148 = vlaneseq
      %v8149 = vshrl.u32 %v8148, 7
      %v8150 = vsub.s32 %v8147, %v8149
      %v8151 = vrot.slane %v7804, %v8150
      %v8153 = vunpack.c.l.s4 1983009808
      %v8154 = vunpack.c.0.s8 %v8153
      %v8155 = vlaneseq
      %v8156 = vshrl.u32 %v8155, 7
      %v8157 = vsub.s32 %v8154, %v8156
      %v8158 = vrot.slane %v8144, %v8157
      %v8159 = vcombine.high %v8151, %v8151
      %v8160 = vcombine.high %v8158, %v8158
      %v8161 = vcombine.high %v7809, %v7809
      %v8163 = vunpack.c.l.s4 1983009808
      %v8164 = vunpack.c.0.s8 %v8163
      %v8165 = vlaneseq
      %v8166 = vshrl.u32 %v8165, 7
      %v8167 = vsub.s32 %v8164, %v8166
      %v8168 = vrot.slane %v7809, %v8167
      %v8170 = vunpack.c.l.s4 1983009808
      %v8171 = vunpack.c.0.s8 %v8170
      %v8172 = vlaneseq
      %v8173 = vshrl.u32 %v8172, 7
      %v8174 = vsub.s32 %v8171, %v8173
      %v8175 = vrot.slane %v8161, %v8174
      %v8176 = vcombine.high %v8168, %v8168
      %v8177 = vcombine.high %v8175, %v8175
      %v8178 = vcombine.high %v7814, %v7814
      %v8180 = vunpack.c.l.s4 1983009808
      %v8181 = vunpack.c.0.s8 %v8180
      %v8182 = vlaneseq
      %v8183 = vshrl.u32 %v8182, 7
      %v8184 = vsub.s32 %v8181, %v8183
      %v8185 = vrot.slane %v7814, %v8184
      %v8187 = vunpack.c.l.s4 1983009808
      %v8188 = vunpack.c.0.s8 %v8187
      %v8189 = vlaneseq
      %v8190 = vshrl.u32 %v8189, 7
      %v8191 = vsub.s32 %v8188, %v8190
      %v8192 = vrot.slane %v8178, %v8191
      %v8193 = vcombine.high %v8185, %v8185
      %v8194 = vcombine.high %v8192, %v8192
      %v8195 = vcombine.high %v7819, %v7819
      %v8197 = vunpack.c.l.s4 1983009808
      %v8198 = vunpack.c.0.s8 %v8197
      %v8199 = vlaneseq
      %v8200 = vshrl.u32 %v8199, 7
      %v8201 = vsub.s32 %v8198, %v8200
      %v8202 = vrot.slane %v7819, %v8201
      %v8204 = vunpack.c.l.s4 1983009808
      %v8205 = vunpack.c.0.s8 %v8204
      %v8206 = vlaneseq
      %v8207 = vshrl.u32 %v8206, 7
      %v8208 = vsub.s32 %v8205, %v8207
      %v8209 = vrot.slane %v8195, %v8208
      %v8210 = vcombine.high %v8202, %v8202
      %v8211 = vcombine.high %v8209, %v8209
      %v8212 = vcombine.high %v7824, %v7824
      %v8214 = vunpack.c.l.s4 1983009808
      %v8215 = vunpack.c.0.s8 %v8214
      %v8216 = vlaneseq
      %v8217 = vshrl.u32 %v8216, 7
      %v8218 = vsub.s32 %v8215, %v8217
      %v8219 = vrot.slane %v7824, %v8218
      %v8221 = vunpack.c.l.s4 1983009808
      %v8222 = vunpack.c.0.s8 %v8221
      %v8223 = vlaneseq
      %v8224 = vshrl.u32 %v8223, 7
      %v8225 = vsub.s32 %v8222, %v8224
      %v8226 = vrot.slane %v8212, %v8225
      %v8227 = vcombine.high %v8219, %v8219
      %v8228 = vcombine.high %v8226, %v8226
      %v8229 = vcombine.high %v7829, %v7829
      %v8231 = vunpack.c.l.s4 1983009808
      %v8232 = vunpack.c.0.s8 %v8231
      %v8233 = vlaneseq
      %v8234 = vshrl.u32 %v8233, 7
      %v8235 = vsub.s32 %v8232, %v8234
      %v8236 = vrot.slane %v7829, %v8235
      %v8238 = vunpack.c.l.s4 1983009808
      %v8239 = vunpack.c.0.s8 %v8238
      %v8240 = vlaneseq
      %v8241 = vshrl.u32 %v8240, 7
      %v8242 = vsub.s32 %v8239, %v8241
      %v8243 = vrot.slane %v8229, %v8242
      %v8244 = vcombine.high %v8236, %v8236
      %v8245 = vcombine.high %v8243, %v8243
      %v8246 = vcombine.high %v7834, %v7834
      %v8248 = vunpack.c.l.s4 1983009808
      %v8249 = vunpack.c.0.s8 %v8248
      %v8250 = vlaneseq
      %v8251 = vshrl.u32 %v8250, 7
      %v8252 = vsub.s32 %v8249, %v8251
      %v8253 = vrot.slane %v7834, %v8252
      %v8255 = vunpack.c.l.s4 1983009808
      %v8256 = vunpack.c.0.s8 %v8255
      %v8257 = vlaneseq
      %v8258 = vshrl.u32 %v8257, 7
      %v8259 = vsub.s32 %v8256, %v8258
      %v8260 = vrot.slane %v8246, %v8259
      %v8261 = vcombine.high %v8253, %v8253
      %v8262 = vcombine.high %v8260, %v8260
      %v8263 = vcombine.high %v7839, %v7839
      %v8265 = vunpack.c.l.s4 1983009808
      %v8266 = vunpack.c.0.s8 %v8265
      %v8267 = vlaneseq
      %v8268 = vshrl.u32 %v8267, 7
      %v8269 = vsub.s32 %v8266, %v8268
      %v8270 = vrot.slane %v7839, %v8269
      %v8272 = vunpack.c.l.s4 1983009808
      %v8273 = vunpack.c.0.s8 %v8272
      %v8274 = vlaneseq
      %v8275 = vshrl.u32 %v8274, 7
      %v8276 = vsub.s32 %v8273, %v8275
      %v8277 = vrot.slane %v8263, %v8276
      %v8278 = vcombine.high %v8270, %v8270
      %v8279 = vcombine.high %v8277, %v8277
      %v8280 = vcombine.high %v7844, %v7844
      %v8282 = vunpack.c.l.s4 1983009808
      %v8283 = vunpack.c.0.s8 %v8282
      %v8284 = vlaneseq
      %v8285 = vshrl.u32 %v8284, 7
      %v8286 = vsub.s32 %v8283, %v8285
      %v8287 = vrot.slane %v7844, %v8286
      %v8289 = vunpack.c.l.s4 1983009808
      %v8290 = vunpack.c.0.s8 %v8289
      %v8291 = vlaneseq
      %v8292 = vshrl.u32 %v8291, 7
      %v8293 = vsub.s32 %v8290, %v8292
      %v8294 = vrot.slane %v8280, %v8293
      %v8295 = vcombine.high %v8287, %v8287
      %v8296 = vcombine.high %v8294, %v8294
      %v8297 = vcombine.high %v7849, %v7849
      %v8299 = vunpack.c.l.s4 1983009808
      %v8300 = vunpack.c.0.s8 %v8299
      %v8301 = vlaneseq
      %v8302 = vshrl.u32 %v8301, 7
      %v8303 = vsub.s32 %v8300, %v8302
      %v8304 = vrot.slane %v7849, %v8303
      %v8306 = vunpack.c.l.s4 1983009808
      %v8307 = vunpack.c.0.s8 %v8306
      %v8308 = vlaneseq
      %v8309 = vshrl.u32 %v8308, 7
      %v8310 = vsub.s32 %v8307, %v8309
      %v8311 = vrot.slane %v8297, %v8310
      %v8312 = vcombine.high %v8304, %v8304
      %v8313 = vcombine.high %v8311, %v8311
      %v8314 = vcombine.high %v7854, %v7854
      %v8316 = vunpack.c.l.s4 1983009808
      %v8317 = vunpack.c.0.s8 %v8316
      %v8318 = vlaneseq
      %v8319 = vshrl.u32 %v8318, 7
      %v8320 = vsub.s32 %v8317, %v8319
      %v8321 = vrot.slane %v7854, %v8320
      %v8323 = vunpack.c.l.s4 1983009808
      %v8324 = vunpack.c.0.s8 %v8323
      %v8325 = vlaneseq
      %v8326 = vshrl.u32 %v8325, 7
      %v8327 = vsub.s32 %v8324, %v8326
      %v8328 = vrot.slane %v8314, %v8327
      %v8329 = vcombine.high %v8321, %v8321
      %v8330 = vcombine.high %v8328, %v8328
      %v8331 = vcombine.high %v7859, %v7859
      %v8333 = vunpack.c.l.s4 1983009808
      %v8334 = vunpack.c.0.s8 %v8333
      %v8335 = vlaneseq
      %v8336 = vshrl.u32 %v8335, 7
      %v8337 = vsub.s32 %v8334, %v8336
      %v8338 = vrot.slane %v7859, %v8337
      %v8340 = vunpack.c.l.s4 1983009808
      %v8341 = vunpack.c.0.s8 %v8340
      %v8342 = vlaneseq
      %v8343 = vshrl.u32 %v8342, 7
      %v8344 = vsub.s32 %v8341, %v8343
      %v8345 = vrot.slane %v8331, %v8344
      %v8346 = vcombine.high %v8338, %v8338
      %v8347 = vcombine.high %v8345, %v8345
      %v8348 = vcombine.high %v7864, %v7864
      %v8350 = vunpack.c.l.s4 1983009808
      %v8351 = vunpack.c.0.s8 %v8350
      %v8352 = vlaneseq
      %v8353 = vshrl.u32 %v8352, 7
      %v8354 = vsub.s32 %v8351, %v8353
      %v8355 = vrot.slane %v7864, %v8354
      %v8357 = vunpack.c.l.s4 1983009808
      %v8358 = vunpack.c.0.s8 %v8357
      %v8359 = vlaneseq
      %v8360 = vshrl.u32 %v8359, 7
      %v8361 = vsub.s32 %v8358, %v8360
      %v8362 = vrot.slane %v8348, %v8361
      %v8363 = vcombine.high %v8355, %v8355
      %v8364 = vcombine.high %v8362, %v8362
      %v8365 = vcombine.high %v7869, %v7869
      %v8367 = vunpack.c.l.s4 1983009808
      %v8368 = vunpack.c.0.s8 %v8367
      %v8369 = vlaneseq
      %v8370 = vshrl.u32 %v8369, 7
      %v8371 = vsub.s32 %v8368, %v8370
      %v8372 = vrot.slane %v7869, %v8371
      %v8374 = vunpack.c.l.s4 1983009808
      %v8375 = vunpack.c.0.s8 %v8374
      %v8376 = vlaneseq
      %v8377 = vshrl.u32 %v8376, 7
      %v8378 = vsub.s32 %v8375, %v8377
      %v8379 = vrot.slane %v8365, %v8378
      %v8380 = vcombine.high %v8372, %v8372
      %v8381 = vcombine.high %v8379, %v8379
      %v8382 = vcombine.high %v7874, %v7874
      %v8384 = vunpack.c.l.s4 1983009808
      %v8385 = vunpack.c.0.s8 %v8384
      %v8386 = vlaneseq
      %v8387 = vshrl.u32 %v8386, 7
      %v8388 = vsub.s32 %v8385, %v8387
      %v8389 = vrot.slane %v7874, %v8388
      %v8391 = vunpack.c.l.s4 1983009808
      %v8392 = vunpack.c.0.s8 %v8391
      %v8393 = vlaneseq
      %v8394 = vshrl.u32 %v8393, 7
      %v8395 = vsub.s32 %v8392, %v8394
      %v8396 = vrot.slane %v8382, %v8395
      %v8397 = vcombine.high %v8389, %v8389
      %v8398 = vcombine.high %v8396, %v8396
      %v8399 = vcombine.high %v7879, %v7879
      %v8401 = vunpack.c.l.s4 1983009808
      %v8402 = vunpack.c.0.s8 %v8401
      %v8403 = vlaneseq
      %v8404 = vshrl.u32 %v8403, 7
      %v8405 = vsub.s32 %v8402, %v8404
      %v8406 = vrot.slane %v7879, %v8405
      %v8408 = vunpack.c.l.s4 1983009808
      %v8409 = vunpack.c.0.s8 %v8408
      %v8410 = vlaneseq
      %v8411 = vshrl.u32 %v8410, 7
      %v8412 = vsub.s32 %v8409, %v8411
      %v8413 = vrot.slane %v8399, %v8412
      %v8414 = vcombine.high %v8406, %v8406
      %v8415 = vcombine.high %v8413, %v8413
      %v8416 = vcombine.high %v7884, %v7884
      %v8418 = vunpack.c.l.s4 1983009808
      %v8419 = vunpack.c.0.s8 %v8418
      %v8420 = vlaneseq
      %v8421 = vshrl.u32 %v8420, 7
      %v8422 = vsub.s32 %v8419, %v8421
      %v8423 = vrot.slane %v7884, %v8422
      %v8425 = vunpack.c.l.s4 1983009808
      %v8426 = vunpack.c.0.s8 %v8425
      %v8427 = vlaneseq
      %v8428 = vshrl.u32 %v8427, 7
      %v8429 = vsub.s32 %v8426, %v8428
      %v8430 = vrot.slane %v8416, %v8429
      %v8431 = vcombine.high %v8423, %v8423
      %v8432 = vcombine.high %v8430, %v8430
      %v8433 = vcombine.high %v7889, %v7889
      %v8435 = vunpack.c.l.s4 1983009808
      %v8436 = vunpack.c.0.s8 %v8435
      %v8437 = vlaneseq
      %v8438 = vshrl.u32 %v8437, 7
      %v8439 = vsub.s32 %v8436, %v8438
      %v8440 = vrot.slane %v7889, %v8439
      %v8442 = vunpack.c.l.s4 1983009808
      %v8443 = vunpack.c.0.s8 %v8442
      %v8444 = vlaneseq
      %v8445 = vshrl.u32 %v8444, 7
      %v8446 = vsub.s32 %v8443, %v8445
      %v8447 = vrot.slane %v8433, %v8446
      %v8448 = vcombine.high %v8440, %v8440
      %v8449 = vcombine.high %v8447, %v8447
      %v8450 = vcombine.high %v7894, %v7894
      %v8452 = vunpack.c.l.s4 1983009808
      %v8453 = vunpack.c.0.s8 %v8452
      %v8454 = vlaneseq
      %v8455 = vshrl.u32 %v8454, 7
      %v8456 = vsub.s32 %v8453, %v8455
      %v8457 = vrot.slane %v7894, %v8456
      %v8459 = vunpack.c.l.s4 1983009808
      %v8460 = vunpack.c.0.s8 %v8459
      %v8461 = vlaneseq
      %v8462 = vshrl.u32 %v8461, 7
      %v8463 = vsub.s32 %v8460, %v8462
      %v8464 = vrot.slane %v8450, %v8463
      %v8465 = vcombine.high %v8457, %v8457
      %v8466 = vcombine.high %v8464, %v8464
      %v8467 = vcombine.high %v7899, %v7899
      %v8469 = vunpack.c.l.s4 1983009808
      %v8470 = vunpack.c.0.s8 %v8469
      %v8471 = vlaneseq
      %v8472 = vshrl.u32 %v8471, 7
      %v8473 = vsub.s32 %v8470, %v8472
      %v8474 = vrot.slane %v7899, %v8473
      %v8476 = vunpack.c.l.s4 1983009808
      %v8477 = vunpack.c.0.s8 %v8476
      %v8478 = vlaneseq
      %v8479 = vshrl.u32 %v8478, 7
      %v8480 = vsub.s32 %v8477, %v8479
      %v8481 = vrot.slane %v8467, %v8480
      %v8482 = vcombine.high %v8474, %v8474
      %v8483 = vcombine.high %v8481, %v8481
      %v8484 = vcombine.high %v7904, %v7904
      %v8486 = vunpack.c.l.s4 1983009808
      %v8487 = vunpack.c.0.s8 %v8486
      %v8488 = vlaneseq
      %v8489 = vshrl.u32 %v8488, 7
      %v8490 = vsub.s32 %v8487, %v8489
      %v8491 = vrot.slane %v7904, %v8490
      %v8493 = vunpack.c.l.s4 1983009808
      %v8494 = vunpack.c.0.s8 %v8493
      %v8495 = vlaneseq
      %v8496 = vshrl.u32 %v8495, 7
      %v8497 = vsub.s32 %v8494, %v8496
      %v8498 = vrot.slane %v8484, %v8497
      %v8499 = vcombine.high %v8491, %v8491
      %v8500 = vcombine.high %v8498, %v8498
      %v8501 = vcombine.high %v7909, %v7909
      %v8503 = vunpack.c.l.s4 1983009808
      %v8504 = vunpack.c.0.s8 %v8503
      %v8505 = vlaneseq
      %v8506 = vshrl.u32 %v8505, 7
      %v8507 = vsub.s32 %v8504, %v8506
      %v8508 = vrot.slane %v7909, %v8507
      %v8510 = vunpack.c.l.s4 1983009808
      %v8511 = vunpack.c.0.s8 %v8510
      %v8512 = vlaneseq
      %v8513 = vshrl.u32 %v8512, 7
      %v8514 = vsub.s32 %v8511, %v8513
      %v8515 = vrot.slane %v8501, %v8514
      %v8516 = vcombine.high %v8508, %v8508
      %v8517 = vcombine.high %v8515, %v8515
      %v8518 = vcombine.high %v7914, %v7914
      %v8520 = vunpack.c.l.s4 1983009808
      %v8521 = vunpack.c.0.s8 %v8520
      %v8522 = vlaneseq
      %v8523 = vshrl.u32 %v8522, 7
      %v8524 = vsub.s32 %v8521, %v8523
      %v8525 = vrot.slane %v7914, %v8524
      %v8527 = vunpack.c.l.s4 1983009808
      %v8528 = vunpack.c.0.s8 %v8527
      %v8529 = vlaneseq
      %v8530 = vshrl.u32 %v8529, 7
      %v8531 = vsub.s32 %v8528, %v8530
      %v8532 = vrot.slane %v8518, %v8531
      %v8533 = vcombine.high %v8525, %v8525
      %v8534 = vcombine.high %v8532, %v8532
      %v8535 = vcombine.high %v7919, %v7919
      %v8537 = vunpack.c.l.s4 1983009808
      %v8538 = vunpack.c.0.s8 %v8537
      %v8539 = vlaneseq
      %v8540 = vshrl.u32 %v8539, 7
      %v8541 = vsub.s32 %v8538, %v8540
      %v8542 = vrot.slane %v7919, %v8541
      %v8544 = vunpack.c.l.s4 1983009808
      %v8545 = vunpack.c.0.s8 %v8544
      %v8546 = vlaneseq
      %v8547 = vshrl.u32 %v8546, 7
      %v8548 = vsub.s32 %v8545, %v8547
      %v8549 = vrot.slane %v8535, %v8548
      %v8550 = vcombine.high %v8542, %v8542
      %v8551 = vcombine.high %v8549, %v8549
      %v8552 = vcombine.high %v7924, %v7924
      %v8554 = vunpack.c.l.s4 1983009808
      %v8555 = vunpack.c.0.s8 %v8554
      %v8556 = vlaneseq
      %v8557 = vshrl.u32 %v8556, 7
      %v8558 = vsub.s32 %v8555, %v8557
      %v8559 = vrot.slane %v7924, %v8558
      %v8561 = vunpack.c.l.s4 1983009808
      %v8562 = vunpack.c.0.s8 %v8561
      %v8563 = vlaneseq
      %v8564 = vshrl.u32 %v8563, 7
      %v8565 = vsub.s32 %v8562, %v8564
      %v8566 = vrot.slane %v8552, %v8565
      %v8567 = vcombine.high %v8559, %v8559
      %v8568 = vcombine.high %v8566, %v8566
      %v8569 = vcombine.high %v7929, %v7929
      %v8571 = vunpack.c.l.s4 1983009808
      %v8572 = vunpack.c.0.s8 %v8571
      %v8573 = vlaneseq
      %v8574 = vshrl.u32 %v8573, 7
      %v8575 = vsub.s32 %v8572, %v8574
      %v8576 = vrot.slane %v7929, %v8575
      %v8578 = vunpack.c.l.s4 1983009808
      %v8579 = vunpack.c.0.s8 %v8578
      %v8580 = vlaneseq
      %v8581 = vshrl.u32 %v8580, 7
      %v8582 = vsub.s32 %v8579, %v8581
      %v8583 = vrot.slane %v8569, %v8582
      %v8584 = vcombine.high %v8576, %v8576
      %v8585 = vcombine.high %v8583, %v8583
      %v8586 = vcombine.high %v7934, %v7934
      %v8588 = vunpack.c.l.s4 1983009808
      %v8589 = vunpack.c.0.s8 %v8588
      %v8590 = vlaneseq
      %v8591 = vshrl.u32 %v8590, 7
      %v8592 = vsub.s32 %v8589, %v8591
      %v8593 = vrot.slane %v7934, %v8592
      %v8595 = vunpack.c.l.s4 1983009808
      %v8596 = vunpack.c.0.s8 %v8595
      %v8597 = vlaneseq
      %v8598 = vshrl.u32 %v8597, 7
      %v8599 = vsub.s32 %v8596, %v8598
      %v8600 = vrot.slane %v8586, %v8599
      %v8601 = vcombine.high %v8593, %v8593
      %v8602 = vcombine.high %v8600, %v8600
      %v8603 = vcombine.high %v7939, %v7939
      %v8605 = vunpack.c.l.s4 1983009808
      %v8606 = vunpack.c.0.s8 %v8605
      %v8607 = vlaneseq
      %v8608 = vshrl.u32 %v8607, 7
      %v8609 = vsub.s32 %v8606, %v8608
      %v8610 = vrot.slane %v7939, %v8609
      %v8612 = vunpack.c.l.s4 1983009808
      %v8613 = vunpack.c.0.s8 %v8612
      %v8614 = vlaneseq
      %v8615 = vshrl.u32 %v8614, 7
      %v8616 = vsub.s32 %v8613, %v8615
      %v8617 = vrot.slane %v8603, %v8616
      %v8618 = vcombine.high %v8610, %v8610
      %v8619 = vcombine.high %v8617, %v8617
      %v8620 = vcombine.high %v7944, %v7944
      %v8622 = vunpack.c.l.s4 1983009808
      %v8623 = vunpack.c.0.s8 %v8622
      %v8624 = vlaneseq
      %v8625 = vshrl.u32 %v8624, 7
      %v8626 = vsub.s32 %v8623, %v8625
      %v8627 = vrot.slane %v7944, %v8626
      %v8629 = vunpack.c.l.s4 1983009808
      %v8630 = vunpack.c.0.s8 %v8629
      %v8631 = vlaneseq
      %v8632 = vshrl.u32 %v8631, 7
      %v8633 = vsub.s32 %v8630, %v8632
      %v8634 = vrot.slane %v8620, %v8633
      %v8635 = vcombine.high %v8627, %v8627
      %v8636 = vcombine.high %v8634, %v8634
      %v8637 = vcombine.high %v7949, %v7949
      %v8639 = vunpack.c.l.s4 1983009808
      %v8640 = vunpack.c.0.s8 %v8639
      %v8641 = vlaneseq
      %v8642 = vshrl.u32 %v8641, 7
      %v8643 = vsub.s32 %v8640, %v8642
      %v8644 = vrot.slane %v7949, %v8643
      %v8646 = vunpack.c.l.s4 1983009808
      %v8647 = vunpack.c.0.s8 %v8646
      %v8648 = vlaneseq
      %v8649 = vshrl.u32 %v8648, 7
      %v8650 = vsub.s32 %v8647, %v8649
      %v8651 = vrot.slane %v8637, %v8650
      %v8652 = vcombine.high %v8644, %v8644
      %v8653 = vcombine.high %v8651, %v8651
      %v8654 = vcombine.high %v7954, %v7954
      %v8656 = vunpack.c.l.s4 1983009808
      %v8657 = vunpack.c.0.s8 %v8656
      %v8658 = vlaneseq
      %v8659 = vshrl.u32 %v8658, 7
      %v8660 = vsub.s32 %v8657, %v8659
      %v8661 = vrot.slane %v7954, %v8660
      %v8663 = vunpack.c.l.s4 1983009808
      %v8664 = vunpack.c.0.s8 %v8663
      %v8665 = vlaneseq
      %v8666 = vshrl.u32 %v8665, 7
      %v8667 = vsub.s32 %v8664, %v8666
      %v8668 = vrot.slane %v8654, %v8667
      %v8669 = vcombine.high %v8661, %v8661
      %v8670 = vcombine.high %v8668, %v8668
      %v8671 = vcombine.high %v7959, %v7959
      %v8673 = vunpack.c.l.s4 1983009808
      %v8674 = vunpack.c.0.s8 %v8673
      %v8675 = vlaneseq
      %v8676 = vshrl.u32 %v8675, 7
      %v8677 = vsub.s32 %v8674, %v8676
      %v8678 = vrot.slane %v7959, %v8677
      %v8680 = vunpack.c.l.s4 1983009808
      %v8681 = vunpack.c.0.s8 %v8680
      %v8682 = vlaneseq
      %v8683 = vshrl.u32 %v8682, 7
      %v8684 = vsub.s32 %v8681, %v8683
      %v8685 = vrot.slane %v8671, %v8684
      %v8686 = vcombine.high %v8678, %v8678
      %v8687 = vcombine.high %v8685, %v8685
      %v8689 = vunpack.c.l.s4 1983009808
      %v8690 = vunpack.c.0.s8 %v8689
      %v8691 = vlaneseq
      %v8692 = vshrl.u32 %v8691, 7
      %v8693 = vsub.s32 %v8690, %v8692
      %v8694 = vrot.slane %v7964, %v8693
      %v8695 = vcombine.high %v8694, %v8694
      %v8696 = vld [vmem:[%s19] sm:$0xf]
      %v8697 = vld [vmem:[%s19 + $0x4] sm:$0xf]
      %v8698 = vld [vmem:[%s19 + $0x8] sm:$0xf]
      %v8699 = vld [vmem:[%s19 + $0xc] sm:$0xf]
      %v8700 = vld [vmem:[%s19 + $0x10] sm:$0xf]
      %v8701 = vld [vmem:[%s19 + $0x14] sm:$0xf]
      %v8702 = vld [vmem:[%s19 + $0x18] sm:$0xf]
      %v8703 = vld [vmem:[%s19 + $0x1c] sm:$0xf]
      %v8704 = vld [vmem:[%s19 + $0x20] sm:$0xf]
      %v8705 = vld [vmem:[%s19 + $0x24] sm:$0xf]
      %v8706 = vld [vmem:[%s19 + $0x28] sm:$0xf]
      %v8707 = vld [vmem:[%s19 + $0x2c] sm:$0xf]
      %v8708 = vld [vmem:[%s19 + $0x30] sm:$0xf]
      %v8709 = vld [vmem:[%s19 + $0x34] sm:$0xf]
      %v8710 = vld [vmem:[%s19 + $0x38] sm:$0xf]
      %v8711 = vld [vmem:[%s19 + $0x3c] sm:$0xf]
      %v8712 = vld [vmem:[%s19 + $0x40] sm:$0xf]
      %v8713 = vld [vmem:[%s19 + $0x44] sm:$0xf]
      %v8714 = vcombine.low %v8015, %v8023
      %v8715 = vcombine.low %v8022, %v8024
      %v8717 = vunpack.c.l.s4 1983009808
      %v8718 = vunpack.c.0.s8 %v8717
      %v8719 = vlaneseq
      %v8720 = vshrl.u32 %v8719, 7
      %v8721 = vsub.s32 %v8718, %v8720
      %v8722 = vrot.slane %v8714, %v8721
      %v8724 = vunpack.c.l.s4 1983009808
      %v8725 = vunpack.c.0.s8 %v8724
      %v8726 = vlaneseq
      %v8727 = vshrl.u32 %v8726, 7
      %v8728 = vsub.s32 %v8725, %v8727
      %v8729 = vrot.slane %v8715, %v8728
      %v8730 = vcombine.low %v8722, %v8729
      %v8731 = vcombine.low %v8032, %v8040
      %v8732 = vcombine.low %v8039, %v8041
      %v8734 = vunpack.c.l.s4 1983009808
      %v8735 = vunpack.c.0.s8 %v8734
      %v8736 = vlaneseq
      %v8737 = vshrl.u32 %v8736, 7
      %v8738 = vsub.s32 %v8735, %v8737
      %v8739 = vrot.slane %v8731, %v8738
      %v8741 = vunpack.c.l.s4 1983009808
      %v8742 = vunpack.c.0.s8 %v8741
      %v8743 = vlaneseq
      %v8744 = vshrl.u32 %v8743, 7
      %v8745 = vsub.s32 %v8742, %v8744
      %v8746 = vrot.slane %v8732, %v8745
      %v8747 = vcombine.low %v8739, %v8746
      %v8748 = vcombine.low %v8057, %v8056
      %v8749 = vcombine.low %v8058, %v8066
      %v8751 = vunpack.c.l.s4 1983009808
      %v8752 = vunpack.c.0.s8 %v8751
      %v8753 = vlaneseq
      %v8754 = vshrl.u32 %v8753, 7
      %v8755 = vsub.s32 %v8752, %v8754
      %v8756 = vrot.slane %v8748, %v8755
      %v8758 = vunpack.c.l.s4 1983009808
      %v8759 = vunpack.c.0.s8 %v8758
      %v8760 = vlaneseq
      %v8761 = vshrl.u32 %v8760, 7
      %v8762 = vsub.s32 %v8759, %v8761
      %v8763 = vrot.slane %v8749, %v8762
      %v8764 = vcombine.low %v8756, %v8763
      %v8765 = vcombine.low %v8074, %v8073
      %v8766 = vcombine.low %v8075, %v8083
      %v8768 = vunpack.c.l.s4 1983009808
      %v8769 = vunpack.c.0.s8 %v8768
      %v8770 = vlaneseq
      %v8771 = vshrl.u32 %v8770, 7
      %v8772 = vsub.s32 %v8769, %v8771
      %v8773 = vrot.slane %v8765, %v8772
      %v8775 = vunpack.c.l.s4 1983009808
      %v8776 = vunpack.c.0.s8 %v8775
      %v8777 = vlaneseq
      %v8778 = vshrl.u32 %v8777, 7
      %v8779 = vsub.s32 %v8776, %v8778
      %v8780 = vrot.slane %v8766, %v8779
      %v8781 = vcombine.low %v8773, %v8780
      %v8782 = vcombine.low %v8090, %v8092
      %v8783 = vcombine.low %v8100, %v8108
      %v8785 = vunpack.c.l.s4 1983009808
      %v8786 = vunpack.c.0.s8 %v8785
      %v8787 = vlaneseq
      %v8788 = vshrl.u32 %v8787, 7
      %v8789 = vsub.s32 %v8786, %v8788
      %v8790 = vrot.slane %v8782, %v8789
      %v8792 = vunpack.c.l.s4 1983009808
      %v8793 = vunpack.c.0.s8 %v8792
      %v8794 = vlaneseq
      %v8795 = vshrl.u32 %v8794, 7
      %v8796 = vsub.s32 %v8793, %v8795
      %v8797 = vrot.slane %v8783, %v8796
      %v8798 = vcombine.low %v8790, %v8797
      %v8799 = vcombine.low %v8107, %v8109
      %v8800 = vcombine.low %v8117, %v8125
      %v8802 = vunpack.c.l.s4 1983009808
      %v8803 = vunpack.c.0.s8 %v8802
      %v8804 = vlaneseq
      %v8805 = vshrl.u32 %v8804, 7
      %v8806 = vsub.s32 %v8803, %v8805
      %v8807 = vrot.slane %v8799, %v8806
      %v8809 = vunpack.c.l.s4 1983009808
      %v8810 = vunpack.c.0.s8 %v8809
      %v8811 = vlaneseq
      %v8812 = vshrl.u32 %v8811, 7
      %v8813 = vsub.s32 %v8810, %v8812
      %v8814 = vrot.slane %v8800, %v8813
      %v8815 = vcombine.low %v8807, %v8814
      %v8816 = vcombine.low %v8126, %v8134
      %v8817 = vcombine.low %v8142, %v8141
      %v8819 = vunpack.c.l.s4 1983009808
      %v8820 = vunpack.c.0.s8 %v8819
      %v8821 = vlaneseq
      %v8822 = vshrl.u32 %v8821, 7
      %v8823 = vsub.s32 %v8820, %v8822
      %v8824 = vrot.slane %v8816, %v8823
      %v8826 = vunpack.c.l.s4 1983009808
      %v8827 = vunpack.c.0.s8 %v8826
      %v8828 = vlaneseq
      %v8829 = vshrl.u32 %v8828, 7
      %v8830 = vsub.s32 %v8827, %v8829
      %v8831 = vrot.slane %v8817, %v8830
      %v8832 = vcombine.low %v8824, %v8831
      %v8833 = vcombine.low %v8143, %v8151
      %v8834 = vcombine.low %v8159, %v8158
      %v8836 = vunpack.c.l.s4 1983009808
      %v8837 = vunpack.c.0.s8 %v8836
      %v8838 = vlaneseq
      %v8839 = vshrl.u32 %v8838, 7
      %v8840 = vsub.s32 %v8837, %v8839
      %v8841 = vrot.slane %v8833, %v8840
      %v8843 = vunpack.c.l.s4 1983009808
      %v8844 = vunpack.c.0.s8 %v8843
      %v8845 = vlaneseq
      %v8846 = vshrl.u32 %v8845, 7
      %v8847 = vsub.s32 %v8844, %v8846
      %v8848 = vrot.slane %v8834, %v8847
      %v8849 = vcombine.low %v8841, %v8848
      %v8850 = vcombine.low %v8168, %v8176
      %v8851 = vcombine.low %v8175, %v8177
      %v8853 = vunpack.c.l.s4 1983009808
      %v8854 = vunpack.c.0.s8 %v8853
      %v8855 = vlaneseq
      %v8856 = vshrl.u32 %v8855, 7
      %v8857 = vsub.s32 %v8854, %v8856
      %v8858 = vrot.slane %v8850, %v8857
      %v8860 = vunpack.c.l.s4 1983009808
      %v8861 = vunpack.c.0.s8 %v8860
      %v8862 = vlaneseq
      %v8863 = vshrl.u32 %v8862, 7
      %v8864 = vsub.s32 %v8861, %v8863
      %v8865 = vrot.slane %v8851, %v8864
      %v8866 = vcombine.low %v8858, %v8865
      %v8867 = vcombine.low %v8185, %v8193
      %v8868 = vcombine.low %v8192, %v8194
      %v8870 = vunpack.c.l.s4 1983009808
      %v8871 = vunpack.c.0.s8 %v8870
      %v8872 = vlaneseq
      %v8873 = vshrl.u32 %v8872, 7
      %v8874 = vsub.s32 %v8871, %v8873
      %v8875 = vrot.slane %v8867, %v8874
      %v8877 = vunpack.c.l.s4 1983009808
      %v8878 = vunpack.c.0.s8 %v8877
      %v8879 = vlaneseq
      %v8880 = vshrl.u32 %v8879, 7
      %v8881 = vsub.s32 %v8878, %v8880
      %v8882 = vrot.slane %v8868, %v8881
      %v8883 = vcombine.low %v8875, %v8882
      %v8884 = vcombine.low %v8210, %v8209
      %v8885 = vcombine.low %v8211, %v8219
      %v8887 = vunpack.c.l.s4 1983009808
      %v8888 = vunpack.c.0.s8 %v8887
      %v8889 = vlaneseq
      %v8890 = vshrl.u32 %v8889, 7
      %v8891 = vsub.s32 %v8888, %v8890
      %v8892 = vrot.slane %v8884, %v8891
      %v8894 = vunpack.c.l.s4 1983009808
      %v8895 = vunpack.c.0.s8 %v8894
      %v8896 = vlaneseq
      %v8897 = vshrl.u32 %v8896, 7
      %v8898 = vsub.s32 %v8895, %v8897
      %v8899 = vrot.slane %v8885, %v8898
      %v8900 = vcombine.low %v8892, %v8899
      %v8901 = vcombine.low %v8227, %v8226
      %v8902 = vcombine.low %v8228, %v8236
      %v8904 = vunpack.c.l.s4 1983009808
      %v8905 = vunpack.c.0.s8 %v8904
      %v8906 = vlaneseq
      %v8907 = vshrl.u32 %v8906, 7
      %v8908 = vsub.s32 %v8905, %v8907
      %v8909 = vrot.slane %v8901, %v8908
      %v8911 = vunpack.c.l.s4 1983009808
      %v8912 = vunpack.c.0.s8 %v8911
      %v8913 = vlaneseq
      %v8914 = vshrl.u32 %v8913, 7
      %v8915 = vsub.s32 %v8912, %v8914
      %v8916 = vrot.slane %v8902, %v8915
      %v8917 = vcombine.low %v8909, %v8916
      %v8918 = vcombine.low %v8243, %v8245
      %v8919 = vcombine.low %v8253, %v8261
      %v8921 = vunpack.c.l.s4 1983009808
      %v8922 = vunpack.c.0.s8 %v8921
      %v8923 = vlaneseq
      %v8924 = vshrl.u32 %v8923, 7
      %v8925 = vsub.s32 %v8922, %v8924
      %v8926 = vrot.slane %v8918, %v8925
      %v8928 = vunpack.c.l.s4 1983009808
      %v8929 = vunpack.c.0.s8 %v8928
      %v8930 = vlaneseq
      %v8931 = vshrl.u32 %v8930, 7
      %v8932 = vsub.s32 %v8929, %v8931
      %v8933 = vrot.slane %v8919, %v8932
      %v8934 = vcombine.low %v8926, %v8933
      %v8935 = vcombine.low %v8260, %v8262
      %v8936 = vcombine.low %v8270, %v8278
      %v8938 = vunpack.c.l.s4 1983009808
      %v8939 = vunpack.c.0.s8 %v8938
      %v8940 = vlaneseq
      %v8941 = vshrl.u32 %v8940, 7
      %v8942 = vsub.s32 %v8939, %v8941
      %v8943 = vrot.slane %v8935, %v8942
      %v8945 = vunpack.c.l.s4 1983009808
      %v8946 = vunpack.c.0.s8 %v8945
      %v8947 = vlaneseq
      %v8948 = vshrl.u32 %v8947, 7
      %v8949 = vsub.s32 %v8946, %v8948
      %v8950 = vrot.slane %v8936, %v8949
      %v8951 = vcombine.low %v8943, %v8950
      %v8952 = vcombine.low %v8279, %v8287
      %v8953 = vcombine.low %v8295, %v8294
      %v8955 = vunpack.c.l.s4 1983009808
      %v8956 = vunpack.c.0.s8 %v8955
      %v8957 = vlaneseq
      %v8958 = vshrl.u32 %v8957, 7
      %v8959 = vsub.s32 %v8956, %v8958
      %v8960 = vrot.slane %v8952, %v8959
      %v8962 = vunpack.c.l.s4 1983009808
      %v8963 = vunpack.c.0.s8 %v8962
      %v8964 = vlaneseq
      %v8965 = vshrl.u32 %v8964, 7
      %v8966 = vsub.s32 %v8963, %v8965
      %v8967 = vrot.slane %v8953, %v8966
      %v8968 = vcombine.low %v8960, %v8967
      %v8969 = vcombine.low %v8296, %v8304
      %v8970 = vcombine.low %v8312, %v8311
      %v8972 = vunpack.c.l.s4 1983009808
      %v8973 = vunpack.c.0.s8 %v8972
      %v8974 = vlaneseq
      %v8975 = vshrl.u32 %v8974, 7
      %v8976 = vsub.s32 %v8973, %v8975
      %v8977 = vrot.slane %v8969, %v8976
      %v8979 = vunpack.c.l.s4 1983009808
      %v8980 = vunpack.c.0.s8 %v8979
      %v8981 = vlaneseq
      %v8982 = vshrl.u32 %v8981, 7
      %v8983 = vsub.s32 %v8980, %v8982
      %v8984 = vrot.slane %v8970, %v8983
      %v8985 = vcombine.low %v8977, %v8984
      %v8986 = vcombine.low %v8321, %v8329
      %v8987 = vcombine.low %v8328, %v8330
      %v8989 = vunpack.c.l.s4 1983009808
      %v8990 = vunpack.c.0.s8 %v8989
      %v8991 = vlaneseq
      %v8992 = vshrl.u32 %v8991, 7
      %v8993 = vsub.s32 %v8990, %v8992
      %v8994 = vrot.slane %v8986, %v8993
      %v8996 = vunpack.c.l.s4 1983009808
      %v8997 = vunpack.c.0.s8 %v8996
      %v8998 = vlaneseq
      %v8999 = vshrl.u32 %v8998, 7
      %v9000 = vsub.s32 %v8997, %v8999
      %v9001 = vrot.slane %v8987, %v9000
      %v9002 = vcombine.low %v8994, %v9001
      %v9003 = vcombine.low %v8338, %v8346
      %v9004 = vcombine.low %v8345, %v8347
      %v9006 = vunpack.c.l.s4 1983009808
      %v9007 = vunpack.c.0.s8 %v9006
      %v9008 = vlaneseq
      %v9009 = vshrl.u32 %v9008, 7
      %v9010 = vsub.s32 %v9007, %v9009
      %v9011 = vrot.slane %v9003, %v9010
      %v9013 = vunpack.c.l.s4 1983009808
      %v9014 = vunpack.c.0.s8 %v9013
      %v9015 = vlaneseq
      %v9016 = vshrl.u32 %v9015, 7
      %v9017 = vsub.s32 %v9014, %v9016
      %v9018 = vrot.slane %v9004, %v9017
      %v9019 = vcombine.low %v9011, %v9018
      %v9020 = vcombine.low %v8363, %v8362
      %v9021 = vcombine.low %v8364, %v8372
      %v9023 = vunpack.c.l.s4 1983009808
      %v9024 = vunpack.c.0.s8 %v9023
      %v9025 = vlaneseq
      %v9026 = vshrl.u32 %v9025, 7
      %v9027 = vsub.s32 %v9024, %v9026
      %v9028 = vrot.slane %v9020, %v9027
      %v9030 = vunpack.c.l.s4 1983009808
      %v9031 = vunpack.c.0.s8 %v9030
      %v9032 = vlaneseq
      %v9033 = vshrl.u32 %v9032, 7
      %v9034 = vsub.s32 %v9031, %v9033
      %v9035 = vrot.slane %v9021, %v9034
      %v9036 = vcombine.low %v9028, %v9035
      %v9037 = vcombine.low %v8380, %v8379
      %v9038 = vcombine.low %v8381, %v8389
      %v9040 = vunpack.c.l.s4 1983009808
      %v9041 = vunpack.c.0.s8 %v9040
      %v9042 = vlaneseq
      %v9043 = vshrl.u32 %v9042, 7
      %v9044 = vsub.s32 %v9041, %v9043
      %v9045 = vrot.slane %v9037, %v9044
      %v9047 = vunpack.c.l.s4 1983009808
      %v9048 = vunpack.c.0.s8 %v9047
      %v9049 = vlaneseq
      %v9050 = vshrl.u32 %v9049, 7
      %v9051 = vsub.s32 %v9048, %v9050
      %v9052 = vrot.slane %v9038, %v9051
      %v9053 = vcombine.low %v9045, %v9052
      %v9054 = vcombine.low %v8396, %v8398
      %v9055 = vcombine.low %v8406, %v8414
      %v9057 = vunpack.c.l.s4 1983009808
      %v9058 = vunpack.c.0.s8 %v9057
      %v9059 = vlaneseq
      %v9060 = vshrl.u32 %v9059, 7
      %v9061 = vsub.s32 %v9058, %v9060
      %v9062 = vrot.slane %v9054, %v9061
      %v9064 = vunpack.c.l.s4 1983009808
      %v9065 = vunpack.c.0.s8 %v9064
      %v9066 = vlaneseq
      %v9067 = vshrl.u32 %v9066, 7
      %v9068 = vsub.s32 %v9065, %v9067
      %v9069 = vrot.slane %v9055, %v9068
      %v9070 = vcombine.low %v9062, %v9069
      %v9071 = vcombine.low %v8413, %v8415
      %v9072 = vcombine.low %v8423, %v8431
      %v9074 = vunpack.c.l.s4 1983009808
      %v9075 = vunpack.c.0.s8 %v9074
      %v9076 = vlaneseq
      %v9077 = vshrl.u32 %v9076, 7
      %v9078 = vsub.s32 %v9075, %v9077
      %v9079 = vrot.slane %v9071, %v9078
      %v9081 = vunpack.c.l.s4 1983009808
      %v9082 = vunpack.c.0.s8 %v9081
      %v9083 = vlaneseq
      %v9084 = vshrl.u32 %v9083, 7
      %v9085 = vsub.s32 %v9082, %v9084
      %v9086 = vrot.slane %v9072, %v9085
      %v9087 = vcombine.low %v9079, %v9086
      %v9088 = vcombine.low %v8432, %v8440
      %v9089 = vcombine.low %v8448, %v8447
      %v9091 = vunpack.c.l.s4 1983009808
      %v9092 = vunpack.c.0.s8 %v9091
      %v9093 = vlaneseq
      %v9094 = vshrl.u32 %v9093, 7
      %v9095 = vsub.s32 %v9092, %v9094
      %v9096 = vrot.slane %v9088, %v9095
      %v9098 = vunpack.c.l.s4 1983009808
      %v9099 = vunpack.c.0.s8 %v9098
      %v9100 = vlaneseq
      %v9101 = vshrl.u32 %v9100, 7
      %v9102 = vsub.s32 %v9099, %v9101
      %v9103 = vrot.slane %v9089, %v9102
      %v9104 = vcombine.low %v9096, %v9103
      %v9105 = vcombine.low %v8449, %v8457
      %v9106 = vcombine.low %v8465, %v8464
      %v9108 = vunpack.c.l.s4 1983009808
      %v9109 = vunpack.c.0.s8 %v9108
      %v9110 = vlaneseq
      %v9111 = vshrl.u32 %v9110, 7
      %v9112 = vsub.s32 %v9109, %v9111
      %v9113 = vrot.slane %v9105, %v9112
      %v9115 = vunpack.c.l.s4 1983009808
      %v9116 = vunpack.c.0.s8 %v9115
      %v9117 = vlaneseq
      %v9118 = vshrl.u32 %v9117, 7
      %v9119 = vsub.s32 %v9116, %v9118
      %v9120 = vrot.slane %v9106, %v9119
      %v9121 = vcombine.low %v9113, %v9120
      %v9122 = vcombine.low %v8474, %v8482
      %v9123 = vcombine.low %v8481, %v8483
      %v9125 = vunpack.c.l.s4 1983009808
      %v9126 = vunpack.c.0.s8 %v9125
      %v9127 = vlaneseq
      %v9128 = vshrl.u32 %v9127, 7
      %v9129 = vsub.s32 %v9126, %v9128
      %v9130 = vrot.slane %v9122, %v9129
      %v9132 = vunpack.c.l.s4 1983009808
      %v9133 = vunpack.c.0.s8 %v9132
      %v9134 = vlaneseq
      %v9135 = vshrl.u32 %v9134, 7
      %v9136 = vsub.s32 %v9133, %v9135
      %v9137 = vrot.slane %v9123, %v9136
      %v9138 = vcombine.low %v9130, %v9137
      %v9139 = vcombine.low %v8491, %v8499
      %v9140 = vcombine.low %v8498, %v8500
      %v9142 = vunpack.c.l.s4 1983009808
      %v9143 = vunpack.c.0.s8 %v9142
      %v9144 = vlaneseq
      %v9145 = vshrl.u32 %v9144, 7
      %v9146 = vsub.s32 %v9143, %v9145
      %v9147 = vrot.slane %v9139, %v9146
      %v9149 = vunpack.c.l.s4 1983009808
      %v9150 = vunpack.c.0.s8 %v9149
      %v9151 = vlaneseq
      %v9152 = vshrl.u32 %v9151, 7
      %v9153 = vsub.s32 %v9150, %v9152
      %v9154 = vrot.slane %v9140, %v9153
      %v9155 = vcombine.low %v9147, %v9154
      %v9156 = vcombine.low %v8516, %v8515
      %v9157 = vcombine.low %v8517, %v8525
      %v9159 = vunpack.c.l.s4 1983009808
      %v9160 = vunpack.c.0.s8 %v9159
      %v9161 = vlaneseq
      %v9162 = vshrl.u32 %v9161, 7
      %v9163 = vsub.s32 %v9160, %v9162
      %v9164 = vrot.slane %v9156, %v9163
      %v9166 = vunpack.c.l.s4 1983009808
      %v9167 = vunpack.c.0.s8 %v9166
      %v9168 = vlaneseq
      %v9169 = vshrl.u32 %v9168, 7
      %v9170 = vsub.s32 %v9167, %v9169
      %v9171 = vrot.slane %v9157, %v9170
      %v9172 = vcombine.low %v9164, %v9171
      %v9173 = vcombine.low %v8533, %v8532
      %v9174 = vcombine.low %v8534, %v8542
      %v9176 = vunpack.c.l.s4 1983009808
      %v9177 = vunpack.c.0.s8 %v9176
      %v9178 = vlaneseq
      %v9179 = vshrl.u32 %v9178, 7
      %v9180 = vsub.s32 %v9177, %v9179
      %v9181 = vrot.slane %v9173, %v9180
      %v9183 = vunpack.c.l.s4 1983009808
      %v9184 = vunpack.c.0.s8 %v9183
      %v9185 = vlaneseq
      %v9186 = vshrl.u32 %v9185, 7
      %v9187 = vsub.s32 %v9184, %v9186
      %v9188 = vrot.slane %v9174, %v9187
      %v9189 = vcombine.low %v9181, %v9188
      %v9190 = vcombine.low %v8549, %v8551
      %v9191 = vcombine.low %v8559, %v8567
      %v9193 = vunpack.c.l.s4 1983009808
      %v9194 = vunpack.c.0.s8 %v9193
      %v9195 = vlaneseq
      %v9196 = vshrl.u32 %v9195, 7
      %v9197 = vsub.s32 %v9194, %v9196
      %v9198 = vrot.slane %v9190, %v9197
      %v9200 = vunpack.c.l.s4 1983009808
      %v9201 = vunpack.c.0.s8 %v9200
      %v9202 = vlaneseq
      %v9203 = vshrl.u32 %v9202, 7
      %v9204 = vsub.s32 %v9201, %v9203
      %v9205 = vrot.slane %v9191, %v9204
      %v9206 = vcombine.low %v9198, %v9205
      %v9207 = vcombine.low %v8566, %v8568
      %v9208 = vcombine.low %v8576, %v8584
      %v9210 = vunpack.c.l.s4 1983009808
      %v9211 = vunpack.c.0.s8 %v9210
      %v9212 = vlaneseq
      %v9213 = vshrl.u32 %v9212, 7
      %v9214 = vsub.s32 %v9211, %v9213
      %v9215 = vrot.slane %v9207, %v9214
      %v9217 = vunpack.c.l.s4 1983009808
      %v9218 = vunpack.c.0.s8 %v9217
      %v9219 = vlaneseq
      %v9220 = vshrl.u32 %v9219, 7
      %v9221 = vsub.s32 %v9218, %v9220
      %v9222 = vrot.slane %v9208, %v9221
      %v9223 = vcombine.low %v9215, %v9222
      %v9224 = vcombine.low %v8585, %v8593
      %v9225 = vcombine.low %v8601, %v8600
      %v9227 = vunpack.c.l.s4 1983009808
      %v9228 = vunpack.c.0.s8 %v9227
      %v9229 = vlaneseq
      %v9230 = vshrl.u32 %v9229, 7
      %v9231 = vsub.s32 %v9228, %v9230
      %v9232 = vrot.slane %v9224, %v9231
      %v9234 = vunpack.c.l.s4 1983009808
      %v9235 = vunpack.c.0.s8 %v9234
      %v9236 = vlaneseq
      %v9237 = vshrl.u32 %v9236, 7
      %v9238 = vsub.s32 %v9235, %v9237
      %v9239 = vrot.slane %v9225, %v9238
      %v9240 = vcombine.low %v9232, %v9239
      %v9241 = vcombine.low %v8602, %v8610
      %v9242 = vcombine.low %v8618, %v8617
      %v9244 = vunpack.c.l.s4 1983009808
      %v9245 = vunpack.c.0.s8 %v9244
      %v9246 = vlaneseq
      %v9247 = vshrl.u32 %v9246, 7
      %v9248 = vsub.s32 %v9245, %v9247
      %v9249 = vrot.slane %v9241, %v9248
      %v9251 = vunpack.c.l.s4 1983009808
      %v9252 = vunpack.c.0.s8 %v9251
      %v9253 = vlaneseq
      %v9254 = vshrl.u32 %v9253, 7
      %v9255 = vsub.s32 %v9252, %v9254
      %v9256 = vrot.slane %v9242, %v9255
      %v9257 = vcombine.low %v9249, %v9256
      %v9291 = vunpack.c.l.s4 1983009808
      %v9292 = vunpack.c.0.s8 %v9291
      %v9293 = vlaneseq
      %v9294 = vshrl.u32 %v9293, 7
      %v9295 = vsub.s32 %v9292, %v9294
      %v9296 = vrot.slane %v8049, %v9295
      %v9298 = vunpack.c.l.s4 1983009808
      %v9299 = vunpack.c.0.s8 %v9298
      %v9300 = vlaneseq
      %v9301 = vshrl.u32 %v9300, 7
      %v9302 = vsub.s32 %v9299, %v9301
      %v9303 = vrot.slane %v8091, %v9302
      %v9305 = vunpack.c.l.s4 1983009808
      %v9306 = vunpack.c.0.s8 %v9305
      %v9307 = vlaneseq
      %v9308 = vshrl.u32 %v9307, 7
      %v9309 = vsub.s32 %v9306, %v9308
      %v9310 = vrot.slane %v8124, %v9309
      %v9312 = vunpack.c.l.s4 1983009808
      %v9313 = vunpack.c.0.s8 %v9312
      %v9314 = vlaneseq
      %v9315 = vshrl.u32 %v9314, 7
      %v9316 = vsub.s32 %v9313, %v9315
      %v9317 = vrot.slane %v8160, %v9316
      %v9319 = vunpack.c.l.s4 1983009808
      %v9320 = vunpack.c.0.s8 %v9319
      %v9321 = vlaneseq
      %v9322 = vshrl.u32 %v9321, 7
      %v9323 = vsub.s32 %v9320, %v9322
      %v9324 = vrot.slane %v8202, %v9323
      %v9326 = vunpack.c.l.s4 1983009808
      %v9327 = vunpack.c.0.s8 %v9326
      %v9328 = vlaneseq
      %v9329 = vshrl.u32 %v9328, 7
      %v9330 = vsub.s32 %v9327, %v9329
      %v9331 = vrot.slane %v8244, %v9330
      %v9333 = vunpack.c.l.s4 1983009808
      %v9334 = vunpack.c.0.s8 %v9333
      %v9335 = vlaneseq
      %v9336 = vshrl.u32 %v9335, 7
      %v9337 = vsub.s32 %v9334, %v9336
      %v9338 = vrot.slane %v8277, %v9337
      %v9340 = vunpack.c.l.s4 1983009808
      %v9341 = vunpack.c.0.s8 %v9340
      %v9342 = vlaneseq
      %v9343 = vshrl.u32 %v9342, 7
      %v9344 = vsub.s32 %v9341, %v9343
      %v9345 = vrot.slane %v8313, %v9344
      %v9347 = vunpack.c.l.s4 1983009808
      %v9348 = vunpack.c.0.s8 %v9347
      %v9349 = vlaneseq
      %v9350 = vshrl.u32 %v9349, 7
      %v9351 = vsub.s32 %v9348, %v9350
      %v9352 = vrot.slane %v8355, %v9351
      %v9354 = vunpack.c.l.s4 1983009808
      %v9355 = vunpack.c.0.s8 %v9354
      %v9356 = vlaneseq
      %v9357 = vshrl.u32 %v9356, 7
      %v9358 = vsub.s32 %v9355, %v9357
      %v9359 = vrot.slane %v8397, %v9358
      %v9361 = vunpack.c.l.s4 1983009808
      %v9362 = vunpack.c.0.s8 %v9361
      %v9363 = vlaneseq
      %v9364 = vshrl.u32 %v9363, 7
      %v9365 = vsub.s32 %v9362, %v9364
      %v9366 = vrot.slane %v8430, %v9365
      %v9368 = vunpack.c.l.s4 1983009808
      %v9369 = vunpack.c.0.s8 %v9368
      %v9370 = vlaneseq
      %v9371 = vshrl.u32 %v9370, 7
      %v9372 = vsub.s32 %v9369, %v9371
      %v9373 = vrot.slane %v8466, %v9372
      %v9375 = vunpack.c.l.s4 1983009808
      %v9376 = vunpack.c.0.s8 %v9375
      %v9377 = vlaneseq
      %v9378 = vshrl.u32 %v9377, 7
      %v9379 = vsub.s32 %v9376, %v9378
      %v9380 = vrot.slane %v8508, %v9379
      %v9382 = vunpack.c.l.s4 1983009808
      %v9383 = vunpack.c.0.s8 %v9382
      %v9384 = vlaneseq
      %v9385 = vshrl.u32 %v9384, 7
      %v9386 = vsub.s32 %v9383, %v9385
      %v9387 = vrot.slane %v8550, %v9386
      %v9389 = vunpack.c.l.s4 1983009808
      %v9390 = vunpack.c.0.s8 %v9389
      %v9391 = vlaneseq
      %v9392 = vshrl.u32 %v9391, 7
      %v9393 = vsub.s32 %v9390, %v9392
      %v9394 = vrot.slane %v8583, %v9393
      %v9396 = vunpack.c.l.s4 1983009808
      %v9397 = vunpack.c.0.s8 %v9396
      %v9398 = vlaneseq
      %v9399 = vshrl.u32 %v9398, 7
      %v9400 = vsub.s32 %v9397, %v9399
      %v9401 = vrot.slane %v8619, %v9400
      %v9402 = vrot.slane %v8730, 1
      %v9403 = vrot.slane %v8747, 1
      %v9404 = vsel %vm732, %v9402, %v9403
      %v9405 = vrot.slane %v9296, 1
      %v9406 = vsel %vm732, %v9403, %v9405
      %v9407 = vrot.slane %v8764, 1
      %v9408 = vrot.slane %v8781, 1
      %v9409 = vsel %vm732, %v9407, %v9408
      %v9410 = vrot.slane %v9303, 1
      %v9411 = vsel %vm732, %v9408, %v9410
      %v9412 = vrot.slane %v8798, 1
      %v9413 = vrot.slane %v8815, 1
      %v9414 = vsel %vm732, %v9412, %v9413
      %v9415 = vrot.slane %v9310, 1
      %v9416 = vsel %vm732, %v9413, %v9415
      %v9417 = vrot.slane %v8832, 1
      %v9418 = vrot.slane %v8849, 1
      %v9419 = vsel %vm732, %v9417, %v9418
      %v9420 = vrot.slane %v9317, 1
      %v9421 = vsel %vm732, %v9418, %v9420
      %v9422 = vrot.slane %v8866, 1
      %v9423 = vrot.slane %v8883, 1
      %v9424 = vsel %vm732, %v9422, %v9423
      %v9425 = vrot.slane %v9324, 1
      %v9426 = vsel %vm732, %v9423, %v9425
      %v9427 = vrot.slane %v8900, 1
      %v9428 = vrot.slane %v8917, 1
      %v9429 = vsel %vm732, %v9427, %v9428
      %v9430 = vrot.slane %v9331, 1
      %v9431 = vsel %vm732, %v9428, %v9430
      %v9432 = vrot.slane %v8934, 1
      %v9433 = vrot.slane %v8951, 1
      %v9434 = vsel %vm732, %v9432, %v9433
      %v9435 = vrot.slane %v9338, 1
      %v9436 = vsel %vm732, %v9433, %v9435
      %v9437 = vrot.slane %v8968, 1
      %v9438 = vrot.slane %v8985, 1
      %v9439 = vsel %vm732, %v9437, %v9438
      %v9440 = vrot.slane %v9345, 1
      %v9441 = vsel %vm732, %v9438, %v9440
      %v9442 = vrot.slane %v9002, 1
      %v9443 = vrot.slane %v9019, 1
      %v9444 = vsel %vm732, %v9442, %v9443
      %v9445 = vrot.slane %v9352, 1
      %v9446 = vsel %vm732, %v9443, %v9445
      %v9447 = vrot.slane %v9036, 1
      %v9448 = vrot.slane %v9053, 1
      %v9449 = vsel %vm732, %v9447, %v9448
      %v9450 = vrot.slane %v9359, 1
      %v9451 = vsel %vm732, %v9448, %v9450
      %v9452 = vrot.slane %v9070, 1
      %v9453 = vrot.slane %v9087, 1
      %v9454 = vsel %vm732, %v9452, %v9453
      %v9455 = vrot.slane %v9366, 1
      %v9456 = vsel %vm732, %v9453, %v9455
      %v9457 = vrot.slane %v9104, 1
      %v9458 = vrot.slane %v9121, 1
      %v9459 = vsel %vm732, %v9457, %v9458
      %v9460 = vrot.slane %v9373, 1
      %v9461 = vsel %vm732, %v9458, %v9460
      %v9462 = vrot.slane %v9138, 1
      %v9463 = vrot.slane %v9155, 1
      %v9464 = vsel %vm732, %v9462, %v9463
      %v9465 = vrot.slane %v9380, 1
      %v9466 = vsel %vm732, %v9463, %v9465
      %v9467 = vrot.slane %v9172, 1
      %v9468 = vrot.slane %v9189, 1
      %v9469 = vsel %vm732, %v9467, %v9468
      %v9470 = vrot.slane %v9387, 1
      %v9471 = vsel %vm732, %v9468, %v9470
      %v9472 = vrot.slane %v9206, 1
      %v9473 = vrot.slane %v9223, 1
      %v9474 = vsel %vm732, %v9472, %v9473
      %v9475 = vrot.slane %v9394, 1
      %v9476 = vsel %vm732, %v9473, %v9475
      %v9477 = vrot.slane %v9240, 1
      %v9478 = vrot.slane %v9257, 1
      %v9479 = vsel %vm732, %v9477, %v9478
      %v9480 = vrot.slane %v9401, 1
      %v9481 = vsel %vm732, %v9478, %v9480
      %9482 = vrot.lane.b32.xlu0 %v9404, 16
      %v9483 = vpop.permute.xlu0 %9482
      %9484 = vrot.lane.b32.xlu0 %v9406, 16
      %v9485 = vpop.permute.xlu0 %9484
      %9486 = vrot.lane.b32.xlu0 %v9409, 16
      %v9487 = vpop.permute.xlu0 %9486
      %9488 = vrot.lane.b32.xlu0 %v9411, 16
      %v9489 = vpop.permute.xlu0 %9488
      %9490 = vrot.lane.b32.xlu0 %v9414, 16
      %v9491 = vpop.permute.xlu0 %9490
      %9492 = vrot.lane.b32.xlu0 %v9416, 16
      %v9493 = vpop.permute.xlu0 %9492
      %9494 = vrot.lane.b32.xlu0 %v9419, 16
      %v9495 = vpop.permute.xlu0 %9494
      %9496 = vrot.lane.b32.xlu0 %v9421, 16
      %v9497 = vpop.permute.xlu0 %9496
      %9498 = vrot.lane.b32.xlu0 %v9424, 16
      %v9499 = vpop.permute.xlu0 %9498
      %9500 = vrot.lane.b32.xlu0 %v9426, 16
      %v9501 = vpop.permute.xlu0 %9500
      %9502 = vrot.lane.b32.xlu0 %v9429, 16
      %v9503 = vpop.permute.xlu0 %9502
      %9504 = vrot.lane.b32.xlu0 %v9431, 16
      %v9505 = vpop.permute.xlu0 %9504
      %9506 = vrot.lane.b32.xlu0 %v9434, 16
      %v9507 = vpop.permute.xlu0 %9506
      %9508 = vrot.lane.b32.xlu0 %v9436, 16
      %v9509 = vpop.permute.xlu0 %9508
      %9510 = vrot.lane.b32.xlu0 %v9439, 16
      %v9511 = vpop.permute.xlu0 %9510
      %9512 = vrot.lane.b32.xlu0 %v9441, 16
      %v9513 = vpop.permute.xlu0 %9512
      %9514 = vrot.lane.b32.xlu0 %v9444, 16
      %v9515 = vpop.permute.xlu0 %9514
      %9516 = vrot.lane.b32.xlu0 %v9446, 16
      %v9517 = vpop.permute.xlu0 %9516
      %9518 = vrot.lane.b32.xlu0 %v9449, 16
      %v9519 = vpop.permute.xlu0 %9518
      %9520 = vrot.lane.b32.xlu0 %v9451, 16
      %v9521 = vpop.permute.xlu0 %9520
      %9522 = vrot.lane.b32.xlu0 %v9454, 16
      %v9523 = vpop.permute.xlu0 %9522
      %9524 = vrot.lane.b32.xlu0 %v9456, 16
      %v9525 = vpop.permute.xlu0 %9524
      %9526 = vrot.lane.b32.xlu0 %v9459, 16
      %v9527 = vpop.permute.xlu0 %9526
      %9528 = vrot.lane.b32.xlu0 %v9461, 16
      %v9529 = vpop.permute.xlu0 %9528
      %9530 = vrot.lane.b32.xlu0 %v9464, 16
      %v9531 = vpop.permute.xlu0 %9530
      %9532 = vrot.lane.b32.xlu0 %v9466, 16
      %v9533 = vpop.permute.xlu0 %9532
      %9534 = vrot.lane.b32.xlu0 %v9469, 16
      %v9535 = vpop.permute.xlu0 %9534
      %9536 = vrot.lane.b32.xlu0 %v9471, 16
      %v9537 = vpop.permute.xlu0 %9536
      %9538 = vrot.lane.b32.xlu0 %v9474, 16
      %v9539 = vpop.permute.xlu0 %9538
      %9540 = vrot.lane.b32.xlu0 %v9476, 16
      %v9541 = vpop.permute.xlu0 %9540
      %9542 = vrot.lane.b32.xlu0 %v9479, 16
      %v9543 = vpop.permute.xlu0 %9542
      %9544 = vrot.lane.b32.xlu0 %v9481, 16
      %v9545 = vpop.permute.xlu0 %9544
      %v9578 = vcombine.low %v8023, %v8022
      %v9579 = vcombine.low %v8024, %v8032
      %v9581 = vunpack.c.l.s4 1983009808
      %v9582 = vunpack.c.0.s8 %v9581
      %v9583 = vlaneseq
      %v9584 = vshrl.u32 %v9583, 7
      %v9585 = vsub.s32 %v9582, %v9584
      %v9586 = vrot.slane %v9578, %v9585
      %v9588 = vunpack.c.l.s4 1983009808
      %v9589 = vunpack.c.0.s8 %v9588
      %v9590 = vlaneseq
      %v9591 = vshrl.u32 %v9590, 7
      %v9592 = vsub.s32 %v9589, %v9591
      %v9593 = vrot.slane %v9579, %v9592
      %v9594 = vcombine.low %v9586, %v9593
      %v9595 = vcombine.low %v8040, %v8039
      %v9596 = vcombine.low %v8041, %v8049
      %v9598 = vunpack.c.l.s4 1983009808
      %v9599 = vunpack.c.0.s8 %v9598
      %v9600 = vlaneseq
      %v9601 = vshrl.u32 %v9600, 7
      %v9602 = vsub.s32 %v9599, %v9601
      %v9603 = vrot.slane %v9595, %v9602
      %v9605 = vunpack.c.l.s4 1983009808
      %v9606 = vunpack.c.0.s8 %v9605
      %v9607 = vlaneseq
      %v9608 = vshrl.u32 %v9607, 7
      %v9609 = vsub.s32 %v9606, %v9608
      %v9610 = vrot.slane %v9596, %v9609
      %v9611 = vcombine.low %v9603, %v9610
      %v9612 = vcombine.low %v8056, %v8058
      %v9613 = vcombine.low %v8066, %v8074
      %v9615 = vunpack.c.l.s4 1983009808
      %v9616 = vunpack.c.0.s8 %v9615
      %v9617 = vlaneseq
      %v9618 = vshrl.u32 %v9617, 7
      %v9619 = vsub.s32 %v9616, %v9618
      %v9620 = vrot.slane %v9612, %v9619
      %v9622 = vunpack.c.l.s4 1983009808
      %v9623 = vunpack.c.0.s8 %v9622
      %v9624 = vlaneseq
      %v9625 = vshrl.u32 %v9624, 7
      %v9626 = vsub.s32 %v9623, %v9625
      %v9627 = vrot.slane %v9613, %v9626
      %v9628 = vcombine.low %v9620, %v9627
      %v9629 = vcombine.low %v8073, %v8075
      %v9630 = vcombine.low %v8083, %v8091
      %v9632 = vunpack.c.l.s4 1983009808
      %v9633 = vunpack.c.0.s8 %v9632
      %v9634 = vlaneseq
      %v9635 = vshrl.u32 %v9634, 7
      %v9636 = vsub.s32 %v9633, %v9635
      %v9637 = vrot.slane %v9629, %v9636
      %v9639 = vunpack.c.l.s4 1983009808
      %v9640 = vunpack.c.0.s8 %v9639
      %v9641 = vlaneseq
      %v9642 = vshrl.u32 %v9641, 7
      %v9643 = vsub.s32 %v9640, %v9642
      %v9644 = vrot.slane %v9630, %v9643
      %v9645 = vcombine.low %v9637, %v9644
      %v9646 = vcombine.low %v8092, %v8100
      %v9647 = vcombine.low %v8108, %v8107
      %v9649 = vunpack.c.l.s4 1983009808
      %v9650 = vunpack.c.0.s8 %v9649
      %v9651 = vlaneseq
      %v9652 = vshrl.u32 %v9651, 7
      %v9653 = vsub.s32 %v9650, %v9652
      %v9654 = vrot.slane %v9646, %v9653
      %v9656 = vunpack.c.l.s4 1983009808
      %v9657 = vunpack.c.0.s8 %v9656
      %v9658 = vlaneseq
      %v9659 = vshrl.u32 %v9658, 7
      %v9660 = vsub.s32 %v9657, %v9659
      %v9661 = vrot.slane %v9647, %v9660
      %v9662 = vcombine.low %v9654, %v9661
      %v9663 = vcombine.low %v8109, %v8117
      %v9664 = vcombine.low %v8125, %v8124
      %v9666 = vunpack.c.l.s4 1983009808
      %v9667 = vunpack.c.0.s8 %v9666
      %v9668 = vlaneseq
      %v9669 = vshrl.u32 %v9668, 7
      %v9670 = vsub.s32 %v9667, %v9669
      %v9671 = vrot.slane %v9663, %v9670
      %v9673 = vunpack.c.l.s4 1983009808
      %v9674 = vunpack.c.0.s8 %v9673
      %v9675 = vlaneseq
      %v9676 = vshrl.u32 %v9675, 7
      %v9677 = vsub.s32 %v9674, %v9676
      %v9678 = vrot.slane %v9664, %v9677
      %v9679 = vcombine.low %v9671, %v9678
      %v9680 = vcombine.low %v8134, %v8142
      %v9681 = vcombine.low %v8141, %v8143
      %v9683 = vunpack.c.l.s4 1983009808
      %v9684 = vunpack.c.0.s8 %v9683
      %v9685 = vlaneseq
      %v9686 = vshrl.u32 %v9685, 7
      %v9687 = vsub.s32 %v9684, %v9686
      %v9688 = vrot.slane %v9680, %v9687
      %v9690 = vunpack.c.l.s4 1983009808
      %v9691 = vunpack.c.0.s8 %v9690
      %v9692 = vlaneseq
      %v9693 = vshrl.u32 %v9692, 7
      %v9694 = vsub.s32 %v9691, %v9693
      %v9695 = vrot.slane %v9681, %v9694
      %v9696 = vcombine.low %v9688, %v9695
      %v9697 = vcombine.low %v8151, %v8159
      %v9698 = vcombine.low %v8158, %v8160
      %v9700 = vunpack.c.l.s4 1983009808
      %v9701 = vunpack.c.0.s8 %v9700
      %v9702 = vlaneseq
      %v9703 = vshrl.u32 %v9702, 7
      %v9704 = vsub.s32 %v9701, %v9703
      %v9705 = vrot.slane %v9697, %v9704
      %v9707 = vunpack.c.l.s4 1983009808
      %v9708 = vunpack.c.0.s8 %v9707
      %v9709 = vlaneseq
      %v9710 = vshrl.u32 %v9709, 7
      %v9711 = vsub.s32 %v9708, %v9710
      %v9712 = vrot.slane %v9698, %v9711
      %v9713 = vcombine.low %v9705, %v9712
      %v9714 = vcombine.low %v8176, %v8175
      %v9715 = vcombine.low %v8177, %v8185
      %v9717 = vunpack.c.l.s4 1983009808
      %v9718 = vunpack.c.0.s8 %v9717
      %v9719 = vlaneseq
      %v9720 = vshrl.u32 %v9719, 7
      %v9721 = vsub.s32 %v9718, %v9720
      %v9722 = vrot.slane %v9714, %v9721
      %v9724 = vunpack.c.l.s4 1983009808
      %v9725 = vunpack.c.0.s8 %v9724
      %v9726 = vlaneseq
      %v9727 = vshrl.u32 %v9726, 7
      %v9728 = vsub.s32 %v9725, %v9727
      %v9729 = vrot.slane %v9715, %v9728
      %v9730 = vcombine.low %v9722, %v9729
      %v9731 = vcombine.low %v8193, %v8192
      %v9732 = vcombine.low %v8194, %v8202
      %v9734 = vunpack.c.l.s4 1983009808
      %v9735 = vunpack.c.0.s8 %v9734
      %v9736 = vlaneseq
      %v9737 = vshrl.u32 %v9736, 7
      %v9738 = vsub.s32 %v9735, %v9737
      %v9739 = vrot.slane %v9731, %v9738
      %v9741 = vunpack.c.l.s4 1983009808
      %v9742 = vunpack.c.0.s8 %v9741
      %v9743 = vlaneseq
      %v9744 = vshrl.u32 %v9743, 7
      %v9745 = vsub.s32 %v9742, %v9744
      %v9746 = vrot.slane %v9732, %v9745
      %v9747 = vcombine.low %v9739, %v9746
      %v9748 = vcombine.low %v8209, %v8211
      %v9749 = vcombine.low %v8219, %v8227
      %v9751 = vunpack.c.l.s4 1983009808
      %v9752 = vunpack.c.0.s8 %v9751
      %v9753 = vlaneseq
      %v9754 = vshrl.u32 %v9753, 7
      %v9755 = vsub.s32 %v9752, %v9754
      %v9756 = vrot.slane %v9748, %v9755
      %v9758 = vunpack.c.l.s4 1983009808
      %v9759 = vunpack.c.0.s8 %v9758
      %v9760 = vlaneseq
      %v9761 = vshrl.u32 %v9760, 7
      %v9762 = vsub.s32 %v9759, %v9761
      %v9763 = vrot.slane %v9749, %v9762
      %v9764 = vcombine.low %v9756, %v9763
      %v9765 = vcombine.low %v8226, %v8228
      %v9766 = vcombine.low %v8236, %v8244
      %v9768 = vunpack.c.l.s4 1983009808
      %v9769 = vunpack.c.0.s8 %v9768
      %v9770 = vlaneseq
      %v9771 = vshrl.u32 %v9770, 7
      %v9772 = vsub.s32 %v9769, %v9771
      %v9773 = vrot.slane %v9765, %v9772
      %v9775 = vunpack.c.l.s4 1983009808
      %v9776 = vunpack.c.0.s8 %v9775
      %v9777 = vlaneseq
      %v9778 = vshrl.u32 %v9777, 7
      %v9779 = vsub.s32 %v9776, %v9778
      %v9780 = vrot.slane %v9766, %v9779
      %v9781 = vcombine.low %v9773, %v9780
      %v9782 = vcombine.low %v8245, %v8253
      %v9783 = vcombine.low %v8261, %v8260
      %v9785 = vunpack.c.l.s4 1983009808
      %v9786 = vunpack.c.0.s8 %v9785
      %v9787 = vlaneseq
      %v9788 = vshrl.u32 %v9787, 7
      %v9789 = vsub.s32 %v9786, %v9788
      %v9790 = vrot.slane %v9782, %v9789
      %v9792 = vunpack.c.l.s4 1983009808
      %v9793 = vunpack.c.0.s8 %v9792
      %v9794 = vlaneseq
      %v9795 = vshrl.u32 %v9794, 7
      %v9796 = vsub.s32 %v9793, %v9795
      %v9797 = vrot.slane %v9783, %v9796
      %v9798 = vcombine.low %v9790, %v9797
      %v9799 = vcombine.low %v8262, %v8270
      %v9800 = vcombine.low %v8278, %v8277
      %v9802 = vunpack.c.l.s4 1983009808
      %v9803 = vunpack.c.0.s8 %v9802
      %v9804 = vlaneseq
      %v9805 = vshrl.u32 %v9804, 7
      %v9806 = vsub.s32 %v9803, %v9805
      %v9807 = vrot.slane %v9799, %v9806
      %v9809 = vunpack.c.l.s4 1983009808
      %v9810 = vunpack.c.0.s8 %v9809
      %v9811 = vlaneseq
      %v9812 = vshrl.u32 %v9811, 7
      %v9813 = vsub.s32 %v9810, %v9812
      %v9814 = vrot.slane %v9800, %v9813
      %v9815 = vcombine.low %v9807, %v9814
      %v9816 = vcombine.low %v8287, %v8295
      %v9817 = vcombine.low %v8294, %v8296
      %v9819 = vunpack.c.l.s4 1983009808
      %v9820 = vunpack.c.0.s8 %v9819
      %v9821 = vlaneseq
      %v9822 = vshrl.u32 %v9821, 7
      %v9823 = vsub.s32 %v9820, %v9822
      %v9824 = vrot.slane %v9816, %v9823
      %v9826 = vunpack.c.l.s4 1983009808
      %v9827 = vunpack.c.0.s8 %v9826
      %v9828 = vlaneseq
      %v9829 = vshrl.u32 %v9828, 7
      %v9830 = vsub.s32 %v9827, %v9829
      %v9831 = vrot.slane %v9817, %v9830
      %v9832 = vcombine.low %v9824, %v9831
      %v9833 = vcombine.low %v8304, %v8312
      %v9834 = vcombine.low %v8311, %v8313
      %v9836 = vunpack.c.l.s4 1983009808
      %v9837 = vunpack.c.0.s8 %v9836
      %v9838 = vlaneseq
      %v9839 = vshrl.u32 %v9838, 7
      %v9840 = vsub.s32 %v9837, %v9839
      %v9841 = vrot.slane %v9833, %v9840
      %v9843 = vunpack.c.l.s4 1983009808
      %v9844 = vunpack.c.0.s8 %v9843
      %v9845 = vlaneseq
      %v9846 = vshrl.u32 %v9845, 7
      %v9847 = vsub.s32 %v9844, %v9846
      %v9848 = vrot.slane %v9834, %v9847
      %v9849 = vcombine.low %v9841, %v9848
      %v9850 = vcombine.low %v8329, %v8328
      %v9851 = vcombine.low %v8330, %v8338
      %v9853 = vunpack.c.l.s4 1983009808
      %v9854 = vunpack.c.0.s8 %v9853
      %v9855 = vlaneseq
      %v9856 = vshrl.u32 %v9855, 7
      %v9857 = vsub.s32 %v9854, %v9856
      %v9858 = vrot.slane %v9850, %v9857
      %v9860 = vunpack.c.l.s4 1983009808
      %v9861 = vunpack.c.0.s8 %v9860
      %v9862 = vlaneseq
      %v9863 = vshrl.u32 %v9862, 7
      %v9864 = vsub.s32 %v9861, %v9863
      %v9865 = vrot.slane %v9851, %v9864
      %v9866 = vcombine.low %v9858, %v9865
      %v9867 = vcombine.low %v8346, %v8345
      %v9868 = vcombine.low %v8347, %v8355
      %v9870 = vunpack.c.l.s4 1983009808
      %v9871 = vunpack.c.0.s8 %v9870
      %v9872 = vlaneseq
      %v9873 = vshrl.u32 %v9872, 7
      %v9874 = vsub.s32 %v9871, %v9873
      %v9875 = vrot.slane %v9867, %v9874
      %v9877 = vunpack.c.l.s4 1983009808
      %v9878 = vunpack.c.0.s8 %v9877
      %v9879 = vlaneseq
      %v9880 = vshrl.u32 %v9879, 7
      %v9881 = vsub.s32 %v9878, %v9880
      %v9882 = vrot.slane %v9868, %v9881
      %v9883 = vcombine.low %v9875, %v9882
      %v9884 = vcombine.low %v8362, %v8364
      %v9885 = vcombine.low %v8372, %v8380
      %v9887 = vunpack.c.l.s4 1983009808
      %v9888 = vunpack.c.0.s8 %v9887
      %v9889 = vlaneseq
      %v9890 = vshrl.u32 %v9889, 7
      %v9891 = vsub.s32 %v9888, %v9890
      %v9892 = vrot.slane %v9884, %v9891
      %v9894 = vunpack.c.l.s4 1983009808
      %v9895 = vunpack.c.0.s8 %v9894
      %v9896 = vlaneseq
      %v9897 = vshrl.u32 %v9896, 7
      %v9898 = vsub.s32 %v9895, %v9897
      %v9899 = vrot.slane %v9885, %v9898
      %v9900 = vcombine.low %v9892, %v9899
      %v9901 = vcombine.low %v8379, %v8381
      %v9902 = vcombine.low %v8389, %v8397
      %v9904 = vunpack.c.l.s4 1983009808
      %v9905 = vunpack.c.0.s8 %v9904
      %v9906 = vlaneseq
      %v9907 = vshrl.u32 %v9906, 7
      %v9908 = vsub.s32 %v9905, %v9907
      %v9909 = vrot.slane %v9901, %v9908
      %v9911 = vunpack.c.l.s4 1983009808
      %v9912 = vunpack.c.0.s8 %v9911
      %v9913 = vlaneseq
      %v9914 = vshrl.u32 %v9913, 7
      %v9915 = vsub.s32 %v9912, %v9914
      %v9916 = vrot.slane %v9902, %v9915
      %v9917 = vcombine.low %v9909, %v9916
      %v9918 = vcombine.low %v8398, %v8406
      %v9919 = vcombine.low %v8414, %v8413
      %v9921 = vunpack.c.l.s4 1983009808
      %v9922 = vunpack.c.0.s8 %v9921
      %v9923 = vlaneseq
      %v9924 = vshrl.u32 %v9923, 7
      %v9925 = vsub.s32 %v9922, %v9924
      %v9926 = vrot.slane %v9918, %v9925
      %v9928 = vunpack.c.l.s4 1983009808
      %v9929 = vunpack.c.0.s8 %v9928
      %v9930 = vlaneseq
      %v9931 = vshrl.u32 %v9930, 7
      %v9932 = vsub.s32 %v9929, %v9931
      %v9933 = vrot.slane %v9919, %v9932
      %v9934 = vcombine.low %v9926, %v9933
      %v9935 = vcombine.low %v8415, %v8423
      %v9936 = vcombine.low %v8431, %v8430
      %v9938 = vunpack.c.l.s4 1983009808
      %v9939 = vunpack.c.0.s8 %v9938
      %v9940 = vlaneseq
      %v9941 = vshrl.u32 %v9940, 7
      %v9942 = vsub.s32 %v9939, %v9941
      %v9943 = vrot.slane %v9935, %v9942
      %v9945 = vunpack.c.l.s4 1983009808
      %v9946 = vunpack.c.0.s8 %v9945
      %v9947 = vlaneseq
      %v9948 = vshrl.u32 %v9947, 7
      %v9949 = vsub.s32 %v9946, %v9948
      %v9950 = vrot.slane %v9936, %v9949
      %v9951 = vcombine.low %v9943, %v9950
      %v9952 = vcombine.low %v8440, %v8448
      %v9953 = vcombine.low %v8447, %v8449
      %v9955 = vunpack.c.l.s4 1983009808
      %v9956 = vunpack.c.0.s8 %v9955
      %v9957 = vlaneseq
      %v9958 = vshrl.u32 %v9957, 7
      %v9959 = vsub.s32 %v9956, %v9958
      %v9960 = vrot.slane %v9952, %v9959
      %v9962 = vunpack.c.l.s4 1983009808
      %v9963 = vunpack.c.0.s8 %v9962
      %v9964 = vlaneseq
      %v9965 = vshrl.u32 %v9964, 7
      %v9966 = vsub.s32 %v9963, %v9965
      %v9967 = vrot.slane %v9953, %v9966
      %v9968 = vcombine.low %v9960, %v9967
      %v9969 = vcombine.low %v8457, %v8465
      %v9970 = vcombine.low %v8464, %v8466
      %v9972 = vunpack.c.l.s4 1983009808
      %v9973 = vunpack.c.0.s8 %v9972
      %v9974 = vlaneseq
      %v9975 = vshrl.u32 %v9974, 7
      %v9976 = vsub.s32 %v9973, %v9975
      %v9977 = vrot.slane %v9969, %v9976
      %v9979 = vunpack.c.l.s4 1983009808
      %v9980 = vunpack.c.0.s8 %v9979
      %v9981 = vlaneseq
      %v9982 = vshrl.u32 %v9981, 7
      %v9983 = vsub.s32 %v9980, %v9982
      %v9984 = vrot.slane %v9970, %v9983
      %v9985 = vcombine.low %v9977, %v9984
      %v9986 = vcombine.low %v8482, %v8481
      %v9987 = vcombine.low %v8483, %v8491
      %v9989 = vunpack.c.l.s4 1983009808
      %v9990 = vunpack.c.0.s8 %v9989
      %v9991 = vlaneseq
      %v9992 = vshrl.u32 %v9991, 7
      %v9993 = vsub.s32 %v9990, %v9992
      %v9994 = vrot.slane %v9986, %v9993
      %v9996 = vunpack.c.l.s4 1983009808
      %v9997 = vunpack.c.0.s8 %v9996
      %v9998 = vlaneseq
      %v9999 = vshrl.u32 %v9998, 7
      %v10000 = vsub.s32 %v9997, %v9999
      %v10001 = vrot.slane %v9987, %v10000
      %v10002 = vcombine.low %v9994, %v10001
      %v10003 = vcombine.low %v8499, %v8498
      %v10004 = vcombine.low %v8500, %v8508
      %v10006 = vunpack.c.l.s4 1983009808
      %v10007 = vunpack.c.0.s8 %v10006
      %v10008 = vlaneseq
      %v10009 = vshrl.u32 %v10008, 7
      %v10010 = vsub.s32 %v10007, %v10009
      %v10011 = vrot.slane %v10003, %v10010
      %v10013 = vunpack.c.l.s4 1983009808
      %v10014 = vunpack.c.0.s8 %v10013
      %v10015 = vlaneseq
      %v10016 = vshrl.u32 %v10015, 7
      %v10017 = vsub.s32 %v10014, %v10016
      %v10018 = vrot.slane %v10004, %v10017
      %v10019 = vcombine.low %v10011, %v10018
      %v10020 = vcombine.low %v8515, %v8517
      %v10021 = vcombine.low %v8525, %v8533
      %v10023 = vunpack.c.l.s4 1983009808
      %v10024 = vunpack.c.0.s8 %v10023
      %v10025 = vlaneseq
      %v10026 = vshrl.u32 %v10025, 7
      %v10027 = vsub.s32 %v10024, %v10026
      %v10028 = vrot.slane %v10020, %v10027
      %v10030 = vunpack.c.l.s4 1983009808
      %v10031 = vunpack.c.0.s8 %v10030
      %v10032 = vlaneseq
      %v10033 = vshrl.u32 %v10032, 7
      %v10034 = vsub.s32 %v10031, %v10033
      %v10035 = vrot.slane %v10021, %v10034
      %v10036 = vcombine.low %v10028, %v10035
      %v10037 = vcombine.low %v8532, %v8534
      %v10038 = vcombine.low %v8542, %v8550
      %v10040 = vunpack.c.l.s4 1983009808
      %v10041 = vunpack.c.0.s8 %v10040
      %v10042 = vlaneseq
      %v10043 = vshrl.u32 %v10042, 7
      %v10044 = vsub.s32 %v10041, %v10043
      %v10045 = vrot.slane %v10037, %v10044
      %v10047 = vunpack.c.l.s4 1983009808
      %v10048 = vunpack.c.0.s8 %v10047
      %v10049 = vlaneseq
      %v10050 = vshrl.u32 %v10049, 7
      %v10051 = vsub.s32 %v10048, %v10050
      %v10052 = vrot.slane %v10038, %v10051
      %v10053 = vcombine.low %v10045, %v10052
      %v10054 = vcombine.low %v8551, %v8559
      %v10055 = vcombine.low %v8567, %v8566
      %v10057 = vunpack.c.l.s4 1983009808
      %v10058 = vunpack.c.0.s8 %v10057
      %v10059 = vlaneseq
      %v10060 = vshrl.u32 %v10059, 7
      %v10061 = vsub.s32 %v10058, %v10060
      %v10062 = vrot.slane %v10054, %v10061
      %v10064 = vunpack.c.l.s4 1983009808
      %v10065 = vunpack.c.0.s8 %v10064
      %v10066 = vlaneseq
      %v10067 = vshrl.u32 %v10066, 7
      %v10068 = vsub.s32 %v10065, %v10067
      %v10069 = vrot.slane %v10055, %v10068
      %v10070 = vcombine.low %v10062, %v10069
      %v10071 = vcombine.low %v8568, %v8576
      %v10072 = vcombine.low %v8584, %v8583
      %v10074 = vunpack.c.l.s4 1983009808
      %v10075 = vunpack.c.0.s8 %v10074
      %v10076 = vlaneseq
      %v10077 = vshrl.u32 %v10076, 7
      %v10078 = vsub.s32 %v10075, %v10077
      %v10079 = vrot.slane %v10071, %v10078
      %v10081 = vunpack.c.l.s4 1983009808
      %v10082 = vunpack.c.0.s8 %v10081
      %v10083 = vlaneseq
      %v10084 = vshrl.u32 %v10083, 7
      %v10085 = vsub.s32 %v10082, %v10084
      %v10086 = vrot.slane %v10072, %v10085
      %v10087 = vcombine.low %v10079, %v10086
      %v10088 = vcombine.low %v8593, %v8601
      %v10089 = vcombine.low %v8600, %v8602
      %v10091 = vunpack.c.l.s4 1983009808
      %v10092 = vunpack.c.0.s8 %v10091
      %v10093 = vlaneseq
      %v10094 = vshrl.u32 %v10093, 7
      %v10095 = vsub.s32 %v10092, %v10094
      %v10096 = vrot.slane %v10088, %v10095
      %v10098 = vunpack.c.l.s4 1983009808
      %v10099 = vunpack.c.0.s8 %v10098
      %v10100 = vlaneseq
      %v10101 = vshrl.u32 %v10100, 7
      %v10102 = vsub.s32 %v10099, %v10101
      %v10103 = vrot.slane %v10089, %v10102
      %v10104 = vcombine.low %v10096, %v10103
      %v10105 = vcombine.low %v8610, %v8618
      %v10106 = vcombine.low %v8617, %v8619
      %v10108 = vunpack.c.l.s4 1983009808
      %v10109 = vunpack.c.0.s8 %v10108
      %v10110 = vlaneseq
      %v10111 = vshrl.u32 %v10110, 7
      %v10112 = vsub.s32 %v10109, %v10111
      %v10113 = vrot.slane %v10105, %v10112
      %v10115 = vunpack.c.l.s4 1983009808
      %v10116 = vunpack.c.0.s8 %v10115
      %v10117 = vlaneseq
      %v10118 = vshrl.u32 %v10117, 7
      %v10119 = vsub.s32 %v10116, %v10118
      %v10120 = vrot.slane %v10106, %v10119
      %v10121 = vcombine.low %v10113, %v10120
      %10122 = vrot.lane.b32.xlu0 %v9594, 32
      %v10123 = vpop.permute.xlu0 %10122
      %10124 = vrot.lane.b32.xlu0 %v9611, 32
      %v10125 = vpop.permute.xlu0 %10124
      %10126 = vrot.lane.b32.xlu0 %v9628, 32
      %v10127 = vpop.permute.xlu0 %10126
      %10128 = vrot.lane.b32.xlu0 %v9645, 32
      %v10129 = vpop.permute.xlu0 %10128
      %10130 = vrot.lane.b32.xlu0 %v9662, 32
      %v10131 = vpop.permute.xlu0 %10130
      %10132 = vrot.lane.b32.xlu0 %v9679, 32
      %v10133 = vpop.permute.xlu0 %10132
      %10134 = vrot.lane.b32.xlu0 %v9696, 32
      %v10135 = vpop.permute.xlu0 %10134
      %10136 = vrot.lane.b32.xlu0 %v9713, 32
      %v10137 = vpop.permute.xlu0 %10136
      %10138 = vrot.lane.b32.xlu0 %v9730, 32
      %v10139 = vpop.permute.xlu0 %10138
      %10140 = vrot.lane.b32.xlu0 %v9747, 32
      %v10141 = vpop.permute.xlu0 %10140
      %10142 = vrot.lane.b32.xlu0 %v9764, 32
      %v10143 = vpop.permute.xlu0 %10142
      %10144 = vrot.lane.b32.xlu0 %v9781, 32
      %v10145 = vpop.permute.xlu0 %10144
      %10146 = vrot.lane.b32.xlu0 %v9798, 32
      %v10147 = vpop.permute.xlu0 %10146
      %10148 = vrot.lane.b32.xlu0 %v9815, 32
      %v10149 = vpop.permute.xlu0 %10148
      %10150 = vrot.lane.b32.xlu0 %v9832, 32
      %v10151 = vpop.permute.xlu0 %10150
      %10152 = vrot.lane.b32.xlu0 %v9849, 32
      %v10153 = vpop.permute.xlu0 %10152
      %10154 = vrot.lane.b32.xlu0 %v9866, 32
      %v10155 = vpop.permute.xlu0 %10154
      %10156 = vrot.lane.b32.xlu0 %v9883, 32
      %v10157 = vpop.permute.xlu0 %10156
      %10158 = vrot.lane.b32.xlu0 %v9900, 32
      %v10159 = vpop.permute.xlu0 %10158
      %10160 = vrot.lane.b32.xlu0 %v9917, 32
      %v10161 = vpop.permute.xlu0 %10160
      %10162 = vrot.lane.b32.xlu0 %v9934, 32
      %v10163 = vpop.permute.xlu0 %10162
      %10164 = vrot.lane.b32.xlu0 %v9951, 32
      %v10165 = vpop.permute.xlu0 %10164
      %10166 = vrot.lane.b32.xlu0 %v9968, 32
      %v10167 = vpop.permute.xlu0 %10166
      %10168 = vrot.lane.b32.xlu0 %v9985, 32
      %v10169 = vpop.permute.xlu0 %10168
      %10170 = vrot.lane.b32.xlu0 %v10002, 32
      %v10171 = vpop.permute.xlu0 %10170
      %10172 = vrot.lane.b32.xlu0 %v10019, 32
      %v10173 = vpop.permute.xlu0 %10172
      %10174 = vrot.lane.b32.xlu0 %v10036, 32
      %v10175 = vpop.permute.xlu0 %10174
      %10176 = vrot.lane.b32.xlu0 %v10053, 32
      %v10177 = vpop.permute.xlu0 %10176
      %10178 = vrot.lane.b32.xlu0 %v10070, 32
      %v10179 = vpop.permute.xlu0 %10178
      %10180 = vrot.lane.b32.xlu0 %v10087, 32
      %v10181 = vpop.permute.xlu0 %10180
      %10182 = vrot.lane.b32.xlu0 %v10104, 32
      %v10183 = vpop.permute.xlu0 %10182
      %10184 = vrot.lane.b32.xlu0 %v10121, 32
      %v10185 = vpop.permute.xlu0 %10184
      %v10218 = vcombine.low %v8627, %v8635
      %v10219 = vcombine.low %v8634, %v8636
      %v10221 = vunpack.c.l.s4 1983009808
      %v10222 = vunpack.c.0.s8 %v10221
      %v10223 = vlaneseq
      %v10224 = vshrl.u32 %v10223, 7
      %v10225 = vsub.s32 %v10222, %v10224
      %v10226 = vrot.slane %v10218, %v10225
      %v10228 = vunpack.c.l.s4 1983009808
      %v10229 = vunpack.c.0.s8 %v10228
      %v10230 = vlaneseq
      %v10231 = vshrl.u32 %v10230, 7
      %v10232 = vsub.s32 %v10229, %v10231
      %v10233 = vrot.slane %v10219, %v10232
      %v10234 = vcombine.low %v10226, %v10233
      %v10235 = vcombine.low %v8644, %v8652
      %v10236 = vcombine.low %v8651, %v8653
      %v10238 = vunpack.c.l.s4 1983009808
      %v10239 = vunpack.c.0.s8 %v10238
      %v10240 = vlaneseq
      %v10241 = vshrl.u32 %v10240, 7
      %v10242 = vsub.s32 %v10239, %v10241
      %v10243 = vrot.slane %v10235, %v10242
      %v10245 = vunpack.c.l.s4 1983009808
      %v10246 = vunpack.c.0.s8 %v10245
      %v10247 = vlaneseq
      %v10248 = vshrl.u32 %v10247, 7
      %v10249 = vsub.s32 %v10246, %v10248
      %v10250 = vrot.slane %v10236, %v10249
      %v10251 = vcombine.low %v10243, %v10250
      %10252 = vrot.lane.b32.xlu0 %v8764, 48
      %v10253 = vpop.permute.xlu0 %10252
      %10254 = vrot.lane.b32.xlu0 %v8781, 48
      %v10255 = vpop.permute.xlu0 %10254
      %10256 = vrot.lane.b32.xlu0 %v8798, 48
      %v10257 = vpop.permute.xlu0 %10256
      %10258 = vrot.lane.b32.xlu0 %v8815, 48
      %v10259 = vpop.permute.xlu0 %10258
      %10260 = vrot.lane.b32.xlu0 %v8832, 48
      %v10261 = vpop.permute.xlu0 %10260
      %10262 = vrot.lane.b32.xlu0 %v8849, 48
      %v10263 = vpop.permute.xlu0 %10262
      %10264 = vrot.lane.b32.xlu0 %v8866, 48
      %v10265 = vpop.permute.xlu0 %10264
      %10266 = vrot.lane.b32.xlu0 %v8883, 48
      %v10267 = vpop.permute.xlu0 %10266
      %10268 = vrot.lane.b32.xlu0 %v8900, 48
      %v10269 = vpop.permute.xlu0 %10268
      %10270 = vrot.lane.b32.xlu0 %v8917, 48
      %v10271 = vpop.permute.xlu0 %10270
      %10272 = vrot.lane.b32.xlu0 %v8934, 48
      %v10273 = vpop.permute.xlu0 %10272
      %10274 = vrot.lane.b32.xlu0 %v8951, 48
      %v10275 = vpop.permute.xlu0 %10274
      %10276 = vrot.lane.b32.xlu0 %v8968, 48
      %v10277 = vpop.permute.xlu0 %10276
      %10278 = vrot.lane.b32.xlu0 %v8985, 48
      %v10279 = vpop.permute.xlu0 %10278
      %10280 = vrot.lane.b32.xlu0 %v9002, 48
      %v10281 = vpop.permute.xlu0 %10280
      %10282 = vrot.lane.b32.xlu0 %v9019, 48
      %v10283 = vpop.permute.xlu0 %10282
      %10284 = vrot.lane.b32.xlu0 %v9036, 48
      %v10285 = vpop.permute.xlu0 %10284
      %10286 = vrot.lane.b32.xlu0 %v9053, 48
      %v10287 = vpop.permute.xlu0 %10286
      %10288 = vrot.lane.b32.xlu0 %v9070, 48
      %v10289 = vpop.permute.xlu0 %10288
      %10290 = vrot.lane.b32.xlu0 %v9087, 48
      %v10291 = vpop.permute.xlu0 %10290
      %10292 = vrot.lane.b32.xlu0 %v9104, 48
      %v10293 = vpop.permute.xlu0 %10292
      %10294 = vrot.lane.b32.xlu0 %v9121, 48
      %v10295 = vpop.permute.xlu0 %10294
      %10296 = vrot.lane.b32.xlu0 %v9138, 48
      %v10297 = vpop.permute.xlu0 %10296
      %10298 = vrot.lane.b32.xlu0 %v9155, 48
      %v10299 = vpop.permute.xlu0 %10298
      %10300 = vrot.lane.b32.xlu0 %v9172, 48
      %v10301 = vpop.permute.xlu0 %10300
      %10302 = vrot.lane.b32.xlu0 %v9189, 48
      %v10303 = vpop.permute.xlu0 %10302
      %10304 = vrot.lane.b32.xlu0 %v9206, 48
      %v10305 = vpop.permute.xlu0 %10304
      %10306 = vrot.lane.b32.xlu0 %v9223, 48
      %v10307 = vpop.permute.xlu0 %10306
      %10308 = vrot.lane.b32.xlu0 %v9240, 48
      %v10309 = vpop.permute.xlu0 %10308
      %10310 = vrot.lane.b32.xlu0 %v9257, 48
      %v10311 = vpop.permute.xlu0 %10310
      %10312 = vrot.lane.b32.xlu0 %v10234, 48
      %v10313 = vpop.permute.xlu0 %10312
      %10314 = vrot.lane.b32.xlu0 %v10251, 48
      %v10315 = vpop.permute.xlu0 %10314
      %v10349 = vunpack.c.l.s4 1983009808
      %v10350 = vunpack.c.0.s8 %v10349
      %v10351 = vlaneseq
      %v10352 = vshrl.u32 %v10351, 7
      %v10353 = vsub.s32 %v10350, %v10352
      %v10354 = vrot.slane %v8661, %v10353
      %v10355 = vrot.slane %v10234, 1
      %v10356 = vrot.slane %v10251, 1
      %v10357 = vsel %vm732, %v10355, %v10356
      %v10358 = vrot.slane %v10354, 1
      %v10359 = vsel %vm732, %v10356, %v10358
      %10360 = vrot.lane.b32.xlu0 %v9409, 64
      %v10361 = vpop.permute.xlu0 %10360
      %10362 = vrot.lane.b32.xlu0 %v9411, 64
      %v10363 = vpop.permute.xlu0 %10362
      %10364 = vrot.lane.b32.xlu0 %v9414, 64
      %v10365 = vpop.permute.xlu0 %10364
      %10366 = vrot.lane.b32.xlu0 %v9416, 64
      %v10367 = vpop.permute.xlu0 %10366
      %10368 = vrot.lane.b32.xlu0 %v9419, 64
      %v10369 = vpop.permute.xlu0 %10368
      %10370 = vrot.lane.b32.xlu0 %v9421, 64
      %v10371 = vpop.permute.xlu0 %10370
      %10372 = vrot.lane.b32.xlu0 %v9424, 64
      %v10373 = vpop.permute.xlu0 %10372
      %10374 = vrot.lane.b32.xlu0 %v9426, 64
      %v10375 = vpop.permute.xlu0 %10374
      %10376 = vrot.lane.b32.xlu0 %v9429, 64
      %v10377 = vpop.permute.xlu0 %10376
      %10378 = vrot.lane.b32.xlu0 %v9431, 64
      %v10379 = vpop.permute.xlu0 %10378
      %10380 = vrot.lane.b32.xlu0 %v9434, 64
      %v10381 = vpop.permute.xlu0 %10380
      %10382 = vrot.lane.b32.xlu0 %v9436, 64
      %v10383 = vpop.permute.xlu0 %10382
      %10384 = vrot.lane.b32.xlu0 %v9439, 64
      %v10385 = vpop.permute.xlu0 %10384
      %10386 = vrot.lane.b32.xlu0 %v9441, 64
      %v10387 = vpop.permute.xlu0 %10386
      %10388 = vrot.lane.b32.xlu0 %v9444, 64
      %v10389 = vpop.permute.xlu0 %10388
      %10390 = vrot.lane.b32.xlu0 %v9446, 64
      %v10391 = vpop.permute.xlu0 %10390
      %10392 = vrot.lane.b32.xlu0 %v9449, 64
      %v10393 = vpop.permute.xlu0 %10392
      %10394 = vrot.lane.b32.xlu0 %v9451, 64
      %v10395 = vpop.permute.xlu0 %10394
      %10396 = vrot.lane.b32.xlu0 %v9454, 64
      %v10397 = vpop.permute.xlu0 %10396
      %10398 = vrot.lane.b32.xlu0 %v9456, 64
      %v10399 = vpop.permute.xlu0 %10398
      %10400 = vrot.lane.b32.xlu0 %v9459, 64
      %v10401 = vpop.permute.xlu0 %10400
      %10402 = vrot.lane.b32.xlu0 %v9461, 64
      %v10403 = vpop.permute.xlu0 %10402
      %10404 = vrot.lane.b32.xlu0 %v9464, 64
      %v10405 = vpop.permute.xlu0 %10404
      %10406 = vrot.lane.b32.xlu0 %v9466, 64
      %v10407 = vpop.permute.xlu0 %10406
      %10408 = vrot.lane.b32.xlu0 %v9469, 64
      %v10409 = vpop.permute.xlu0 %10408
      %10410 = vrot.lane.b32.xlu0 %v9471, 64
      %v10411 = vpop.permute.xlu0 %10410
      %10412 = vrot.lane.b32.xlu0 %v9474, 64
      %v10413 = vpop.permute.xlu0 %10412
      %10414 = vrot.lane.b32.xlu0 %v9476, 64
      %v10415 = vpop.permute.xlu0 %10414
      %10416 = vrot.lane.b32.xlu0 %v9479, 64
      %v10417 = vpop.permute.xlu0 %10416
      %10418 = vrot.lane.b32.xlu0 %v9481, 64
      %v10419 = vpop.permute.xlu0 %10418
      %10420 = vrot.lane.b32.xlu0 %v10357, 64
      %v10421 = vpop.permute.xlu0 %10420
      %10422 = vrot.lane.b32.xlu0 %v10359, 64
      %v10423 = vpop.permute.xlu0 %10422
      %v10456 = vcombine.low %v8635, %v8634
      %v10457 = vcombine.low %v8636, %v8644
      %v10459 = vunpack.c.l.s4 1983009808
      %v10460 = vunpack.c.0.s8 %v10459
      %v10461 = vlaneseq
      %v10462 = vshrl.u32 %v10461, 7
      %v10463 = vsub.s32 %v10460, %v10462
      %v10464 = vrot.slane %v10456, %v10463
      %v10466 = vunpack.c.l.s4 1983009808
      %v10467 = vunpack.c.0.s8 %v10466
      %v10468 = vlaneseq
      %v10469 = vshrl.u32 %v10468, 7
      %v10470 = vsub.s32 %v10467, %v10469
      %v10471 = vrot.slane %v10457, %v10470
      %v10472 = vcombine.low %v10464, %v10471
      %v10473 = vcombine.low %v8652, %v8651
      %v10474 = vcombine.low %v8653, %v8661
      %v10476 = vunpack.c.l.s4 1983009808
      %v10477 = vunpack.c.0.s8 %v10476
      %v10478 = vlaneseq
      %v10479 = vshrl.u32 %v10478, 7
      %v10480 = vsub.s32 %v10477, %v10479
      %v10481 = vrot.slane %v10473, %v10480
      %v10483 = vunpack.c.l.s4 1983009808
      %v10484 = vunpack.c.0.s8 %v10483
      %v10485 = vlaneseq
      %v10486 = vshrl.u32 %v10485, 7
      %v10487 = vsub.s32 %v10484, %v10486
      %v10488 = vrot.slane %v10474, %v10487
      %v10489 = vcombine.low %v10481, %v10488
      %10490 = vrot.lane.b32.xlu0 %v9628, 80
      %v10491 = vpop.permute.xlu0 %10490
      %10492 = vrot.lane.b32.xlu0 %v9645, 80
      %v10493 = vpop.permute.xlu0 %10492
      %10494 = vrot.lane.b32.xlu0 %v9662, 80
      %v10495 = vpop.permute.xlu0 %10494
      %10496 = vrot.lane.b32.xlu0 %v9679, 80
      %v10497 = vpop.permute.xlu0 %10496
      %10498 = vrot.lane.b32.xlu0 %v9696, 80
      %v10499 = vpop.permute.xlu0 %10498
      %10500 = vrot.lane.b32.xlu0 %v9713, 80
      %v10501 = vpop.permute.xlu0 %10500
      %10502 = vrot.lane.b32.xlu0 %v9730, 80
      %v10503 = vpop.permute.xlu0 %10502
      %10504 = vrot.lane.b32.xlu0 %v9747, 80
      %v10505 = vpop.permute.xlu0 %10504
      %10506 = vrot.lane.b32.xlu0 %v9764, 80
      %v10507 = vpop.permute.xlu0 %10506
      %10508 = vrot.lane.b32.xlu0 %v9781, 80
      %v10509 = vpop.permute.xlu0 %10508
      %10510 = vrot.lane.b32.xlu0 %v9798, 80
      %v10511 = vpop.permute.xlu0 %10510
      %10512 = vrot.lane.b32.xlu0 %v9815, 80
      %v10513 = vpop.permute.xlu0 %10512
      %10514 = vrot.lane.b32.xlu0 %v9832, 80
      %v10515 = vpop.permute.xlu0 %10514
      %10516 = vrot.lane.b32.xlu0 %v9849, 80
      %v10517 = vpop.permute.xlu0 %10516
      %10518 = vrot.lane.b32.xlu0 %v9866, 80
      %v10519 = vpop.permute.xlu0 %10518
      %10520 = vrot.lane.b32.xlu0 %v9883, 80
      %v10521 = vpop.permute.xlu0 %10520
      %10522 = vrot.lane.b32.xlu0 %v9900, 80
      %v10523 = vpop.permute.xlu0 %10522
      %10524 = vrot.lane.b32.xlu0 %v9917, 80
      %v10525 = vpop.permute.xlu0 %10524
      %10526 = vrot.lane.b32.xlu0 %v9934, 80
      %v10527 = vpop.permute.xlu0 %10526
      %10528 = vrot.lane.b32.xlu0 %v9951, 80
      %v10529 = vpop.permute.xlu0 %10528
      %10530 = vrot.lane.b32.xlu0 %v9968, 80
      %v10531 = vpop.permute.xlu0 %10530
      %10532 = vrot.lane.b32.xlu0 %v9985, 80
      %v10533 = vpop.permute.xlu0 %10532
      %10534 = vrot.lane.b32.xlu0 %v10002, 80
      %v10535 = vpop.permute.xlu0 %10534
      %10536 = vrot.lane.b32.xlu0 %v10019, 80
      %v10537 = vpop.permute.xlu0 %10536
      %10538 = vrot.lane.b32.xlu0 %v10036, 80
      %v10539 = vpop.permute.xlu0 %10538
      %10540 = vrot.lane.b32.xlu0 %v10053, 80
      %v10541 = vpop.permute.xlu0 %10540
      %10542 = vrot.lane.b32.xlu0 %v10070, 80
      %v10543 = vpop.permute.xlu0 %10542
      %10544 = vrot.lane.b32.xlu0 %v10087, 80
      %v10545 = vpop.permute.xlu0 %10544
      %10546 = vrot.lane.b32.xlu0 %v10104, 80
      %v10547 = vpop.permute.xlu0 %10546
      %10548 = vrot.lane.b32.xlu0 %v10121, 80
      %v10549 = vpop.permute.xlu0 %10548
      %10550 = vrot.lane.b32.xlu0 %v10472, 80
      %v10551 = vpop.permute.xlu0 %10550
      %10552 = vrot.lane.b32.xlu0 %v10489, 80
      %v10553 = vpop.permute.xlu0 %10552
      %v10586 = vcombine.low %v8669, %v8668
      %v10587 = vcombine.low %v8670, %v8678
      %v10589 = vunpack.c.l.s4 1983009808
      %v10590 = vunpack.c.0.s8 %v10589
      %v10591 = vlaneseq
      %v10592 = vshrl.u32 %v10591, 7
      %v10593 = vsub.s32 %v10590, %v10592
      %v10594 = vrot.slane %v10586, %v10593
      %v10596 = vunpack.c.l.s4 1983009808
      %v10597 = vunpack.c.0.s8 %v10596
      %v10598 = vlaneseq
      %v10599 = vshrl.u32 %v10598, 7
      %v10600 = vsub.s32 %v10597, %v10599
      %v10601 = vrot.slane %v10587, %v10600
      %v10602 = vcombine.low %v10594, %v10601
      %v10603 = vcombine.low %v8686, %v8685
      %v10604 = vcombine.low %v8687, %v8694
      %v10606 = vunpack.c.l.s4 1983009808
      %v10607 = vunpack.c.0.s8 %v10606
      %v10608 = vlaneseq
      %v10609 = vshrl.u32 %v10608, 7
      %v10610 = vsub.s32 %v10607, %v10609
      %v10611 = vrot.slane %v10603, %v10610
      %v10613 = vunpack.c.l.s4 1983009808
      %v10614 = vunpack.c.0.s8 %v10613
      %v10615 = vlaneseq
      %v10616 = vshrl.u32 %v10615, 7
      %v10617 = vsub.s32 %v10614, %v10616
      %v10618 = vrot.slane %v10604, %v10617
      %v10619 = vcombine.low %v10611, %v10618
      %10620 = vrot.lane.b32.xlu0 %v8798, 96
      %v10621 = vpop.permute.xlu0 %10620
      %10622 = vrot.lane.b32.xlu0 %v8815, 96
      %v10623 = vpop.permute.xlu0 %10622
      %10624 = vrot.lane.b32.xlu0 %v8832, 96
      %v10625 = vpop.permute.xlu0 %10624
      %10626 = vrot.lane.b32.xlu0 %v8849, 96
      %v10627 = vpop.permute.xlu0 %10626
      %10628 = vrot.lane.b32.xlu0 %v8866, 96
      %v10629 = vpop.permute.xlu0 %10628
      %10630 = vrot.lane.b32.xlu0 %v8883, 96
      %v10631 = vpop.permute.xlu0 %10630
      %10632 = vrot.lane.b32.xlu0 %v8900, 96
      %v10633 = vpop.permute.xlu0 %10632
      %10634 = vrot.lane.b32.xlu0 %v8917, 96
      %v10635 = vpop.permute.xlu0 %10634
      %10636 = vrot.lane.b32.xlu0 %v8934, 96
      %v10637 = vpop.permute.xlu0 %10636
      %10638 = vrot.lane.b32.xlu0 %v8951, 96
      %v10639 = vpop.permute.xlu0 %10638
      %10640 = vrot.lane.b32.xlu0 %v8968, 96
      %v10641 = vpop.permute.xlu0 %10640
      %10642 = vrot.lane.b32.xlu0 %v8985, 96
      %v10643 = vpop.permute.xlu0 %10642
      %10644 = vrot.lane.b32.xlu0 %v9002, 96
      %v10645 = vpop.permute.xlu0 %10644
      %10646 = vrot.lane.b32.xlu0 %v9019, 96
      %v10647 = vpop.permute.xlu0 %10646
      %10648 = vrot.lane.b32.xlu0 %v9036, 96
      %v10649 = vpop.permute.xlu0 %10648
      %10650 = vrot.lane.b32.xlu0 %v9053, 96
      %v10651 = vpop.permute.xlu0 %10650
      %10652 = vrot.lane.b32.xlu0 %v9070, 96
      %v10653 = vpop.permute.xlu0 %10652
      %10654 = vrot.lane.b32.xlu0 %v9087, 96
      %v10655 = vpop.permute.xlu0 %10654
      %10656 = vrot.lane.b32.xlu0 %v9104, 96
      %v10657 = vpop.permute.xlu0 %10656
      %10658 = vrot.lane.b32.xlu0 %v9121, 96
      %v10659 = vpop.permute.xlu0 %10658
      %10660 = vrot.lane.b32.xlu0 %v9138, 96
      %v10661 = vpop.permute.xlu0 %10660
      %10662 = vrot.lane.b32.xlu0 %v9155, 96
      %v10663 = vpop.permute.xlu0 %10662
      %10664 = vrot.lane.b32.xlu0 %v9172, 96
      %v10665 = vpop.permute.xlu0 %10664
      %10666 = vrot.lane.b32.xlu0 %v9189, 96
      %v10667 = vpop.permute.xlu0 %10666
      %10668 = vrot.lane.b32.xlu0 %v9206, 96
      %v10669 = vpop.permute.xlu0 %10668
      %10670 = vrot.lane.b32.xlu0 %v9223, 96
      %v10671 = vpop.permute.xlu0 %10670
      %10672 = vrot.lane.b32.xlu0 %v9240, 96
      %v10673 = vpop.permute.xlu0 %10672
      %10674 = vrot.lane.b32.xlu0 %v9257, 96
      %v10675 = vpop.permute.xlu0 %10674
      %10676 = vrot.lane.b32.xlu0 %v10234, 96
      %v10677 = vpop.permute.xlu0 %10676
      %10678 = vrot.lane.b32.xlu0 %v10251, 96
      %v10679 = vpop.permute.xlu0 %10678
      %10680 = vrot.lane.b32.xlu0 %v10602, 96
      %v10681 = vpop.permute.xlu0 %10680
      %10682 = vrot.lane.b32.xlu0 %v10619, 96
      %v10683 = vpop.permute.xlu0 %10682
      %v10717 = vunpack.c.l.s4 1983009808
      %v10718 = vunpack.c.0.s8 %v10717
      %v10719 = vlaneseq
      %v10720 = vshrl.u32 %v10719, 7
      %v10721 = vsub.s32 %v10718, %v10720
      %v10722 = vrot.slane %v8695, %v10721
      %v10723 = vrot.slane %v10602, 1
      %v10724 = vrot.slane %v10619, 1
      %v10725 = vsel %vm732, %v10723, %v10724
      %v10726 = vrot.slane %v10722, 1
      %v10727 = vsel %vm732, %v10724, %v10726
      %10728 = vrot.lane.b32.xlu0 %v9414, 112
      %v10729 = vpop.permute.xlu0 %10728
      %10730 = vrot.lane.b32.xlu0 %v9416, 112
      %v10731 = vpop.permute.xlu0 %10730
      %10732 = vrot.lane.b32.xlu0 %v9419, 112
      %v10733 = vpop.permute.xlu0 %10732
      %10734 = vrot.lane.b32.xlu0 %v9421, 112
      %v10735 = vpop.permute.xlu0 %10734
      %10736 = vrot.lane.b32.xlu0 %v9424, 112
      %v10737 = vpop.permute.xlu0 %10736
      %10738 = vrot.lane.b32.xlu0 %v9426, 112
      %v10739 = vpop.permute.xlu0 %10738
      %10740 = vrot.lane.b32.xlu0 %v9429, 112
      %v10741 = vpop.permute.xlu0 %10740
      %10742 = vrot.lane.b32.xlu0 %v9431, 112
      %v10743 = vpop.permute.xlu0 %10742
      %10744 = vrot.lane.b32.xlu0 %v9434, 112
      %v10745 = vpop.permute.xlu0 %10744
      %10746 = vrot.lane.b32.xlu0 %v9436, 112
      %v10747 = vpop.permute.xlu0 %10746
      %10748 = vrot.lane.b32.xlu0 %v9439, 112
      %v10749 = vpop.permute.xlu0 %10748
      %10750 = vrot.lane.b32.xlu0 %v9441, 112
      %v10751 = vpop.permute.xlu0 %10750
      %10752 = vrot.lane.b32.xlu0 %v9444, 112
      %v10753 = vpop.permute.xlu0 %10752
      %10754 = vrot.lane.b32.xlu0 %v9446, 112
      %v10755 = vpop.permute.xlu0 %10754
      %10756 = vrot.lane.b32.xlu0 %v9449, 112
      %v10757 = vpop.permute.xlu0 %10756
      %10758 = vrot.lane.b32.xlu0 %v9451, 112
      %v10759 = vpop.permute.xlu0 %10758
      %10760 = vrot.lane.b32.xlu0 %v9454, 112
      %v10761 = vpop.permute.xlu0 %10760
      %10762 = vrot.lane.b32.xlu0 %v9456, 112
      %v10763 = vpop.permute.xlu0 %10762
      %10764 = vrot.lane.b32.xlu0 %v9459, 112
      %v10765 = vpop.permute.xlu0 %10764
      %10766 = vrot.lane.b32.xlu0 %v9461, 112
      %v10767 = vpop.permute.xlu0 %10766
      %10768 = vrot.lane.b32.xlu0 %v9464, 112
      %v10769 = vpop.permute.xlu0 %10768
      %10770 = vrot.lane.b32.xlu0 %v9466, 112
      %v10771 = vpop.permute.xlu0 %10770
      %10772 = vrot.lane.b32.xlu0 %v9469, 112
      %v10773 = vpop.permute.xlu0 %10772
      %10774 = vrot.lane.b32.xlu0 %v9471, 112
      %v10775 = vpop.permute.xlu0 %10774
      %10776 = vrot.lane.b32.xlu0 %v9474, 112
      %v10777 = vpop.permute.xlu0 %10776
      %10778 = vrot.lane.b32.xlu0 %v9476, 112
      %v10779 = vpop.permute.xlu0 %10778
      %10780 = vrot.lane.b32.xlu0 %v9479, 112
      %v10781 = vpop.permute.xlu0 %10780
      %10782 = vrot.lane.b32.xlu0 %v9481, 112
      %v10783 = vpop.permute.xlu0 %10782
      %10784 = vrot.lane.b32.xlu0 %v10357, 112
      %v10785 = vpop.permute.xlu0 %10784
      %10786 = vrot.lane.b32.xlu0 %v10359, 112
      %v10787 = vpop.permute.xlu0 %10786
      %10788 = vrot.lane.b32.xlu0 %v10725, 112
      %v10789 = vpop.permute.xlu0 %10788
      %10790 = vrot.lane.b32.xlu0 %v10727, 112
      %v10791 = vpop.permute.xlu0 %10790
      %v10824 = vcombine.low %v8668, %v8670
      %v10825 = vcombine.low %v8678, %v8686
      %v10827 = vunpack.c.l.s4 1983009808
      %v10828 = vunpack.c.0.s8 %v10827
      %v10829 = vlaneseq
      %v10830 = vshrl.u32 %v10829, 7
      %v10831 = vsub.s32 %v10828, %v10830
      %v10832 = vrot.slane %v10824, %v10831
      %v10834 = vunpack.c.l.s4 1983009808
      %v10835 = vunpack.c.0.s8 %v10834
      %v10836 = vlaneseq
      %v10837 = vshrl.u32 %v10836, 7
      %v10838 = vsub.s32 %v10835, %v10837
      %v10839 = vrot.slane %v10825, %v10838
      %v10840 = vcombine.low %v10832, %v10839
      %v10841 = vcombine.low %v8685, %v8687
      %v10842 = vcombine.low %v8694, %v8695
      %v10844 = vunpack.c.l.s4 1983009808
      %v10845 = vunpack.c.0.s8 %v10844
      %v10846 = vlaneseq
      %v10847 = vshrl.u32 %v10846, 7
      %v10848 = vsub.s32 %v10845, %v10847
      %v10849 = vrot.slane %v10841, %v10848
      %v10851 = vunpack.c.l.s4 1983009808
      %v10852 = vunpack.c.0.s8 %v10851
      %v10853 = vlaneseq
      %v10854 = vshrl.u32 %v10853, 7
      %v10855 = vsub.s32 %v10852, %v10854
      %v10856 = vrot.slane %v10842, %v10855
      %v10857 = vcombine.low %v10849, %v10856
      %v10890 = vsel %vm974, %v8730, %v9483
      %v10891 = vsel %vm974, %v8747, %v9485
      %v10892 = vsel %vm974, %v8764, %v9487
      %v10893 = vsel %vm974, %v8781, %v9489
      %v10894 = vsel %vm974, %v8798, %v9491
      %v10895 = vsel %vm974, %v8815, %v9493
      %v10896 = vsel %vm974, %v8832, %v9495
      %v10897 = vsel %vm974, %v8849, %v9497
      %v10898 = vsel %vm974, %v8866, %v9499
      %v10899 = vsel %vm974, %v8883, %v9501
      %v10900 = vsel %vm974, %v8900, %v9503
      %v10901 = vsel %vm974, %v8917, %v9505
      %v10902 = vsel %vm974, %v8934, %v9507
      %v10903 = vsel %vm974, %v8951, %v9509
      %v10904 = vsel %vm974, %v8968, %v9511
      %v10905 = vsel %vm974, %v8985, %v9513
      %v10906 = vsel %vm974, %v9002, %v9515
      %v10907 = vsel %vm974, %v9019, %v9517
      %v10908 = vsel %vm974, %v9036, %v9519
      %v10909 = vsel %vm974, %v9053, %v9521
      %v10910 = vsel %vm974, %v9070, %v9523
      %v10911 = vsel %vm974, %v9087, %v9525
      %v10912 = vsel %vm974, %v9104, %v9527
      %v10913 = vsel %vm974, %v9121, %v9529
      %v10914 = vsel %vm974, %v9138, %v9531
      %v10915 = vsel %vm974, %v9155, %v9533
      %v10916 = vsel %vm974, %v9172, %v9535
      %v10917 = vsel %vm974, %v9189, %v9537
      %v10918 = vsel %vm974, %v9206, %v9539
      %v10919 = vsel %vm974, %v9223, %v9541
      %v10920 = vsel %vm974, %v9240, %v9543
      %v10921 = vsel %vm974, %v9257, %v9545
      %v10922 = vsel %vm983, %v10890, %v10123
      %v10923 = vsel %vm983, %v10891, %v10125
      %v10924 = vsel %vm983, %v10892, %v10127
      %v10925 = vsel %vm983, %v10893, %v10129
      %v10926 = vsel %vm983, %v10894, %v10131
      %v10927 = vsel %vm983, %v10895, %v10133
      %v10928 = vsel %vm983, %v10896, %v10135
      %v10929 = vsel %vm983, %v10897, %v10137
      %v10930 = vsel %vm983, %v10898, %v10139
      %v10931 = vsel %vm983, %v10899, %v10141
      %v10932 = vsel %vm983, %v10900, %v10143
      %v10933 = vsel %vm983, %v10901, %v10145
      %v10934 = vsel %vm983, %v10902, %v10147
      %v10935 = vsel %vm983, %v10903, %v10149
      %v10936 = vsel %vm983, %v10904, %v10151
      %v10937 = vsel %vm983, %v10905, %v10153
      %v10938 = vsel %vm983, %v10906, %v10155
      %v10939 = vsel %vm983, %v10907, %v10157
      %v10940 = vsel %vm983, %v10908, %v10159
      %v10941 = vsel %vm983, %v10909, %v10161
      %v10942 = vsel %vm983, %v10910, %v10163
      %v10943 = vsel %vm983, %v10911, %v10165
      %v10944 = vsel %vm983, %v10912, %v10167
      %v10945 = vsel %vm983, %v10913, %v10169
      %v10946 = vsel %vm983, %v10914, %v10171
      %v10947 = vsel %vm983, %v10915, %v10173
      %v10948 = vsel %vm983, %v10916, %v10175
      %v10949 = vsel %vm983, %v10917, %v10177
      %v10950 = vsel %vm983, %v10918, %v10179
      %v10951 = vsel %vm983, %v10919, %v10181
      %v10952 = vsel %vm983, %v10920, %v10183
      %v10953 = vsel %vm983, %v10921, %v10185
      %v10954 = vsel %vm992, %v10922, %v10253
      %v10955 = vsel %vm992, %v10923, %v10255
      %v10956 = vsel %vm992, %v10924, %v10257
      %v10957 = vsel %vm992, %v10925, %v10259
      %v10958 = vsel %vm992, %v10926, %v10261
      %v10959 = vsel %vm992, %v10927, %v10263
      %v10960 = vsel %vm992, %v10928, %v10265
      %v10961 = vsel %vm992, %v10929, %v10267
      %v10962 = vsel %vm992, %v10930, %v10269
      %v10963 = vsel %vm992, %v10931, %v10271
      %v10964 = vsel %vm992, %v10932, %v10273
      %v10965 = vsel %vm992, %v10933, %v10275
      %v10966 = vsel %vm992, %v10934, %v10277
      %v10967 = vsel %vm992, %v10935, %v10279
      %v10968 = vsel %vm992, %v10936, %v10281
      %v10969 = vsel %vm992, %v10937, %v10283
      %v10970 = vsel %vm992, %v10938, %v10285
      %v10971 = vsel %vm992, %v10939, %v10287
      %v10972 = vsel %vm992, %v10940, %v10289
      %v10973 = vsel %vm992, %v10941, %v10291
      %v10974 = vsel %vm992, %v10942, %v10293
      %v10975 = vsel %vm992, %v10943, %v10295
      %v10976 = vsel %vm992, %v10944, %v10297
      %v10977 = vsel %vm992, %v10945, %v10299
      %v10978 = vsel %vm992, %v10946, %v10301
      %v10979 = vsel %vm992, %v10947, %v10303
      %v10980 = vsel %vm992, %v10948, %v10305
      %v10981 = vsel %vm992, %v10949, %v10307
      %v10982 = vsel %vm992, %v10950, %v10309
      %v10983 = vsel %vm992, %v10951, %v10311
      %v10984 = vsel %vm992, %v10952, %v10313
      %v10985 = vsel %vm992, %v10953, %v10315
      %v10986 = vsel %vm1001, %v10954, %v10361
      %v10987 = vsel %vm1001, %v10955, %v10363
      %v10988 = vsel %vm1001, %v10956, %v10365
      %v10989 = vsel %vm1001, %v10957, %v10367
      %v10990 = vsel %vm1001, %v10958, %v10369
      %v10991 = vsel %vm1001, %v10959, %v10371
      %v10992 = vsel %vm1001, %v10960, %v10373
      %v10993 = vsel %vm1001, %v10961, %v10375
      %v10994 = vsel %vm1001, %v10962, %v10377
      %v10995 = vsel %vm1001, %v10963, %v10379
      %v10996 = vsel %vm1001, %v10964, %v10381
      %v10997 = vsel %vm1001, %v10965, %v10383
      %v10998 = vsel %vm1001, %v10966, %v10385
      %v10999 = vsel %vm1001, %v10967, %v10387
      %v11000 = vsel %vm1001, %v10968, %v10389
      %v11001 = vsel %vm1001, %v10969, %v10391
      %v11002 = vsel %vm1001, %v10970, %v10393
      %v11003 = vsel %vm1001, %v10971, %v10395
      %v11004 = vsel %vm1001, %v10972, %v10397
      %v11005 = vsel %vm1001, %v10973, %v10399
      %v11006 = vsel %vm1001, %v10974, %v10401
      %v11007 = vsel %vm1001, %v10975, %v10403
      %v11008 = vsel %vm1001, %v10976, %v10405
      %v11009 = vsel %vm1001, %v10977, %v10407
      %v11010 = vsel %vm1001, %v10978, %v10409
      %v11011 = vsel %vm1001, %v10979, %v10411
      %v11012 = vsel %vm1001, %v10980, %v10413
      %v11013 = vsel %vm1001, %v10981, %v10415
      %v11014 = vsel %vm1001, %v10982, %v10417
      %v11015 = vsel %vm1001, %v10983, %v10419
      %v11016 = vsel %vm1001, %v10984, %v10421
      %v11017 = vsel %vm1001, %v10985, %v10423
      %v11018 = vsel %vm1010, %v10986, %v10491
      %v11019 = vsel %vm1010, %v10987, %v10493
      %v11020 = vsel %vm1010, %v10988, %v10495
      %v11021 = vsel %vm1010, %v10989, %v10497
      %v11022 = vsel %vm1010, %v10990, %v10499
      %v11023 = vsel %vm1010, %v10991, %v10501
      %v11024 = vsel %vm1010, %v10992, %v10503
      %v11025 = vsel %vm1010, %v10993, %v10505
      %v11026 = vsel %vm1010, %v10994, %v10507
      %v11027 = vsel %vm1010, %v10995, %v10509
      %v11028 = vsel %vm1010, %v10996, %v10511
      %v11029 = vsel %vm1010, %v10997, %v10513
      %v11030 = vsel %vm1010, %v10998, %v10515
      %v11031 = vsel %vm1010, %v10999, %v10517
      %v11032 = vsel %vm1010, %v11000, %v10519
      %v11033 = vsel %vm1010, %v11001, %v10521
      %v11034 = vsel %vm1010, %v11002, %v10523
      %v11035 = vsel %vm1010, %v11003, %v10525
      %v11036 = vsel %vm1010, %v11004, %v10527
      %v11037 = vsel %vm1010, %v11005, %v10529
      %v11038 = vsel %vm1010, %v11006, %v10531
      %v11039 = vsel %vm1010, %v11007, %v10533
      %v11040 = vsel %vm1010, %v11008, %v10535
      %v11041 = vsel %vm1010, %v11009, %v10537
      %v11042 = vsel %vm1010, %v11010, %v10539
      %v11043 = vsel %vm1010, %v11011, %v10541
      %v11044 = vsel %vm1010, %v11012, %v10543
      %v11045 = vsel %vm1010, %v11013, %v10545
      %v11046 = vsel %vm1010, %v11014, %v10547
      %v11047 = vsel %vm1010, %v11015, %v10549
      %v11048 = vsel %vm1010, %v11016, %v10551
      %v11049 = vsel %vm1010, %v11017, %v10553
      %v11050 = vsel %vm1019, %v11018, %v10621
      %v11051 = vsel %vm1019, %v11019, %v10623
      %v11052 = vsel %vm1019, %v11020, %v10625
      %v11053 = vsel %vm1019, %v11021, %v10627
      %v11054 = vsel %vm1019, %v11022, %v10629
      %v11055 = vsel %vm1019, %v11023, %v10631
      %v11056 = vsel %vm1019, %v11024, %v10633
      %v11057 = vsel %vm1019, %v11025, %v10635
      %v11058 = vsel %vm1019, %v11026, %v10637
      %v11059 = vsel %vm1019, %v11027, %v10639
      %v11060 = vsel %vm1019, %v11028, %v10641
      %v11061 = vsel %vm1019, %v11029, %v10643
      %v11062 = vsel %vm1019, %v11030, %v10645
      %v11063 = vsel %vm1019, %v11031, %v10647
      %v11064 = vsel %vm1019, %v11032, %v10649
      %v11065 = vsel %vm1019, %v11033, %v10651
      %v11066 = vsel %vm1019, %v11034, %v10653
      %v11067 = vsel %vm1019, %v11035, %v10655
      %v11068 = vsel %vm1019, %v11036, %v10657
      %v11069 = vsel %vm1019, %v11037, %v10659
      %v11070 = vsel %vm1019, %v11038, %v10661
      %v11071 = vsel %vm1019, %v11039, %v10663
      %v11072 = vsel %vm1019, %v11040, %v10665
      %v11073 = vsel %vm1019, %v11041, %v10667
      %v11074 = vsel %vm1019, %v11042, %v10669
      %v11075 = vsel %vm1019, %v11043, %v10671
      %v11076 = vsel %vm1019, %v11044, %v10673
      %v11077 = vsel %vm1019, %v11045, %v10675
      %v11078 = vsel %vm1019, %v11046, %v10677
      %v11079 = vsel %vm1019, %v11047, %v10679
      %v11080 = vsel %vm1019, %v11048, %v10681
      %v11081 = vsel %vm1019, %v11049, %v10683
      %v11082 = vsel %vm1028, %v11050, %v10729
      %v11083 = vsel %vm1028, %v11051, %v10731
      %v11084 = vsel %vm1028, %v11052, %v10733
      %v11085 = vsel %vm1028, %v11053, %v10735
      %v11086 = vsel %vm1028, %v11054, %v10737
      %v11087 = vsel %vm1028, %v11055, %v10739
      %v11088 = vsel %vm1028, %v11056, %v10741
      %v11089 = vsel %vm1028, %v11057, %v10743
      %v11090 = vsel %vm1028, %v11058, %v10745
      %v11091 = vsel %vm1028, %v11059, %v10747
      %v11092 = vsel %vm1028, %v11060, %v10749
      %v11093 = vsel %vm1028, %v11061, %v10751
      %v11094 = vsel %vm1028, %v11062, %v10753
      %v11095 = vsel %vm1028, %v11063, %v10755
      %v11096 = vsel %vm1028, %v11064, %v10757
      %v11097 = vsel %vm1028, %v11065, %v10759
      %v11098 = vsel %vm1028, %v11066, %v10761
      %v11099 = vsel %vm1028, %v11067, %v10763
      %v11100 = vsel %vm1028, %v11068, %v10765
      %v11101 = vsel %vm1028, %v11069, %v10767
      %v11102 = vsel %vm1028, %v11070, %v10769
      %v11103 = vsel %vm1028, %v11071, %v10771
      %v11104 = vsel %vm1028, %v11072, %v10773
      %v11105 = vsel %vm1028, %v11073, %v10775
      %v11106 = vsel %vm1028, %v11074, %v10777
      %v11107 = vsel %vm1028, %v11075, %v10779
      %v11108 = vsel %vm1028, %v11076, %v10781
      %v11109 = vsel %vm1028, %v11077, %v10783
      %v11110 = vsel %vm1028, %v11078, %v10785
      %v11111 = vsel %vm1028, %v11079, %v10787
      %v11112 = vsel %vm1028, %v11080, %v10789
      %v11113 = vsel %vm1028, %v11081, %v10791
      %v11114 = vpack.c.bf16 %v11083, %v11082
      %v11115 = vpack.c.bf16 %v9679, %v9662
      %v11116 = vpack.c.bf16 %v11085, %v11084
      %v11117 = vpack.c.bf16 %v9713, %v9696
      %v11118 = vpack.c.bf16 %v11087, %v11086
      %v11119 = vpack.c.bf16 %v9747, %v9730
      %v11120 = vpack.c.bf16 %v11089, %v11088
      %v11121 = vpack.c.bf16 %v9781, %v9764
      %v11122 = vpack.c.bf16 %v11091, %v11090
      %v11123 = vpack.c.bf16 %v9815, %v9798
      %v11124 = vpack.c.bf16 %v11093, %v11092
      %v11125 = vpack.c.bf16 %v9849, %v9832
      %v11126 = vpack.c.bf16 %v11095, %v11094
      %v11127 = vpack.c.bf16 %v9883, %v9866
      %v11128 = vpack.c.bf16 %v11097, %v11096
      %v11129 = vpack.c.bf16 %v9917, %v9900
      %v11130 = vpack.c.bf16 %v11099, %v11098
      %v11131 = vpack.c.bf16 %v9951, %v9934
      %v11132 = vpack.c.bf16 %v11101, %v11100
      %v11133 = vpack.c.bf16 %v9985, %v9968
      %v11134 = vpack.c.bf16 %v11103, %v11102
      %v11135 = vpack.c.bf16 %v10019, %v10002
      %v11136 = vpack.c.bf16 %v11105, %v11104
      %v11137 = vpack.c.bf16 %v10053, %v10036
      %v11138 = vpack.c.bf16 %v11107, %v11106
      %v11139 = vpack.c.bf16 %v10087, %v10070
      %v11140 = vpack.c.bf16 %v11109, %v11108
      %v11141 = vpack.c.bf16 %v10121, %v10104
      %v11142 = vpack.c.bf16 %v11111, %v11110
      %v11143 = vpack.c.bf16 %v10489, %v10472
      %v11144 = vpack.c.bf16 %v11113, %v11112
      %v11145 = vpack.c.bf16 %v10857, %v10840
      %v11164 = vunpack.c.l.b16 %v8696
      %v11165 = vunpack.c.l.b16 %v8697
      %v11166 = vunpack.c.l.b16 %v8698
      %v11167 = vunpack.c.l.b16 %v8699
      %v11168 = vunpack.c.l.b16 %v8700
      %v11169 = vunpack.c.l.b16 %v8701
      %v11170 = vunpack.c.l.b16 %v8702
      %v11171 = vunpack.c.l.b16 %v8703
      %v11172 = vunpack.c.l.b16 %v8704
      %v11173 = vunpack.c.l.b16 %v8705
      %v11174 = vunpack.c.l.b16 %v8706
      %v11175 = vunpack.c.l.b16 %v8707
      %v11176 = vunpack.c.l.b16 %v8708
      %v11177 = vunpack.c.l.b16 %v8709
      %v11178 = vunpack.c.l.b16 %v8710
      %v11179 = vunpack.c.l.b16 %v8711
      %v11180 = vunpack.c.l.b16 %v8712
      %v11181 = vunpack.c.l.b16 %v8713
      %v11182 = vpack.c.b16 %v11165, %v11164
      %v11183 = vpack.c.b16 %v11167, %v11166
      %v11184 = vpack.c.b16 %v11169, %v11168
      %v11185 = vpack.c.b16 %v11171, %v11170
      %v11186 = vpack.c.b16 %v11173, %v11172
      %v11187 = vpack.c.b16 %v11175, %v11174
      %v11188 = vpack.c.b16 %v11177, %v11176
      %v11189 = vpack.c.b16 %v11179, %v11178
      %v11190 = vpack.c.b16 %v11181, %v11180
      %v11201 = vsel %vm974, %v11115, 0
      %v11204 = vsel %vm974, %v11117, 0
      %v11207 = vsel %vm974, %v11119, 0
      %v11210 = vsel %vm974, %v11121, 0
      %v11213 = vsel %vm974, %v11123, 0
      %v11216 = vsel %vm974, %v11125, 0
      %v11219 = vsel %vm974, %v11127, 0
      %v11222 = vsel %vm974, %v11129, 0
      %v11225 = vsel %vm974, %v11131, 0
      %v11228 = vsel %vm974, %v11133, 0
      %v11231 = vsel %vm974, %v11135, 0
      %v11234 = vsel %vm974, %v11137, 0
      %v11237 = vsel %vm974, %v11139, 0
      %v11240 = vsel %vm974, %v11141, 0
      %v11243 = vsel %vm974, %v11143, 0
      %v11246 = vsel %vm974, %v11145, 0
      %11248 = vmatprep.subr.bf16.mxu0 0
      %11249 = vmatpush1.bf16.msra.mxu0 %v11182
      %11250 = vmatprep.subr.bf16.mxu0 0
      %11251 = vmatpush1.bf16.msra.mxu0 %v11183
      %11252 = vmatprep.subr.bf16.mxu0 0
      %11253 = vmatpush1.bf16.msra.mxu0 %v11184
      %11254 = vmatprep.subr.bf16.mxu0 0
      %11255 = vmatpush1.bf16.msra.mxu0 %v11185
      %11256 = vmatprep.subr.bf16.mxu0 0
      %11257 = vmatpush1.bf16.msra.mxu0 %v11186
      %11258 = vmatprep.subr.bf16.mxu0 0
      %11259 = vmatpush1.bf16.msra.mxu0 %v11187
      %11260 = vmatprep.subr.bf16.mxu0 0
      %11261 = vmatpush1.bf16.msra.mxu0 %v11188
      %11262 = vmatprep.subr.bf16.mxu0 0
      %11263 = vmatpush1.bf16.msra.mxu0 %v11189
      %11264 = vmatprep.subr.bf16.mxu0 0
      %11265 = vmatpush1.bf16.msra.mxu0 %v11190
      %11266 = vmatprep.subr.bf16.mxu0 0
      %11267 = vmatpush1.bf16.msra.mxu0 0
      %11268 = vmatprep.subr.bf16.mxu0 0
      %11269 = vmatpush1.bf16.msra.mxu0 0
      %11270 = vmatprep.subr.bf16.mxu0 0
      %11271 = vmatpush1.bf16.msra.mxu0 0
      %11272 = vmatprep.subr.bf16.mxu0 0
      %11273 = vmatpush1.bf16.msra.mxu0 0
      %11274 = vmatprep.subr.bf16.mxu0 0
      %11275 = vmatpush1.bf16.msra.mxu0 0
      %11276 = vmatprep.subr.bf16.mxu0 0
      %11277 = vmatpush1.bf16.msra.mxu0 0
      %11278 = vmatprep.subr.bf16.mxu0 0
      %11279 = vmatpush1.bf16.msra.mxu0 0
      %11280 = vmatprep.mubr.bf16.mxu0 %v11201
      %11281 = vmatmul.mubr.bf16.gmra.mrb[0].mxu0 %v11114
      %v11282 = vpop.f32.mrb[0].mxu0
      %v11283 = vadd.f32 0.0, %v11282
      %v11284 = vpop.f32.mrb[0].mxu0
      %v11285 = vpop.f32.mrb[0].mxu0
      %v11286 = vadd.f32 0.0, %v11285
      %v11287 = vpop.f32.mrb[0].mxu0
      %11288 = vmatprep.mubr.bf16.mxu0 %v11204
      %11289 = vmatmul.mubr.bf16.gmra.mrb[0].mxu0 %v11116
      %v11290 = vpop.f32.mrb[0].mxu0
      %v11291 = vadd.f32 0.0, %v11290
      %v11292 = vpop.f32.mrb[0].mxu0
      %v11293 = vpop.f32.mrb[0].mxu0
      %v11294 = vadd.f32 0.0, %v11293
      %v11295 = vpop.f32.mrb[0].mxu0
      %11296 = vmatprep.mubr.bf16.mxu0 %v11207
      %11297 = vmatmul.mubr.bf16.gmra.mrb[0].mxu0 %v11118
      %v11298 = vpop.f32.mrb[0].mxu0
      %v11299 = vadd.f32 0.0, %v11298
      %v11300 = vpop.f32.mrb[0].mxu0
      %v11301 = vpop.f32.mrb[0].mxu0
      %v11302 = vadd.f32 0.0, %v11301
      %v11303 = vpop.f32.mrb[0].mxu0
      %11304 = vmatprep.mubr.bf16.mxu0 %v11210
      %11305 = vmatmul.mubr.bf16.gmra.mrb[0].mxu0 %v11120
      %v11306 = vpop.f32.mrb[0].mxu0
      %v11307 = vadd.f32 0.0, %v11306
      %v11308 = vpop.f32.mrb[0].mxu0
      %v11309 = vpop.f32.mrb[0].mxu0
      %v11310 = vadd.f32 0.0, %v11309
      %v11311 = vpop.f32.mrb[0].mxu0
      %11312 = vmatprep.mubr.bf16.mxu0 %v11213
      %11313 = vmatmul.mubr.bf16.gmra.mrb[0].mxu0 %v11122
      %v11314 = vpop.f32.mrb[0].mxu0
      %v11315 = vadd.f32 0.0, %v11314
      %v11316 = vpop.f32.mrb[0].mxu0
      %v11317 = vpop.f32.mrb[0].mxu0
      %v11318 = vadd.f32 0.0, %v11317
      %v11319 = vpop.f32.mrb[0].mxu0
      %11320 = vmatprep.mubr.bf16.mxu0 %v11216
      %11321 = vmatmul.mubr.bf16.gmra.mrb[0].mxu0 %v11124
      %v11322 = vpop.f32.mrb[0].mxu0
      %v11323 = vadd.f32 0.0, %v11322
      %v11324 = vpop.f32.mrb[0].mxu0
      %v11325 = vpop.f32.mrb[0].mxu0
      %v11326 = vadd.f32 0.0, %v11325
      %v11327 = vpop.f32.mrb[0].mxu0
      %11328 = vmatprep.mubr.bf16.mxu0 %v11219
      %11329 = vmatmul.mubr.bf16.gmra.mrb[0].mxu0 %v11126
      %v11330 = vpop.f32.mrb[0].mxu0
      %v11331 = vadd.f32 0.0, %v11330
      %v11332 = vpop.f32.mrb[0].mxu0
      %v11333 = vpop.f32.mrb[0].mxu0
      %v11334 = vadd.f32 0.0, %v11333
      %v11335 = vpop.f32.mrb[0].mxu0
      %11336 = vmatprep.mubr.bf16.mxu0 %v11222
      %11337 = vmatmul.mubr.bf16.gmra.mrb[0].mxu0 %v11128
      %v11338 = vpop.f32.mrb[0].mxu0
      %v11339 = vadd.f32 0.0, %v11338
      %v11340 = vpop.f32.mrb[0].mxu0
      %v11341 = vpop.f32.mrb[0].mxu0
      %v11342 = vadd.f32 0.0, %v11341
      %v11343 = vpop.f32.mrb[0].mxu0
      %11344 = vmatprep.mubr.bf16.mxu0 %v11225
      %11345 = vmatmul.mubr.bf16.gmra.mrb[0].mxu0 %v11130
      %v11346 = vpop.f32.mrb[0].mxu0
      %v11347 = vadd.f32 0.0, %v11346
      %v11348 = vpop.f32.mrb[0].mxu0
      %v11349 = vpop.f32.mrb[0].mxu0
      %v11350 = vadd.f32 0.0, %v11349
      %v11351 = vpop.f32.mrb[0].mxu0
      %11352 = vmatprep.mubr.bf16.mxu0 %v11228
      %11353 = vmatmul.mubr.bf16.gmra.mrb[0].mxu0 %v11132
      %v11354 = vpop.f32.mrb[0].mxu0
      %v11355 = vadd.f32 0.0, %v11354
      %v11356 = vpop.f32.mrb[0].mxu0
      %v11357 = vpop.f32.mrb[0].mxu0
      %v11358 = vadd.f32 0.0, %v11357
      %v11359 = vpop.f32.mrb[0].mxu0
      %11360 = vmatprep.mubr.bf16.mxu0 %v11231
      %11361 = vmatmul.mubr.bf16.gmra.mrb[0].mxu0 %v11134
      %v11362 = vpop.f32.mrb[0].mxu0
      %v11363 = vadd.f32 0.0, %v11362
      %v11364 = vpop.f32.mrb[0].mxu0
      %v11365 = vpop.f32.mrb[0].mxu0
      %v11366 = vadd.f32 0.0, %v11365
      %v11367 = vpop.f32.mrb[0].mxu0
      %11368 = vmatprep.mubr.bf16.mxu0 %v11234
      %11369 = vmatmul.mubr.bf16.gmra.mrb[0].mxu0 %v11136
      %v11370 = vpop.f32.mrb[0].mxu0
      %v11371 = vadd.f32 0.0, %v11370
      %v11372 = vpop.f32.mrb[0].mxu0
      %v11373 = vpop.f32.mrb[0].mxu0
      %v11374 = vadd.f32 0.0, %v11373
      %v11375 = vpop.f32.mrb[0].mxu0
      %11376 = vmatprep.mubr.bf16.mxu0 %v11237
      %11377 = vmatmul.mubr.bf16.gmra.mrb[0].mxu0 %v11138
      %v11378 = vpop.f32.mrb[0].mxu0
      %v11379 = vadd.f32 0.0, %v11378
      %v11380 = vpop.f32.mrb[0].mxu0
      %v11381 = vpop.f32.mrb[0].mxu0
      %v11382 = vadd.f32 0.0, %v11381
      %v11383 = vpop.f32.mrb[0].mxu0
      %11384 = vmatprep.mubr.bf16.mxu0 %v11240
      %11385 = vmatmul.mubr.bf16.gmra.mrb[0].mxu0 %v11140
      %v11386 = vpop.f32.mrb[0].mxu0
      %v11387 = vadd.f32 0.0, %v11386
      %v11388 = vpop.f32.mrb[0].mxu0
      %v11389 = vpop.f32.mrb[0].mxu0
      %v11390 = vadd.f32 0.0, %v11389
      %v11391 = vpop.f32.mrb[0].mxu0
      %11392 = vmatprep.mubr.bf16.mxu0 %v11243
      %11393 = vmatmul.mubr.bf16.gmra.mrb[0].mxu0 %v11142
      %v11394 = vpop.f32.mrb[0].mxu0
      %v11395 = vadd.f32 0.0, %v11394
      %v11396 = vpop.f32.mrb[0].mxu0
      %v11397 = vpop.f32.mrb[0].mxu0
      %v11398 = vadd.f32 0.0, %v11397
      %v11399 = vpop.f32.mrb[0].mxu0
      %11400 = vmatprep.mubr.bf16.mxu0 %v11246
      %11401 = vmatmul.mubr.bf16.gmra.mrb[0].mxu0 %v11144
      %v11402 = vpop.f32.mrb[0].mxu0
      %v11403 = vadd.f32 0.0, %v11402
      %v11404 = vpop.f32.mrb[0].mxu0
      %v11405 = vpop.f32.mrb[0].mxu0
      %v11406 = vadd.f32 0.0, %v11405
      %v11407 = vpop.f32.mrb[0].mxu0
      %11408 = vdwg.mxu0
      %v11409 = vld [vmem:[%s20] sm:$0x3]
      %v11410 = vlaneseq
      %v11411 = vshrl.u32 %v11410, 7
      %v11412 = vsub.s32 0, %v11411
      %v11413 = vrot.slane %v11409, %v11412
      %v11414 = vmul.f32 %v11283, %v11413
      %v11415 = vmul.f32 %v11286, %v11413
      %v11416 = vmul.f32 %v11291, %v11413
      %v11417 = vmul.f32 %v11294, %v11413
      %v11418 = vmul.f32 %v11299, %v11413
      %v11419 = vmul.f32 %v11302, %v11413
      %v11420 = vmul.f32 %v11307, %v11413
      %v11421 = vmul.f32 %v11310, %v11413
      %v11422 = vmul.f32 %v11315, %v11413
      %v11423 = vmul.f32 %v11318, %v11413
      %v11424 = vmul.f32 %v11323, %v11413
      %v11425 = vmul.f32 %v11326, %v11413
      %v11426 = vmul.f32 %v11331, %v11413
      %v11427 = vmul.f32 %v11334, %v11413
      %v11428 = vmul.f32 %v11339, %v11413
      %v11429 = vmul.f32 %v11342, %v11413
      %v11430 = vmul.f32 %v11347, %v11413
      %v11431 = vmul.f32 %v11350, %v11413
      %v11432 = vmul.f32 %v11355, %v11413
      %v11433 = vmul.f32 %v11358, %v11413
      %v11434 = vmul.f32 %v11363, %v11413
      %v11435 = vmul.f32 %v11366, %v11413
      %v11436 = vmul.f32 %v11371, %v11413
      %v11437 = vmul.f32 %v11374, %v11413
      %v11438 = vmul.f32 %v11379, %v11413
      %v11439 = vmul.f32 %v11382, %v11413
      %v11440 = vmul.f32 %v11387, %v11413
      %v11441 = vmul.f32 %v11390, %v11413
      %v11442 = vmul.f32 %v11395, %v11413
      %v11443 = vmul.f32 %v11398, %v11413
      %v11444 = vmul.f32 %v11403, %v11413
      %v11445 = vmul.f32 %v11406, %v11413
      %v11446 = vlaneseq
      %v11447 = vshrl.u32 %v11446, 7
      %v11448 = vsub.s32 1, %v11447
      %v11449 = vrot.slane %v11409, %v11448
      %v11450 = vadd.f32 %v11414, %v11449
      %v11451 = vadd.f32 %v11415, %v11449
      %v11452 = vadd.f32 %v11416, %v11449
      %v11453 = vadd.f32 %v11417, %v11449
      %v11454 = vadd.f32 %v11418, %v11449
      %v11455 = vadd.f32 %v11419, %v11449
      %v11456 = vadd.f32 %v11420, %v11449
      %v11457 = vadd.f32 %v11421, %v11449
      %v11458 = vadd.f32 %v11422, %v11449
      %v11459 = vadd.f32 %v11423, %v11449
      %v11460 = vadd.f32 %v11424, %v11449
      %v11461 = vadd.f32 %v11425, %v11449
      %v11462 = vadd.f32 %v11426, %v11449
      %v11463 = vadd.f32 %v11427, %v11449
      %v11464 = vadd.f32 %v11428, %v11449
      %v11465 = vadd.f32 %v11429, %v11449
      %v11466 = vadd.f32 %v11430, %v11449
      %v11467 = vadd.f32 %v11431, %v11449
      %v11468 = vadd.f32 %v11432, %v11449
      %v11469 = vadd.f32 %v11433, %v11449
      %v11470 = vadd.f32 %v11434, %v11449
      %v11471 = vadd.f32 %v11435, %v11449
      %v11472 = vadd.f32 %v11436, %v11449
      %v11473 = vadd.f32 %v11437, %v11449
      %v11474 = vadd.f32 %v11438, %v11449
      %v11475 = vadd.f32 %v11439, %v11449
      %v11476 = vadd.f32 %v11440, %v11449
      %v11477 = vadd.f32 %v11441, %v11449
      %v11478 = vadd.f32 %v11442, %v11449
      %v11479 = vadd.f32 %v11443, %v11449
      %v11480 = vadd.f32 %v11444, %v11449
      %v11481 = vadd.f32 %v11445, %v11449
      %v11482 = vmax.f32 %v11450, 0.0
      %v11483 = vmax.f32 %v11451, 0.0
      %v11484 = vmax.f32 %v11452, 0.0
      %v11485 = vmax.f32 %v11453, 0.0
      %v11486 = vmax.f32 %v11454, 0.0
      %v11487 = vmax.f32 %v11455, 0.0
      %v11488 = vmax.f32 %v11456, 0.0
      %v11489 = vmax.f32 %v11457, 0.0
      %v11490 = vmax.f32 %v11458, 0.0
      %v11491 = vmax.f32 %v11459, 0.0
      %v11492 = vmax.f32 %v11460, 0.0
      %v11493 = vmax.f32 %v11461, 0.0
      %v11494 = vmax.f32 %v11462, 0.0
      %v11495 = vmax.f32 %v11463, 0.0
      %v11496 = vmax.f32 %v11464, 0.0
      %v11497 = vmax.f32 %v11465, 0.0
      %v11498 = vmax.f32 %v11466, 0.0
      %v11499 = vmax.f32 %v11467, 0.0
      %v11500 = vmax.f32 %v11468, 0.0
      %v11501 = vmax.f32 %v11469, 0.0
      %v11502 = vmax.f32 %v11470, 0.0
      %v11503 = vmax.f32 %v11471, 0.0
      %v11504 = vmax.f32 %v11472, 0.0
      %v11505 = vmax.f32 %v11473, 0.0
      %v11506 = vmax.f32 %v11474, 0.0
      %v11507 = vmax.f32 %v11475, 0.0
      %v11508 = vmax.f32 %v11476, 0.0
      %v11509 = vmax.f32 %v11477, 0.0
      %v11510 = vmax.f32 %v11478, 0.0
      %v11511 = vmax.f32 %v11479, 0.0
      %v11512 = vmax.f32 %v11480, 0.0
      %v11513 = vmax.f32 %v11481, 0.0
      %11514 = vst.msk [vmem:[%s676] sm:$0xff] %vm974, %v11482
      %11515 = vst.msk [vmem:[%s676 + $0x8] sm:$0xff] %vm974, %v11483
      %11516 = vst.msk [vmem:[%s676 + $0x10] sm:$0xff] %vm974, %v11484
      %11517 = vst.msk [vmem:[%s676 + $0x18] sm:$0xff] %vm974, %v11485
      %11518 = vst.msk [vmem:[%s676 + $0x20] sm:$0xff] %vm974, %v11486
      %11519 = vst.msk [vmem:[%s676 + $0x28] sm:$0xff] %vm974, %v11487
      %11520 = vst.msk [vmem:[%s676 + $0x30] sm:$0xff] %vm974, %v11488
      %11521 = vst.msk [vmem:[%s676 + $0x38] sm:$0xff] %vm974, %v11489
      %11522 = vst.msk [vmem:[%s676 + $0x40] sm:$0xff] %vm974, %v11490
      %11523 = vst.msk [vmem:[%s676 + $0x48] sm:$0xff] %vm974, %v11491
      %11524 = vst.msk [vmem:[%s676 + $0x50] sm:$0xff] %vm974, %v11492
      %11525 = vst.msk [vmem:[%s676 + $0x58] sm:$0xff] %vm974, %v11493
      %11526 = vst.msk [vmem:[%s676 + $0x60] sm:$0xff] %vm974, %v11494
      %11527 = vst.msk [vmem:[%s676 + $0x68] sm:$0xff] %vm974, %v11495
      %11528 = vst.msk [vmem:[%s676 + $0x70] sm:$0xff] %vm974, %v11496
      %11529 = vst.msk [vmem:[%s676 + $0x78] sm:$0xff] %vm974, %v11497
      %11530 = vst.msk [vmem:[%s676 + $0x80] sm:$0xff] %vm974, %v11498
      %11531 = vst.msk [vmem:[%s676 + $0x88] sm:$0xff] %vm974, %v11499
      %11532 = vst.msk [vmem:[%s676 + $0x90] sm:$0xff] %vm974, %v11500
      %11533 = vst.msk [vmem:[%s676 + $0x98] sm:$0xff] %vm974, %v11501
      %11534 = vst.msk [vmem:[%s676 + $0xa0] sm:$0xff] %vm974, %v11502
      %11535 = vst.msk [vmem:[%s676 + $0xa8] sm:$0xff] %vm974, %v11503
      %11536 = vst.msk [vmem:[%s676 + $0xb0] sm:$0xff] %vm974, %v11504
      %11537 = vst.msk [vmem:[%s676 + $0xb8] sm:$0xff] %vm974, %v11505
      %11538 = vst.msk [vmem:[%s676 + $0xc0] sm:$0xff] %vm974, %v11506
      %11539 = vst.msk [vmem:[%s676 + $0xc8] sm:$0xff] %vm974, %v11507
      %11540 = vst.msk [vmem:[%s676 + $0xd0] sm:$0xff] %vm974, %v11508
      %11541 = vst.msk [vmem:[%s676 + $0xd8] sm:$0xff] %vm974, %v11509
      %11542 = vst.msk [vmem:[%s676 + $0xe0] sm:$0xff] %vm974, %v11510
      %11543 = vst.msk [vmem:[%s676 + $0xe8] sm:$0xff] %vm974, %v11511
      %11544 = vst.msk [vmem:[%s676 + $0xf0] sm:$0xff] %vm974, %v11512
      %11545 = vst.msk [vmem:[%s676 + $0xf8] sm:$0xff] %vm974, %v11513
      %p11546 = scmp.lt.s32.totalorder %s32, 1
      %s11547 = scalar_select %p11546, %s32, 1
      %s11548 = smul.addr %s11547, 32
      %s11549 = smul.addr %s11548, 8
      %s11550 = scalar_lea.vmem %s21, %s11549
      // Predicated region
      $region105: #{mfab2d_forward.1} parent=103 // pred_check
        %p11551 = pneg %p501
      $region106: #{mfab2d_forward.1} parent=103 // pred_check_branch
        %11553 = sbr.rel (%p11551) target = $region108
      $region107: #{mfab2d_forward.1} parent=103 // pred_region
        _
      $region108: #{mfab2d_forward.1} parent=103 // pred_fallthru
        _
    $region104: #{mfab2d_forward.1} parent=5 // pred_fallthru
      _
    %p11554 = scmp.le.s32.totalorder 2, %s27
    // Predicated region
    $region109: #{mfab2d_forward.1} parent=5 // pred_check
      %p11555 = pneg %p11554
    $region110: #{mfab2d_forward.1} parent=5 // pred_check_branch
      %11557 = sbr.rel (%p11555) target = $region112
    $region111: #{mfab2d_forward.1} parent=5 // pred_region
      %s11558 = ssub.s32 %s27, 2
      // Predicated region
      $region113: #{mfab2d_forward.1} parent=111 // pred_check
        %p11559 = pneg %p507
      $region114: #{mfab2d_forward.1} parent=111 // pred_check_branch
        %11561 = sbr.rel (%p11559) target = $region116
      $region115: #{mfab2d_forward.1} parent=111 // pred_region
        %p11562 = scmp.lt.s32.totalorder %s33, 1
        %s11563 = scalar_select %p11562, %s33, 1
        %s11564 = smul.addr %s11563, 32
        %s11565 = smul.addr %s11564, 8
        %s11566 = scalar_lea.vmem %s21, %s11565
      $region116: #{mfab2d_forward.1} parent=111 // pred_fallthru
        _
    $region112: #{mfab2d_forward.1} parent=5 // pred_fallthru
      _
  $region6: #{mfab2d_forward.1} parent=0 // loop_footer
    %s31 = sadd.s32 1, %s27
  $region7: #{mfab2d_forward.1} parent=0 // loop_footer_branch
    %26 = sbr.rel target = $region3
  $region8: #{mfab2d_forward.1} parent=0 // loop_exit
    _

</llo_original>
